<compile_context>
chip_gen: v6e
topology: v6e:2x2x1
jax: 0.10.0
libtpu: 0.0.40
codegen_flags: <defaults>
</compile_context>

<pallas_src>
import jax
import jax.numpy as jnp
import numpy as np
from jax.experimental import pallas as pl
from jax.experimental.pallas import tpu as pltpu

# ---------------- small, model-consistent shapes ----------------
B = 2          # batch
D = 128        # hidden size (real model: 1536)
HS = 4         # feature-map spatial side (real: 7)
P = HS * HS    # flattened spatial (real: 49)
L = 2          # rnn_layers
T = 5          # text_max_len
V = 64         # NUM_WORDS
VP = 128       # V padded to lane width for a dense output store
SOS_IDX = 1    # word2idx['<SOS>']
ATTN_SCALE = 1.0 / 7.0


# ---------------- Pallas kernel: full decode loop ----------------
def decoder_kernel(ch_ref, h0_ref, sos_ref,
                   wg_ref, bg_ref,        # fused LSTM gate weights / pre-summed bias
                   wqh_ref, bqh_ref,      # fused [Wq^T | Wh_h^T] per layer, [bq | bh]
                   wha_ref,               # Wh_att^T per layer
                   wkv_ref, bkv_ref,      # fused fc_k/fc_v for all layers
                   wp_ref, bp_ref,        # vocab projection, lane-padded to VP
                   out_ref):
    # ch_ref : [B, P, D]       image features, D lane-dense
    # h0_ref : [L, B, D]       initial hidden (pooler repeated over layers)
    # sos_ref: [B, D]          <SOS> embedding repeated over batch
    # wg_ref : [L, 2D, 4D]     bg_ref : [L, 1, 4D]
    # wqh_ref: [L, D, 2D]      bqh_ref: [L, 1, 2D]
    # wha_ref: [L, D, D]
    # wkv_ref: [2LP, P]        bkv_ref: [2LP, 1]   rows = [k_l0; v_l0; k_l1; v_l1]
    # wp_ref : [D, VP]         bp_ref : [1, VP]
    # out_ref: [T*B, VP]       logits, rows ordered (t0 b0, t0 b1, t1 b0, ...)

    # ---- one-time: keys / values per layer in [B, P, D] layout ----
    wkv = wkv_ref[...]                                                   # hoisted reads
    bkv = bkv_ref[...]
    kv_rows = []
    for b in range(B):
        kv_rows.append(jnp.tanh(
            jnp.dot(wkv, ch_ref[b], preferred_element_type=jnp.float32)
            + bkv))                                                      # [2LP, D]
    keys, vals = [], []
    for l in range(L):
        k_l = jnp.stack([kv_rows[b][(2 * l) * P:(2 * l + 1) * P, :] for b in range(B)],
                        axis=0)
        v_l = jnp.stack([kv_rows[b][(2 * l + 1) * P:(2 * l + 2) * P, :] for b in range(B)],
                        axis=0)
        keys.append(k_l * ATTN_SCALE)    # fold the 1/7 score scale into the keys
        vals.append(v_l)                 # [B, P, D]

    # ---- hoisted bias broadcasts (emitted once, reused across the unrolled loop) ----
    bg = [jnp.broadcast_to(bg_ref[l], (B, 4 * D)) for l in range(L)]
    bqh = [jnp.broadcast_to(bqh_ref[l], (B, 2 * D)) for l in range(L)]

    h = [h0_ref[l] for l in range(L)]
    c = [jnp.zeros((B, D), jnp.float32) for _ in range(L)]

    x = sos_ref[...]
    outs = [x]                            # un-projected outputs; projected once at the end

    for _ in range(T - 1):
        # ---- multi-layer LSTM, single time step (PyTorch gate order i,f,g,o) ----
        layer_in = x
        for l in range(L):
            zin = jnp.concatenate([layer_in, h[l]], axis=1)                    # [B, 2D]
            gates = jnp.dot(zin, wg_ref[l],
                            preferred_element_type=jnp.float32) + bg[l]        # [B, 4D]
            i_g = jax.nn.sigmoid(gates[:, 0 * D:1 * D])
            f_g = jax.nn.sigmoid(gates[:, 1 * D:2 * D])
            g_g = jnp.tanh(gates[:, 2 * D:3 * D])
            o_g = jax.nn.sigmoid(gates[:, 3 * D:4 * D])
            c[l] = f_g * c[l] + i_g * g_g
            h[l] = o_g * jnp.tanh(c[l])
            layer_in = h[l]

        outs.append(layer_in)             # top-layer output
        x = layer_in                      # inp = out

        # ---- per-layer cross attention, then h <- tanh([att|h] @ Wh^T + bh) ----
        for l in range(L):
            fused = jnp.dot(h[l], wqh_ref[l],
                            preferred_element_type=jnp.float32) + bqh[l]       # [B, 2D]
            q = jnp.tanh(fused[:, :D])                                         # [B, D]
            hpart = fused[:, D:]                                               # h @ Wh_h^T + bh
            s = jnp.sum(keys[l] * q[:, None, :], axis=-1)                      # [B, P]
            # numerically-stable softmax; divide replaced by EUP approx reciprocal
            s = s - jnp.max(s, axis=-1, keepdims=True)
            e = jnp.exp(s)
            w = e * pl.reciprocal(jnp.sum(e, axis=-1, keepdims=True), approx=True)
            att = jnp.einsum('bqp,bpd->bqd', w[:, None, :], vals[l],
                             preferred_element_type=jnp.float32)[:, 0, :]      # [B, D]
            h[l] = jnp.tanh(jnp.dot(att, wha_ref[l],
                                    preferred_element_type=jnp.float32) + hpart)

    # ---- single deferred, lane-dense projection of all T outputs ----
    pred = jnp.concatenate(outs, axis=0)                                       # [T*B, D]
    out_ref[...] = (jnp.dot(pred, wp_ref[...],
                            preferred_element_type=jnp.float32) + bp_ref[...])


# ---------------- wrapper (parameter plumbing = glue) ----------------
def cross_attention_lstm_forward(params, img_channels, pooler):
    Bv, C, Hs, Ws = img_channels.shape
    ch = img_channels.reshape(Bv, C, Hs * Ws).astype(jnp.float32)       # [B, D, P]
    ch_t = jnp.transpose(ch, (0, 2, 1))                                 # [B, P, D]
    sos = jnp.broadcast_to(params["embed"][SOS_IDX][None, :], (Bv, D)).astype(jnp.float32)
    h0 = jnp.broadcast_to(pooler[None, :, :], (L, Bv, D)).astype(jnp.float32)

    # Fused LSTM gate weight: [x | h] @ [W_ih^T ; W_hh^T], bias pre-summed.
    wg = jnp.concatenate([jnp.transpose(params["w_ih"], (0, 2, 1)),
                          jnp.transpose(params["w_hh"], (0, 2, 1))], axis=1)  # [L, 2D, 4D]
    bg = (params["b_ih"] + params["b_hh"])[:, None, :]                        # [L, 1, 4D]

    # Fused per-layer h-input projection: [Wq^T | Wh_h^T], bias [bq | bh]; split Wh_att.
    wq_t = jnp.transpose(params["wq"], (0, 2, 1))                             # [L, D, D]
    wh_t = jnp.transpose(params["wh"], (0, 2, 1))                             # [L, 2D, D]
    wqh = jnp.concatenate([wq_t, wh_t[:, D:, :]], axis=2)                     # [L, D, 2D]
    bqh = jnp.concatenate([params["bq"], params["bh"]], axis=1)[:, None, :]   # [L, 1, 2D]
    wha = wh_t[:, :D, :]                                                      # [L, D, D]

    # Fused fc_k / fc_v for all layers: rows [k_l0; v_l0; k_l1; v_l1].
    wkv = jnp.concatenate(
        [jnp.concatenate([params["wk"][l], params["wv"][l]], axis=0) for l in range(L)],
        axis=0)                                                               # [2LP, P]
    bkv = jnp.concatenate(
        [jnp.concatenate([params["bk"][l], params["bv"][l]], axis=0) for l in range(L)],
        axis=0)[:, None]                                                      # [2LP, 1]

    # Vocab projection padded to lane width (sliced back to V outside).
    wp = jnp.zeros((D, VP), jnp.float32).at[:, :V].set(params["w_proj"].T)
    bp = jnp.zeros((1, VP), jnp.float32).at[:, :V].set(params["b_proj"][None, :])

    inputs = (ch_t, h0, sos, wg, bg, wqh, bqh, wha, wkv, bkv, wp, bp)
    vmem = pl.BlockSpec(memory_space=pltpu.MemorySpace.VMEM)
    out = pl.pallas_call(
        decoder_kernel,
        out_shape=jax.ShapeDtypeStruct((T * Bv, VP), jnp.float32),
        in_specs=[vmem] * len(inputs),
        out_specs=vmem,
    )(*inputs)

    # rows (t, b) -> [T, B, VP] -> slice padding -> PyTorch layout [B, NUM_WORDS, T]
    logits = out.reshape(T, Bv, VP)[:, :, :V]
    return jnp.transpose(logits, (1, 2, 0))


# ---------------- deterministic parameter init ----------------
def init_params(key):
    ks = jax.random.split(key, 16)

    def u(k, shape, scale):
        return jax.random.uniform(k, shape, jnp.float32, -scale, scale)

    s_d = 1.0 / np.sqrt(D)
    s_p = 1.0 / np.sqrt(P)
    s_2d = 1.0 / np.sqrt(2 * D)
    return dict(
        embed=u(ks[0], (V, D), 1.0),              # nn.Embedding(NUM_WORDS, D)
        w_ih=u(ks[1], (L, 4 * D, D), s_d),        # LSTM weight_ih per layer
        w_hh=u(ks[2], (L, 4 * D, D), s_d),        # LSTM weight_hh per layer
        b_ih=u(ks[3], (L, 4 * D), s_d),
        b_hh=u(ks[4], (L, 4 * D), s_d),
        wq=u(ks[5], (L, D, D), s_d),              # CrossAttention.fc_q
        bq=u(ks[6], (L, D), s_d),
        wk=u(ks[7], (L, P, P), s_p),              # CrossAttention.fc_k
        bk=u(ks[8], (L, P), s_p),
        wv=u(ks[9], (L, P, P), s_p),              # CrossAttention.fc_v
        bv=u(ks[10], (L, P), s_p),
        wh=u(ks[11], (L, D, 2 * D), s_2d),        # h_att Linear(2D, D)
        bh=u(ks[12], (L, D), s_2d),
        w_proj=u(ks[13], (V, D), s_d),            # proj Linear(D, NUM_WORDS)
        b_proj=u(ks[14], (V,), s_d),
    )


# ---------------- pure-JAX reference (mirrors PyTorch forward) ----------------
def reference_forward(params, img_channels, pooler):
    Bv = img_channels.shape[0]
    ch = img_channels.reshape(Bv, D, P)
    lin = lambda x, w, b: jnp.dot(x, w.T) + b

    x = jnp.broadcast_to(params["embed"][SOS_IDX][None, :], (Bv, D))
    h = [pooler for _ in range(L)]
    c = [jnp.zeros((Bv, D), jnp.float32) for _ in range(L)]
    preds = [x]
    for _ in range(T - 1):
        layer_in = x
        for l in range(L):
            gates = (lin(layer_in, params["w_ih"][l], params["b_ih"][l])
                     + lin(h[l], params["w_hh"][l], params["b_hh"][l]))
            i_g = jax.nn.sigmoid(gates[:, :D])
            f_g = jax.nn.sigmoid(gates[:, D:2 * D])
            g_g = jnp.tanh(gates[:, 2 * D:3 * D])
            o_g = jax.nn.sigmoid(gates[:, 3 * D:])
            c[l] = f_g * c[l] + i_g * g_g
            h[l] = o_g * jnp.tanh(c[l])
            layer_in = h[l]
        out = layer_in
        preds.append(out)
        x = out
        new_h = []
        for l in range(L):
            values = jnp.tanh(lin(ch, params["wv"][l], params["bv"][l]))   # [B, D, P]
            keys = jnp.tanh(lin(ch, params["wk"][l], params["bk"][l]))     # [B, D, P]
            q = jnp.tanh(lin(h[l], params["wq"][l], params["bq"][l]))      # [B, D]
            scores = jnp.einsum("bdp,bd->bp", keys, q)
            w = jax.nn.softmax(scores / 7.0, axis=1)
            att = jnp.einsum("bp,bdp->bd", w, values)
            cat = jnp.concatenate([att, h[l]], axis=1)
            new_h.append(jnp.tanh(lin(cat, params["wh"][l], params["bh"][l])))
        h = new_h
    pred = jnp.stack(preds, axis=0)                       # [T, B, D]
    res = jnp.transpose(pred, (1, 0, 2))                  # [B, T, D]
    res = lin(res, params["w_proj"], params["b_proj"])    # [B, T, V]
    return jnp.transpose(res, (0, 2, 1))                  # [B, V, T]


if __name__ == "__main__":
    key = jax.random.PRNGKey(0)
    kp, kc, kf = jax.random.split(key, 3)
    params = init_params(kp)

    # Synthetic EfficientNet outputs (see TODO(synk) above).
    img_channels = jax.random.normal(kc, (B, D, HS, HS), jnp.float32)  # last_hidden_state
    pooler = jax.random.normal(kf, (B, D), jnp.float32)                # pooler_output

    out = cross_attention_lstm_forward(params, img_channels, pooler)
    out = jax.block_until_ready(out)

    ref = reference_forward(params, img_channels, pooler)
    np.testing.assert_allclose(np.asarray(out), np.asarray(ref), rtol=2e-2, atol=2e-2)
    assert out.shape == (B, V, T)
    print("KERNEL_OK")
</pallas_src>

<mosaic_0001>
module attributes {stable_mosaic.version = 11 : i64} {
  func.func @decoder_kernel(%arg0: memref<2x16x128xf32, #tpu.memory_space<vmem>>, %arg1: memref<2x2x128xf32, #tpu.memory_space<vmem>>, %arg2: memref<2x128xf32, #tpu.memory_space<vmem>>, %arg3: memref<2x256x512xf32, #tpu.memory_space<vmem>>, %arg4: memref<2x1x512xf32, #tpu.memory_space<vmem>>, %arg5: memref<2x128x256xf32, #tpu.memory_space<vmem>>, %arg6: memref<2x1x256xf32, #tpu.memory_space<vmem>>, %arg7: memref<2x128x128xf32, #tpu.memory_space<vmem>>, %arg8: memref<64x16xf32, #tpu.memory_space<vmem>>, %arg9: memref<64x1xf32, #tpu.memory_space<vmem>>, %arg10: memref<128x128xf32, #tpu.memory_space<vmem>>, %arg11: memref<1x128xf32, #tpu.memory_space<vmem>>, %arg12: memref<10x128xf32, #tpu.memory_space<vmem>>) attributes {dimension_semantics = [], scalar_prefetch = 0 : i64, scratch_operands = 0 : i64, tpu.core_type = #tpu.core_type<tc>} {
    %c0 = arith.constant 0 : index
    %c0_0 = arith.constant 0 : index
    %0 = vector.load %arg8[%c0, %c0_0] : memref<64x16xf32, #tpu.memory_space<vmem>>, vector<64x16xf32>
    %c0_1 = arith.constant 0 : index
    %c0_2 = arith.constant 0 : index
    %1 = vector.load %arg9[%c0_1, %c0_2] : memref<64x1xf32, #tpu.memory_space<vmem>>, vector<64x1xf32>
    %c0_3 = arith.constant 0 : index
    %c0_4 = arith.constant 0 : index
    %c0_5 = arith.constant 0 : index
    %2 = vector.load %arg0[%c0_3, %c0_4, %c0_5] : memref<2x16x128xf32, #tpu.memory_space<vmem>>, vector<1x16x128xf32>
    %3 = vector.shape_cast %2 : vector<1x16x128xf32> to vector<16x128xf32>
    %cst = arith.constant dense<0.000000e+00> : vector<64x128xf32>
    %4 = tpu.matmul %0, %3, %cst {dimension_numbers = #tpu.dot_dimension_numbers<[1], [0], [0], [1], [0, 0, 1, 1], [], []>} : vector<64x16xf32>, vector<16x128xf32>, vector<64x128xf32> -> vector<64x128xf32>
    %5 = vector.broadcast %1 : vector<64x1xf32> to vector<64x128xf32>
    %6 = arith.addf %4, %5 : vector<64x128xf32>
    %7 = math.tanh %6 : vector<64x128xf32>
    %c1 = arith.constant 1 : index
    %c0_6 = arith.constant 0 : index
    %c0_7 = arith.constant 0 : index
    %8 = vector.load %arg0[%c1, %c0_6, %c0_7] : memref<2x16x128xf32, #tpu.memory_space<vmem>>, vector<1x16x128xf32>
    %9 = vector.shape_cast %8 : vector<1x16x128xf32> to vector<16x128xf32>
    %cst_8 = arith.constant dense<0.000000e+00> : vector<64x128xf32>
    %10 = tpu.matmul %0, %9, %cst_8 {dimension_numbers = #tpu.dot_dimension_numbers<[1], [0], [0], [1], [0, 0, 1, 1], [], []>} : vector<64x16xf32>, vector<16x128xf32>, vector<64x128xf32> -> vector<64x128xf32>
    %11 = vector.broadcast %1 : vector<64x1xf32> to vector<64x128xf32>
    %12 = arith.addf %10, %11 : vector<64x128xf32>
    %13 = math.tanh %12 : vector<64x128xf32>
    %14 = vector.extract_strided_slice %7 {offsets = [0, 0], sizes = [16, 128], strides = [1, 1]} : vector<64x128xf32> to vector<16x128xf32>
    %15 = vector.extract_strided_slice %13 {offsets = [0, 0], sizes = [16, 128], strides = [1, 1]} : vector<64x128xf32> to vector<16x128xf32>
    %16 = vector.shape_cast %14 : vector<16x128xf32> to vector<1x16x128xf32>
    %17 = vector.shape_cast %15 : vector<16x128xf32> to vector<1x16x128xf32>
    %18 = tpu.concatenate %16, %17 in 0 : vector<1x16x128xf32>, vector<1x16x128xf32> -> vector<2x16x128xf32>
    %19 = vector.extract_strided_slice %7 {offsets = [16, 0], sizes = [16, 128], strides = [1, 1]} : vector<64x128xf32> to vector<16x128xf32>
    %20 = vector.extract_strided_slice %13 {offsets = [16, 0], sizes = [16, 128], strides = [1, 1]} : vector<64x128xf32> to vector<16x128xf32>
    %21 = vector.shape_cast %19 : vector<16x128xf32> to vector<1x16x128xf32>
    %22 = vector.shape_cast %20 : vector<16x128xf32> to vector<1x16x128xf32>
    %23 = tpu.concatenate %21, %22 in 0 : vector<1x16x128xf32>, vector<1x16x128xf32> -> vector<2x16x128xf32>
    %cst_9 = arith.constant 0.142857149 : f32
    %24 = vector.broadcast %cst_9 : f32 to vector<2x16x128xf32>
    %25 = arith.mulf %18, %24 : vector<2x16x128xf32>
    %26 = vector.extract_strided_slice %7 {offsets = [32, 0], sizes = [16, 128], strides = [1, 1]} : vector<64x128xf32> to vector<16x128xf32>
    %27 = vector.extract_strided_slice %13 {offsets = [32, 0], sizes = [16, 128], strides = [1, 1]} : vector<64x128xf32> to vector<16x128xf32>
    %28 = vector.shape_cast %26 : vector<16x128xf32> to vector<1x16x128xf32>
    %29 = vector.shape_cast %27 : vector<16x128xf32> to vector<1x16x128xf32>
    %30 = tpu.concatenate %28, %29 in 0 : vector<1x16x128xf32>, vector<1x16x128xf32> -> vector<2x16x128xf32>
    %31 = vector.extract_strided_slice %7 {offsets = [48, 0], sizes = [16, 128], strides = [1, 1]} : vector<64x128xf32> to vector<16x128xf32>
    %32 = vector.extract_strided_slice %13 {offsets = [48, 0], sizes = [16, 128], strides = [1, 1]} : vector<64x128xf32> to vector<16x128xf32>
    %33 = vector.shape_cast %31 : vector<16x128xf32> to vector<1x16x128xf32>
    %34 = vector.shape_cast %32 : vector<16x128xf32> to vector<1x16x128xf32>
    %35 = tpu.concatenate %33, %34 in 0 : vector<1x16x128xf32>, vector<1x16x128xf32> -> vector<2x16x128xf32>
    %cst_10 = arith.constant 0.142857149 : f32
    %36 = vector.broadcast %cst_10 : f32 to vector<2x16x128xf32>
    %37 = arith.mulf %30, %36 : vector<2x16x128xf32>
    %c0_11 = arith.constant 0 : index
    %c0_12 = arith.constant 0 : index
    %c0_13 = arith.constant 0 : index
    %38 = vector.load %arg4[%c0_11, %c0_12, %c0_13] : memref<2x1x512xf32, #tpu.memory_space<vmem>>, vector<1x1x512xf32>
    %39 = vector.shape_cast %38 : vector<1x1x512xf32> to vector<1x512xf32>
    %40 = vector.shape_cast %39 : vector<1x512xf32> to vector<1x512xf32>
    %41 = vector.broadcast %40 : vector<1x512xf32> to vector<2x512xf32>
    %c1_14 = arith.constant 1 : index
    %c0_15 = arith.constant 0 : index
    %c0_16 = arith.constant 0 : index
    %42 = vector.load %arg4[%c1_14, %c0_15, %c0_16] : memref<2x1x512xf32, #tpu.memory_space<vmem>>, vector<1x1x512xf32>
    %43 = vector.shape_cast %42 : vector<1x1x512xf32> to vector<1x512xf32>
    %44 = vector.shape_cast %43 : vector<1x512xf32> to vector<1x512xf32>
    %45 = vector.broadcast %44 : vector<1x512xf32> to vector<2x512xf32>
    %c0_17 = arith.constant 0 : index
    %c0_18 = arith.constant 0 : index
    %c0_19 = arith.constant 0 : index
    %46 = vector.load %arg6[%c0_17, %c0_18, %c0_19] : memref<2x1x256xf32, #tpu.memory_space<vmem>>, vector<1x1x256xf32>
    %47 = vector.shape_cast %46 : vector<1x1x256xf32> to vector<1x256xf32>
    %48 = vector.shape_cast %47 : vector<1x256xf32> to vector<1x256xf32>
    %49 = vector.broadcast %48 : vector<1x256xf32> to vector<2x256xf32>
    %c1_20 = arith.constant 1 : index
    %c0_21 = arith.constant 0 : index
    %c0_22 = arith.constant 0 : index
    %50 = vector.load %arg6[%c1_20, %c0_21, %c0_22] : memref<2x1x256xf32, #tpu.memory_space<vmem>>, vector<1x1x256xf32>
    %51 = vector.shape_cast %50 : vector<1x1x256xf32> to vector<1x256xf32>
    %52 = vector.shape_cast %51 : vector<1x256xf32> to vector<1x256xf32>
    %53 = vector.broadcast %52 : vector<1x256xf32> to vector<2x256xf32>
    %c0_23 = arith.constant 0 : index
    %c0_24 = arith.constant 0 : index
    %c0_25 = arith.constant 0 : index
    %54 = vector.load %arg1[%c0_23, %c0_24, %c0_25] : memref<2x2x128xf32, #tpu.memory_space<vmem>>, vector<1x2x128xf32>
    %55 = vector.shape_cast %54 : vector<1x2x128xf32> to vector<2x128xf32>
    %c1_26 = arith.constant 1 : index
    %c0_27 = arith.constant 0 : index
    %c0_28 = arith.constant 0 : index
    %56 = vector.load %arg1[%c1_26, %c0_27, %c0_28] : memref<2x2x128xf32, #tpu.memory_space<vmem>>, vector<1x2x128xf32>
    %57 = vector.shape_cast %56 : vector<1x2x128xf32> to vector<2x128xf32>
    %cst_29 = arith.constant 0.000000e+00 : f32
    %58 = vector.broadcast %cst_29 : f32 to vector<2x128xf32>
    %cst_30 = arith.constant 0.000000e+00 : f32
    %59 = vector.broadcast %cst_30 : f32 to vector<2x128xf32>
    %c0_31 = arith.constant 0 : index
    %c0_32 = arith.constant 0 : index
    %60 = vector.load %arg2[%c0_31, %c0_32] : memref<2x128xf32, #tpu.memory_space<vmem>>, vector<2x128xf32>
    %61 = tpu.concatenate %60, %55 in 1 : vector<2x128xf32>, vector<2x128xf32> -> vector<2x256xf32>
    %c0_33 = arith.constant 0 : index
    %c0_34 = arith.constant 0 : index
    %c0_35 = arith.constant 0 : index
    %62 = vector.load %arg3[%c0_33, %c0_34, %c0_35] : memref<2x256x512xf32, #tpu.memory_space<vmem>>, vector<1x256x512xf32>
    %63 = vector.shape_cast %62 : vector<1x256x512xf32> to vector<256x512xf32>
    %cst_36 = arith.constant dense<0.000000e+00> : vector<2x512xf32>
    %64 = tpu.matmul %61, %63, %cst_36 {dimension_numbers = #tpu.dot_dimension_numbers<[1], [0], [0], [1], [0, 0, 1, 1], [], []>} : vector<2x256xf32>, vector<256x512xf32>, vector<2x512xf32> -> vector<2x512xf32>
    %65 = arith.addf %64, %41 : vector<2x512xf32>
    %66 = vector.extract_strided_slice %65 {offsets = [0, 0], sizes = [2, 128], strides = [1, 1]} : vector<2x512xf32> to vector<2x128xf32>
    %67 = arith.negf %66 : vector<2x128xf32>
    %68 = math.exp %67 : vector<2x128xf32>
    %cst_37 = arith.constant 1.000000e+00 : f32
    %69 = vector.broadcast %cst_37 : f32 to vector<2x128xf32>
    %70 = arith.addf %69, %68 : vector<2x128xf32>
    %71 = arith.divf %69, %70 : vector<2x128xf32>
    %72 = vector.extract_strided_slice %65 {offsets = [0, 128], sizes = [2, 128], strides = [1, 1]} : vector<2x512xf32> to vector<2x128xf32>
    %73 = arith.negf %72 : vector<2x128xf32>
    %74 = math.exp %73 : vector<2x128xf32>
    %cst_38 = arith.constant 1.000000e+00 : f32
    %75 = vector.broadcast %cst_38 : f32 to vector<2x128xf32>
    %76 = arith.addf %75, %74 : vector<2x128xf32>
    %77 = arith.divf %75, %76 : vector<2x128xf32>
    %78 = vector.extract_strided_slice %65 {offsets = [0, 256], sizes = [2, 128], strides = [1, 1]} : vector<2x512xf32> to vector<2x128xf32>
    %79 = math.tanh %78 : vector<2x128xf32>
    %80 = vector.extract_strided_slice %65 {offsets = [0, 384], sizes = [2, 128], strides = [1, 1]} : vector<2x512xf32> to vector<2x128xf32>
    %81 = arith.negf %80 : vector<2x128xf32>
    %82 = math.exp %81 : vector<2x128xf32>
    %cst_39 = arith.constant 1.000000e+00 : f32
    %83 = vector.broadcast %cst_39 : f32 to vector<2x128xf32>
    %84 = arith.addf %83, %82 : vector<2x128xf32>
    %85 = arith.divf %83, %84 : vector<2x128xf32>
    %86 = arith.mulf %77, %58 : vector<2x128xf32>
    %87 = arith.mulf %71, %79 : vector<2x128xf32>
    %88 = arith.addf %86, %87 : vector<2x128xf32>
    %89 = math.tanh %88 : vector<2x128xf32>
    %90 = arith.mulf %85, %89 : vector<2x128xf32>
    %91 = tpu.concatenate %90, %57 in 1 : vector<2x128xf32>, vector<2x128xf32> -> vector<2x256xf32>
    %c1_40 = arith.constant 1 : index
    %c0_41 = arith.constant 0 : index
    %c0_42 = arith.constant 0 : index
    %92 = vector.load %arg3[%c1_40, %c0_41, %c0_42] : memref<2x256x512xf32, #tpu.memory_space<vmem>>, vector<1x256x512xf32>
    %93 = vector.shape_cast %92 : vector<1x256x512xf32> to vector<256x512xf32>
    %cst_43 = arith.constant dense<0.000000e+00> : vector<2x512xf32>
    %94 = tpu.matmul %91, %93, %cst_43 {dimension_numbers = #tpu.dot_dimension_numbers<[1], [0], [0], [1], [0, 0, 1, 1], [], []>} : vector<2x256xf32>, vector<256x512xf32>, vector<2x512xf32> -> vector<2x512xf32>
    %95 = arith.addf %94, %45 : vector<2x512xf32>
    %96 = vector.extract_strided_slice %95 {offsets = [0, 0], sizes = [2, 128], strides = [1, 1]} : vector<2x512xf32> to vector<2x128xf32>
    %97 = arith.negf %96 : vector<2x128xf32>
    %98 = math.exp %97 : vector<2x128xf32>
    %cst_44 = arith.constant 1.000000e+00 : f32
    %99 = vector.broadcast %cst_44 : f32 to vector<2x128xf32>
    %100 = arith.addf %99, %98 : vector<2x128xf32>
    %101 = arith.divf %99, %100 : vector<2x128xf32>
    %102 = vector.extract_strided_slice %95 {offsets = [0, 128], sizes = [2, 128], strides = [1, 1]} : vector<2x512xf32> to vector<2x128xf32>
    %103 = arith.negf %102 : vector<2x128xf32>
    %104 = math.exp %103 : vector<2x128xf32>
    %cst_45 = arith.constant 1.000000e+00 : f32
    %105 = vector.broadcast %cst_45 : f32 to vector<2x128xf32>
    %106 = arith.addf %105, %104 : vector<2x128xf32>
    %107 = arith.divf %105, %106 : vector<2x128xf32>
    %108 = vector.extract_strided_slice %95 {offsets = [0, 256], sizes = [2, 128], strides = [1, 1]} : vector<2x512xf32> to vector<2x128xf32>
    %109 = math.tanh %108 : vector<2x128xf32>
    %110 = vector.extract_strided_slice %95 {offsets = [0, 384], sizes = [2, 128], strides = [1, 1]} : vector<2x512xf32> to vector<2x128xf32>
    %111 = arith.negf %110 : vector<2x128xf32>
    %112 = math.exp %111 : vector<2x128xf32>
    %cst_46 = arith.constant 1.000000e+00 : f32
    %113 = vector.broadcast %cst_46 : f32 to vector<2x128xf32>
    %114 = arith.addf %113, %112 : vector<2x128xf32>
    %115 = arith.divf %113, %114 : vector<2x128xf32>
    %116 = arith.mulf %107, %59 : vector<2x128xf32>
    %117 = arith.mulf %101, %109 : vector<2x128xf32>
    %118 = arith.addf %116, %117 : vector<2x128xf32>
    %119 = math.tanh %118 : vector<2x128xf32>
    %120 = arith.mulf %115, %119 : vector<2x128xf32>
    %c0_47 = arith.constant 0 : index
    %c0_48 = arith.constant 0 : index
    %c0_49 = arith.constant 0 : index
    %121 = vector.load %arg5[%c0_47, %c0_48, %c0_49] : memref<2x128x256xf32, #tpu.memory_space<vmem>>, vector<1x128x256xf32>
    %122 = vector.shape_cast %121 : vector<1x128x256xf32> to vector<128x256xf32>
    %cst_50 = arith.constant dense<0.000000e+00> : vector<2x256xf32>
    %123 = tpu.matmul %90, %122, %cst_50 {dimension_numbers = #tpu.dot_dimension_numbers<[1], [0], [0], [1], [0, 0, 1, 1], [], []>} : vector<2x128xf32>, vector<128x256xf32>, vector<2x256xf32> -> vector<2x256xf32>
    %124 = arith.addf %123, %49 : vector<2x256xf32>
    %125 = vector.extract_strided_slice %124 {offsets = [0, 0], sizes = [2, 128], strides = [1, 1]} : vector<2x256xf32> to vector<2x128xf32>
    %126 = math.tanh %125 : vector<2x128xf32>
    %127 = vector.extract_strided_slice %124 {offsets = [0, 128], sizes = [2, 128], strides = [1, 1]} : vector<2x256xf32> to vector<2x128xf32>
    %128 = vector.shape_cast %126 : vector<2x128xf32> to vector<2x1x128xf32>
    %129 = vector.broadcast %128 : vector<2x1x128xf32> to vector<2x16x128xf32>
    %130 = arith.mulf %25, %129 : vector<2x16x128xf32>
    %cst_51 = arith.constant dense<0.000000e+00> : vector<2x16xf32>
    %131 = vector.multi_reduction <add>, %130, %cst_51 [2] : vector<2x16x128xf32> to vector<2x16xf32>
    %cst_52 = arith.constant dense<0xFF800000> : vector<2xf32>
    %132 = vector.multi_reduction <maximumf>, %131, %cst_52 [1] : vector<2x16xf32> to vector<2xf32>
    %133 = vector.shape_cast %132 : vector<2xf32> to vector<2x1xf32>
    %134 = vector.broadcast %133 : vector<2x1xf32> to vector<2x16xf32>
    %135 = arith.subf %131, %134 : vector<2x16xf32>
    %136 = math.exp %135 : vector<2x16xf32>
    %cst_53 = arith.constant dense<0.000000e+00> : vector<2xf32>
    %137 = vector.multi_reduction <add>, %136, %cst_53 [1] : vector<2x16xf32> to vector<2xf32>
    %138 = vector.shape_cast %137 : vector<2xf32> to vector<2x1xf32>
    %139 = tpu.reciprocal %138 {approx = true} : vector<2x1xf32> -> vector<2x1xf32>
    %140 = vector.broadcast %139 : vector<2x1xf32> to vector<2x16xf32>
    %141 = arith.mulf %136, %140 : vector<2x16xf32>
    %142 = vector.shape_cast %141 : vector<2x16xf32> to vector<2x1x16xf32>
    "tpu.trace_start"() <{level = 10 : i32, message = "bqp,bpd->bqd"}> : () -> ()
    %cst_54 = arith.constant dense<0.000000e+00> : vector<2x1x128xf32>
    %143 = tpu.matmul %142, %23, %cst_54 {dimension_numbers = #tpu.dot_dimension_numbers<[2], [1], [1], [2], [0, 0, 0, 1, 1, 2], [0], [0]>} : vector<2x1x16xf32>, vector<2x16x128xf32>, vector<2x1x128xf32> -> vector<2x1x128xf32>
    "tpu.trace_stop"() : () -> ()
    %144 = vector.shape_cast %143 : vector<2x1x128xf32> to vector<2x128xf32>
    %c0_55 = arith.constant 0 : index
    %c0_56 = arith.constant 0 : index
    %c0_57 = arith.constant 0 : index
    %145 = vector.load %arg7[%c0_55, %c0_56, %c0_57] : memref<2x128x128xf32, #tpu.memory_space<vmem>>, vector<1x128x128xf32>
    %146 = vector.shape_cast %145 : vector<1x128x128xf32> to vector<128x128xf32>
    %cst_58 = arith.constant dense<0.000000e+00> : vector<2x128xf32>
    %147 = tpu.matmul %144, %146, %cst_58 {dimension_numbers = #tpu.dot_dimension_numbers<[1], [0], [0], [1], [0, 0, 1, 1], [], []>} : vector<2x128xf32>, vector<128x128xf32>, vector<2x128xf32> -> vector<2x128xf32>
    %148 = arith.addf %147, %127 : vector<2x128xf32>
    %149 = math.tanh %148 : vector<2x128xf32>
    %c1_59 = arith.constant 1 : index
    %c0_60 = arith.constant 0 : index
    %c0_61 = arith.constant 0 : index
    %150 = vector.load %arg5[%c1_59, %c0_60, %c0_61] : memref<2x128x256xf32, #tpu.memory_space<vmem>>, vector<1x128x256xf32>
    %151 = vector.shape_cast %150 : vector<1x128x256xf32> to vector<128x256xf32>
    %cst_62 = arith.constant dense<0.000000e+00> : vector<2x256xf32>
    %152 = tpu.matmul %120, %151, %cst_62 {dimension_numbers = #tpu.dot_dimension_numbers<[1], [0], [0], [1], [0, 0, 1, 1], [], []>} : vector<2x128xf32>, vector<128x256xf32>, vector<2x256xf32> -> vector<2x256xf32>
    %153 = arith.addf %152, %53 : vector<2x256xf32>
    %154 = vector.extract_strided_slice %153 {offsets = [0, 0], sizes = [2, 128], strides = [1, 1]} : vector<2x256xf32> to vector<2x128xf32>
    %155 = math.tanh %154 : vector<2x128xf32>
    %156 = vector.extract_strided_slice %153 {offsets = [0, 128], sizes = [2, 128], strides = [1, 1]} : vector<2x256xf32> to vector<2x128xf32>
    %157 = vector.shape_cast %155 : vector<2x128xf32> to vector<2x1x128xf32>
    %158 = vector.broadcast %157 : vector<2x1x128xf32> to vector<2x16x128xf32>
    %159 = arith.mulf %37, %158 : vector<2x16x128xf32>
    %cst_63 = arith.constant dense<0.000000e+00> : vector<2x16xf32>
    %160 = vector.multi_reduction <add>, %159, %cst_63 [2] : vector<2x16x128xf32> to vector<2x16xf32>
    %cst_64 = arith.constant dense<0xFF800000> : vector<2xf32>
    %161 = vector.multi_reduction <maximumf>, %160, %cst_64 [1] : vector<2x16xf32> to vector<2xf32>
    %162 = vector.shape_cast %161 : vector<2xf32> to vector<2x1xf32>
    %163 = vector.broadcast %162 : vector<2x1xf32> to vector<2x16xf32>
    %164 = arith.subf %160, %163 : vector<2x16xf32>
    %165 = math.exp %164 : vector<2x16xf32>
    %cst_65 = arith.constant dense<0.000000e+00> : vector<2xf32>
    %166 = vector.multi_reduction <add>, %165, %cst_65 [1] : vector<2x16xf32> to vector<2xf32>
    %167 = vector.shape_cast %166 : vector<2xf32> to vector<2x1xf32>
    %168 = tpu.reciprocal %167 {approx = true} : vector<2x1xf32> -> vector<2x1xf32>
    %169 = vector.broadcast %168 : vector<2x1xf32> to vector<2x16xf32>
    %170 = arith.mulf %165, %169 : vector<2x16xf32>
    %171 = vector.shape_cast %170 : vector<2x16xf32> to vector<2x1x16xf32>
    "tpu.trace_start"() <{level = 10 : i32, message = "bqp,bpd->bqd"}> : () -> ()
    %cst_66 = arith.constant dense<0.000000e+00> : vector<2x1x128xf32>
    %172 = tpu.matmul %171, %35, %cst_66 {dimension_numbers = #tpu.dot_dimension_numbers<[2], [1], [1], [2], [0, 0, 0, 1, 1, 2], [0], [0]>} : vector<2x1x16xf32>, vector<2x16x128xf32>, vector<2x1x128xf32> -> vector<2x1x128xf32>
    "tpu.trace_stop"() : () -> ()
    %173 = vector.shape_cast %172 : vector<2x1x128xf32> to vector<2x128xf32>
    %c1_67 = arith.constant 1 : index
    %c0_68 = arith.constant 0 : index
    %c0_69 = arith.constant 0 : index
    %174 = vector.load %arg7[%c1_67, %c0_68, %c0_69] : memref<2x128x128xf32, #tpu.memory_space<vmem>>, vector<1x128x128xf32>
    %175 = vector.shape_cast %174 : vector<1x128x128xf32> to vector<128x128xf32>
    %cst_70 = arith.constant dense<0.000000e+00> : vector<2x128xf32>
    %176 = tpu.matmul %173, %175, %cst_70 {dimension_numbers = #tpu.dot_dimension_numbers<[1], [0], [0], [1], [0, 0, 1, 1], [], []>} : vector<2x128xf32>, vector<128x128xf32>, vector<2x128xf32> -> vector<2x128xf32>
    %177 = arith.addf %176, %156 : vector<2x128xf32>
    %178 = math.tanh %177 : vector<2x128xf32>
    %179 = tpu.concatenate %120, %149 in 1 : vector<2x128xf32>, vector<2x128xf32> -> vector<2x256xf32>
    %c0_71 = arith.constant 0 : index
    %c0_72 = arith.constant 0 : index
    %c0_73 = arith.constant 0 : index
    %180 = vector.load %arg3[%c0_71, %c0_72, %c0_73] : memref<2x256x512xf32, #tpu.memory_space<vmem>>, vector<1x256x512xf32>
    %181 = vector.shape_cast %180 : vector<1x256x512xf32> to vector<256x512xf32>
    %cst_74 = arith.constant dense<0.000000e+00> : vector<2x512xf32>
    %182 = tpu.matmul %179, %181, %cst_74 {dimension_numbers = #tpu.dot_dimension_numbers<[1], [0], [0], [1], [0, 0, 1, 1], [], []>} : vector<2x256xf32>, vector<256x512xf32>, vector<2x512xf32> -> vector<2x512xf32>
    %183 = arith.addf %182, %41 : vector<2x512xf32>
    %184 = vector.extract_strided_slice %183 {offsets = [0, 0], sizes = [2, 128], strides = [1, 1]} : vector<2x512xf32> to vector<2x128xf32>
    %185 = arith.negf %184 : vector<2x128xf32>
    %186 = math.exp %185 : vector<2x128xf32>
    %cst_75 = arith.constant 1.000000e+00 : f32
    %187 = vector.broadcast %cst_75 : f32 to vector<2x128xf32>
    %188 = arith.addf %187, %186 : vector<2x128xf32>
    %189 = arith.divf %187, %188 : vector<2x128xf32>
    %190 = vector.extract_strided_slice %183 {offsets = [0, 128], sizes = [2, 128], strides = [1, 1]} : vector<2x512xf32> to vector<2x128xf32>
    %191 = arith.negf %190 : vector<2x128xf32>
    %192 = math.exp %191 : vector<2x128xf32>
    %cst_76 = arith.constant 1.000000e+00 : f32
    %193 = vector.broadcast %cst_76 : f32 to vector<2x128xf32>
    %194 = arith.addf %193, %192 : vector<2x128xf32>
    %195 = arith.divf %193, %194 : vector<2x128xf32>
    %196 = vector.extract_strided_slice %183 {offsets = [0, 256], sizes = [2, 128], strides = [1, 1]} : vector<2x512xf32> to vector<2x128xf32>
    %197 = math.tanh %196 : vector<2x128xf32>
    %198 = vector.extract_strided_slice %183 {offsets = [0, 384], sizes = [2, 128], strides = [1, 1]} : vector<2x512xf32> to vector<2x128xf32>
    %199 = arith.negf %198 : vector<2x128xf32>
    %200 = math.exp %199 : vector<2x128xf32>
    %cst_77 = arith.constant 1.000000e+00 : f32
    %201 = vector.broadcast %cst_77 : f32 to vector<2x128xf32>
    %202 = arith.addf %201, %200 : vector<2x128xf32>
    %203 = arith.divf %201, %202 : vector<2x128xf32>
    %204 = arith.mulf %195, %88 : vector<2x128xf32>
    %205 = arith.mulf %189, %197 : vector<2x128xf32>
    %206 = arith.addf %204, %205 : vector<2x128xf32>
    %207 = math.tanh %206 : vector<2x128xf32>
    %208 = arith.mulf %203, %207 : vector<2x128xf32>
    %209 = tpu.concatenate %208, %178 in 1 : vector<2x128xf32>, vector<2x128xf32> -> vector<2x256xf32>
    %c1_78 = arith.constant 1 : index
    %c0_79 = arith.constant 0 : index
    %c0_80 = arith.constant 0 : index
    %210 = vector.load %arg3[%c1_78, %c0_79, %c0_80] : memref<2x256x512xf32, #tpu.memory_space<vmem>>, vector<1x256x512xf32>
    %211 = vector.shape_cast %210 : vector<1x256x512xf32> to vector<256x512xf32>
    %cst_81 = arith.constant dense<0.000000e+00> : vector<2x512xf32>
    %212 = tpu.matmul %209, %211, %cst_81 {dimension_numbers = #tpu.dot_dimension_numbers<[1], [0], [0], [1], [0, 0, 1, 1], [], []>} : vector<2x256xf32>, vector<256x512xf32>, vector<2x512xf32> -> vector<2x512xf32>
    %213 = arith.addf %212, %45 : vector<2x512xf32>
    %214 = vector.extract_strided_slice %213 {offsets = [0, 0], sizes = [2, 128], strides = [1, 1]} : vector<2x512xf32> to vector<2x128xf32>
    %215 = arith.negf %214 : vector<2x128xf32>
    %216 = math.exp %215 : vector<2x128xf32>
    %cst_82 = arith.constant 1.000000e+00 : f32
    %217 = vector.broadcast %cst_82 : f32 to vector<2x128xf32>
    %218 = arith.addf %217, %216 : vector<2x128xf32>
    %219 = arith.divf %217, %218 : vector<2x128xf32>
    %220 = vector.extract_strided_slice %213 {offsets = [0, 128], sizes = [2, 128], strides = [1, 1]} : vector<2x512xf32> to vector<2x128xf32>
    %221 = arith.negf %220 : vector<2x128xf32>
    %222 = math.exp %221 : vector<2x128xf32>
    %cst_83 = arith.constant 1.000000e+00 : f32
    %223 = vector.broadcast %cst_83 : f32 to vector<2x128xf32>
    %224 = arith.addf %223, %222 : vector<2x128xf32>
    %225 = arith.divf %223, %224 : vector<2x128xf32>
    %226 = vector.extract_strided_slice %213 {offsets = [0, 256], sizes = [2, 128], strides = [1, 1]} : vector<2x512xf32> to vector<2x128xf32>
    %227 = math.tanh %226 : vector<2x128xf32>
    %228 = vector.extract_strided_slice %213 {offsets = [0, 384], sizes = [2, 128], strides = [1, 1]} : vector<2x512xf32> to vector<2x128xf32>
    %229 = arith.negf %228 : vector<2x128xf32>
    %230 = math.exp %229 : vector<2x128xf32>
    %cst_84 = arith.constant 1.000000e+00 : f32
    %231 = vector.broadcast %cst_84 : f32 to vector<2x128xf32>
    %232 = arith.addf %231, %230 : vector<2x128xf32>
    %233 = arith.divf %231, %232 : vector<2x128xf32>
    %234 = arith.mulf %225, %118 : vector<2x128xf32>
    %235 = arith.mulf %219, %227 : vector<2x128xf32>
    %236 = arith.addf %234, %235 : vector<2x128xf32>
    %237 = math.tanh %236 : vector<2x128xf32>
    %238 = arith.mulf %233, %237 : vector<2x128xf32>
    %c0_85 = arith.constant 0 : index
    %c0_86 = arith.constant 0 : index
    %c0_87 = arith.constant 0 : index
    %239 = vector.load %arg5[%c0_85, %c0_86, %c0_87] : memref<2x128x256xf32, #tpu.memory_space<vmem>>, vector<1x128x256xf32>
    %240 = vector.shape_cast %239 : vector<1x128x256xf32> to vector<128x256xf32>
    %cst_88 = arith.constant dense<0.000000e+00> : vector<2x256xf32>
    %241 = tpu.matmul %208, %240, %cst_88 {dimension_numbers = #tpu.dot_dimension_numbers<[1], [0], [0], [1], [0, 0, 1, 1], [], []>} : vector<2x128xf32>, vector<128x256xf32>, vector<2x256xf32> -> vector<2x256xf32>
    %242 = arith.addf %241, %49 : vector<2x256xf32>
    %243 = vector.extract_strided_slice %242 {offsets = [0, 0], sizes = [2, 128], strides = [1, 1]} : vector<2x256xf32> to vector<2x128xf32>
    %244 = math.tanh %243 : vector<2x128xf32>
    %245 = vector.extract_strided_slice %242 {offsets = [0, 128], sizes = [2, 128], strides = [1, 1]} : vector<2x256xf32> to vector<2x128xf32>
    %246 = vector.shape_cast %244 : vector<2x128xf32> to vector<2x1x128xf32>
    %247 = vector.broadcast %246 : vector<2x1x128xf32> to vector<2x16x128xf32>
    %248 = arith.mulf %25, %247 : vector<2x16x128xf32>
    %cst_89 = arith.constant dense<0.000000e+00> : vector<2x16xf32>
    %249 = vector.multi_reduction <add>, %248, %cst_89 [2] : vector<2x16x128xf32> to vector<2x16xf32>
    %cst_90 = arith.constant dense<0xFF800000> : vector<2xf32>
    %250 = vector.multi_reduction <maximumf>, %249, %cst_90 [1] : vector<2x16xf32> to vector<2xf32>
    %251 = vector.shape_cast %250 : vector<2xf32> to vector<2x1xf32>
    %252 = vector.broadcast %251 : vector<2x1xf32> to vector<2x16xf32>
    %253 = arith.subf %249, %252 : vector<2x16xf32>
    %254 = math.exp %253 : vector<2x16xf32>
    %cst_91 = arith.constant dense<0.000000e+00> : vector<2xf32>
    %255 = vector.multi_reduction <add>, %254, %cst_91 [1] : vector<2x16xf32> to vector<2xf32>
    %256 = vector.shape_cast %255 : vector<2xf32> to vector<2x1xf32>
    %257 = tpu.reciprocal %256 {approx = true} : vector<2x1xf32> -> vector<2x1xf32>
    %258 = vector.broadcast %257 : vector<2x1xf32> to vector<2x16xf32>
    %259 = arith.mulf %254, %258 : vector<2x16xf32>
    %260 = vector.shape_cast %259 : vector<2x16xf32> to vector<2x1x16xf32>
    "tpu.trace_start"() <{level = 10 : i32, message = "bqp,bpd->bqd"}> : () -> ()
    %cst_92 = arith.constant dense<0.000000e+00> : vector<2x1x128xf32>
    %261 = tpu.matmul %260, %23, %cst_92 {dimension_numbers = #tpu.dot_dimension_numbers<[2], [1], [1], [2], [0, 0, 0, 1, 1, 2], [0], [0]>} : vector<2x1x16xf32>, vector<2x16x128xf32>, vector<2x1x128xf32> -> vector<2x1x128xf32>
    "tpu.trace_stop"() : () -> ()
    %262 = vector.shape_cast %261 : vector<2x1x128xf32> to vector<2x128xf32>
    %c0_93 = arith.constant 0 : index
    %c0_94 = arith.constant 0 : index
    %c0_95 = arith.constant 0 : index
    %263 = vector.load %arg7[%c0_93, %c0_94, %c0_95] : memref<2x128x128xf32, #tpu.memory_space<vmem>>, vector<1x128x128xf32>
    %264 = vector.shape_cast %263 : vector<1x128x128xf32> to vector<128x128xf32>
    %cst_96 = arith.constant dense<0.000000e+00> : vector<2x128xf32>
    %265 = tpu.matmul %262, %264, %cst_96 {dimension_numbers = #tpu.dot_dimension_numbers<[1], [0], [0], [1], [0, 0, 1, 1], [], []>} : vector<2x128xf32>, vector<128x128xf32>, vector<2x128xf32> -> vector<2x128xf32>
    %266 = arith.addf %265, %245 : vector<2x128xf32>
    %267 = math.tanh %266 : vector<2x128xf32>
    %c1_97 = arith.constant 1 : index
    %c0_98 = arith.constant 0 : index
    %c0_99 = arith.constant 0 : index
    %268 = vector.load %arg5[%c1_97, %c0_98, %c0_99] : memref<2x128x256xf32, #tpu.memory_space<vmem>>, vector<1x128x256xf32>
    %269 = vector.shape_cast %268 : vector<1x128x256xf32> to vector<128x256xf32>
    %cst_100 = arith.constant dense<0.000000e+00> : vector<2x256xf32>
    %270 = tpu.matmul %238, %269, %cst_100 {dimension_numbers = #tpu.dot_dimension_numbers<[1], [0], [0], [1], [0, 0, 1, 1], [], []>} : vector<2x128xf32>, vector<128x256xf32>, vector<2x256xf32> -> vector<2x256xf32>
    %271 = arith.addf %270, %53 : vector<2x256xf32>
    %272 = vector.extract_strided_slice %271 {offsets = [0, 0], sizes = [2, 128], strides = [1, 1]} : vector<2x256xf32> to vector<2x128xf32>
    %273 = math.tanh %272 : vector<2x128xf32>
    %274 = vector.extract_strided_slice %271 {offsets = [0, 128], sizes = [2, 128], strides = [1, 1]} : vector<2x256xf32> to vector<2x128xf32>
    %275 = vector.shape_cast %273 : vector<2x128xf32> to vector<2x1x128xf32>
    %276 = vector.broadcast %275 : vector<2x1x128xf32> to vector<2x16x128xf32>
    %277 = arith.mulf %37, %276 : vector<2x16x128xf32>
    %cst_101 = arith.constant dense<0.000000e+00> : vector<2x16xf32>
    %278 = vector.multi_reduction <add>, %277, %cst_101 [2] : vector<2x16x128xf32> to vector<2x16xf32>
    %cst_102 = arith.constant dense<0xFF800000> : vector<2xf32>
    %279 = vector.multi_reduction <maximumf>, %278, %cst_102 [1] : vector<2x16xf32> to vector<2xf32>
    %280 = vector.shape_cast %279 : vector<2xf32> to vector<2x1xf32>
    %281 = vector.broadcast %280 : vector<2x1xf32> to vector<2x16xf32>
    %282 = arith.subf %278, %281 : vector<2x16xf32>
    %283 = math.exp %282 : vector<2x16xf32>
    %cst_103 = arith.constant dense<0.000000e+00> : vector<2xf32>
    %284 = vector.multi_reduction <add>, %283, %cst_103 [1] : vector<2x16xf32> to vector<2xf32>
    %285 = vector.shape_cast %284 : vector<2xf32> to vector<2x1xf32>
    %286 = tpu.reciprocal %285 {approx = true} : vector<2x1xf32> -> vector<2x1xf32>
    %287 = vector.broadcast %286 : vector<2x1xf32> to vector<2x16xf32>
    %288 = arith.mulf %283, %287 : vector<2x16xf32>
    %289 = vector.shape_cast %288 : vector<2x16xf32> to vector<2x1x16xf32>
    "tpu.trace_start"() <{level = 10 : i32, message = "bqp,bpd->bqd"}> : () -> ()
    %cst_104 = arith.constant dense<0.000000e+00> : vector<2x1x128xf32>
    %290 = tpu.matmul %289, %35, %cst_104 {dimension_numbers = #tpu.dot_dimension_numbers<[2], [1], [1], [2], [0, 0, 0, 1, 1, 2], [0], [0]>} : vector<2x1x16xf32>, vector<2x16x128xf32>, vector<2x1x128xf32> -> vector<2x1x128xf32>
    "tpu.trace_stop"() : () -> ()
    %291 = vector.shape_cast %290 : vector<2x1x128xf32> to vector<2x128xf32>
    %c1_105 = arith.constant 1 : index
    %c0_106 = arith.constant 0 : index
    %c0_107 = arith.constant 0 : index
    %292 = vector.load %arg7[%c1_105, %c0_106, %c0_107] : memref<2x128x128xf32, #tpu.memory_space<vmem>>, vector<1x128x128xf32>
    %293 = vector.shape_cast %292 : vector<1x128x128xf32> to vector<128x128xf32>
    %cst_108 = arith.constant dense<0.000000e+00> : vector<2x128xf32>
    %294 = tpu.matmul %291, %293, %cst_108 {dimension_numbers = #tpu.dot_dimension_numbers<[1], [0], [0], [1], [0, 0, 1, 1], [], []>} : vector<2x128xf32>, vector<128x128xf32>, vector<2x128xf32> -> vector<2x128xf32>
    %295 = arith.addf %294, %274 : vector<2x128xf32>
    %296 = math.tanh %295 : vector<2x128xf32>
    %297 = tpu.concatenate %238, %267 in 1 : vector<2x128xf32>, vector<2x128xf32> -> vector<2x256xf32>
    %c0_109 = arith.constant 0 : index
    %c0_110 = arith.constant 0 : index
    %c0_111 = arith.constant 0 : index
    %298 = vector.load %arg3[%c0_109, %c0_110, %c0_111] : memref<2x256x512xf32, #tpu.memory_space<vmem>>, vector<1x256x512xf32>
    %299 = vector.shape_cast %298 : vector<1x256x512xf32> to vector<256x512xf32>
    %cst_112 = arith.constant dense<0.000000e+00> : vector<2x512xf32>
    %300 = tpu.matmul %297, %299, %cst_112 {dimension_numbers = #tpu.dot_dimension_numbers<[1], [0], [0], [1], [0, 0, 1, 1], [], []>} : vector<2x256xf32>, vector<256x512xf32>, vector<2x512xf32> -> vector<2x512xf32>
    %301 = arith.addf %300, %41 : vector<2x512xf32>
    %302 = vector.extract_strided_slice %301 {offsets = [0, 0], sizes = [2, 128], strides = [1, 1]} : vector<2x512xf32> to vector<2x128xf32>
    %303 = arith.negf %302 : vector<2x128xf32>
    %304 = math.exp %303 : vector<2x128xf32>
    %cst_113 = arith.constant 1.000000e+00 : f32
    %305 = vector.broadcast %cst_113 : f32 to vector<2x128xf32>
    %306 = arith.addf %305, %304 : vector<2x128xf32>
    %307 = arith.divf %305, %306 : vector<2x128xf32>
    %308 = vector.extract_strided_slice %301 {offsets = [0, 128], sizes = [2, 128], strides = [1, 1]} : vector<2x512xf32> to vector<2x128xf32>
    %309 = arith.negf %308 : vector<2x128xf32>
    %310 = math.exp %309 : vector<2x128xf32>
    %cst_114 = arith.constant 1.000000e+00 : f32
    %311 = vector.broadcast %cst_114 : f32 to vector<2x128xf32>
    %312 = arith.addf %311, %310 : vector<2x128xf32>
    %313 = arith.divf %311, %312 : vector<2x128xf32>
    %314 = vector.extract_strided_slice %301 {offsets = [0, 256], sizes = [2, 128], strides = [1, 1]} : vector<2x512xf32> to vector<2x128xf32>
    %315 = math.tanh %314 : vector<2x128xf32>
    %316 = vector.extract_strided_slice %301 {offsets = [0, 384], sizes = [2, 128], strides = [1, 1]} : vector<2x512xf32> to vector<2x128xf32>
    %317 = arith.negf %316 : vector<2x128xf32>
    %318 = math.exp %317 : vector<2x128xf32>
    %cst_115 = arith.constant 1.000000e+00 : f32
    %319 = vector.broadcast %cst_115 : f32 to vector<2x128xf32>
    %320 = arith.addf %319, %318 : vector<2x128xf32>
    %321 = arith.divf %319, %320 : vector<2x128xf32>
    %322 = arith.mulf %313, %206 : vector<2x128xf32>
    %323 = arith.mulf %307, %315 : vector<2x128xf32>
    %324 = arith.addf %322, %323 : vector<2x128xf32>
    %325 = math.tanh %324 : vector<2x128xf32>
    %326 = arith.mulf %321, %325 : vector<2x128xf32>
    %327 = tpu.concatenate %326, %296 in 1 : vector<2x128xf32>, vector<2x128xf32> -> vector<2x256xf32>
    %c1_116 = arith.constant 1 : index
    %c0_117 = arith.constant 0 : index
    %c0_118 = arith.constant 0 : index
    %328 = vector.load %arg3[%c1_116, %c0_117, %c0_118] : memref<2x256x512xf32, #tpu.memory_space<vmem>>, vector<1x256x512xf32>
    %329 = vector.shape_cast %328 : vector<1x256x512xf32> to vector<256x512xf32>
    %cst_119 = arith.constant dense<0.000000e+00> : vector<2x512xf32>
    %330 = tpu.matmul %327, %329, %cst_119 {dimension_numbers = #tpu.dot_dimension_numbers<[1], [0], [0], [1], [0, 0, 1, 1], [], []>} : vector<2x256xf32>, vector<256x512xf32>, vector<2x512xf32> -> vector<2x512xf32>
    %331 = arith.addf %330, %45 : vector<2x512xf32>
    %332 = vector.extract_strided_slice %331 {offsets = [0, 0], sizes = [2, 128], strides = [1, 1]} : vector<2x512xf32> to vector<2x128xf32>
    %333 = arith.negf %332 : vector<2x128xf32>
    %334 = math.exp %333 : vector<2x128xf32>
    %cst_120 = arith.constant 1.000000e+00 : f32
    %335 = vector.broadcast %cst_120 : f32 to vector<2x128xf32>
    %336 = arith.addf %335, %334 : vector<2x128xf32>
    %337 = arith.divf %335, %336 : vector<2x128xf32>
    %338 = vector.extract_strided_slice %331 {offsets = [0, 128], sizes = [2, 128], strides = [1, 1]} : vector<2x512xf32> to vector<2x128xf32>
    %339 = arith.negf %338 : vector<2x128xf32>
    %340 = math.exp %339 : vector<2x128xf32>
    %cst_121 = arith.constant 1.000000e+00 : f32
    %341 = vector.broadcast %cst_121 : f32 to vector<2x128xf32>
    %342 = arith.addf %341, %340 : vector<2x128xf32>
    %343 = arith.divf %341, %342 : vector<2x128xf32>
    %344 = vector.extract_strided_slice %331 {offsets = [0, 256], sizes = [2, 128], strides = [1, 1]} : vector<2x512xf32> to vector<2x128xf32>
    %345 = math.tanh %344 : vector<2x128xf32>
    %346 = vector.extract_strided_slice %331 {offsets = [0, 384], sizes = [2, 128], strides = [1, 1]} : vector<2x512xf32> to vector<2x128xf32>
    %347 = arith.negf %346 : vector<2x128xf32>
    %348 = math.exp %347 : vector<2x128xf32>
    %cst_122 = arith.constant 1.000000e+00 : f32
    %349 = vector.broadcast %cst_122 : f32 to vector<2x128xf32>
    %350 = arith.addf %349, %348 : vector<2x128xf32>
    %351 = arith.divf %349, %350 : vector<2x128xf32>
    %352 = arith.mulf %343, %236 : vector<2x128xf32>
    %353 = arith.mulf %337, %345 : vector<2x128xf32>
    %354 = arith.addf %352, %353 : vector<2x128xf32>
    %355 = math.tanh %354 : vector<2x128xf32>
    %356 = arith.mulf %351, %355 : vector<2x128xf32>
    %c0_123 = arith.constant 0 : index
    %c0_124 = arith.constant 0 : index
    %c0_125 = arith.constant 0 : index
    %357 = vector.load %arg5[%c0_123, %c0_124, %c0_125] : memref<2x128x256xf32, #tpu.memory_space<vmem>>, vector<1x128x256xf32>
    %358 = vector.shape_cast %357 : vector<1x128x256xf32> to vector<128x256xf32>
    %cst_126 = arith.constant dense<0.000000e+00> : vector<2x256xf32>
    %359 = tpu.matmul %326, %358, %cst_126 {dimension_numbers = #tpu.dot_dimension_numbers<[1], [0], [0], [1], [0, 0, 1, 1], [], []>} : vector<2x128xf32>, vector<128x256xf32>, vector<2x256xf32> -> vector<2x256xf32>
    %360 = arith.addf %359, %49 : vector<2x256xf32>
    %361 = vector.extract_strided_slice %360 {offsets = [0, 0], sizes = [2, 128], strides = [1, 1]} : vector<2x256xf32> to vector<2x128xf32>
    %362 = math.tanh %361 : vector<2x128xf32>
    %363 = vector.extract_strided_slice %360 {offsets = [0, 128], sizes = [2, 128], strides = [1, 1]} : vector<2x256xf32> to vector<2x128xf32>
    %364 = vector.shape_cast %362 : vector<2x128xf32> to vector<2x1x128xf32>
    %365 = vector.broadcast %364 : vector<2x1x128xf32> to vector<2x16x128xf32>
    %366 = arith.mulf %25, %365 : vector<2x16x128xf32>
    %cst_127 = arith.constant dense<0.000000e+00> : vector<2x16xf32>
    %367 = vector.multi_reduction <add>, %366, %cst_127 [2] : vector<2x16x128xf32> to vector<2x16xf32>
    %cst_128 = arith.constant dense<0xFF800000> : vector<2xf32>
    %368 = vector.multi_reduction <maximumf>, %367, %cst_128 [1] : vector<2x16xf32> to vector<2xf32>
    %369 = vector.shape_cast %368 : vector<2xf32> to vector<2x1xf32>
    %370 = vector.broadcast %369 : vector<2x1xf32> to vector<2x16xf32>
    %371 = arith.subf %367, %370 : vector<2x16xf32>
    %372 = math.exp %371 : vector<2x16xf32>
    %cst_129 = arith.constant dense<0.000000e+00> : vector<2xf32>
    %373 = vector.multi_reduction <add>, %372, %cst_129 [1] : vector<2x16xf32> to vector<2xf32>
    %374 = vector.shape_cast %373 : vector<2xf32> to vector<2x1xf32>
    %375 = tpu.reciprocal %374 {approx = true} : vector<2x1xf32> -> vector<2x1xf32>
    %376 = vector.broadcast %375 : vector<2x1xf32> to vector<2x16xf32>
    %377 = arith.mulf %372, %376 : vector<2x16xf32>
    %378 = vector.shape_cast %377 : vector<2x16xf32> to vector<2x1x16xf32>
    "tpu.trace_start"() <{level = 10 : i32, message = "bqp,bpd->bqd"}> : () -> ()
    %cst_130 = arith.constant dense<0.000000e+00> : vector<2x1x128xf32>
    %379 = tpu.matmul %378, %23, %cst_130 {dimension_numbers = #tpu.dot_dimension_numbers<[2], [1], [1], [2], [0, 0, 0, 1, 1, 2], [0], [0]>} : vector<2x1x16xf32>, vector<2x16x128xf32>, vector<2x1x128xf32> -> vector<2x1x128xf32>
    "tpu.trace_stop"() : () -> ()
    %380 = vector.shape_cast %379 : vector<2x1x128xf32> to vector<2x128xf32>
    %c0_131 = arith.constant 0 : index
    %c0_132 = arith.constant 0 : index
    %c0_133 = arith.constant 0 : index
    %381 = vector.load %arg7[%c0_131, %c0_132, %c0_133] : memref<2x128x128xf32, #tpu.memory_space<vmem>>, vector<1x128x128xf32>
    %382 = vector.shape_cast %381 : vector<1x128x128xf32> to vector<128x128xf32>
    %cst_134 = arith.constant dense<0.000000e+00> : vector<2x128xf32>
    %383 = tpu.matmul %380, %382, %cst_134 {dimension_numbers = #tpu.dot_dimension_numbers<[1], [0], [0], [1], [0, 0, 1, 1], [], []>} : vector<2x128xf32>, vector<128x128xf32>, vector<2x128xf32> -> vector<2x128xf32>
    %384 = arith.addf %383, %363 : vector<2x128xf32>
    %385 = math.tanh %384 : vector<2x128xf32>
    %c1_135 = arith.constant 1 : index
    %c0_136 = arith.constant 0 : index
    %c0_137 = arith.constant 0 : index
    %386 = vector.load %arg5[%c1_135, %c0_136, %c0_137] : memref<2x128x256xf32, #tpu.memory_space<vmem>>, vector<1x128x256xf32>
    %387 = vector.shape_cast %386 : vector<1x128x256xf32> to vector<128x256xf32>
    %cst_138 = arith.constant dense<0.000000e+00> : vector<2x256xf32>
    %388 = tpu.matmul %356, %387, %cst_138 {dimension_numbers = #tpu.dot_dimension_numbers<[1], [0], [0], [1], [0, 0, 1, 1], [], []>} : vector<2x128xf32>, vector<128x256xf32>, vector<2x256xf32> -> vector<2x256xf32>
    %389 = arith.addf %388, %53 : vector<2x256xf32>
    %390 = vector.extract_strided_slice %389 {offsets = [0, 0], sizes = [2, 128], strides = [1, 1]} : vector<2x256xf32> to vector<2x128xf32>
    %391 = math.tanh %390 : vector<2x128xf32>
    %392 = vector.extract_strided_slice %389 {offsets = [0, 128], sizes = [2, 128], strides = [1, 1]} : vector<2x256xf32> to vector<2x128xf32>
    %393 = vector.shape_cast %391 : vector<2x128xf32> to vector<2x1x128xf32>
    %394 = vector.broadcast %393 : vector<2x1x128xf32> to vector<2x16x128xf32>
    %395 = arith.mulf %37, %394 : vector<2x16x128xf32>
    %cst_139 = arith.constant dense<0.000000e+00> : vector<2x16xf32>
    %396 = vector.multi_reduction <add>, %395, %cst_139 [2] : vector<2x16x128xf32> to vector<2x16xf32>
    %cst_140 = arith.constant dense<0xFF800000> : vector<2xf32>
    %397 = vector.multi_reduction <maximumf>, %396, %cst_140 [1] : vector<2x16xf32> to vector<2xf32>
    %398 = vector.shape_cast %397 : vector<2xf32> to vector<2x1xf32>
    %399 = vector.broadcast %398 : vector<2x1xf32> to vector<2x16xf32>
    %400 = arith.subf %396, %399 : vector<2x16xf32>
    %401 = math.exp %400 : vector<2x16xf32>
    %cst_141 = arith.constant dense<0.000000e+00> : vector<2xf32>
    %402 = vector.multi_reduction <add>, %401, %cst_141 [1] : vector<2x16xf32> to vector<2xf32>
    %403 = vector.shape_cast %402 : vector<2xf32> to vector<2x1xf32>
    %404 = tpu.reciprocal %403 {approx = true} : vector<2x1xf32> -> vector<2x1xf32>
    %405 = vector.broadcast %404 : vector<2x1xf32> to vector<2x16xf32>
    %406 = arith.mulf %401, %405 : vector<2x16xf32>
    %407 = vector.shape_cast %406 : vector<2x16xf32> to vector<2x1x16xf32>
    "tpu.trace_start"() <{level = 10 : i32, message = "bqp,bpd->bqd"}> : () -> ()
    %cst_142 = arith.constant dense<0.000000e+00> : vector<2x1x128xf32>
    %408 = tpu.matmul %407, %35, %cst_142 {dimension_numbers = #tpu.dot_dimension_numbers<[2], [1], [1], [2], [0, 0, 0, 1, 1, 2], [0], [0]>} : vector<2x1x16xf32>, vector<2x16x128xf32>, vector<2x1x128xf32> -> vector<2x1x128xf32>
    "tpu.trace_stop"() : () -> ()
    %409 = vector.shape_cast %408 : vector<2x1x128xf32> to vector<2x128xf32>
    %c1_143 = arith.constant 1 : index
    %c0_144 = arith.constant 0 : index
    %c0_145 = arith.constant 0 : index
    %410 = vector.load %arg7[%c1_143, %c0_144, %c0_145] : memref<2x128x128xf32, #tpu.memory_space<vmem>>, vector<1x128x128xf32>
    %411 = vector.shape_cast %410 : vector<1x128x128xf32> to vector<128x128xf32>
    %cst_146 = arith.constant dense<0.000000e+00> : vector<2x128xf32>
    %412 = tpu.matmul %409, %411, %cst_146 {dimension_numbers = #tpu.dot_dimension_numbers<[1], [0], [0], [1], [0, 0, 1, 1], [], []>} : vector<2x128xf32>, vector<128x128xf32>, vector<2x128xf32> -> vector<2x128xf32>
    %413 = arith.addf %412, %392 : vector<2x128xf32>
    %414 = math.tanh %413 : vector<2x128xf32>
    %415 = tpu.concatenate %356, %385 in 1 : vector<2x128xf32>, vector<2x128xf32> -> vector<2x256xf32>
    %c0_147 = arith.constant 0 : index
    %c0_148 = arith.constant 0 : index
    %c0_149 = arith.constant 0 : index
    %416 = vector.load %arg3[%c0_147, %c0_148, %c0_149] : memref<2x256x512xf32, #tpu.memory_space<vmem>>, vector<1x256x512xf32>
    %417 = vector.shape_cast %416 : vector<1x256x512xf32> to vector<256x512xf32>
    %cst_150 = arith.constant dense<0.000000e+00> : vector<2x512xf32>
    %418 = tpu.matmul %415, %417, %cst_150 {dimension_numbers = #tpu.dot_dimension_numbers<[1], [0], [0], [1], [0, 0, 1, 1], [], []>} : vector<2x256xf32>, vector<256x512xf32>, vector<2x512xf32> -> vector<2x512xf32>
    %419 = arith.addf %418, %41 : vector<2x512xf32>
    %420 = vector.extract_strided_slice %419 {offsets = [0, 0], sizes = [2, 128], strides = [1, 1]} : vector<2x512xf32> to vector<2x128xf32>
    %421 = arith.negf %420 : vector<2x128xf32>
    %422 = math.exp %421 : vector<2x128xf32>
    %cst_151 = arith.constant 1.000000e+00 : f32
    %423 = vector.broadcast %cst_151 : f32 to vector<2x128xf32>
    %424 = arith.addf %423, %422 : vector<2x128xf32>
    %425 = arith.divf %423, %424 : vector<2x128xf32>
    %426 = vector.extract_strided_slice %419 {offsets = [0, 128], sizes = [2, 128], strides = [1, 1]} : vector<2x512xf32> to vector<2x128xf32>
    %427 = arith.negf %426 : vector<2x128xf32>
    %428 = math.exp %427 : vector<2x128xf32>
    %cst_152 = arith.constant 1.000000e+00 : f32
    %429 = vector.broadcast %cst_152 : f32 to vector<2x128xf32>
    %430 = arith.addf %429, %428 : vector<2x128xf32>
    %431 = arith.divf %429, %430 : vector<2x128xf32>
    %432 = vector.extract_strided_slice %419 {offsets = [0, 256], sizes = [2, 128], strides = [1, 1]} : vector<2x512xf32> to vector<2x128xf32>
    %433 = math.tanh %432 : vector<2x128xf32>
    %434 = vector.extract_strided_slice %419 {offsets = [0, 384], sizes = [2, 128], strides = [1, 1]} : vector<2x512xf32> to vector<2x128xf32>
    %435 = arith.negf %434 : vector<2x128xf32>
    %436 = math.exp %435 : vector<2x128xf32>
    %cst_153 = arith.constant 1.000000e+00 : f32
    %437 = vector.broadcast %cst_153 : f32 to vector<2x128xf32>
    %438 = arith.addf %437, %436 : vector<2x128xf32>
    %439 = arith.divf %437, %438 : vector<2x128xf32>
    %440 = arith.mulf %431, %324 : vector<2x128xf32>
    %441 = arith.mulf %425, %433 : vector<2x128xf32>
    %442 = arith.addf %440, %441 : vector<2x128xf32>
    %443 = math.tanh %442 : vector<2x128xf32>
    %444 = arith.mulf %439, %443 : vector<2x128xf32>
    %445 = tpu.concatenate %444, %414 in 1 : vector<2x128xf32>, vector<2x128xf32> -> vector<2x256xf32>
    %c1_154 = arith.constant 1 : index
    %c0_155 = arith.constant 0 : index
    %c0_156 = arith.constant 0 : index
    %446 = vector.load %arg3[%c1_154, %c0_155, %c0_156] : memref<2x256x512xf32, #tpu.memory_space<vmem>>, vector<1x256x512xf32>
    %447 = vector.shape_cast %446 : vector<1x256x512xf32> to vector<256x512xf32>
    %cst_157 = arith.constant dense<0.000000e+00> : vector<2x512xf32>
    %448 = tpu.matmul %445, %447, %cst_157 {dimension_numbers = #tpu.dot_dimension_numbers<[1], [0], [0], [1], [0, 0, 1, 1], [], []>} : vector<2x256xf32>, vector<256x512xf32>, vector<2x512xf32> -> vector<2x512xf32>
    %449 = arith.addf %448, %45 : vector<2x512xf32>
    %450 = vector.extract_strided_slice %449 {offsets = [0, 0], sizes = [2, 128], strides = [1, 1]} : vector<2x512xf32> to vector<2x128xf32>
    %451 = arith.negf %450 : vector<2x128xf32>
    %452 = math.exp %451 : vector<2x128xf32>
    %cst_158 = arith.constant 1.000000e+00 : f32
    %453 = vector.broadcast %cst_158 : f32 to vector<2x128xf32>
    %454 = arith.addf %453, %452 : vector<2x128xf32>
    %455 = arith.divf %453, %454 : vector<2x128xf32>
    %456 = vector.extract_strided_slice %449 {offsets = [0, 128], sizes = [2, 128], strides = [1, 1]} : vector<2x512xf32> to vector<2x128xf32>
    %457 = arith.negf %456 : vector<2x128xf32>
    %458 = math.exp %457 : vector<2x128xf32>
    %cst_159 = arith.constant 1.000000e+00 : f32
    %459 = vector.broadcast %cst_159 : f32 to vector<2x128xf32>
    %460 = arith.addf %459, %458 : vector<2x128xf32>
    %461 = arith.divf %459, %460 : vector<2x128xf32>
    %462 = vector.extract_strided_slice %449 {offsets = [0, 256], sizes = [2, 128], strides = [1, 1]} : vector<2x512xf32> to vector<2x128xf32>
    %463 = math.tanh %462 : vector<2x128xf32>
    %464 = vector.extract_strided_slice %449 {offsets = [0, 384], sizes = [2, 128], strides = [1, 1]} : vector<2x512xf32> to vector<2x128xf32>
    %465 = arith.negf %464 : vector<2x128xf32>
    %466 = math.exp %465 : vector<2x128xf32>
    %cst_160 = arith.constant 1.000000e+00 : f32
    %467 = vector.broadcast %cst_160 : f32 to vector<2x128xf32>
    %468 = arith.addf %467, %466 : vector<2x128xf32>
    %469 = arith.divf %467, %468 : vector<2x128xf32>
    %470 = arith.mulf %461, %354 : vector<2x128xf32>
    %471 = arith.mulf %455, %463 : vector<2x128xf32>
    %472 = arith.addf %470, %471 : vector<2x128xf32>
    %473 = math.tanh %472 : vector<2x128xf32>
    %474 = arith.mulf %469, %473 : vector<2x128xf32>
    %475 = tpu.concatenate %60, %120, %238, %356, %474 in 0 : vector<2x128xf32>, vector<2x128xf32>, vector<2x128xf32>, vector<2x128xf32>, vector<2x128xf32> -> vector<10x128xf32>
    %c0_161 = arith.constant 0 : index
    %c0_162 = arith.constant 0 : index
    %476 = vector.load %arg10[%c0_161, %c0_162] : memref<128x128xf32, #tpu.memory_space<vmem>>, vector<128x128xf32>
    %cst_163 = arith.constant dense<0.000000e+00> : vector<10x128xf32>
    %477 = tpu.matmul %475, %476, %cst_163 {dimension_numbers = #tpu.dot_dimension_numbers<[1], [0], [0], [1], [0, 0, 1, 1], [], []>} : vector<10x128xf32>, vector<128x128xf32>, vector<10x128xf32> -> vector<10x128xf32>
    %c0_164 = arith.constant 0 : index
    %c0_165 = arith.constant 0 : index
    %478 = vector.load %arg11[%c0_164, %c0_165] : memref<1x128xf32, #tpu.memory_space<vmem>>, vector<1x128xf32>
    %479 = vector.broadcast %478 : vector<1x128xf32> to vector<10x128xf32>
    %480 = arith.addf %477, %479 : vector<10x128xf32>
    %c0_166 = arith.constant 0 : index
    %c0_167 = arith.constant 0 : index
    %481 = vector.load %arg12[%c0_166, %c0_167] : memref<10x128xf32, #tpu.memory_space<vmem>>, vector<10x128xf32>
    tpu.vector_store %arg12[%c0_166, %c0_167], %480 {strides = array<i32>} : memref<10x128xf32, #tpu.memory_space<vmem>>, vector<10x128xf32>,
    return
  }
}

</mosaic_0001>

<llo_original>
// kernel: tpu_custom_call.1
$region0: #{tpu_custom_call.1}
  #allocation0 [shape = 'u32[]', space=smem, size = 0x4, offset = 0x4, fixed_abs, tag = 'smem constant byte address 0x4 - core index']
  #allocation1 [shape = 'u32[144,128]{1,0:T(1,128)}', space=vmem, size = 0x12000, scoped, tag = 'internal scratch']
  %s0 = inlined_call_operand.vmem [shape: f32[2,16,128], index: 0, kind: input, shape index: {}]
  %s1 = inlined_call_operand.hbm [shape: f32[2,2,128], index: 1, kind: input, shape index: {}]
  %s2 = inlined_call_operand.vmem [shape: f32[2,128], index: 2, kind: input, shape index: {}]
  %s3 = inlined_call_operand.hbm [shape: f32[2,256,512], index: 3, kind: input, shape index: {}]
  %s4 = inlined_call_operand.hbm [shape: f32[2,1,512], index: 4, kind: input, shape index: {}]
  %s5 = inlined_call_operand.hbm [shape: f32[2,128,256], index: 5, kind: input, shape index: {}]
  %s6 = inlined_call_operand.hbm [shape: f32[2,1,256], index: 6, kind: input, shape index: {}]
  %s7 = inlined_call_operand.hbm [shape: f32[2,128,128], index: 7, kind: input, shape index: {}]
  %s8 = inlined_call_operand.vmem [shape: f32[64,16], index: 8, kind: input, shape index: {}]
  %s9 = inlined_call_operand.vmem [shape: f32[64,1], index: 9, kind: input, shape index: {}]
  %s10 = inlined_call_operand.vmem [shape: f32[128,128], index: 10, kind: input, shape index: {}]
  %s11 = inlined_call_operand.vmem [shape: f32[1,128], index: 11, kind: input, shape index: {}]
  %s12 = inlined_call_operand.hbm [shape: f32[10,128], index: 12, kind: output, shape index: {}]
  %s13 = sld [smem:[#allocation0]]
  $region82: #{tpu_custom_call.1} parent=0
    _
  %s15 = ssub.s32 1, %s13
  %s16 = scalar_select 0, %s15, %s13
  $region1: #{tpu_custom_call.1} parent=0
    #allocation2 [shape = 'u8[2048]{0}', space=vmem, size = 0x800, scoped, tag = 'input window, operand 1, single buffered']
    #allocation3 [shape = 's32[1]{0}', space=sflag, size = 0x4, scoped, tag = 'scoped memory for tpu_custom_call.1']
    #allocation4 [shape = 's32[1]{0}', space=sflag, size = 0x4, scoped, tag = 'scoped memory for tpu_custom_call.1']
    #allocation5 [shape = 'u8[1048576]{0}', space=vmem, size = 0x100000, scoped, tag = 'input window, operand 3, single buffered']
    #allocation6 [shape = 's32[1]{0}', space=sflag, size = 0x4, scoped, tag = 'scoped memory for tpu_custom_call.1']
    #allocation7 [shape = 'u8[4096]{0}', space=vmem, size = 0x1000, scoped, tag = 'input window, operand 4, single buffered']
    #allocation8 [shape = 'u8[262144]{0}', space=vmem, size = 0x40000, scoped, tag = 'input window, operand 5, single buffered']
    #allocation9 [shape = 's32[1]{0}', space=sflag, size = 0x4, scoped, tag = 'scoped memory for tpu_custom_call.1']
    #allocation10 [shape = 'u8[2048]{0}', space=vmem, size = 0x800, scoped, tag = 'input window, operand 6, single buffered']
    #allocation11 [shape = 'u8[131072]{0}', space=vmem, size = 0x20000, scoped, tag = 'input window, operand 7, single buffered']
    #allocation12 [shape = 's32[1]{0}', space=sflag, size = 0x4, scoped, tag = 'scoped memory for tpu_custom_call.1']
    #allocation13 [shape = 'u8[8192]{0}', space=vmem, size = 0x2000, scoped, tag = 'output window, operand 0, single buffered']
    %17 = vsyncpa [#allocation3], 0
    %18 = vsyncpa [#allocation6], 0
    %19 = vsyncpa [#allocation9], 0
    %20 = vsyncpa [#allocation12], 0
    %21 = vsyncpa [#allocation4], 0
    // Predicated region
    $region2: #{tpu_custom_call.1} parent=1 // pred_check
      _
    $region3: #{tpu_custom_call.1} parent=1 // pred_check_branch
      %23 = sbr.rel (0) target = $region5
    $region4: #{tpu_custom_call.1} parent=1 // pred_region
      _
    $region5: #{tpu_custom_call.1} parent=1 // pred_fallthru
      _
    // Predicated region
    $region6: #{tpu_custom_call.1} parent=1 // pred_check
      _
    $region7: #{tpu_custom_call.1} parent=1 // pred_check_branch
      %25 = sbr.rel (0) target = $region9
    $region8: #{tpu_custom_call.1} parent=1 // pred_region
      %s27 = ssub.s32 64, 64
      %28 = vsyncadd [#allocation3], %s27
      %s29 = sshll.u32 [#allocation2], 4
      %s30 = int_to_ptr.vmem [resolvable:$true] %s29
      %35 = dma.hbm_to_vmem [thread:$0]  %s1, 64, %s30, [#allocation3], 32, 32, 2
    $region9: #{tpu_custom_call.1} parent=1 // pred_fallthru
      _
    // Predicated region
    $region10: #{tpu_custom_call.1} parent=1 // pred_check
      _
    $region11: #{tpu_custom_call.1} parent=1 // pred_check_branch
      %37 = sbr.rel (0) target = $region13
    $region12: #{tpu_custom_call.1} parent=1 // pred_region
      _
    $region13: #{tpu_custom_call.1} parent=1 // pred_fallthru
      _
    // Predicated region
    $region14: #{tpu_custom_call.1} parent=1 // pred_check
      _
    $region15: #{tpu_custom_call.1} parent=1 // pred_check_branch
      %39 = sbr.rel (0) target = $region17
    $region16: #{tpu_custom_call.1} parent=1 // pred_region
      %s41 = ssub.s32 32768, 32768
      %42 = vsyncadd [#allocation6], %s41
      %s43 = sshll.u32 [#allocation5], 4
      %s44 = int_to_ptr.vmem [resolvable:$true] %s43
      %49 = dma.hbm_to_vmem [thread:$0]  %s3, 32768, %s44, [#allocation6], 512, 512, 32
    $region17: #{tpu_custom_call.1} parent=1 // pred_fallthru
      _
    // Predicated region
    $region18: #{tpu_custom_call.1} parent=1 // pred_check
      _
    $region19: #{tpu_custom_call.1} parent=1 // pred_check_branch
      %51 = sbr.rel (0) target = $region21
    $region20: #{tpu_custom_call.1} parent=1 // pred_region
      %s53 = ssub.s32 128, 128
      %54 = vsyncadd [#allocation6], %s53
      %s55 = sshll.u32 [#allocation7], 4
      %s56 = int_to_ptr.vmem [resolvable:$true] %s55
      %61 = dma.hbm_to_vmem [thread:$0]  %s4, 128, %s56, [#allocation6], 64, 64, 4
    $region21: #{tpu_custom_call.1} parent=1 // pred_fallthru
      _
    // Predicated region
    $region22: #{tpu_custom_call.1} parent=1 // pred_check
      _
    $region23: #{tpu_custom_call.1} parent=1 // pred_check_branch
      %63 = sbr.rel (0) target = $region25
    $region24: #{tpu_custom_call.1} parent=1 // pred_region
      %s65 = ssub.s32 8192, 8192
      %66 = vsyncadd [#allocation9], %s65
      %s67 = sshll.u32 [#allocation8], 4
      %s68 = int_to_ptr.vmem [resolvable:$true] %s67
      %73 = dma.hbm_to_vmem [thread:$0]  %s5, 8192, %s68, [#allocation9], 256, 256, 16
    $region25: #{tpu_custom_call.1} parent=1 // pred_fallthru
      _
    // Predicated region
    $region26: #{tpu_custom_call.1} parent=1 // pred_check
      _
    $region27: #{tpu_custom_call.1} parent=1 // pred_check_branch
      %75 = sbr.rel (0) target = $region29
    $region28: #{tpu_custom_call.1} parent=1 // pred_region
      %s77 = ssub.s32 64, 64
      %78 = vsyncadd [#allocation9], %s77
      %s79 = sshll.u32 [#allocation10], 4
      %s80 = int_to_ptr.vmem [resolvable:$true] %s79
      %85 = dma.hbm_to_vmem [thread:$0]  %s6, 64, %s80, [#allocation9], 32, 32, 2
    $region29: #{tpu_custom_call.1} parent=1 // pred_fallthru
      _
    // Predicated region
    $region30: #{tpu_custom_call.1} parent=1 // pred_check
      _
    $region31: #{tpu_custom_call.1} parent=1 // pred_check_branch
      %87 = sbr.rel (0) target = $region33
    $region32: #{tpu_custom_call.1} parent=1 // pred_region
      %s89 = ssub.s32 4096, 4096
      %90 = vsyncadd [#allocation12], %s89
      %s91 = sshll.u32 [#allocation11], 4
      %s92 = int_to_ptr.vmem [resolvable:$true] %s91
      %97 = dma.hbm_to_vmem [thread:$0]  %s7, 4096, %s92, [#allocation12], 128, 128, 8
    $region33: #{tpu_custom_call.1} parent=1 // pred_fallthru
      _
    // Predicated region
    $region34: #{tpu_custom_call.1} parent=1 // pred_check
      _
    $region35: #{tpu_custom_call.1} parent=1 // pred_check_branch
      %99 = sbr.rel (0) target = $region37
    $region36: #{tpu_custom_call.1} parent=1 // pred_region
      _
    $region37: #{tpu_custom_call.1} parent=1 // pred_fallthru
      _
    // Predicated region
    $region38: #{tpu_custom_call.1} parent=1 // pred_check
      _
    $region39: #{tpu_custom_call.1} parent=1 // pred_check_branch
      %101 = sbr.rel (0) target = $region41
    $region40: #{tpu_custom_call.1} parent=1 // pred_region
      _
    $region41: #{tpu_custom_call.1} parent=1 // pred_fallthru
      _
    // Predicated region
    $region42: #{tpu_custom_call.1} parent=1 // pred_check
      _
    $region43: #{tpu_custom_call.1} parent=1 // pred_check_branch
      %103 = sbr.rel (0) target = $region45
    $region44: #{tpu_custom_call.1} parent=1 // pred_region
      _
    $region45: #{tpu_custom_call.1} parent=1 // pred_fallthru
      _
    // Predicated region
    $region46: #{tpu_custom_call.1} parent=1 // pred_check
      _
    $region47: #{tpu_custom_call.1} parent=1 // pred_check_branch
      %105 = sbr.rel (0) target = $region49
    $region48: #{tpu_custom_call.1} parent=1 // pred_region
      _
    $region49: #{tpu_custom_call.1} parent=1 // pred_fallthru
      _
    // Predicated region
    $region50: #{tpu_custom_call.1} parent=1 // pred_check
      _
    $region51: #{tpu_custom_call.1} parent=1 // pred_check_branch
      %107 = sbr.rel (0) target = $region53
    $region52: #{tpu_custom_call.1} parent=1 // pred_region
      %108 = dma.done [#allocation3], 64
    $region53: #{tpu_custom_call.1} parent=1 // pred_fallthru
      _
    // Predicated region
    $region54: #{tpu_custom_call.1} parent=1 // pred_check
      _
    $region55: #{tpu_custom_call.1} parent=1 // pred_check_branch
      %110 = sbr.rel (0) target = $region57
    $region56: #{tpu_custom_call.1} parent=1 // pred_region
      %111 = dma.done [#allocation6], 32768
    $region57: #{tpu_custom_call.1} parent=1 // pred_fallthru
      _
    // Predicated region
    $region58: #{tpu_custom_call.1} parent=1 // pred_check
      _
    $region59: #{tpu_custom_call.1} parent=1 // pred_check_branch
      %113 = sbr.rel (0) target = $region61
    $region60: #{tpu_custom_call.1} parent=1 // pred_region
      %114 = dma.done [#allocation6], 128
    $region61: #{tpu_custom_call.1} parent=1 // pred_fallthru
      _
    // Predicated region
    $region62: #{tpu_custom_call.1} parent=1 // pred_check
      _
    $region63: #{tpu_custom_call.1} parent=1 // pred_check_branch
      %116 = sbr.rel (0) target = $region65
    $region64: #{tpu_custom_call.1} parent=1 // pred_region
      %117 = dma.done [#allocation9], 8192
    $region65: #{tpu_custom_call.1} parent=1 // pred_fallthru
      _
    // Predicated region
    $region66: #{tpu_custom_call.1} parent=1 // pred_check
      _
    $region67: #{tpu_custom_call.1} parent=1 // pred_check_branch
      %119 = sbr.rel (0) target = $region69
    $region68: #{tpu_custom_call.1} parent=1 // pred_region
      %120 = dma.done [#allocation9], 64
    $region69: #{tpu_custom_call.1} parent=1 // pred_fallthru
      _
    // Predicated region
    $region70: #{tpu_custom_call.1} parent=1 // pred_check
      _
    $region71: #{tpu_custom_call.1} parent=1 // pred_check_branch
      %122 = sbr.rel (0) target = $region73
    $region72: #{tpu_custom_call.1} parent=1 // pred_region
      %123 = dma.done [#allocation12], 4096
    $region73: #{tpu_custom_call.1} parent=1 // pred_fallthru
      _
    %v124 = vld [vmem:[%s8] sm:$0xff]
    %v125 = vld [vmem:[%s8 + $0x8] sm:$0xff]
    %v126 = vld [vmem:[%s8 + $0x10] sm:$0xff]
    %v127 = vld [vmem:[%s8 + $0x18] sm:$0xff]
    %v128 = vld [vmem:[%s8 + $0x20] sm:$0xff]
    %v129 = vld [vmem:[%s8 + $0x28] sm:$0xff]
    %v130 = vld [vmem:[%s8 + $0x30] sm:$0xff]
    %v131 = vld [vmem:[%s8 + $0x38] sm:$0xff]
    %v132 = vld [vmem:[%s9] sm:$0xff]
    %v133 = vld [vmem:[%s9 + $0x8] sm:$0xff]
    %v134 = vld [vmem:[%s9 + $0x10] sm:$0xff]
    %v135 = vld [vmem:[%s9 + $0x18] sm:$0xff]
    %v136 = vld [vmem:[%s9 + $0x20] sm:$0xff]
    %v137 = vld [vmem:[%s9 + $0x28] sm:$0xff]
    %v138 = vld [vmem:[%s9 + $0x30] sm:$0xff]
    %v139 = vld [vmem:[%s9 + $0x38] sm:$0xff]
    %v140 = vld [vmem:[%s0] sm:$0xff]
    %v141 = vld [vmem:[%s0 + $0x8] sm:$0xff]
    %143 = vset.pattern.permute.xlu0 0
    %144 = vperm.xlu0 %143, %v132
    %v145 = vpop.permute.xlu0 %144
    %148 = vset.pattern.permute.xlu0 0
    %149 = vperm.xlu0 %148, %v133
    %v150 = vpop.permute.xlu0 %149
    %153 = vset.pattern.permute.xlu0 0
    %154 = vperm.xlu0 %153, %v134
    %v155 = vpop.permute.xlu0 %154
    %158 = vset.pattern.permute.xlu0 0
    %159 = vperm.xlu0 %158, %v135
    %v160 = vpop.permute.xlu0 %159
    %163 = vset.pattern.permute.xlu0 0
    %164 = vperm.xlu0 %163, %v136
    %v165 = vpop.permute.xlu0 %164
    %168 = vset.pattern.permute.xlu0 0
    %169 = vperm.xlu0 %168, %v137
    %v170 = vpop.permute.xlu0 %169
    %173 = vset.pattern.permute.xlu0 0
    %174 = vperm.xlu0 %173, %v138
    %v175 = vpop.permute.xlu0 %174
    %178 = vset.pattern.permute.xlu0 0
    %179 = vperm.xlu0 %178, %v139
    %v180 = vpop.permute.xlu0 %179
    %vm182 = vcmask 130048
    %v184 = vsel %vm182, %v124, 0
    %v187 = vsel %vm182, %v125, 0
    %v190 = vsel %vm182, %v126, 0
    %v193 = vsel %vm182, %v127, 0
    %v196 = vsel %vm182, %v128, 0
    %v199 = vsel %vm182, %v129, 0
    %v202 = vsel %vm182, %v130, 0
    %v205 = vsel %vm182, %v131, 0
    %207 = vmatprep.subr.mxu0 0.0
    %208 = vmatpush1.msra.mxu0 0.0
    %209 = vmatprep.subr.mxu0 0.0
    %210 = vmatpush1.msra.mxu0 0.0
    %211 = vmatprep.subr.mxu0 0.0
    %212 = vmatpush1.msra.mxu0 0.0
    %213 = vmatprep.subr.mxu0 0.0
    %214 = vmatpush1.msra.mxu0 0.0
    %215 = vmatprep.subr.mxu0 0.0
    %216 = vmatpush1.msra.mxu0 0.0
    %217 = vmatprep.subr.mxu0 0.0
    %218 = vmatpush1.msra.mxu0 0.0
    %219 = vmatprep.subr.mxu0 0.0
    %220 = vmatpush1.msra.mxu0 0.0
    %221 = vmatprep.subr.mxu0 0.0
    %222 = vmatpush1.msra.mxu0 0.0
    %223 = vmatprep.subr.mxu0 0.0
    %224 = vmatpush1.msra.mxu0 0.0
    %225 = vmatprep.subr.mxu0 0.0
    %226 = vmatpush1.msra.mxu0 0.0
    %227 = vmatprep.subr.mxu0 0.0
    %228 = vmatpush1.msra.mxu0 0.0
    %229 = vmatprep.subr.mxu0 0.0
    %230 = vmatpush1.msra.mxu0 0.0
    %231 = vmatprep.subr.mxu0 0.0
    %232 = vmatpush1.msra.mxu0 0.0
    %233 = vmatprep.subr.mxu0 0.0
    %234 = vmatpush1.msra.mxu0 0.0
    %235 = vmatprep.subr.mxu0 0.0
    %236 = vmatpush1.msra.mxu0 %v141
    %237 = vmatprep.subr.mxu0 0.0
    %238 = vmatpush1.msra.mxu0 %v140
    %239 = vmatprep.subr.mxu0 0.0
    %240 = vmatpush2.msra.mxu0 0.0
    %241 = vmatprep.subr.mxu0 0.0
    %242 = vmatpush2.msra.mxu0 0.0
    %243 = vmatprep.subr.mxu0 0.0
    %244 = vmatpush2.msra.mxu0 0.0
    %245 = vmatprep.subr.mxu0 0.0
    %246 = vmatpush2.msra.mxu0 0.0
    %247 = vmatprep.subr.mxu0 0.0
    %248 = vmatpush2.msra.mxu0 0.0
    %249 = vmatprep.subr.mxu0 0.0
    %250 = vmatpush2.msra.mxu0 0.0
    %251 = vmatprep.subr.mxu0 0.0
    %252 = vmatpush2.msra.mxu0 0.0
    %253 = vmatprep.subr.mxu0 0.0
    %254 = vmatpush2.msra.mxu0 0.0
    %255 = vmatprep.subr.mxu0 0.0
    %256 = vmatpush2.msra.mxu0 0.0
    %257 = vmatprep.subr.mxu0 0.0
    %258 = vmatpush2.msra.mxu0 0.0
    %259 = vmatprep.subr.mxu0 0.0
    %260 = vmatpush2.msra.mxu0 0.0
    %261 = vmatprep.subr.mxu0 0.0
    %262 = vmatpush2.msra.mxu0 0.0
    %263 = vmatprep.subr.mxu0 0.0
    %264 = vmatpush2.msra.mxu0 0.0
    %265 = vmatprep.subr.mxu0 0.0
    %266 = vmatpush2.msra.mxu0 0.0
    %267 = vmatprep.subr.mxu0 0.0
    %268 = vmatpush2.msra.mxu0 0.0
    %269 = vmatprep.subr.mxu0 0.0
    %270 = vmatpush2.msra.mxu0 0.0
    %271 = vmatprep.mubr.f32.mxu0 0.0
    %272 = vmatmul.mubr.f32.gmra.mxu0 %v184
    %v273 = vpop.f32.mrf.mxu0
    %v274 = vadd.f32 %v145, %v273
    %v275 = vpop.f32.mrf.mxu0
    %276 = vmatprep.mubr.f32.mxu0 0.0
    %277 = vmatmul.mubr.f32.gmra.mxu0 %v187
    %v278 = vpop.f32.mrf.mxu0
    %v279 = vadd.f32 %v150, %v278
    %v280 = vpop.f32.mrf.mxu0
    %281 = vmatprep.mubr.f32.mxu0 0.0
    %282 = vmatmul.mubr.f32.gmra.mxu0 %v190
    %v283 = vpop.f32.mrf.mxu0
    %v284 = vadd.f32 %v155, %v283
    %v285 = vpop.f32.mrf.mxu0
    %286 = vmatprep.mubr.f32.mxu0 0.0
    %287 = vmatmul.mubr.f32.gmra.mxu0 %v193
    %v288 = vpop.f32.mrf.mxu0
    %v289 = vadd.f32 %v160, %v288
    %v290 = vpop.f32.mrf.mxu0
    %291 = vmatprep.mubr.f32.mxu0 0.0
    %292 = vmatmul.mubr.f32.gmra.mxu0 %v196
    %v293 = vpop.f32.mrf.mxu0
    %v294 = vadd.f32 %v165, %v293
    %v295 = vpop.f32.mrf.mxu0
    %296 = vmatprep.mubr.f32.mxu0 0.0
    %297 = vmatmul.mubr.f32.gmra.mxu0 %v199
    %v298 = vpop.f32.mrf.mxu0
    %v299 = vadd.f32 %v170, %v298
    %v300 = vpop.f32.mrf.mxu0
    %301 = vmatprep.mubr.f32.mxu0 0.0
    %302 = vmatmul.mubr.f32.gmra.mxu0 %v202
    %v303 = vpop.f32.mrf.mxu0
    %v304 = vadd.f32 %v175, %v303
    %v305 = vpop.f32.mrf.mxu0
    %306 = vmatprep.mubr.f32.mxu0 0.0
    %307 = vmatmul.mubr.f32.gmra.mxu0 %v205
    %v308 = vpop.f32.mrf.mxu0
    %v309 = vadd.f32 %v180, %v308
    %v310 = vpop.f32.mrf.mxu0
    %311 = vdwg.mxu0
    %v312 = vtanh.pop %v274
    %v313 = vtanh.pop %v279
    %v314 = vtanh.pop %v284
    %v315 = vtanh.pop %v289
    %v316 = vtanh.pop %v294
    %v317 = vtanh.pop %v299
    %v318 = vtanh.pop %v304
    %v319 = vtanh.pop %v309
    %s320 = scalar_lea.vmem %s0, 16
    %v321 = vld [vmem:[%s320] sm:$0xff]
    %v322 = vld [vmem:[%s320 + $0x8] sm:$0xff]
    %323 = vmatprep.subr.mxu0 0.0
    %324 = vmatpush1.msra.mxu0 0.0
    %325 = vmatprep.subr.mxu0 0.0
    %326 = vmatpush1.msra.mxu0 0.0
    %327 = vmatprep.subr.mxu0 0.0
    %328 = vmatpush1.msra.mxu0 0.0
    %329 = vmatprep.subr.mxu0 0.0
    %330 = vmatpush1.msra.mxu0 0.0
    %331 = vmatprep.subr.mxu0 0.0
    %332 = vmatpush1.msra.mxu0 0.0
    %333 = vmatprep.subr.mxu0 0.0
    %334 = vmatpush1.msra.mxu0 0.0
    %335 = vmatprep.subr.mxu0 0.0
    %336 = vmatpush1.msra.mxu0 0.0
    %337 = vmatprep.subr.mxu0 0.0
    %338 = vmatpush1.msra.mxu0 0.0
    %339 = vmatprep.subr.mxu0 0.0
    %340 = vmatpush1.msra.mxu0 0.0
    %341 = vmatprep.subr.mxu0 0.0
    %342 = vmatpush1.msra.mxu0 0.0
    %343 = vmatprep.subr.mxu0 0.0
    %344 = vmatpush1.msra.mxu0 0.0
    %345 = vmatprep.subr.mxu0 0.0
    %346 = vmatpush1.msra.mxu0 0.0
    %347 = vmatprep.subr.mxu0 0.0
    %348 = vmatpush1.msra.mxu0 0.0
    %349 = vmatprep.subr.mxu0 0.0
    %350 = vmatpush1.msra.mxu0 0.0
    %351 = vmatprep.subr.mxu0 0.0
    %352 = vmatpush1.msra.mxu0 %v322
    %353 = vmatprep.subr.mxu0 0.0
    %354 = vmatpush1.msra.mxu0 %v321
    %355 = vmatprep.subr.mxu0 0.0
    %356 = vmatpush2.msra.mxu0 0.0
    %357 = vmatprep.subr.mxu0 0.0
    %358 = vmatpush2.msra.mxu0 0.0
    %359 = vmatprep.subr.mxu0 0.0
    %360 = vmatpush2.msra.mxu0 0.0
    %361 = vmatprep.subr.mxu0 0.0
    %362 = vmatpush2.msra.mxu0 0.0
    %363 = vmatprep.subr.mxu0 0.0
    %364 = vmatpush2.msra.mxu0 0.0
    %365 = vmatprep.subr.mxu0 0.0
    %366 = vmatpush2.msra.mxu0 0.0
    %367 = vmatprep.subr.mxu0 0.0
    %368 = vmatpush2.msra.mxu0 0.0
    %369 = vmatprep.subr.mxu0 0.0
    %370 = vmatpush2.msra.mxu0 0.0
    %371 = vmatprep.subr.mxu0 0.0
    %372 = vmatpush2.msra.mxu0 0.0
    %373 = vmatprep.subr.mxu0 0.0
    %374 = vmatpush2.msra.mxu0 0.0
    %375 = vmatprep.subr.mxu0 0.0
    %376 = vmatpush2.msra.mxu0 0.0
    %377 = vmatprep.subr.mxu0 0.0
    %378 = vmatpush2.msra.mxu0 0.0
    %379 = vmatprep.subr.mxu0 0.0
    %380 = vmatpush2.msra.mxu0 0.0
    %381 = vmatprep.subr.mxu0 0.0
    %382 = vmatpush2.msra.mxu0 0.0
    %383 = vmatprep.subr.mxu0 0.0
    %384 = vmatpush2.msra.mxu0 0.0
    %385 = vmatprep.subr.mxu0 0.0
    %386 = vmatpush2.msra.mxu0 0.0
    %387 = vmatprep.mubr.f32.mxu0 0.0
    %388 = vmatmul.mubr.f32.gmra.mxu0 %v184
    %v389 = vpop.f32.mrf.mxu0
    %v390 = vadd.f32 %v145, %v389
    %v391 = vpop.f32.mrf.mxu0
    %392 = vmatprep.mubr.f32.mxu0 0.0
    %393 = vmatmul.mubr.f32.gmra.mxu0 %v187
    %v394 = vpop.f32.mrf.mxu0
    %v395 = vadd.f32 %v150, %v394
    %v396 = vpop.f32.mrf.mxu0
    %397 = vmatprep.mubr.f32.mxu0 0.0
    %398 = vmatmul.mubr.f32.gmra.mxu0 %v190
    %v399 = vpop.f32.mrf.mxu0
    %v400 = vadd.f32 %v155, %v399
    %v401 = vpop.f32.mrf.mxu0
    %402 = vmatprep.mubr.f32.mxu0 0.0
    %403 = vmatmul.mubr.f32.gmra.mxu0 %v193
    %v404 = vpop.f32.mrf.mxu0
    %v405 = vadd.f32 %v160, %v404
    %v406 = vpop.f32.mrf.mxu0
    %407 = vmatprep.mubr.f32.mxu0 0.0
    %408 = vmatmul.mubr.f32.gmra.mxu0 %v196
    %v409 = vpop.f32.mrf.mxu0
    %v410 = vadd.f32 %v165, %v409
    %v411 = vpop.f32.mrf.mxu0
    %412 = vmatprep.mubr.f32.mxu0 0.0
    %413 = vmatmul.mubr.f32.gmra.mxu0 %v199
    %v414 = vpop.f32.mrf.mxu0
    %v415 = vadd.f32 %v170, %v414
    %v416 = vpop.f32.mrf.mxu0
    %417 = vmatprep.mubr.f32.mxu0 0.0
    %418 = vmatmul.mubr.f32.gmra.mxu0 %v202
    %v419 = vpop.f32.mrf.mxu0
    %v420 = vadd.f32 %v175, %v419
    %v421 = vpop.f32.mrf.mxu0
    %422 = vmatprep.mubr.f32.mxu0 0.0
    %423 = vmatmul.mubr.f32.gmra.mxu0 %v205
    %v424 = vpop.f32.mrf.mxu0
    %v425 = vadd.f32 %v180, %v424
    %v426 = vpop.f32.mrf.mxu0
    %427 = vdwg.mxu0
    %v428 = vtanh.pop %v390
    %v429 = vtanh.pop %v395
    %v430 = vtanh.pop %v400
    %v431 = vtanh.pop %v405
    %v432 = vtanh.pop %v410
    %v433 = vtanh.pop %v415
    %v434 = vtanh.pop %v420
    %v435 = vtanh.pop %v425
    %v436 = vmul.f32 %v312, 0.14285715
    %v437 = vmul.f32 %v313, 0.14285715
    %v438 = vmul.f32 %v428, 0.14285715
    %v439 = vmul.f32 %v429, 0.14285715
    %v440 = vmul.f32 %v316, 0.14285715
    %v441 = vmul.f32 %v317, 0.14285715
    %v442 = vmul.f32 %v432, 0.14285715
    %v443 = vmul.f32 %v433, 0.14285715
    %v444 = vld [vmem:[#allocation7] sm:$0xf]
    %v446 = vlaneseq
    %v447 = vshrl.u32 %v446, 7
    %v448 = vsub.s32 0, %v447
    %v449 = vrot.slane %v444, %v448
    %v450 = vlaneseq
    %v451 = vshrl.u32 %v450, 7
    %v452 = vsub.s32 1, %v451
    %v453 = vrot.slane %v444, %v452
    %v454 = vlaneseq
    %v455 = vshrl.u32 %v454, 7
    %v456 = vsub.s32 2, %v455
    %v457 = vrot.slane %v444, %v456
    %v458 = vlaneseq
    %v459 = vshrl.u32 %v458, 7
    %v460 = vsub.s32 3, %v459
    %v461 = vrot.slane %v444, %v460
    %s466 = scalar_lea.vmem [#allocation7], 4
    %v467 = vld [vmem:[%s466] sm:$0xf]
    %v469 = vlaneseq
    %v470 = vshrl.u32 %v469, 7
    %v471 = vsub.s32 0, %v470
    %v472 = vrot.slane %v467, %v471
    %v473 = vlaneseq
    %v474 = vshrl.u32 %v473, 7
    %v475 = vsub.s32 1, %v474
    %v476 = vrot.slane %v467, %v475
    %v477 = vlaneseq
    %v478 = vshrl.u32 %v477, 7
    %v479 = vsub.s32 2, %v478
    %v480 = vrot.slane %v467, %v479
    %v481 = vlaneseq
    %v482 = vshrl.u32 %v481, 7
    %v483 = vsub.s32 3, %v482
    %v484 = vrot.slane %v467, %v483
    %v489 = vld [vmem:[#allocation10] sm:$0x3]
    %v491 = vlaneseq
    %v492 = vshrl.u32 %v491, 7
    %v493 = vsub.s32 0, %v492
    %v494 = vrot.slane %v489, %v493
    %v495 = vlaneseq
    %v496 = vshrl.u32 %v495, 7
    %v497 = vsub.s32 1, %v496
    %v498 = vrot.slane %v489, %v497
    %s501 = scalar_lea.vmem [#allocation10], 2
    %v502 = vld [vmem:[%s501] sm:$0x3]
    %v504 = vlaneseq
    %v505 = vshrl.u32 %v504, 7
    %v506 = vsub.s32 0, %v505
    %v507 = vrot.slane %v502, %v506
    %v508 = vlaneseq
    %v509 = vshrl.u32 %v508, 7
    %v510 = vsub.s32 1, %v509
    %v511 = vrot.slane %v502, %v510
    %v514 = vld [vmem:[#allocation2] sm:$0x3]
    %s515 = scalar_lea.vmem [#allocation2], 2
    %v516 = vld [vmem:[%s515] sm:$0x3]
    %v517 = vld [vmem:[%s2] sm:$0x3]
    %v518 = vld [vmem:[#allocation5] sm:$0xff]
    %v519 = vld [vmem:[#allocation5 + $0x8] sm:$0xff]
    %v520 = vld [vmem:[#allocation5 + $0x10] sm:$0xff]
    %v521 = vld [vmem:[#allocation5 + $0x18] sm:$0xff]
    %v522 = vld [vmem:[#allocation5 + $0x20] sm:$0xff]
    %v523 = vld [vmem:[#allocation5 + $0x28] sm:$0xff]
    %v524 = vld [vmem:[#allocation5 + $0x30] sm:$0xff]
    %v525 = vld [vmem:[#allocation5 + $0x38] sm:$0xff]
    %v526 = vld [vmem:[#allocation5 + $0x40] sm:$0xff]
    %v527 = vld [vmem:[#allocation5 + $0x48] sm:$0xff]
    %v528 = vld [vmem:[#allocation5 + $0x50] sm:$0xff]
    %v529 = vld [vmem:[#allocation5 + $0x58] sm:$0xff]
    %v530 = vld [vmem:[#allocation5 + $0x60] sm:$0xff]
    %v531 = vld [vmem:[#allocation5 + $0x68] sm:$0xff]
    %v532 = vld [vmem:[#allocation5 + $0x70] sm:$0xff]
    %v533 = vld [vmem:[#allocation5 + $0x78] sm:$0xff]
    %v534 = vld [vmem:[#allocation5 + $0x80] sm:$0xff]
    %v535 = vld [vmem:[#allocation5 + $0x88] sm:$0xff]
    %v536 = vld [vmem:[#allocation5 + $0x90] sm:$0xff]
    %v537 = vld [vmem:[#allocation5 + $0x98] sm:$0xff]
    %v538 = vld [vmem:[#allocation5 + $0xa0] sm:$0xff]
    %v539 = vld [vmem:[#allocation5 + $0xa8] sm:$0xff]
    %v540 = vld [vmem:[#allocation5 + $0xb0] sm:$0xff]
    %v541 = vld [vmem:[#allocation5 + $0xb8] sm:$0xff]
    %v542 = vld [vmem:[#allocation5 + $0xc0] sm:$0xff]
    %v543 = vld [vmem:[#allocation5 + $0xc8] sm:$0xff]
    %v544 = vld [vmem:[#allocation5 + $0xd0] sm:$0xff]
    %v545 = vld [vmem:[#allocation5 + $0xd8] sm:$0xff]
    %v546 = vld [vmem:[#allocation5 + $0xe0] sm:$0xff]
    %v547 = vld [vmem:[#allocation5 + $0xe8] sm:$0xff]
    %v548 = vld [vmem:[#allocation5 + $0xf0] sm:$0xff]
    %v549 = vld [vmem:[#allocation5 + $0xf8] sm:$0xff]
    %v550 = vld [vmem:[#allocation5 + $0x100] sm:$0xff]
    %v551 = vld [vmem:[#allocation5 + $0x108] sm:$0xff]
    %v552 = vld [vmem:[#allocation5 + $0x110] sm:$0xff]
    %v553 = vld [vmem:[#allocation5 + $0x118] sm:$0xff]
    %v554 = vld [vmem:[#allocation5 + $0x120] sm:$0xff]
    %v555 = vld [vmem:[#allocation5 + $0x128] sm:$0xff]
    %v556 = vld [vmem:[#allocation5 + $0x130] sm:$0xff]
    %v557 = vld [vmem:[#allocation5 + $0x138] sm:$0xff]
    %v558 = vld [vmem:[#allocation5 + $0x140] sm:$0xff]
    %v559 = vld [vmem:[#allocation5 + $0x148] sm:$0xff]
    %v560 = vld [vmem:[#allocation5 + $0x150] sm:$0xff]
    %v561 = vld [vmem:[#allocation5 + $0x158] sm:$0xff]
    %v562 = vld [vmem:[#allocation5 + $0x160] sm:$0xff]
    %v563 = vld [vmem:[#allocation5 + $0x168] sm:$0xff]
    %v564 = vld [vmem:[#allocation5 + $0x170] sm:$0xff]
    %v565 = vld [vmem:[#allocation5 + $0x178] sm:$0xff]
    %v566 = vld [vmem:[#allocation5 + $0x180] sm:$0xff]
    %v567 = vld [vmem:[#allocation5 + $0x188] sm:$0xff]
    %v568 = vld [vmem:[#allocation5 + $0x190] sm:$0xff]
    %v569 = vld [vmem:[#allocation5 + $0x198] sm:$0xff]
    %v570 = vld [vmem:[#allocation5 + $0x1a0] sm:$0xff]
    %v571 = vld [vmem:[#allocation5 + $0x1a8] sm:$0xff]
    %v572 = vld [vmem:[#allocation5 + $0x1b0] sm:$0xff]
    %v573 = vld [vmem:[#allocation5 + $0x1b8] sm:$0xff]
    %v574 = vld [vmem:[#allocation5 + $0x1c0] sm:$0xff]
    %v575 = vld [vmem:[#allocation5 + $0x1c8] sm:$0xff]
    %v576 = vld [vmem:[#allocation5 + $0x1d0] sm:$0xff]
    %v577 = vld [vmem:[#allocation5 + $0x1d8] sm:$0xff]
    %v578 = vld [vmem:[#allocation5 + $0x1e0] sm:$0xff]
    %v579 = vld [vmem:[#allocation5 + $0x1e8] sm:$0xff]
    %v580 = vld [vmem:[#allocation5 + $0x1f0] sm:$0xff]
    %v581 = vld [vmem:[#allocation5 + $0x1f8] sm:$0xff]
    %v582 = vld [vmem:[#allocation5 + $0x200] sm:$0xff]
    %v583 = vld [vmem:[#allocation5 + $0x208] sm:$0xff]
    %v584 = vld [vmem:[#allocation5 + $0x210] sm:$0xff]
    %v585 = vld [vmem:[#allocation5 + $0x218] sm:$0xff]
    %v586 = vld [vmem:[#allocation5 + $0x220] sm:$0xff]
    %v587 = vld [vmem:[#allocation5 + $0x228] sm:$0xff]
    %v588 = vld [vmem:[#allocation5 + $0x230] sm:$0xff]
    %v589 = vld [vmem:[#allocation5 + $0x238] sm:$0xff]
    %v590 = vld [vmem:[#allocation5 + $0x240] sm:$0xff]
    %v591 = vld [vmem:[#allocation5 + $0x248] sm:$0xff]
    %v592 = vld [vmem:[#allocation5 + $0x250] sm:$0xff]
    %v593 = vld [vmem:[#allocation5 + $0x258] sm:$0xff]
    %v594 = vld [vmem:[#allocation5 + $0x260] sm:$0xff]
    %v595 = vld [vmem:[#allocation5 + $0x268] sm:$0xff]
    %v596 = vld [vmem:[#allocation5 + $0x270] sm:$0xff]
    %v597 = vld [vmem:[#allocation5 + $0x278] sm:$0xff]
    %v598 = vld [vmem:[#allocation5 + $0x280] sm:$0xff]
    %v599 = vld [vmem:[#allocation5 + $0x288] sm:$0xff]
    %v600 = vld [vmem:[#allocation5 + $0x290] sm:$0xff]
    %v601 = vld [vmem:[#allocation5 + $0x298] sm:$0xff]
    %v602 = vld [vmem:[#allocation5 + $0x2a0] sm:$0xff]
    %v603 = vld [vmem:[#allocation5 + $0x2a8] sm:$0xff]
    %v604 = vld [vmem:[#allocation5 + $0x2b0] sm:$0xff]
    %v605 = vld [vmem:[#allocation5 + $0x2b8] sm:$0xff]
    %v606 = vld [vmem:[#allocation5 + $0x2c0] sm:$0xff]
    %v607 = vld [vmem:[#allocation5 + $0x2c8] sm:$0xff]
    %v608 = vld [vmem:[#allocation5 + $0x2d0] sm:$0xff]
    %v609 = vld [vmem:[#allocation5 + $0x2d8] sm:$0xff]
    %v610 = vld [vmem:[#allocation5 + $0x2e0] sm:$0xff]
    %v611 = vld [vmem:[#allocation5 + $0x2e8] sm:$0xff]
    %v612 = vld [vmem:[#allocation5 + $0x2f0] sm:$0xff]
    %v613 = vld [vmem:[#allocation5 + $0x2f8] sm:$0xff]
    %v614 = vld [vmem:[#allocation5 + $0x300] sm:$0xff]
    %v615 = vld [vmem:[#allocation5 + $0x308] sm:$0xff]
    %v616 = vld [vmem:[#allocation5 + $0x310] sm:$0xff]
    %v617 = vld [vmem:[#allocation5 + $0x318] sm:$0xff]
    %v618 = vld [vmem:[#allocation5 + $0x320] sm:$0xff]
    %v619 = vld [vmem:[#allocation5 + $0x328] sm:$0xff]
    %v620 = vld [vmem:[#allocation5 + $0x330] sm:$0xff]
    %v621 = vld [vmem:[#allocation5 + $0x338] sm:$0xff]
    %v622 = vld [vmem:[#allocation5 + $0x340] sm:$0xff]
    %v623 = vld [vmem:[#allocation5 + $0x348] sm:$0xff]
    %v624 = vld [vmem:[#allocation5 + $0x350] sm:$0xff]
    %v625 = vld [vmem:[#allocation5 + $0x358] sm:$0xff]
    %v626 = vld [vmem:[#allocation5 + $0x360] sm:$0xff]
    %v627 = vld [vmem:[#allocation5 + $0x368] sm:$0xff]
    %v628 = vld [vmem:[#allocation5 + $0x370] sm:$0xff]
    %v629 = vld [vmem:[#allocation5 + $0x378] sm:$0xff]
    %v630 = vld [vmem:[#allocation5 + $0x380] sm:$0xff]
    %v631 = vld [vmem:[#allocation5 + $0x388] sm:$0xff]
    %v632 = vld [vmem:[#allocation5 + $0x390] sm:$0xff]
    %v633 = vld [vmem:[#allocation5 + $0x398] sm:$0xff]
    %v634 = vld [vmem:[#allocation5 + $0x3a0] sm:$0xff]
    %v635 = vld [vmem:[#allocation5 + $0x3a8] sm:$0xff]
    %v636 = vld [vmem:[#allocation5 + $0x3b0] sm:$0xff]
    %v637 = vld [vmem:[#allocation5 + $0x3b8] sm:$0xff]
    %v638 = vld [vmem:[#allocation5 + $0x3c0] sm:$0xff]
    %v639 = vld [vmem:[#allocation5 + $0x3c8] sm:$0xff]
    %v640 = vld [vmem:[#allocation5 + $0x3d0] sm:$0xff]
    %v641 = vld [vmem:[#allocation5 + $0x3d8] sm:$0xff]
    %v642 = vld [vmem:[#allocation5 + $0x3e0] sm:$0xff]
    %v643 = vld [vmem:[#allocation5 + $0x3e8] sm:$0xff]
    %v644 = vld [vmem:[#allocation5 + $0x3f0] sm:$0xff]
    %v645 = vld [vmem:[#allocation5 + $0x3f8] sm:$0xff]
    %646 = vmatprep.subr.mxu0 %v579
    %647 = vmatpush1.msra.mxu0 %v578
    %648 = vmatprep.subr.mxu0 %v575
    %649 = vmatpush1.msra.mxu0 %v574
    %650 = vmatprep.subr.mxu0 %v571
    %651 = vmatpush1.msra.mxu0 %v570
    %652 = vmatprep.subr.mxu0 %v567
    %653 = vmatpush1.msra.mxu0 %v566
    %654 = vmatprep.subr.mxu0 %v563
    %655 = vmatpush1.msra.mxu0 %v562
    %656 = vmatprep.subr.mxu0 %v559
    %657 = vmatpush1.msra.mxu0 %v558
    %658 = vmatprep.subr.mxu0 %v555
    %659 = vmatpush1.msra.mxu0 %v554
    %660 = vmatprep.subr.mxu0 %v551
    %661 = vmatpush1.msra.mxu0 %v550
    %662 = vmatprep.subr.mxu0 %v547
    %663 = vmatpush1.msra.mxu0 %v546
    %664 = vmatprep.subr.mxu0 %v543
    %665 = vmatpush1.msra.mxu0 %v542
    %666 = vmatprep.subr.mxu0 %v539
    %667 = vmatpush1.msra.mxu0 %v538
    %668 = vmatprep.subr.mxu0 %v535
    %669 = vmatpush1.msra.mxu0 %v534
    %670 = vmatprep.subr.mxu0 %v531
    %671 = vmatpush1.msra.mxu0 %v530
    %672 = vmatprep.subr.mxu0 %v527
    %673 = vmatpush1.msra.mxu0 %v526
    %674 = vmatprep.subr.mxu0 %v523
    %675 = vmatpush1.msra.mxu0 %v522
    %676 = vmatprep.subr.mxu0 %v519
    %677 = vmatpush1.msra.mxu0 %v518
    %678 = vmatprep.subr.mxu0 %v643
    %679 = vmatpush2.msra.mxu0 %v642
    %680 = vmatprep.subr.mxu0 %v639
    %681 = vmatpush2.msra.mxu0 %v638
    %682 = vmatprep.subr.mxu0 %v635
    %683 = vmatpush2.msra.mxu0 %v634
    %684 = vmatprep.subr.mxu0 %v631
    %685 = vmatpush2.msra.mxu0 %v630
    %686 = vmatprep.subr.mxu0 %v627
    %687 = vmatpush2.msra.mxu0 %v626
    %688 = vmatprep.subr.mxu0 %v623
    %689 = vmatpush2.msra.mxu0 %v622
    %690 = vmatprep.subr.mxu0 %v619
    %691 = vmatpush2.msra.mxu0 %v618
    %692 = vmatprep.subr.mxu0 %v615
    %693 = vmatpush2.msra.mxu0 %v614
    %694 = vmatprep.subr.mxu0 %v611
    %695 = vmatpush2.msra.mxu0 %v610
    %696 = vmatprep.subr.mxu0 %v607
    %697 = vmatpush2.msra.mxu0 %v606
    %698 = vmatprep.subr.mxu0 %v603
    %699 = vmatpush2.msra.mxu0 %v602
    %700 = vmatprep.subr.mxu0 %v599
    %701 = vmatpush2.msra.mxu0 %v598
    %702 = vmatprep.subr.mxu0 %v595
    %703 = vmatpush2.msra.mxu0 %v594
    %704 = vmatprep.subr.mxu0 %v591
    %705 = vmatpush2.msra.mxu0 %v590
    %706 = vmatprep.subr.mxu0 %v587
    %707 = vmatpush2.msra.mxu0 %v586
    %708 = vmatprep.subr.mxu0 %v583
    %709 = vmatpush2.msra.mxu0 %v582
    %710 = vmatprep.mubr.f32.mxu0 %v514
    %711 = vmatmul.mubr.f32.gmra.mxu0 %v517
    %v712 = vpop.f32.mrf.mxu0
    %v713 = vadd.f32 %v449, %v712
    %v714 = vpop.f32.mrf.mxu0
    %v715 = vadd.f32 %v453, %v714
    %716 = vdwg.mxu0
    %717 = vmatprep.subr.mxu0 %v581
    %718 = vmatpush1.msra.mxu0 %v580
    %719 = vmatprep.subr.mxu0 %v577
    %720 = vmatpush1.msra.mxu0 %v576
    %721 = vmatprep.subr.mxu0 %v573
    %722 = vmatpush1.msra.mxu0 %v572
    %723 = vmatprep.subr.mxu0 %v569
    %724 = vmatpush1.msra.mxu0 %v568
    %725 = vmatprep.subr.mxu0 %v565
    %726 = vmatpush1.msra.mxu0 %v564
    %727 = vmatprep.subr.mxu0 %v561
    %728 = vmatpush1.msra.mxu0 %v560
    %729 = vmatprep.subr.mxu0 %v557
    %730 = vmatpush1.msra.mxu0 %v556
    %731 = vmatprep.subr.mxu0 %v553
    %732 = vmatpush1.msra.mxu0 %v552
    %733 = vmatprep.subr.mxu0 %v549
    %734 = vmatpush1.msra.mxu0 %v548
    %735 = vmatprep.subr.mxu0 %v545
    %736 = vmatpush1.msra.mxu0 %v544
    %737 = vmatprep.subr.mxu0 %v541
    %738 = vmatpush1.msra.mxu0 %v540
    %739 = vmatprep.subr.mxu0 %v537
    %740 = vmatpush1.msra.mxu0 %v536
    %741 = vmatprep.subr.mxu0 %v533
    %742 = vmatpush1.msra.mxu0 %v532
    %743 = vmatprep.subr.mxu0 %v529
    %744 = vmatpush1.msra.mxu0 %v528
    %745 = vmatprep.subr.mxu0 %v525
    %746 = vmatpush1.msra.mxu0 %v524
    %747 = vmatprep.subr.mxu0 %v521
    %748 = vmatpush1.msra.mxu0 %v520
    %749 = vmatprep.subr.mxu0 %v645
    %750 = vmatpush2.msra.mxu0 %v644
    %751 = vmatprep.subr.mxu0 %v641
    %752 = vmatpush2.msra.mxu0 %v640
    %753 = vmatprep.subr.mxu0 %v637
    %754 = vmatpush2.msra.mxu0 %v636
    %755 = vmatprep.subr.mxu0 %v633
    %756 = vmatpush2.msra.mxu0 %v632
    %757 = vmatprep.subr.mxu0 %v629
    %758 = vmatpush2.msra.mxu0 %v628
    %759 = vmatprep.subr.mxu0 %v625
    %760 = vmatpush2.msra.mxu0 %v624
    %761 = vmatprep.subr.mxu0 %v621
    %762 = vmatpush2.msra.mxu0 %v620
    %763 = vmatprep.subr.mxu0 %v617
    %764 = vmatpush2.msra.mxu0 %v616
    %765 = vmatprep.subr.mxu0 %v613
    %766 = vmatpush2.msra.mxu0 %v612
    %767 = vmatprep.subr.mxu0 %v609
    %768 = vmatpush2.msra.mxu0 %v608
    %769 = vmatprep.subr.mxu0 %v605
    %770 = vmatpush2.msra.mxu0 %v604
    %771 = vmatprep.subr.mxu0 %v601
    %772 = vmatpush2.msra.mxu0 %v600
    %773 = vmatprep.subr.mxu0 %v597
    %774 = vmatpush2.msra.mxu0 %v596
    %775 = vmatprep.subr.mxu0 %v593
    %776 = vmatpush2.msra.mxu0 %v592
    %777 = vmatprep.subr.mxu0 %v589
    %778 = vmatpush2.msra.mxu0 %v588
    %779 = vmatprep.subr.mxu0 %v585
    %780 = vmatpush2.msra.mxu0 %v584
    %781 = vmatprep.mubr.f32.mxu0 %v514
    %782 = vmatmul.mubr.f32.gmra.mxu0 %v517
    %v783 = vpop.f32.mrf.mxu0
    %v784 = vadd.f32 %v457, %v783
    %v785 = vpop.f32.mrf.mxu0
    %v786 = vadd.f32 %v461, %v785
    %787 = vdwg.mxu0
    %v788 = vxor.u32 %v713, 2147483648
    %v789 = vmul.f32 %v788, 1.442695
    %v790 = vpow.pop %v789
    %v791 = vadd.f32 %v790, 1.0
    %v792 = vrcp.pop %v791
    %v793 = vmul.f32 1.0, %v792
    %v794 = vxor.u32 %v715, 2147483648
    %v795 = vmul.f32 %v794, 1.442695
    %v796 = vpow.pop %v795
    %v797 = vadd.f32 %v796, 1.0
    %v798 = vrcp.pop %v797
    %v799 = vmul.f32 1.0, %v798
    %v800 = vtanh.pop %v784
    %v801 = vxor.u32 %v786, 2147483648
    %v802 = vmul.f32 %v801, 1.442695
    %v803 = vpow.pop %v802
    %v804 = vadd.f32 %v803, 1.0
    %v805 = vrcp.pop %v804
    %v806 = vmul.f32 1.0, %v805
    %v807 = vmul.f32 %v799, 0.0
    %v808 = vmul.f32 %v793, %v800
    %v809 = vadd.f32 %v807, %v808
    %v810 = vtanh.pop %v809
    %v811 = vmul.f32 %v806, %v810
    %s812 = scalar_lea.vmem [#allocation5], 1024
    %v813 = vld [vmem:[%s812] sm:$0xff]
    %v814 = vld [vmem:[%s812 + $0x8] sm:$0xff]
    %v815 = vld [vmem:[%s812 + $0x10] sm:$0xff]
    %v816 = vld [vmem:[%s812 + $0x18] sm:$0xff]
    %v817 = vld [vmem:[%s812 + $0x20] sm:$0xff]
    %v818 = vld [vmem:[%s812 + $0x28] sm:$0xff]
    %v819 = vld [vmem:[%s812 + $0x30] sm:$0xff]
    %v820 = vld [vmem:[%s812 + $0x38] sm:$0xff]
    %v821 = vld [vmem:[%s812 + $0x40] sm:$0xff]
    %v822 = vld [vmem:[%s812 + $0x48] sm:$0xff]
    %v823 = vld [vmem:[%s812 + $0x50] sm:$0xff]
    %v824 = vld [vmem:[%s812 + $0x58] sm:$0xff]
    %v825 = vld [vmem:[%s812 + $0x60] sm:$0xff]
    %v826 = vld [vmem:[%s812 + $0x68] sm:$0xff]
    %v827 = vld [vmem:[%s812 + $0x70] sm:$0xff]
    %v828 = vld [vmem:[%s812 + $0x78] sm:$0xff]
    %v829 = vld [vmem:[%s812 + $0x80] sm:$0xff]
    %v830 = vld [vmem:[%s812 + $0x88] sm:$0xff]
    %v831 = vld [vmem:[%s812 + $0x90] sm:$0xff]
    %v832 = vld [vmem:[%s812 + $0x98] sm:$0xff]
    %v833 = vld [vmem:[%s812 + $0xa0] sm:$0xff]
    %v834 = vld [vmem:[%s812 + $0xa8] sm:$0xff]
    %v835 = vld [vmem:[%s812 + $0xb0] sm:$0xff]
    %v836 = vld [vmem:[%s812 + $0xb8] sm:$0xff]
    %v837 = vld [vmem:[%s812 + $0xc0] sm:$0xff]
    %v838 = vld [vmem:[%s812 + $0xc8] sm:$0xff]
    %v839 = vld [vmem:[%s812 + $0xd0] sm:$0xff]
    %v840 = vld [vmem:[%s812 + $0xd8] sm:$0xff]
    %v841 = vld [vmem:[%s812 + $0xe0] sm:$0xff]
    %v842 = vld [vmem:[%s812 + $0xe8] sm:$0xff]
    %v843 = vld [vmem:[%s812 + $0xf0] sm:$0xff]
    %v844 = vld [vmem:[%s812 + $0xf8] sm:$0xff]
    %v845 = vld [vmem:[%s812 + $0x100] sm:$0xff]
    %v846 = vld [vmem:[%s812 + $0x108] sm:$0xff]
    %v847 = vld [vmem:[%s812 + $0x110] sm:$0xff]
    %v848 = vld [vmem:[%s812 + $0x118] sm:$0xff]
    %v849 = vld [vmem:[%s812 + $0x120] sm:$0xff]
    %v850 = vld [vmem:[%s812 + $0x128] sm:$0xff]
    %v851 = vld [vmem:[%s812 + $0x130] sm:$0xff]
    %v852 = vld [vmem:[%s812 + $0x138] sm:$0xff]
    %v853 = vld [vmem:[%s812 + $0x140] sm:$0xff]
    %v854 = vld [vmem:[%s812 + $0x148] sm:$0xff]
    %v855 = vld [vmem:[%s812 + $0x150] sm:$0xff]
    %v856 = vld [vmem:[%s812 + $0x158] sm:$0xff]
    %v857 = vld [vmem:[%s812 + $0x160] sm:$0xff]
    %v858 = vld [vmem:[%s812 + $0x168] sm:$0xff]
    %v859 = vld [vmem:[%s812 + $0x170] sm:$0xff]
    %v860 = vld [vmem:[%s812 + $0x178] sm:$0xff]
    %v861 = vld [vmem:[%s812 + $0x180] sm:$0xff]
    %v862 = vld [vmem:[%s812 + $0x188] sm:$0xff]
    %v863 = vld [vmem:[%s812 + $0x190] sm:$0xff]
    %v864 = vld [vmem:[%s812 + $0x198] sm:$0xff]
    %v865 = vld [vmem:[%s812 + $0x1a0] sm:$0xff]
    %v866 = vld [vmem:[%s812 + $0x1a8] sm:$0xff]
    %v867 = vld [vmem:[%s812 + $0x1b0] sm:$0xff]
    %v868 = vld [vmem:[%s812 + $0x1b8] sm:$0xff]
    %v869 = vld [vmem:[%s812 + $0x1c0] sm:$0xff]
    %v870 = vld [vmem:[%s812 + $0x1c8] sm:$0xff]
    %v871 = vld [vmem:[%s812 + $0x1d0] sm:$0xff]
    %v872 = vld [vmem:[%s812 + $0x1d8] sm:$0xff]
    %v873 = vld [vmem:[%s812 + $0x1e0] sm:$0xff]
    %v874 = vld [vmem:[%s812 + $0x1e8] sm:$0xff]
    %v875 = vld [vmem:[%s812 + $0x1f0] sm:$0xff]
    %v876 = vld [vmem:[%s812 + $0x1f8] sm:$0xff]
    %v877 = vld [vmem:[%s812 + $0x200] sm:$0xff]
    %v878 = vld [vmem:[%s812 + $0x208] sm:$0xff]
    %v879 = vld [vmem:[%s812 + $0x210] sm:$0xff]
    %v880 = vld [vmem:[%s812 + $0x218] sm:$0xff]
    %v881 = vld [vmem:[%s812 + $0x220] sm:$0xff]
    %v882 = vld [vmem:[%s812 + $0x228] sm:$0xff]
    %v883 = vld [vmem:[%s812 + $0x230] sm:$0xff]
    %v884 = vld [vmem:[%s812 + $0x238] sm:$0xff]
    %v885 = vld [vmem:[%s812 + $0x240] sm:$0xff]
    %v886 = vld [vmem:[%s812 + $0x248] sm:$0xff]
    %v887 = vld [vmem:[%s812 + $0x250] sm:$0xff]
    %v888 = vld [vmem:[%s812 + $0x258] sm:$0xff]
    %v889 = vld [vmem:[%s812 + $0x260] sm:$0xff]
    %v890 = vld [vmem:[%s812 + $0x268] sm:$0xff]
    %v891 = vld [vmem:[%s812 + $0x270] sm:$0xff]
    %v892 = vld [vmem:[%s812 + $0x278] sm:$0xff]
    %v893 = vld [vmem:[%s812 + $0x280] sm:$0xff]
    %v894 = vld [vmem:[%s812 + $0x288] sm:$0xff]
    %v895 = vld [vmem:[%s812 + $0x290] sm:$0xff]
    %v896 = vld [vmem:[%s812 + $0x298] sm:$0xff]
    %v897 = vld [vmem:[%s812 + $0x2a0] sm:$0xff]
    %v898 = vld [vmem:[%s812 + $0x2a8] sm:$0xff]
    %v899 = vld [vmem:[%s812 + $0x2b0] sm:$0xff]
    %v900 = vld [vmem:[%s812 + $0x2b8] sm:$0xff]
    %v901 = vld [vmem:[%s812 + $0x2c0] sm:$0xff]
    %v902 = vld [vmem:[%s812 + $0x2c8] sm:$0xff]
    %v903 = vld [vmem:[%s812 + $0x2d0] sm:$0xff]
    %v904 = vld [vmem:[%s812 + $0x2d8] sm:$0xff]
    %v905 = vld [vmem:[%s812 + $0x2e0] sm:$0xff]
    %v906 = vld [vmem:[%s812 + $0x2e8] sm:$0xff]
    %v907 = vld [vmem:[%s812 + $0x2f0] sm:$0xff]
    %v908 = vld [vmem:[%s812 + $0x2f8] sm:$0xff]
    %v909 = vld [vmem:[%s812 + $0x300] sm:$0xff]
    %v910 = vld [vmem:[%s812 + $0x308] sm:$0xff]
    %v911 = vld [vmem:[%s812 + $0x310] sm:$0xff]
    %v912 = vld [vmem:[%s812 + $0x318] sm:$0xff]
    %v913 = vld [vmem:[%s812 + $0x320] sm:$0xff]
    %v914 = vld [vmem:[%s812 + $0x328] sm:$0xff]
    %v915 = vld [vmem:[%s812 + $0x330] sm:$0xff]
    %v916 = vld [vmem:[%s812 + $0x338] sm:$0xff]
    %v917 = vld [vmem:[%s812 + $0x340] sm:$0xff]
    %v918 = vld [vmem:[%s812 + $0x348] sm:$0xff]
    %v919 = vld [vmem:[%s812 + $0x350] sm:$0xff]
    %v920 = vld [vmem:[%s812 + $0x358] sm:$0xff]
    %v921 = vld [vmem:[%s812 + $0x360] sm:$0xff]
    %v922 = vld [vmem:[%s812 + $0x368] sm:$0xff]
    %v923 = vld [vmem:[%s812 + $0x370] sm:$0xff]
    %v924 = vld [vmem:[%s812 + $0x378] sm:$0xff]
    %v925 = vld [vmem:[%s812 + $0x380] sm:$0xff]
    %v926 = vld [vmem:[%s812 + $0x388] sm:$0xff]
    %v927 = vld [vmem:[%s812 + $0x390] sm:$0xff]
    %v928 = vld [vmem:[%s812 + $0x398] sm:$0xff]
    %v929 = vld [vmem:[%s812 + $0x3a0] sm:$0xff]
    %v930 = vld [vmem:[%s812 + $0x3a8] sm:$0xff]
    %v931 = vld [vmem:[%s812 + $0x3b0] sm:$0xff]
    %v932 = vld [vmem:[%s812 + $0x3b8] sm:$0xff]
    %v933 = vld [vmem:[%s812 + $0x3c0] sm:$0xff]
    %v934 = vld [vmem:[%s812 + $0x3c8] sm:$0xff]
    %v935 = vld [vmem:[%s812 + $0x3d0] sm:$0xff]
    %v936 = vld [vmem:[%s812 + $0x3d8] sm:$0xff]
    %v937 = vld [vmem:[%s812 + $0x3e0] sm:$0xff]
    %v938 = vld [vmem:[%s812 + $0x3e8] sm:$0xff]
    %v939 = vld [vmem:[%s812 + $0x3f0] sm:$0xff]
    %v940 = vld [vmem:[%s812 + $0x3f8] sm:$0xff]
    %941 = vmatprep.subr.mxu0 %v874
    %942 = vmatpush1.msra.mxu0 %v873
    %943 = vmatprep.subr.mxu0 %v870
    %944 = vmatpush1.msra.mxu0 %v869
    %945 = vmatprep.subr.mxu0 %v866
    %946 = vmatpush1.msra.mxu0 %v865
    %947 = vmatprep.subr.mxu0 %v862
    %948 = vmatpush1.msra.mxu0 %v861
    %949 = vmatprep.subr.mxu0 %v858
    %950 = vmatpush1.msra.mxu0 %v857
    %951 = vmatprep.subr.mxu0 %v854
    %952 = vmatpush1.msra.mxu0 %v853
    %953 = vmatprep.subr.mxu0 %v850
    %954 = vmatpush1.msra.mxu0 %v849
    %955 = vmatprep.subr.mxu0 %v846
    %956 = vmatpush1.msra.mxu0 %v845
    %957 = vmatprep.subr.mxu0 %v842
    %958 = vmatpush1.msra.mxu0 %v841
    %959 = vmatprep.subr.mxu0 %v838
    %960 = vmatpush1.msra.mxu0 %v837
    %961 = vmatprep.subr.mxu0 %v834
    %962 = vmatpush1.msra.mxu0 %v833
    %963 = vmatprep.subr.mxu0 %v830
    %964 = vmatpush1.msra.mxu0 %v829
    %965 = vmatprep.subr.mxu0 %v826
    %966 = vmatpush1.msra.mxu0 %v825
    %967 = vmatprep.subr.mxu0 %v822
    %968 = vmatpush1.msra.mxu0 %v821
    %969 = vmatprep.subr.mxu0 %v818
    %970 = vmatpush1.msra.mxu0 %v817
    %971 = vmatprep.subr.mxu0 %v814
    %972 = vmatpush1.msra.mxu0 %v813
    %973 = vmatprep.subr.mxu0 %v938
    %974 = vmatpush2.msra.mxu0 %v937
    %975 = vmatprep.subr.mxu0 %v934
    %976 = vmatpush2.msra.mxu0 %v933
    %977 = vmatprep.subr.mxu0 %v930
    %978 = vmatpush2.msra.mxu0 %v929
    %979 = vmatprep.subr.mxu0 %v926
    %980 = vmatpush2.msra.mxu0 %v925
    %981 = vmatprep.subr.mxu0 %v922
    %982 = vmatpush2.msra.mxu0 %v921
    %983 = vmatprep.subr.mxu0 %v918
    %984 = vmatpush2.msra.mxu0 %v917
    %985 = vmatprep.subr.mxu0 %v914
    %986 = vmatpush2.msra.mxu0 %v913
    %987 = vmatprep.subr.mxu0 %v910
    %988 = vmatpush2.msra.mxu0 %v909
    %989 = vmatprep.subr.mxu0 %v906
    %990 = vmatpush2.msra.mxu0 %v905
    %991 = vmatprep.subr.mxu0 %v902
    %992 = vmatpush2.msra.mxu0 %v901
    %993 = vmatprep.subr.mxu0 %v898
    %994 = vmatpush2.msra.mxu0 %v897
    %995 = vmatprep.subr.mxu0 %v894
    %996 = vmatpush2.msra.mxu0 %v893
    %997 = vmatprep.subr.mxu0 %v890
    %998 = vmatpush2.msra.mxu0 %v889
    %999 = vmatprep.subr.mxu0 %v886
    %1000 = vmatpush2.msra.mxu0 %v885
    %1001 = vmatprep.subr.mxu0 %v882
    %1002 = vmatpush2.msra.mxu0 %v881
    %1003 = vmatprep.subr.mxu0 %v878
    %1004 = vmatpush2.msra.mxu0 %v877
    %1005 = vmatprep.mubr.f32.mxu0 %v516
    %1006 = vmatmul.mubr.f32.gmra.mxu0 %v811
    %v1007 = vpop.f32.mrf.mxu0
    %v1008 = vadd.f32 %v472, %v1007
    %v1009 = vpop.f32.mrf.mxu0
    %v1010 = vadd.f32 %v476, %v1009
    %1011 = vdwg.mxu0
    %1012 = vmatprep.subr.mxu0 %v876
    %1013 = vmatpush1.msra.mxu0 %v875
    %1014 = vmatprep.subr.mxu0 %v872
    %1015 = vmatpush1.msra.mxu0 %v871
    %1016 = vmatprep.subr.mxu0 %v868
    %1017 = vmatpush1.msra.mxu0 %v867
    %1018 = vmatprep.subr.mxu0 %v864
    %1019 = vmatpush1.msra.mxu0 %v863
    %1020 = vmatprep.subr.mxu0 %v860
    %1021 = vmatpush1.msra.mxu0 %v859
    %1022 = vmatprep.subr.mxu0 %v856
    %1023 = vmatpush1.msra.mxu0 %v855
    %1024 = vmatprep.subr.mxu0 %v852
    %1025 = vmatpush1.msra.mxu0 %v851
    %1026 = vmatprep.subr.mxu0 %v848
    %1027 = vmatpush1.msra.mxu0 %v847
    %1028 = vmatprep.subr.mxu0 %v844
    %1029 = vmatpush1.msra.mxu0 %v843
    %1030 = vmatprep.subr.mxu0 %v840
    %1031 = vmatpush1.msra.mxu0 %v839
    %1032 = vmatprep.subr.mxu0 %v836
    %1033 = vmatpush1.msra.mxu0 %v835
    %1034 = vmatprep.subr.mxu0 %v832
    %1035 = vmatpush1.msra.mxu0 %v831
    %1036 = vmatprep.subr.mxu0 %v828
    %1037 = vmatpush1.msra.mxu0 %v827
    %1038 = vmatprep.subr.mxu0 %v824
    %1039 = vmatpush1.msra.mxu0 %v823
    %1040 = vmatprep.subr.mxu0 %v820
    %1041 = vmatpush1.msra.mxu0 %v819
    %1042 = vmatprep.subr.mxu0 %v816
    %1043 = vmatpush1.msra.mxu0 %v815
    %1044 = vmatprep.subr.mxu0 %v940
    %1045 = vmatpush2.msra.mxu0 %v939
    %1046 = vmatprep.subr.mxu0 %v936
    %1047 = vmatpush2.msra.mxu0 %v935
    %1048 = vmatprep.subr.mxu0 %v932
    %1049 = vmatpush2.msra.mxu0 %v931
    %1050 = vmatprep.subr.mxu0 %v928
    %1051 = vmatpush2.msra.mxu0 %v927
    %1052 = vmatprep.subr.mxu0 %v924
    %1053 = vmatpush2.msra.mxu0 %v923
    %1054 = vmatprep.subr.mxu0 %v920
    %1055 = vmatpush2.msra.mxu0 %v919
    %1056 = vmatprep.subr.mxu0 %v916
    %1057 = vmatpush2.msra.mxu0 %v915
    %1058 = vmatprep.subr.mxu0 %v912
    %1059 = vmatpush2.msra.mxu0 %v911
    %1060 = vmatprep.subr.mxu0 %v908
    %1061 = vmatpush2.msra.mxu0 %v907
    %1062 = vmatprep.subr.mxu0 %v904
    %1063 = vmatpush2.msra.mxu0 %v903
    %1064 = vmatprep.subr.mxu0 %v900
    %1065 = vmatpush2.msra.mxu0 %v899
    %1066 = vmatprep.subr.mxu0 %v896
    %1067 = vmatpush2.msra.mxu0 %v895
    %1068 = vmatprep.subr.mxu0 %v892
    %1069 = vmatpush2.msra.mxu0 %v891
    %1070 = vmatprep.subr.mxu0 %v888
    %1071 = vmatpush2.msra.mxu0 %v887
    %1072 = vmatprep.subr.mxu0 %v884
    %1073 = vmatpush2.msra.mxu0 %v883
    %1074 = vmatprep.subr.mxu0 %v880
    %1075 = vmatpush2.msra.mxu0 %v879
    %1076 = vmatprep.mubr.f32.mxu0 %v516
    %1077 = vmatmul.mubr.f32.gmra.mxu0 %v811
    %v1078 = vpop.f32.mrf.mxu0
    %v1079 = vadd.f32 %v480, %v1078
    %v1080 = vpop.f32.mrf.mxu0
    %v1081 = vadd.f32 %v484, %v1080
    %1082 = vdwg.mxu0
    %v1083 = vxor.u32 %v1008, 2147483648
    %v1084 = vmul.f32 %v1083, 1.442695
    %v1085 = vpow.pop %v1084
    %v1086 = vadd.f32 %v1085, 1.0
    %v1087 = vrcp.pop %v1086
    %v1088 = vmul.f32 1.0, %v1087
    %v1089 = vxor.u32 %v1010, 2147483648
    %v1090 = vmul.f32 %v1089, 1.442695
    %v1091 = vpow.pop %v1090
    %v1092 = vadd.f32 %v1091, 1.0
    %v1093 = vrcp.pop %v1092
    %v1094 = vmul.f32 1.0, %v1093
    %v1095 = vtanh.pop %v1079
    %v1096 = vxor.u32 %v1081, 2147483648
    %v1097 = vmul.f32 %v1096, 1.442695
    %v1098 = vpow.pop %v1097
    %v1099 = vadd.f32 %v1098, 1.0
    %v1100 = vrcp.pop %v1099
    %v1101 = vmul.f32 1.0, %v1100
    %v1102 = vmul.f32 %v1094, 0.0
    %v1103 = vmul.f32 %v1088, %v1095
    %v1104 = vadd.f32 %v1102, %v1103
    %v1105 = vtanh.pop %v1104
    %v1106 = vmul.f32 %v1101, %v1105
    %v1107 = vld [vmem:[#allocation8] sm:$0xff]
    %v1108 = vld [vmem:[#allocation8 + $0x8] sm:$0xff]
    %v1109 = vld [vmem:[#allocation8 + $0x10] sm:$0xff]
    %v1110 = vld [vmem:[#allocation8 + $0x18] sm:$0xff]
    %v1111 = vld [vmem:[#allocation8 + $0x20] sm:$0xff]
    %v1112 = vld [vmem:[#allocation8 + $0x28] sm:$0xff]
    %v1113 = vld [vmem:[#allocation8 + $0x30] sm:$0xff]
    %v1114 = vld [vmem:[#allocation8 + $0x38] sm:$0xff]
    %v1115 = vld [vmem:[#allocation8 + $0x40] sm:$0xff]
    %v1116 = vld [vmem:[#allocation8 + $0x48] sm:$0xff]
    %v1117 = vld [vmem:[#allocation8 + $0x50] sm:$0xff]
    %v1118 = vld [vmem:[#allocation8 + $0x58] sm:$0xff]
    %v1119 = vld [vmem:[#allocation8 + $0x60] sm:$0xff]
    %v1120 = vld [vmem:[#allocation8 + $0x68] sm:$0xff]
    %v1121 = vld [vmem:[#allocation8 + $0x70] sm:$0xff]
    %v1122 = vld [vmem:[#allocation8 + $0x78] sm:$0xff]
    %v1123 = vld [vmem:[#allocation8 + $0x80] sm:$0xff]
    %v1124 = vld [vmem:[#allocation8 + $0x88] sm:$0xff]
    %v1125 = vld [vmem:[#allocation8 + $0x90] sm:$0xff]
    %v1126 = vld [vmem:[#allocation8 + $0x98] sm:$0xff]
    %v1127 = vld [vmem:[#allocation8 + $0xa0] sm:$0xff]
    %v1128 = vld [vmem:[#allocation8 + $0xa8] sm:$0xff]
    %v1129 = vld [vmem:[#allocation8 + $0xb0] sm:$0xff]
    %v1130 = vld [vmem:[#allocation8 + $0xb8] sm:$0xff]
    %v1131 = vld [vmem:[#allocation8 + $0xc0] sm:$0xff]
    %v1132 = vld [vmem:[#allocation8 + $0xc8] sm:$0xff]
    %v1133 = vld [vmem:[#allocation8 + $0xd0] sm:$0xff]
    %v1134 = vld [vmem:[#allocation8 + $0xd8] sm:$0xff]
    %v1135 = vld [vmem:[#allocation8 + $0xe0] sm:$0xff]
    %v1136 = vld [vmem:[#allocation8 + $0xe8] sm:$0xff]
    %v1137 = vld [vmem:[#allocation8 + $0xf0] sm:$0xff]
    %v1138 = vld [vmem:[#allocation8 + $0xf8] sm:$0xff]
    %1139 = vmatprep.subr.mxu0 %v1138
    %1140 = vmatpush1.msra.mxu0 %v1137
    %1141 = vmatprep.subr.mxu0 %v1136
    %1142 = vmatpush1.msra.mxu0 %v1135
    %1143 = vmatprep.subr.mxu0 %v1134
    %1144 = vmatpush1.msra.mxu0 %v1133
    %1145 = vmatprep.subr.mxu0 %v1132
    %1146 = vmatpush1.msra.mxu0 %v1131
    %1147 = vmatprep.subr.mxu0 %v1130
    %1148 = vmatpush1.msra.mxu0 %v1129
    %1149 = vmatprep.subr.mxu0 %v1128
    %1150 = vmatpush1.msra.mxu0 %v1127
    %1151 = vmatprep.subr.mxu0 %v1126
    %1152 = vmatpush1.msra.mxu0 %v1125
    %1153 = vmatprep.subr.mxu0 %v1124
    %1154 = vmatpush1.msra.mxu0 %v1123
    %1155 = vmatprep.subr.mxu0 %v1122
    %1156 = vmatpush1.msra.mxu0 %v1121
    %1157 = vmatprep.subr.mxu0 %v1120
    %1158 = vmatpush1.msra.mxu0 %v1119
    %1159 = vmatprep.subr.mxu0 %v1118
    %1160 = vmatpush1.msra.mxu0 %v1117
    %1161 = vmatprep.subr.mxu0 %v1116
    %1162 = vmatpush1.msra.mxu0 %v1115
    %1163 = vmatprep.subr.mxu0 %v1114
    %1164 = vmatpush1.msra.mxu0 %v1113
    %1165 = vmatprep.subr.mxu0 %v1112
    %1166 = vmatpush1.msra.mxu0 %v1111
    %1167 = vmatprep.subr.mxu0 %v1110
    %1168 = vmatpush1.msra.mxu0 %v1109
    %1169 = vmatprep.subr.mxu0 %v1108
    %1170 = vmatpush1.msra.mxu0 %v1107
    %1171 = vmatprep.subr.mxu0 0.0
    %1172 = vmatpush2.msra.mxu0 0.0
    %1173 = vmatprep.subr.mxu0 0.0
    %1174 = vmatpush2.msra.mxu0 0.0
    %1175 = vmatprep.subr.mxu0 0.0
    %1176 = vmatpush2.msra.mxu0 0.0
    %1177 = vmatprep.subr.mxu0 0.0
    %1178 = vmatpush2.msra.mxu0 0.0
    %1179 = vmatprep.subr.mxu0 0.0
    %1180 = vmatpush2.msra.mxu0 0.0
    %1181 = vmatprep.subr.mxu0 0.0
    %1182 = vmatpush2.msra.mxu0 0.0
    %1183 = vmatprep.subr.mxu0 0.0
    %1184 = vmatpush2.msra.mxu0 0.0
    %1185 = vmatprep.subr.mxu0 0.0
    %1186 = vmatpush2.msra.mxu0 0.0
    %1187 = vmatprep.subr.mxu0 0.0
    %1188 = vmatpush2.msra.mxu0 0.0
    %1189 = vmatprep.subr.mxu0 0.0
    %1190 = vmatpush2.msra.mxu0 0.0
    %1191 = vmatprep.subr.mxu0 0.0
    %1192 = vmatpush2.msra.mxu0 0.0
    %1193 = vmatprep.subr.mxu0 0.0
    %1194 = vmatpush2.msra.mxu0 0.0
    %1195 = vmatprep.subr.mxu0 0.0
    %1196 = vmatpush2.msra.mxu0 0.0
    %1197 = vmatprep.subr.mxu0 0.0
    %1198 = vmatpush2.msra.mxu0 0.0
    %1199 = vmatprep.subr.mxu0 0.0
    %1200 = vmatpush2.msra.mxu0 0.0
    %1201 = vmatprep.subr.mxu0 0.0
    %1202 = vmatpush2.msra.mxu0 0.0
    %1203 = vmatprep.mubr.f32.mxu0 0.0
    %1204 = vmatmul.mubr.f32.gmra.mxu0 %v811
    %v1205 = vpop.f32.mrf.mxu0
    %v1206 = vadd.f32 %v494, %v1205
    %v1207 = vpop.f32.mrf.mxu0
    %v1208 = vadd.f32 %v498, %v1207
    %1209 = vdwg.mxu0
    %v1210 = vtanh.pop %v1206
    %v1213 = vunpack.c.l.s4 1966171168
    %v1214 = vunpack.c.0.s8 %v1213
    %v1215 = vlaneseq
    %v1216 = vshrl.u32 %v1215, 7
    %v1217 = vsub.s32 %v1214, %v1216
    %v1218 = vrot.slane %v1210, %v1217
    %v1219 = vcombine.high %v1218, %v1218
    %v1221 = vunpack.c.l.s4 1966171168
    %v1222 = vunpack.c.0.s8 %v1221
    %v1223 = vlaneseq
    %v1224 = vshrl.u32 %v1223, 7
    %v1225 = vsub.s32 %v1222, %v1224
    %v1226 = vrot.slane %v1218, %v1225
    %v1228 = vunpack.c.l.s4 1966171168
    %v1229 = vunpack.c.0.s8 %v1228
    %v1230 = vlaneseq
    %v1231 = vshrl.u32 %v1230, 7
    %v1232 = vsub.s32 %v1229, %v1231
    %v1233 = vrot.slane %v1219, %v1232
    %v1234 = vlaneseq
    %v1235 = vshrl.u32 %v1234, 7
    %v1236 = vsub.s32 0, %v1235
    %v1237 = vrot.slane %v1226, %v1236
    %v1238 = vlaneseq
    %v1239 = vshrl.u32 %v1238, 7
    %v1240 = vsub.s32 0, %v1239
    %v1241 = vrot.slane %v1233, %v1240
    %v1244 = vmul.f32 %v436, %v1237
    %v1245 = vmul.f32 %v437, %v1237
    %v1246 = vmul.f32 %v438, %v1241
    %v1247 = vmul.f32 %v439, %v1241
    %1248 = vadd.xlane.f32.xlu0 %v1244
    %v1249 = vpop.xlane.xlu0 %1248
    %1250 = vadd.xlane.f32.xlu0 %v1245
    %v1251 = vpop.xlane.xlu0 %1250
    %1252 = vadd.xlane.f32.xlu0 %v1246
    %v1253 = vpop.xlane.xlu0 %1252
    %1254 = vadd.xlane.f32.xlu0 %v1247
    %v1255 = vpop.xlane.xlu0 %1254
    %v1260 = vlaneseq
    %v1261 = vand.u32 %v1260, 127
    %v1262 = vlaneseq
    %v1263 = vshrl.u32 %v1262, 7
    %v1264 = vsub.s32 %v1261, %v1263
    %v1265 = vrot.slane %v1249, %v1264
    %v1266 = vadd.s32 %v1261, 4294967288
    %v1267 = vlaneseq
    %v1268 = vshrl.u32 %v1267, 7
    %v1269 = vsub.s32 %v1266, %v1268
    %v1270 = vrot.slane %v1251, %v1269
    %vm1271 = vcmask 130112
    %v1272 = vsel %vm1271, %v1270, %v1265
    %v1273 = vlaneseq
    %v1274 = vshrl.u32 %v1273, 7
    %v1275 = vsub.s32 %v1261, %v1274
    %v1276 = vrot.slane %v1253, %v1275
    %v1277 = vlaneseq
    %v1278 = vshrl.u32 %v1277, 7
    %v1279 = vsub.s32 %v1266, %v1278
    %v1280 = vrot.slane %v1255, %v1279
    %v1281 = vsel %vm1271, %v1280, %v1276
    %vm1282 = vcmask 1041409
    %v1283 = vsel %vm1282, %v1281, %v1272
    %vm1285 = vcmask 123904
    %v1286 = vsel %vm1285, %v1283, -inf
    %1287 = vmax.xlane.f32.xlu0 %v1286
    %v1288 = vpop.xlane.xlu0 %1287
    %v1290 = vlaneseq
    %v1291 = vshrl.u32 %v1290, 7
    %v1292 = vsub.s32 0, %v1291
    %v1293 = vrot.slane %v1288, %v1292
    %v1294 = vlaneseq
    %v1295 = vshrl.u32 %v1294, 7
    %v1296 = vsub.s32 1, %v1295
    %v1297 = vrot.slane %v1288, %v1296
    %v1300 = vsub.f32 %v1249, %v1293
    %v1301 = vsub.f32 %v1251, %v1293
    %v1302 = vsub.f32 %v1253, %v1297
    %v1303 = vsub.f32 %v1255, %v1297
    %v1304 = vmul.f32 %v1300, 1.442695
    %v1305 = vpow.pop %v1304
    %v1306 = vmul.f32 %v1301, 1.442695
    %v1307 = vpow.pop %v1306
    %v1308 = vmul.f32 %v1302, 1.442695
    %v1309 = vpow.pop %v1308
    %v1310 = vmul.f32 %v1303, 1.442695
    %v1311 = vpow.pop %v1310
    %1316 = vset.pattern.permute.xlu0 0
    %1317 = vperm.xlu0 %1316, %v1305
    %v1318 = vpop.permute.xlu0 %1317
    %1319 = vset.pattern.permute.xlu0 0
    %1320 = vperm.xlu0 %1319, %v1307
    %v1321 = vpop.permute.xlu0 %1320
    %1322 = vset.pattern.permute.xlu0 0
    %1323 = vperm.xlu0 %1322, %v1309
    %v1324 = vpop.permute.xlu0 %1323
    %1325 = vset.pattern.permute.xlu0 0
    %1326 = vperm.xlu0 %1325, %v1311
    %v1327 = vpop.permute.xlu0 %1326
    %v1328 = vlaneseq
    %v1329 = vshrl.u32 %v1328, 7
    %v1330 = vsub.s32 %v1261, %v1329
    %v1331 = vrot.slane %v1318, %v1330
    %v1332 = vlaneseq
    %v1333 = vshrl.u32 %v1332, 7
    %v1334 = vsub.s32 %v1266, %v1333
    %v1335 = vrot.slane %v1321, %v1334
    %v1336 = vsel %vm1271, %v1335, %v1331
    %v1337 = vlaneseq
    %v1338 = vshrl.u32 %v1337, 7
    %v1339 = vsub.s32 %v1261, %v1338
    %v1340 = vrot.slane %v1324, %v1339
    %v1341 = vlaneseq
    %v1342 = vshrl.u32 %v1341, 7
    %v1343 = vsub.s32 %v1266, %v1342
    %v1344 = vrot.slane %v1327, %v1343
    %v1345 = vsel %vm1271, %v1344, %v1340
    %v1346 = vsel %vm1282, %v1345, %v1336
    %v1348 = vsel %vm1285, %v1346, 0.0
    %1349 = vadd.xlane.f32.xlu0 %v1348
    %v1350 = vpop.xlane.xlu0 %1349
    %v1351 = vrcp.pop %v1350
    %v1353 = vlaneseq
    %v1354 = vshrl.u32 %v1353, 7
    %v1355 = vsub.s32 0, %v1354
    %v1356 = vrot.slane %v1351, %v1355
    %v1357 = vlaneseq
    %v1358 = vshrl.u32 %v1357, 7
    %v1359 = vsub.s32 1, %v1358
    %v1360 = vrot.slane %v1351, %v1359
    %v1363 = vmul.f32 %v1305, %v1356
    %v1364 = vmul.f32 %v1307, %v1356
    %v1365 = vmul.f32 %v1309, %v1360
    %v1366 = vmul.f32 %v1311, %v1360
    %1369 = vset.pattern.permute.xlu0 0
    %1370 = vperm.xlu0 %1369, %v1363
    %v1371 = vpop.permute.xlu0 %1370
    %1372 = vset.pattern.permute.xlu0 0
    %1373 = vperm.xlu0 %1372, %v1364
    %v1374 = vpop.permute.xlu0 %1373
    %v1375 = vlaneseq
    %v1376 = vshrl.u32 %v1375, 7
    %v1377 = vsub.s32 %v1261, %v1376
    %v1378 = vrot.slane %v1371, %v1377
    %v1379 = vlaneseq
    %v1380 = vshrl.u32 %v1379, 7
    %v1381 = vsub.s32 %v1266, %v1380
    %v1382 = vrot.slane %v1374, %v1381
    %v1383 = vsel %vm1271, %v1382, %v1378
    %v1384 = vsel %vm182, %v1383, 0
    %1386 = vmatprep.subr.mxu0 0.0
    %1387 = vmatpush1.msra.mxu0 0.0
    %1388 = vmatprep.subr.mxu0 0.0
    %1389 = vmatpush1.msra.mxu0 0.0
    %1390 = vmatprep.subr.mxu0 0.0
    %1391 = vmatpush1.msra.mxu0 0.0
    %1392 = vmatprep.subr.mxu0 0.0
    %1393 = vmatpush1.msra.mxu0 0.0
    %1394 = vmatprep.subr.mxu0 0.0
    %1395 = vmatpush1.msra.mxu0 0.0
    %1396 = vmatprep.subr.mxu0 0.0
    %1397 = vmatpush1.msra.mxu0 0.0
    %1398 = vmatprep.subr.mxu0 0.0
    %1399 = vmatpush1.msra.mxu0 0.0
    %1400 = vmatprep.subr.mxu0 0.0
    %1401 = vmatpush1.msra.mxu0 0.0
    %1402 = vmatprep.subr.mxu0 0.0
    %1403 = vmatpush1.msra.mxu0 0.0
    %1404 = vmatprep.subr.mxu0 0.0
    %1405 = vmatpush1.msra.mxu0 0.0
    %1406 = vmatprep.subr.mxu0 0.0
    %1407 = vmatpush1.msra.mxu0 0.0
    %1408 = vmatprep.subr.mxu0 0.0
    %1409 = vmatpush1.msra.mxu0 0.0
    %1410 = vmatprep.subr.mxu0 0.0
    %1411 = vmatpush1.msra.mxu0 0.0
    %1412 = vmatprep.subr.mxu0 0.0
    %1413 = vmatpush1.msra.mxu0 0.0
    %1414 = vmatprep.subr.mxu0 0.0
    %1415 = vmatpush1.msra.mxu0 %v315
    %1416 = vmatprep.subr.mxu0 0.0
    %1417 = vmatpush1.msra.mxu0 %v314
    %1418 = vmatprep.subr.mxu0 0.0
    %1419 = vmatpush2.msra.mxu0 0.0
    %1420 = vmatprep.subr.mxu0 0.0
    %1421 = vmatpush2.msra.mxu0 0.0
    %1422 = vmatprep.subr.mxu0 0.0
    %1423 = vmatpush2.msra.mxu0 0.0
    %1424 = vmatprep.subr.mxu0 0.0
    %1425 = vmatpush2.msra.mxu0 0.0
    %1426 = vmatprep.subr.mxu0 0.0
    %1427 = vmatpush2.msra.mxu0 0.0
    %1428 = vmatprep.subr.mxu0 0.0
    %1429 = vmatpush2.msra.mxu0 0.0
    %1430 = vmatprep.subr.mxu0 0.0
    %1431 = vmatpush2.msra.mxu0 0.0
    %1432 = vmatprep.subr.mxu0 0.0
    %1433 = vmatpush2.msra.mxu0 0.0
    %1434 = vmatprep.subr.mxu0 0.0
    %1435 = vmatpush2.msra.mxu0 0.0
    %1436 = vmatprep.subr.mxu0 0.0
    %1437 = vmatpush2.msra.mxu0 0.0
    %1438 = vmatprep.subr.mxu0 0.0
    %1439 = vmatpush2.msra.mxu0 0.0
    %1440 = vmatprep.subr.mxu0 0.0
    %1441 = vmatpush2.msra.mxu0 0.0
    %1442 = vmatprep.subr.mxu0 0.0
    %1443 = vmatpush2.msra.mxu0 0.0
    %1444 = vmatprep.subr.mxu0 0.0
    %1445 = vmatpush2.msra.mxu0 0.0
    %1446 = vmatprep.subr.mxu0 0.0
    %1447 = vmatpush2.msra.mxu0 0.0
    %1448 = vmatprep.subr.mxu0 0.0
    %1449 = vmatpush2.msra.mxu0 0.0
    %1450 = vmatprep.mubr.f32.mxu0 0.0
    %1451 = vmatmul.mubr.f32.gmra.mxu0 %v1384
    %v1452 = vpop.f32.mrf.mxu0
    %v1453 = vadd.f32 0.0, %v1452
    %v1454 = vpop.f32.mrf.mxu0
    %1455 = vdwg.mxu0
    %1458 = vset.pattern.permute.xlu0 0
    %1459 = vperm.xlu0 %1458, %v1365
    %v1460 = vpop.permute.xlu0 %1459
    %1461 = vset.pattern.permute.xlu0 0
    %1462 = vperm.xlu0 %1461, %v1366
    %v1463 = vpop.permute.xlu0 %1462
    %v1464 = vlaneseq
    %v1465 = vshrl.u32 %v1464, 7
    %v1466 = vsub.s32 %v1261, %v1465
    %v1467 = vrot.slane %v1460, %v1466
    %v1468 = vlaneseq
    %v1469 = vshrl.u32 %v1468, 7
    %v1470 = vsub.s32 %v1266, %v1469
    %v1471 = vrot.slane %v1463, %v1470
    %v1472 = vsel %vm1271, %v1471, %v1467
    %v1473 = vsel %vm182, %v1472, 0
    %1475 = vmatprep.subr.mxu0 0.0
    %1476 = vmatpush1.msra.mxu0 0.0
    %1477 = vmatprep.subr.mxu0 0.0
    %1478 = vmatpush1.msra.mxu0 0.0
    %1479 = vmatprep.subr.mxu0 0.0
    %1480 = vmatpush1.msra.mxu0 0.0
    %1481 = vmatprep.subr.mxu0 0.0
    %1482 = vmatpush1.msra.mxu0 0.0
    %1483 = vmatprep.subr.mxu0 0.0
    %1484 = vmatpush1.msra.mxu0 0.0
    %1485 = vmatprep.subr.mxu0 0.0
    %1486 = vmatpush1.msra.mxu0 0.0
    %1487 = vmatprep.subr.mxu0 0.0
    %1488 = vmatpush1.msra.mxu0 0.0
    %1489 = vmatprep.subr.mxu0 0.0
    %1490 = vmatpush1.msra.mxu0 0.0
    %1491 = vmatprep.subr.mxu0 0.0
    %1492 = vmatpush1.msra.mxu0 0.0
    %1493 = vmatprep.subr.mxu0 0.0
    %1494 = vmatpush1.msra.mxu0 0.0
    %1495 = vmatprep.subr.mxu0 0.0
    %1496 = vmatpush1.msra.mxu0 0.0
    %1497 = vmatprep.subr.mxu0 0.0
    %1498 = vmatpush1.msra.mxu0 0.0
    %1499 = vmatprep.subr.mxu0 0.0
    %1500 = vmatpush1.msra.mxu0 0.0
    %1501 = vmatprep.subr.mxu0 0.0
    %1502 = vmatpush1.msra.mxu0 0.0
    %1503 = vmatprep.subr.mxu0 0.0
    %1504 = vmatpush1.msra.mxu0 %v431
    %1505 = vmatprep.subr.mxu0 0.0
    %1506 = vmatpush1.msra.mxu0 %v430
    %1507 = vmatprep.subr.mxu0 0.0
    %1508 = vmatpush2.msra.mxu0 0.0
    %1509 = vmatprep.subr.mxu0 0.0
    %1510 = vmatpush2.msra.mxu0 0.0
    %1511 = vmatprep.subr.mxu0 0.0
    %1512 = vmatpush2.msra.mxu0 0.0
    %1513 = vmatprep.subr.mxu0 0.0
    %1514 = vmatpush2.msra.mxu0 0.0
    %1515 = vmatprep.subr.mxu0 0.0
    %1516 = vmatpush2.msra.mxu0 0.0
    %1517 = vmatprep.subr.mxu0 0.0
    %1518 = vmatpush2.msra.mxu0 0.0
    %1519 = vmatprep.subr.mxu0 0.0
    %1520 = vmatpush2.msra.mxu0 0.0
    %1521 = vmatprep.subr.mxu0 0.0
    %1522 = vmatpush2.msra.mxu0 0.0
    %1523 = vmatprep.subr.mxu0 0.0
    %1524 = vmatpush2.msra.mxu0 0.0
    %1525 = vmatprep.subr.mxu0 0.0
    %1526 = vmatpush2.msra.mxu0 0.0
    %1527 = vmatprep.subr.mxu0 0.0
    %1528 = vmatpush2.msra.mxu0 0.0
    %1529 = vmatprep.subr.mxu0 0.0
    %1530 = vmatpush2.msra.mxu0 0.0
    %1531 = vmatprep.subr.mxu0 0.0
    %1532 = vmatpush2.msra.mxu0 0.0
    %1533 = vmatprep.subr.mxu0 0.0
    %1534 = vmatpush2.msra.mxu0 0.0
    %1535 = vmatprep.subr.mxu0 0.0
    %1536 = vmatpush2.msra.mxu0 0.0
    %1537 = vmatprep.subr.mxu0 0.0
    %1538 = vmatpush2.msra.mxu0 0.0
    %1539 = vmatprep.mubr.f32.mxu0 0.0
    %1540 = vmatmul.mubr.f32.gmra.mxu0 %v1473
    %v1541 = vpop.f32.mrf.mxu0
    %v1542 = vadd.f32 0.0, %v1541
    %v1543 = vpop.f32.mrf.mxu0
    %1544 = vdwg.mxu0
    %v1545 = vld [vmem:[#allocation11] sm:$0xff]
    %v1546 = vld [vmem:[#allocation11 + $0x8] sm:$0xff]
    %v1547 = vld [vmem:[#allocation11 + $0x10] sm:$0xff]
    %v1548 = vld [vmem:[#allocation11 + $0x18] sm:$0xff]
    %v1549 = vld [vmem:[#allocation11 + $0x20] sm:$0xff]
    %v1550 = vld [vmem:[#allocation11 + $0x28] sm:$0xff]
    %v1551 = vld [vmem:[#allocation11 + $0x30] sm:$0xff]
    %v1552 = vld [vmem:[#allocation11 + $0x38] sm:$0xff]
    %v1553 = vld [vmem:[#allocation11 + $0x40] sm:$0xff]
    %v1554 = vld [vmem:[#allocation11 + $0x48] sm:$0xff]
    %v1555 = vld [vmem:[#allocation11 + $0x50] sm:$0xff]
    %v1556 = vld [vmem:[#allocation11 + $0x58] sm:$0xff]
    %v1557 = vld [vmem:[#allocation11 + $0x60] sm:$0xff]
    %v1558 = vld [vmem:[#allocation11 + $0x68] sm:$0xff]
    %v1559 = vld [vmem:[#allocation11 + $0x70] sm:$0xff]
    %v1560 = vld [vmem:[#allocation11 + $0x78] sm:$0xff]
    %v1563 = vrot.slane %v1542, 7
    %v1564 = vsel %vm1282, %v1563, %v1453
    %1566 = vmatprep.subr.mxu0 0.0
    %1567 = vmatpush1.msra.mxu0 %v1560
    %1568 = vmatprep.subr.mxu0 0.0
    %1569 = vmatpush1.msra.mxu0 %v1559
    %1570 = vmatprep.subr.mxu0 0.0
    %1571 = vmatpush1.msra.mxu0 %v1558
    %1572 = vmatprep.subr.mxu0 0.0
    %1573 = vmatpush1.msra.mxu0 %v1557
    %1574 = vmatprep.subr.mxu0 0.0
    %1575 = vmatpush1.msra.mxu0 %v1556
    %1576 = vmatprep.subr.mxu0 0.0
    %1577 = vmatpush1.msra.mxu0 %v1555
    %1578 = vmatprep.subr.mxu0 0.0
    %1579 = vmatpush1.msra.mxu0 %v1554
    %1580 = vmatprep.subr.mxu0 0.0
    %1581 = vmatpush1.msra.mxu0 %v1553
    %1582 = vmatprep.subr.mxu0 0.0
    %1583 = vmatpush1.msra.mxu0 %v1552
    %1584 = vmatprep.subr.mxu0 0.0
    %1585 = vmatpush1.msra.mxu0 %v1551
    %1586 = vmatprep.subr.mxu0 0.0
    %1587 = vmatpush1.msra.mxu0 %v1550
    %1588 = vmatprep.subr.mxu0 0.0
    %1589 = vmatpush1.msra.mxu0 %v1549
    %1590 = vmatprep.subr.mxu0 0.0
    %1591 = vmatpush1.msra.mxu0 %v1548
    %1592 = vmatprep.subr.mxu0 0.0
    %1593 = vmatpush1.msra.mxu0 %v1547
    %1594 = vmatprep.subr.mxu0 0.0
    %1595 = vmatpush1.msra.mxu0 %v1546
    %1596 = vmatprep.subr.mxu0 0.0
    %1597 = vmatpush1.msra.mxu0 %v1545
    %1598 = vmatprep.subr.mxu0 0.0
    %1599 = vmatpush2.msra.mxu0 0.0
    %1600 = vmatprep.subr.mxu0 0.0
    %1601 = vmatpush2.msra.mxu0 0.0
    %1602 = vmatprep.subr.mxu0 0.0
    %1603 = vmatpush2.msra.mxu0 0.0
    %1604 = vmatprep.subr.mxu0 0.0
    %1605 = vmatpush2.msra.mxu0 0.0
    %1606 = vmatprep.subr.mxu0 0.0
    %1607 = vmatpush2.msra.mxu0 0.0
    %1608 = vmatprep.subr.mxu0 0.0
    %1609 = vmatpush2.msra.mxu0 0.0
    %1610 = vmatprep.subr.mxu0 0.0
    %1611 = vmatpush2.msra.mxu0 0.0
    %1612 = vmatprep.subr.mxu0 0.0
    %1613 = vmatpush2.msra.mxu0 0.0
    %1614 = vmatprep.subr.mxu0 0.0
    %1615 = vmatpush2.msra.mxu0 0.0
    %1616 = vmatprep.subr.mxu0 0.0
    %1617 = vmatpush2.msra.mxu0 0.0
    %1618 = vmatprep.subr.mxu0 0.0
    %1619 = vmatpush2.msra.mxu0 0.0
    %1620 = vmatprep.subr.mxu0 0.0
    %1621 = vmatpush2.msra.mxu0 0.0
    %1622 = vmatprep.subr.mxu0 0.0
    %1623 = vmatpush2.msra.mxu0 0.0
    %1624 = vmatprep.subr.mxu0 0.0
    %1625 = vmatpush2.msra.mxu0 0.0
    %1626 = vmatprep.subr.mxu0 0.0
    %1627 = vmatpush2.msra.mxu0 0.0
    %1628 = vmatprep.subr.mxu0 0.0
    %1629 = vmatpush2.msra.mxu0 0.0
    %1630 = vmatprep.mubr.f32.mxu0 0.0
    %1631 = vmatmul.mubr.f32.gmra.mxu0 %v1564
    %v1632 = vpop.f32.mrf.mxu0
    %v1633 = vadd.f32 %v1208, %v1632
    %v1634 = vpop.f32.mrf.mxu0
    %1635 = vdwg.mxu0
    %v1636 = vtanh.pop %v1633
    %s1637 = scalar_lea.vmem [#allocation8], 256
    %v1638 = vld [vmem:[%s1637] sm:$0xff]
    %v1639 = vld [vmem:[%s1637 + $0x8] sm:$0xff]
    %v1640 = vld [vmem:[%s1637 + $0x10] sm:$0xff]
    %v1641 = vld [vmem:[%s1637 + $0x18] sm:$0xff]
    %v1642 = vld [vmem:[%s1637 + $0x20] sm:$0xff]
    %v1643 = vld [vmem:[%s1637 + $0x28] sm:$0xff]
    %v1644 = vld [vmem:[%s1637 + $0x30] sm:$0xff]
    %v1645 = vld [vmem:[%s1637 + $0x38] sm:$0xff]
    %v1646 = vld [vmem:[%s1637 + $0x40] sm:$0xff]
    %v1647 = vld [vmem:[%s1637 + $0x48] sm:$0xff]
    %v1648 = vld [vmem:[%s1637 + $0x50] sm:$0xff]
    %v1649 = vld [vmem:[%s1637 + $0x58] sm:$0xff]
    %v1650 = vld [vmem:[%s1637 + $0x60] sm:$0xff]
    %v1651 = vld [vmem:[%s1637 + $0x68] sm:$0xff]
    %v1652 = vld [vmem:[%s1637 + $0x70] sm:$0xff]
    %v1653 = vld [vmem:[%s1637 + $0x78] sm:$0xff]
    %v1654 = vld [vmem:[%s1637 + $0x80] sm:$0xff]
    %v1655 = vld [vmem:[%s1637 + $0x88] sm:$0xff]
    %v1656 = vld [vmem:[%s1637 + $0x90] sm:$0xff]
    %v1657 = vld [vmem:[%s1637 + $0x98] sm:$0xff]
    %v1658 = vld [vmem:[%s1637 + $0xa0] sm:$0xff]
    %v1659 = vld [vmem:[%s1637 + $0xa8] sm:$0xff]
    %v1660 = vld [vmem:[%s1637 + $0xb0] sm:$0xff]
    %v1661 = vld [vmem:[%s1637 + $0xb8] sm:$0xff]
    %v1662 = vld [vmem:[%s1637 + $0xc0] sm:$0xff]
    %v1663 = vld [vmem:[%s1637 + $0xc8] sm:$0xff]
    %v1664 = vld [vmem:[%s1637 + $0xd0] sm:$0xff]
    %v1665 = vld [vmem:[%s1637 + $0xd8] sm:$0xff]
    %v1666 = vld [vmem:[%s1637 + $0xe0] sm:$0xff]
    %v1667 = vld [vmem:[%s1637 + $0xe8] sm:$0xff]
    %v1668 = vld [vmem:[%s1637 + $0xf0] sm:$0xff]
    %v1669 = vld [vmem:[%s1637 + $0xf8] sm:$0xff]
    %1670 = vmatprep.subr.mxu0 %v1669
    %1671 = vmatpush1.msra.mxu0 %v1668
    %1672 = vmatprep.subr.mxu0 %v1667
    %1673 = vmatpush1.msra.mxu0 %v1666
    %1674 = vmatprep.subr.mxu0 %v1665
    %1675 = vmatpush1.msra.mxu0 %v1664
    %1676 = vmatprep.subr.mxu0 %v1663
    %1677 = vmatpush1.msra.mxu0 %v1662
    %1678 = vmatprep.subr.mxu0 %v1661
    %1679 = vmatpush1.msra.mxu0 %v1660
    %1680 = vmatprep.subr.mxu0 %v1659
    %1681 = vmatpush1.msra.mxu0 %v1658
    %1682 = vmatprep.subr.mxu0 %v1657
    %1683 = vmatpush1.msra.mxu0 %v1656
    %1684 = vmatprep.subr.mxu0 %v1655
    %1685 = vmatpush1.msra.mxu0 %v1654
    %1686 = vmatprep.subr.mxu0 %v1653
    %1687 = vmatpush1.msra.mxu0 %v1652
    %1688 = vmatprep.subr.mxu0 %v1651
    %1689 = vmatpush1.msra.mxu0 %v1650
    %1690 = vmatprep.subr.mxu0 %v1649
    %1691 = vmatpush1.msra.mxu0 %v1648
    %1692 = vmatprep.subr.mxu0 %v1647
    %1693 = vmatpush1.msra.mxu0 %v1646
    %1694 = vmatprep.subr.mxu0 %v1645
    %1695 = vmatpush1.msra.mxu0 %v1644
    %1696 = vmatprep.subr.mxu0 %v1643
    %1697 = vmatpush1.msra.mxu0 %v1642
    %1698 = vmatprep.subr.mxu0 %v1641
    %1699 = vmatpush1.msra.mxu0 %v1640
    %1700 = vmatprep.subr.mxu0 %v1639
    %1701 = vmatpush1.msra.mxu0 %v1638
    %1702 = vmatprep.subr.mxu0 0.0
    %1703 = vmatpush2.msra.mxu0 0.0
    %1704 = vmatprep.subr.mxu0 0.0
    %1705 = vmatpush2.msra.mxu0 0.0
    %1706 = vmatprep.subr.mxu0 0.0
    %1707 = vmatpush2.msra.mxu0 0.0
    %1708 = vmatprep.subr.mxu0 0.0
    %1709 = vmatpush2.msra.mxu0 0.0
    %1710 = vmatprep.subr.mxu0 0.0
    %1711 = vmatpush2.msra.mxu0 0.0
    %1712 = vmatprep.subr.mxu0 0.0
    %1713 = vmatpush2.msra.mxu0 0.0
    %1714 = vmatprep.subr.mxu0 0.0
    %1715 = vmatpush2.msra.mxu0 0.0
    %1716 = vmatprep.subr.mxu0 0.0
    %1717 = vmatpush2.msra.mxu0 0.0
    %1718 = vmatprep.subr.mxu0 0.0
    %1719 = vmatpush2.msra.mxu0 0.0
    %1720 = vmatprep.subr.mxu0 0.0
    %1721 = vmatpush2.msra.mxu0 0.0
    %1722 = vmatprep.subr.mxu0 0.0
    %1723 = vmatpush2.msra.mxu0 0.0
    %1724 = vmatprep.subr.mxu0 0.0
    %1725 = vmatpush2.msra.mxu0 0.0
    %1726 = vmatprep.subr.mxu0 0.0
    %1727 = vmatpush2.msra.mxu0 0.0
    %1728 = vmatprep.subr.mxu0 0.0
    %1729 = vmatpush2.msra.mxu0 0.0
    %1730 = vmatprep.subr.mxu0 0.0
    %1731 = vmatpush2.msra.mxu0 0.0
    %1732 = vmatprep.subr.mxu0 0.0
    %1733 = vmatpush2.msra.mxu0 0.0
    %1734 = vmatprep.mubr.f32.mxu0 0.0
    %1735 = vmatmul.mubr.f32.gmra.mxu0 %v1106
    %v1736 = vpop.f32.mrf.mxu0
    %v1737 = vadd.f32 %v507, %v1736
    %v1738 = vpop.f32.mrf.mxu0
    %v1739 = vadd.f32 %v511, %v1738
    %1740 = vdwg.mxu0
    %v1741 = vtanh.pop %v1737
    %v1744 = vunpack.c.l.s4 1966171168
    %v1745 = vunpack.c.0.s8 %v1744
    %v1746 = vlaneseq
    %v1747 = vshrl.u32 %v1746, 7
    %v1748 = vsub.s32 %v1745, %v1747
    %v1749 = vrot.slane %v1741, %v1748
    %v1750 = vcombine.high %v1749, %v1749
    %v1752 = vunpack.c.l.s4 1966171168
    %v1753 = vunpack.c.0.s8 %v1752
    %v1754 = vlaneseq
    %v1755 = vshrl.u32 %v1754, 7
    %v1756 = vsub.s32 %v1753, %v1755
    %v1757 = vrot.slane %v1749, %v1756
    %v1759 = vunpack.c.l.s4 1966171168
    %v1760 = vunpack.c.0.s8 %v1759
    %v1761 = vlaneseq
    %v1762 = vshrl.u32 %v1761, 7
    %v1763 = vsub.s32 %v1760, %v1762
    %v1764 = vrot.slane %v1750, %v1763
    %v1765 = vlaneseq
    %v1766 = vshrl.u32 %v1765, 7
    %v1767 = vsub.s32 0, %v1766
    %v1768 = vrot.slane %v1757, %v1767
    %v1769 = vlaneseq
    %v1770 = vshrl.u32 %v1769, 7
    %v1771 = vsub.s32 0, %v1770
    %v1772 = vrot.slane %v1764, %v1771
    %v1775 = vmul.f32 %v440, %v1768
    %v1776 = vmul.f32 %v441, %v1768
    %v1777 = vmul.f32 %v442, %v1772
    %v1778 = vmul.f32 %v443, %v1772
    %1779 = vadd.xlane.f32.xlu0 %v1775
    %v1780 = vpop.xlane.xlu0 %1779
    %1781 = vadd.xlane.f32.xlu0 %v1776
    %v1782 = vpop.xlane.xlu0 %1781
    %1783 = vadd.xlane.f32.xlu0 %v1777
    %v1784 = vpop.xlane.xlu0 %1783
    %1785 = vadd.xlane.f32.xlu0 %v1778
    %v1786 = vpop.xlane.xlu0 %1785
    %v1791 = vlaneseq
    %v1792 = vshrl.u32 %v1791, 7
    %v1793 = vsub.s32 %v1261, %v1792
    %v1794 = vrot.slane %v1780, %v1793
    %v1795 = vlaneseq
    %v1796 = vshrl.u32 %v1795, 7
    %v1797 = vsub.s32 %v1266, %v1796
    %v1798 = vrot.slane %v1782, %v1797
    %v1799 = vsel %vm1271, %v1798, %v1794
    %v1800 = vlaneseq
    %v1801 = vshrl.u32 %v1800, 7
    %v1802 = vsub.s32 %v1261, %v1801
    %v1803 = vrot.slane %v1784, %v1802
    %v1804 = vlaneseq
    %v1805 = vshrl.u32 %v1804, 7
    %v1806 = vsub.s32 %v1266, %v1805
    %v1807 = vrot.slane %v1786, %v1806
    %v1808 = vsel %vm1271, %v1807, %v1803
    %v1809 = vsel %vm1282, %v1808, %v1799
    %v1811 = vsel %vm1285, %v1809, -inf
    %1812 = vmax.xlane.f32.xlu0 %v1811
    %v1813 = vpop.xlane.xlu0 %1812
    %v1815 = vlaneseq
    %v1816 = vshrl.u32 %v1815, 7
    %v1817 = vsub.s32 0, %v1816
    %v1818 = vrot.slane %v1813, %v1817
    %v1819 = vlaneseq
    %v1820 = vshrl.u32 %v1819, 7
    %v1821 = vsub.s32 1, %v1820
    %v1822 = vrot.slane %v1813, %v1821
    %v1825 = vsub.f32 %v1780, %v1818
    %v1826 = vsub.f32 %v1782, %v1818
    %v1827 = vsub.f32 %v1784, %v1822
    %v1828 = vsub.f32 %v1786, %v1822
    %v1829 = vmul.f32 %v1825, 1.442695
    %v1830 = vpow.pop %v1829
    %v1831 = vmul.f32 %v1826, 1.442695
    %v1832 = vpow.pop %v1831
    %v1833 = vmul.f32 %v1827, 1.442695
    %v1834 = vpow.pop %v1833
    %v1835 = vmul.f32 %v1828, 1.442695
    %v1836 = vpow.pop %v1835
    %1841 = vset.pattern.permute.xlu0 0
    %1842 = vperm.xlu0 %1841, %v1830
    %v1843 = vpop.permute.xlu0 %1842
    %1844 = vset.pattern.permute.xlu0 0
    %1845 = vperm.xlu0 %1844, %v1832
    %v1846 = vpop.permute.xlu0 %1845
    %1847 = vset.pattern.permute.xlu0 0
    %1848 = vperm.xlu0 %1847, %v1834
    %v1849 = vpop.permute.xlu0 %1848
    %1850 = vset.pattern.permute.xlu0 0
    %1851 = vperm.xlu0 %1850, %v1836
    %v1852 = vpop.permute.xlu0 %1851
    %v1853 = vlaneseq
    %v1854 = vshrl.u32 %v1853, 7
    %v1855 = vsub.s32 %v1261, %v1854
    %v1856 = vrot.slane %v1843, %v1855
    %v1857 = vlaneseq
    %v1858 = vshrl.u32 %v1857, 7
    %v1859 = vsub.s32 %v1266, %v1858
    %v1860 = vrot.slane %v1846, %v1859
    %v1861 = vsel %vm1271, %v1860, %v1856
    %v1862 = vlaneseq
    %v1863 = vshrl.u32 %v1862, 7
    %v1864 = vsub.s32 %v1261, %v1863
    %v1865 = vrot.slane %v1849, %v1864
    %v1866 = vlaneseq
    %v1867 = vshrl.u32 %v1866, 7
    %v1868 = vsub.s32 %v1266, %v1867
    %v1869 = vrot.slane %v1852, %v1868
    %v1870 = vsel %vm1271, %v1869, %v1865
    %v1871 = vsel %vm1282, %v1870, %v1861
    %v1873 = vsel %vm1285, %v1871, 0.0
    %1874 = vadd.xlane.f32.xlu0 %v1873
    %v1875 = vpop.xlane.xlu0 %1874
    %v1876 = vrcp.pop %v1875
    %v1878 = vlaneseq
    %v1879 = vshrl.u32 %v1878, 7
    %v1880 = vsub.s32 0, %v1879
    %v1881 = vrot.slane %v1876, %v1880
    %v1882 = vlaneseq
    %v1883 = vshrl.u32 %v1882, 7
    %v1884 = vsub.s32 1, %v1883
    %v1885 = vrot.slane %v1876, %v1884
    %v1888 = vmul.f32 %v1830, %v1881
    %v1889 = vmul.f32 %v1832, %v1881
    %v1890 = vmul.f32 %v1834, %v1885
    %v1891 = vmul.f32 %v1836, %v1885
    %1894 = vset.pattern.permute.xlu0 0
    %1895 = vperm.xlu0 %1894, %v1888
    %v1896 = vpop.permute.xlu0 %1895
    %1897 = vset.pattern.permute.xlu0 0
    %1898 = vperm.xlu0 %1897, %v1889
    %v1899 = vpop.permute.xlu0 %1898
    %v1900 = vlaneseq
    %v1901 = vshrl.u32 %v1900, 7
    %v1902 = vsub.s32 %v1261, %v1901
    %v1903 = vrot.slane %v1896, %v1902
    %v1904 = vlaneseq
    %v1905 = vshrl.u32 %v1904, 7
    %v1906 = vsub.s32 %v1266, %v1905
    %v1907 = vrot.slane %v1899, %v1906
    %v1908 = vsel %vm1271, %v1907, %v1903
    %v1909 = vsel %vm182, %v1908, 0
    %1911 = vmatprep.subr.mxu0 0.0
    %1912 = vmatpush1.msra.mxu0 0.0
    %1913 = vmatprep.subr.mxu0 0.0
    %1914 = vmatpush1.msra.mxu0 0.0
    %1915 = vmatprep.subr.mxu0 0.0
    %1916 = vmatpush1.msra.mxu0 0.0
    %1917 = vmatprep.subr.mxu0 0.0
    %1918 = vmatpush1.msra.mxu0 0.0
    %1919 = vmatprep.subr.mxu0 0.0
    %1920 = vmatpush1.msra.mxu0 0.0
    %1921 = vmatprep.subr.mxu0 0.0
    %1922 = vmatpush1.msra.mxu0 0.0
    %1923 = vmatprep.subr.mxu0 0.0
    %1924 = vmatpush1.msra.mxu0 0.0
    %1925 = vmatprep.subr.mxu0 0.0
    %1926 = vmatpush1.msra.mxu0 0.0
    %1927 = vmatprep.subr.mxu0 0.0
    %1928 = vmatpush1.msra.mxu0 0.0
    %1929 = vmatprep.subr.mxu0 0.0
    %1930 = vmatpush1.msra.mxu0 0.0
    %1931 = vmatprep.subr.mxu0 0.0
    %1932 = vmatpush1.msra.mxu0 0.0
    %1933 = vmatprep.subr.mxu0 0.0
    %1934 = vmatpush1.msra.mxu0 0.0
    %1935 = vmatprep.subr.mxu0 0.0
    %1936 = vmatpush1.msra.mxu0 0.0
    %1937 = vmatprep.subr.mxu0 0.0
    %1938 = vmatpush1.msra.mxu0 0.0
    %1939 = vmatprep.subr.mxu0 0.0
    %1940 = vmatpush1.msra.mxu0 %v319
    %1941 = vmatprep.subr.mxu0 0.0
    %1942 = vmatpush1.msra.mxu0 %v318
    %1943 = vmatprep.subr.mxu0 0.0
    %1944 = vmatpush2.msra.mxu0 0.0
    %1945 = vmatprep.subr.mxu0 0.0
    %1946 = vmatpush2.msra.mxu0 0.0
    %1947 = vmatprep.subr.mxu0 0.0
    %1948 = vmatpush2.msra.mxu0 0.0
    %1949 = vmatprep.subr.mxu0 0.0
    %1950 = vmatpush2.msra.mxu0 0.0
    %1951 = vmatprep.subr.mxu0 0.0
    %1952 = vmatpush2.msra.mxu0 0.0
    %1953 = vmatprep.subr.mxu0 0.0
    %1954 = vmatpush2.msra.mxu0 0.0
    %1955 = vmatprep.subr.mxu0 0.0
    %1956 = vmatpush2.msra.mxu0 0.0
    %1957 = vmatprep.subr.mxu0 0.0
    %1958 = vmatpush2.msra.mxu0 0.0
    %1959 = vmatprep.subr.mxu0 0.0
    %1960 = vmatpush2.msra.mxu0 0.0
    %1961 = vmatprep.subr.mxu0 0.0
    %1962 = vmatpush2.msra.mxu0 0.0
    %1963 = vmatprep.subr.mxu0 0.0
    %1964 = vmatpush2.msra.mxu0 0.0
    %1965 = vmatprep.subr.mxu0 0.0
    %1966 = vmatpush2.msra.mxu0 0.0
    %1967 = vmatprep.subr.mxu0 0.0
    %1968 = vmatpush2.msra.mxu0 0.0
    %1969 = vmatprep.subr.mxu0 0.0
    %1970 = vmatpush2.msra.mxu0 0.0
    %1971 = vmatprep.subr.mxu0 0.0
    %1972 = vmatpush2.msra.mxu0 0.0
    %1973 = vmatprep.subr.mxu0 0.0
    %1974 = vmatpush2.msra.mxu0 0.0
    %1975 = vmatprep.mubr.f32.mxu0 0.0
    %1976 = vmatmul.mubr.f32.gmra.mxu0 %v1909
    %v1977 = vpop.f32.mrf.mxu0
    %v1978 = vadd.f32 0.0, %v1977
    %v1979 = vpop.f32.mrf.mxu0
    %1980 = vdwg.mxu0
    %1983 = vset.pattern.permute.xlu0 0
    %1984 = vperm.xlu0 %1983, %v1890
    %v1985 = vpop.permute.xlu0 %1984
    %1986 = vset.pattern.permute.xlu0 0
    %1987 = vperm.xlu0 %1986, %v1891
    %v1988 = vpop.permute.xlu0 %1987
    %v1989 = vlaneseq
    %v1990 = vshrl.u32 %v1989, 7
    %v1991 = vsub.s32 %v1261, %v1990
    %v1992 = vrot.slane %v1985, %v1991
    %v1993 = vlaneseq
    %v1994 = vshrl.u32 %v1993, 7
    %v1995 = vsub.s32 %v1266, %v1994
    %v1996 = vrot.slane %v1988, %v1995
    %v1997 = vsel %vm1271, %v1996, %v1992
    %v1998 = vsel %vm182, %v1997, 0
    %2000 = vmatprep.subr.mxu0 0.0
    %2001 = vmatpush1.msra.mxu0 0.0
    %2002 = vmatprep.subr.mxu0 0.0
    %2003 = vmatpush1.msra.mxu0 0.0
    %2004 = vmatprep.subr.mxu0 0.0
    %2005 = vmatpush1.msra.mxu0 0.0
    %2006 = vmatprep.subr.mxu0 0.0
    %2007 = vmatpush1.msra.mxu0 0.0
    %2008 = vmatprep.subr.mxu0 0.0
    %2009 = vmatpush1.msra.mxu0 0.0
    %2010 = vmatprep.subr.mxu0 0.0
    %2011 = vmatpush1.msra.mxu0 0.0
    %2012 = vmatprep.subr.mxu0 0.0
    %2013 = vmatpush1.msra.mxu0 0.0
    %2014 = vmatprep.subr.mxu0 0.0
    %2015 = vmatpush1.msra.mxu0 0.0
    %2016 = vmatprep.subr.mxu0 0.0
    %2017 = vmatpush1.msra.mxu0 0.0
    %2018 = vmatprep.subr.mxu0 0.0
    %2019 = vmatpush1.msra.mxu0 0.0
    %2020 = vmatprep.subr.mxu0 0.0
    %2021 = vmatpush1.msra.mxu0 0.0
    %2022 = vmatprep.subr.mxu0 0.0
    %2023 = vmatpush1.msra.mxu0 0.0
    %2024 = vmatprep.subr.mxu0 0.0
    %2025 = vmatpush1.msra.mxu0 0.0
    %2026 = vmatprep.subr.mxu0 0.0
    %2027 = vmatpush1.msra.mxu0 0.0
    %2028 = vmatprep.subr.mxu0 0.0
    %2029 = vmatpush1.msra.mxu0 %v435
    %2030 = vmatprep.subr.mxu0 0.0
    %2031 = vmatpush1.msra.mxu0 %v434
    %2032 = vmatprep.subr.mxu0 0.0
    %2033 = vmatpush2.msra.mxu0 0.0
    %2034 = vmatprep.subr.mxu0 0.0
    %2035 = vmatpush2.msra.mxu0 0.0
    %2036 = vmatprep.subr.mxu0 0.0
    %2037 = vmatpush2.msra.mxu0 0.0
    %2038 = vmatprep.subr.mxu0 0.0
    %2039 = vmatpush2.msra.mxu0 0.0
    %2040 = vmatprep.subr.mxu0 0.0
    %2041 = vmatpush2.msra.mxu0 0.0
    %2042 = vmatprep.subr.mxu0 0.0
    %2043 = vmatpush2.msra.mxu0 0.0
    %2044 = vmatprep.subr.mxu0 0.0
    %2045 = vmatpush2.msra.mxu0 0.0
    %2046 = vmatprep.subr.mxu0 0.0
    %2047 = vmatpush2.msra.mxu0 0.0
    %2048 = vmatprep.subr.mxu0 0.0
    %2049 = vmatpush2.msra.mxu0 0.0
    %2050 = vmatprep.subr.mxu0 0.0
    %2051 = vmatpush2.msra.mxu0 0.0
    %2052 = vmatprep.subr.mxu0 0.0
    %2053 = vmatpush2.msra.mxu0 0.0
    %2054 = vmatprep.subr.mxu0 0.0
    %2055 = vmatpush2.msra.mxu0 0.0
    %2056 = vmatprep.subr.mxu0 0.0
    %2057 = vmatpush2.msra.mxu0 0.0
    %2058 = vmatprep.subr.mxu0 0.0
    %2059 = vmatpush2.msra.mxu0 0.0
    %2060 = vmatprep.subr.mxu0 0.0
    %2061 = vmatpush2.msra.mxu0 0.0
    %2062 = vmatprep.subr.mxu0 0.0
    %2063 = vmatpush2.msra.mxu0 0.0
    %2064 = vmatprep.mubr.f32.mxu0 0.0
    %2065 = vmatmul.mubr.f32.gmra.mxu0 %v1998
    %v2066 = vpop.f32.mrf.mxu0
    %v2067 = vadd.f32 0.0, %v2066
    %v2068 = vpop.f32.mrf.mxu0
    %2069 = vdwg.mxu0
    %s2070 = scalar_lea.vmem [#allocation11], 128
    %v2071 = vld [vmem:[%s2070] sm:$0xff]
    %v2072 = vld [vmem:[%s2070 + $0x8] sm:$0xff]
    %v2073 = vld [vmem:[%s2070 + $0x10] sm:$0xff]
    %v2074 = vld [vmem:[%s2070 + $0x18] sm:$0xff]
    %v2075 = vld [vmem:[%s2070 + $0x20] sm:$0xff]
    %v2076 = vld [vmem:[%s2070 + $0x28] sm:$0xff]
    %v2077 = vld [vmem:[%s2070 + $0x30] sm:$0xff]
    %v2078 = vld [vmem:[%s2070 + $0x38] sm:$0xff]
    %v2079 = vld [vmem:[%s2070 + $0x40] sm:$0xff]
    %v2080 = vld [vmem:[%s2070 + $0x48] sm:$0xff]
    %v2081 = vld [vmem:[%s2070 + $0x50] sm:$0xff]
    %v2082 = vld [vmem:[%s2070 + $0x58] sm:$0xff]
    %v2083 = vld [vmem:[%s2070 + $0x60] sm:$0xff]
    %v2084 = vld [vmem:[%s2070 + $0x68] sm:$0xff]
    %v2085 = vld [vmem:[%s2070 + $0x70] sm:$0xff]
    %v2086 = vld [vmem:[%s2070 + $0x78] sm:$0xff]
    %v2089 = vrot.slane %v2067, 7
    %v2090 = vsel %vm1282, %v2089, %v1978
    %2092 = vmatprep.subr.mxu0 0.0
    %2093 = vmatpush1.msra.mxu0 %v2086
    %2094 = vmatprep.subr.mxu0 0.0
    %2095 = vmatpush1.msra.mxu0 %v2085
    %2096 = vmatprep.subr.mxu0 0.0
    %2097 = vmatpush1.msra.mxu0 %v2084
    %2098 = vmatprep.subr.mxu0 0.0
    %2099 = vmatpush1.msra.mxu0 %v2083
    %2100 = vmatprep.subr.mxu0 0.0
    %2101 = vmatpush1.msra.mxu0 %v2082
    %2102 = vmatprep.subr.mxu0 0.0
    %2103 = vmatpush1.msra.mxu0 %v2081
    %2104 = vmatprep.subr.mxu0 0.0
    %2105 = vmatpush1.msra.mxu0 %v2080
    %2106 = vmatprep.subr.mxu0 0.0
    %2107 = vmatpush1.msra.mxu0 %v2079
    %2108 = vmatprep.subr.mxu0 0.0
    %2109 = vmatpush1.msra.mxu0 %v2078
    %2110 = vmatprep.subr.mxu0 0.0
    %2111 = vmatpush1.msra.mxu0 %v2077
    %2112 = vmatprep.subr.mxu0 0.0
    %2113 = vmatpush1.msra.mxu0 %v2076
    %2114 = vmatprep.subr.mxu0 0.0
    %2115 = vmatpush1.msra.mxu0 %v2075
    %2116 = vmatprep.subr.mxu0 0.0
    %2117 = vmatpush1.msra.mxu0 %v2074
    %2118 = vmatprep.subr.mxu0 0.0
    %2119 = vmatpush1.msra.mxu0 %v2073
    %2120 = vmatprep.subr.mxu0 0.0
    %2121 = vmatpush1.msra.mxu0 %v2072
    %2122 = vmatprep.subr.mxu0 0.0
    %2123 = vmatpush1.msra.mxu0 %v2071
    %2124 = vmatprep.subr.mxu0 0.0
    %2125 = vmatpush2.msra.mxu0 0.0
    %2126 = vmatprep.subr.mxu0 0.0
    %2127 = vmatpush2.msra.mxu0 0.0
    %2128 = vmatprep.subr.mxu0 0.0
    %2129 = vmatpush2.msra.mxu0 0.0
    %2130 = vmatprep.subr.mxu0 0.0
    %2131 = vmatpush2.msra.mxu0 0.0
    %2132 = vmatprep.subr.mxu0 0.0
    %2133 = vmatpush2.msra.mxu0 0.0
    %2134 = vmatprep.subr.mxu0 0.0
    %2135 = vmatpush2.msra.mxu0 0.0
    %2136 = vmatprep.subr.mxu0 0.0
    %2137 = vmatpush2.msra.mxu0 0.0
    %2138 = vmatprep.subr.mxu0 0.0
    %2139 = vmatpush2.msra.mxu0 0.0
    %2140 = vmatprep.subr.mxu0 0.0
    %2141 = vmatpush2.msra.mxu0 0.0
    %2142 = vmatprep.subr.mxu0 0.0
    %2143 = vmatpush2.msra.mxu0 0.0
    %2144 = vmatprep.subr.mxu0 0.0
    %2145 = vmatpush2.msra.mxu0 0.0
    %2146 = vmatprep.subr.mxu0 0.0
    %2147 = vmatpush2.msra.mxu0 0.0
    %2148 = vmatprep.subr.mxu0 0.0
    %2149 = vmatpush2.msra.mxu0 0.0
    %2150 = vmatprep.subr.mxu0 0.0
    %2151 = vmatpush2.msra.mxu0 0.0
    %2152 = vmatprep.subr.mxu0 0.0
    %2153 = vmatpush2.msra.mxu0 0.0
    %2154 = vmatprep.subr.mxu0 0.0
    %2155 = vmatpush2.msra.mxu0 0.0
    %2156 = vmatprep.mubr.f32.mxu0 0.0
    %2157 = vmatmul.mubr.f32.gmra.mxu0 %v2090
    %v2158 = vpop.f32.mrf.mxu0
    %v2159 = vadd.f32 %v1739, %v2158
    %v2160 = vpop.f32.mrf.mxu0
    %2161 = vdwg.mxu0
    %v2162 = vtanh.pop %v2159
    %v2163 = vld [vmem:[#allocation5] sm:$0xff]
    %v2164 = vld [vmem:[#allocation5 + $0x8] sm:$0xff]
    %v2165 = vld [vmem:[#allocation5 + $0x10] sm:$0xff]
    %v2166 = vld [vmem:[#allocation5 + $0x18] sm:$0xff]
    %v2167 = vld [vmem:[#allocation5 + $0x20] sm:$0xff]
    %v2168 = vld [vmem:[#allocation5 + $0x28] sm:$0xff]
    %v2169 = vld [vmem:[#allocation5 + $0x30] sm:$0xff]
    %v2170 = vld [vmem:[#allocation5 + $0x38] sm:$0xff]
    %v2171 = vld [vmem:[#allocation5 + $0x40] sm:$0xff]
    %v2172 = vld [vmem:[#allocation5 + $0x48] sm:$0xff]
    %v2173 = vld [vmem:[#allocation5 + $0x50] sm:$0xff]
    %v2174 = vld [vmem:[#allocation5 + $0x58] sm:$0xff]
    %v2175 = vld [vmem:[#allocation5 + $0x60] sm:$0xff]
    %v2176 = vld [vmem:[#allocation5 + $0x68] sm:$0xff]
    %v2177 = vld [vmem:[#allocation5 + $0x70] sm:$0xff]
    %v2178 = vld [vmem:[#allocation5 + $0x78] sm:$0xff]
    %v2179 = vld [vmem:[#allocation5 + $0x80] sm:$0xff]
    %v2180 = vld [vmem:[#allocation5 + $0x88] sm:$0xff]
    %v2181 = vld [vmem:[#allocation5 + $0x90] sm:$0xff]
    %v2182 = vld [vmem:[#allocation5 + $0x98] sm:$0xff]
    %v2183 = vld [vmem:[#allocation5 + $0xa0] sm:$0xff]
    %v2184 = vld [vmem:[#allocation5 + $0xa8] sm:$0xff]
    %v2185 = vld [vmem:[#allocation5 + $0xb0] sm:$0xff]
    %v2186 = vld [vmem:[#allocation5 + $0xb8] sm:$0xff]
    %v2187 = vld [vmem:[#allocation5 + $0xc0] sm:$0xff]
    %v2188 = vld [vmem:[#allocation5 + $0xc8] sm:$0xff]
    %v2189 = vld [vmem:[#allocation5 + $0xd0] sm:$0xff]
    %v2190 = vld [vmem:[#allocation5 + $0xd8] sm:$0xff]
    %v2191 = vld [vmem:[#allocation5 + $0xe0] sm:$0xff]
    %v2192 = vld [vmem:[#allocation5 + $0xe8] sm:$0xff]
    %v2193 = vld [vmem:[#allocation5 + $0xf0] sm:$0xff]
    %v2194 = vld [vmem:[#allocation5 + $0xf8] sm:$0xff]
    %v2195 = vld [vmem:[#allocation5 + $0x100] sm:$0xff]
    %v2196 = vld [vmem:[#allocation5 + $0x108] sm:$0xff]
    %v2197 = vld [vmem:[#allocation5 + $0x110] sm:$0xff]
    %v2198 = vld [vmem:[#allocation5 + $0x118] sm:$0xff]
    %v2199 = vld [vmem:[#allocation5 + $0x120] sm:$0xff]
    %v2200 = vld [vmem:[#allocation5 + $0x128] sm:$0xff]
    %v2201 = vld [vmem:[#allocation5 + $0x130] sm:$0xff]
    %v2202 = vld [vmem:[#allocation5 + $0x138] sm:$0xff]
    %v2203 = vld [vmem:[#allocation5 + $0x140] sm:$0xff]
    %v2204 = vld [vmem:[#allocation5 + $0x148] sm:$0xff]
    %v2205 = vld [vmem:[#allocation5 + $0x150] sm:$0xff]
    %v2206 = vld [vmem:[#allocation5 + $0x158] sm:$0xff]
    %v2207 = vld [vmem:[#allocation5 + $0x160] sm:$0xff]
    %v2208 = vld [vmem:[#allocation5 + $0x168] sm:$0xff]
    %v2209 = vld [vmem:[#allocation5 + $0x170] sm:$0xff]
    %v2210 = vld [vmem:[#allocation5 + $0x178] sm:$0xff]
    %v2211 = vld [vmem:[#allocation5 + $0x180] sm:$0xff]
    %v2212 = vld [vmem:[#allocation5 + $0x188] sm:$0xff]
    %v2213 = vld [vmem:[#allocation5 + $0x190] sm:$0xff]
    %v2214 = vld [vmem:[#allocation5 + $0x198] sm:$0xff]
    %v2215 = vld [vmem:[#allocation5 + $0x1a0] sm:$0xff]
    %v2216 = vld [vmem:[#allocation5 + $0x1a8] sm:$0xff]
    %v2217 = vld [vmem:[#allocation5 + $0x1b0] sm:$0xff]
    %v2218 = vld [vmem:[#allocation5 + $0x1b8] sm:$0xff]
    %v2219 = vld [vmem:[#allocation5 + $0x1c0] sm:$0xff]
    %v2220 = vld [vmem:[#allocation5 + $0x1c8] sm:$0xff]
    %v2221 = vld [vmem:[#allocation5 + $0x1d0] sm:$0xff]
    %v2222 = vld [vmem:[#allocation5 + $0x1d8] sm:$0xff]
    %v2223 = vld [vmem:[#allocation5 + $0x1e0] sm:$0xff]
    %v2224 = vld [vmem:[#allocation5 + $0x1e8] sm:$0xff]
    %v2225 = vld [vmem:[#allocation5 + $0x1f0] sm:$0xff]
    %v2226 = vld [vmem:[#allocation5 + $0x1f8] sm:$0xff]
    %v2227 = vld [vmem:[#allocation5 + $0x200] sm:$0xff]
    %v2228 = vld [vmem:[#allocation5 + $0x208] sm:$0xff]
    %v2229 = vld [vmem:[#allocation5 + $0x210] sm:$0xff]
    %v2230 = vld [vmem:[#allocation5 + $0x218] sm:$0xff]
    %v2231 = vld [vmem:[#allocation5 + $0x220] sm:$0xff]
    %v2232 = vld [vmem:[#allocation5 + $0x228] sm:$0xff]
    %v2233 = vld [vmem:[#allocation5 + $0x230] sm:$0xff]
    %v2234 = vld [vmem:[#allocation5 + $0x238] sm:$0xff]
    %v2235 = vld [vmem:[#allocation5 + $0x240] sm:$0xff]
    %v2236 = vld [vmem:[#allocation5 + $0x248] sm:$0xff]
    %v2237 = vld [vmem:[#allocation5 + $0x250] sm:$0xff]
    %v2238 = vld [vmem:[#allocation5 + $0x258] sm:$0xff]
    %v2239 = vld [vmem:[#allocation5 + $0x260] sm:$0xff]
    %v2240 = vld [vmem:[#allocation5 + $0x268] sm:$0xff]
    %v2241 = vld [vmem:[#allocation5 + $0x270] sm:$0xff]
    %v2242 = vld [vmem:[#allocation5 + $0x278] sm:$0xff]
    %v2243 = vld [vmem:[#allocation5 + $0x280] sm:$0xff]
    %v2244 = vld [vmem:[#allocation5 + $0x288] sm:$0xff]
    %v2245 = vld [vmem:[#allocation5 + $0x290] sm:$0xff]
    %v2246 = vld [vmem:[#allocation5 + $0x298] sm:$0xff]
    %v2247 = vld [vmem:[#allocation5 + $0x2a0] sm:$0xff]
    %v2248 = vld [vmem:[#allocation5 + $0x2a8] sm:$0xff]
    %v2249 = vld [vmem:[#allocation5 + $0x2b0] sm:$0xff]
    %v2250 = vld [vmem:[#allocation5 + $0x2b8] sm:$0xff]
    %v2251 = vld [vmem:[#allocation5 + $0x2c0] sm:$0xff]
    %v2252 = vld [vmem:[#allocation5 + $0x2c8] sm:$0xff]
    %v2253 = vld [vmem:[#allocation5 + $0x2d0] sm:$0xff]
    %v2254 = vld [vmem:[#allocation5 + $0x2d8] sm:$0xff]
    %v2255 = vld [vmem:[#allocation5 + $0x2e0] sm:$0xff]
    %v2256 = vld [vmem:[#allocation5 + $0x2e8] sm:$0xff]
    %v2257 = vld [vmem:[#allocation5 + $0x2f0] sm:$0xff]
    %v2258 = vld [vmem:[#allocation5 + $0x2f8] sm:$0xff]
    %v2259 = vld [vmem:[#allocation5 + $0x300] sm:$0xff]
    %v2260 = vld [vmem:[#allocation5 + $0x308] sm:$0xff]
    %v2261 = vld [vmem:[#allocation5 + $0x310] sm:$0xff]
    %v2262 = vld [vmem:[#allocation5 + $0x318] sm:$0xff]
    %v2263 = vld [vmem:[#allocation5 + $0x320] sm:$0xff]
    %v2264 = vld [vmem:[#allocation5 + $0x328] sm:$0xff]
    %v2265 = vld [vmem:[#allocation5 + $0x330] sm:$0xff]
    %v2266 = vld [vmem:[#allocation5 + $0x338] sm:$0xff]
    %v2267 = vld [vmem:[#allocation5 + $0x340] sm:$0xff]
    %v2268 = vld [vmem:[#allocation5 + $0x348] sm:$0xff]
    %v2269 = vld [vmem:[#allocation5 + $0x350] sm:$0xff]
    %v2270 = vld [vmem:[#allocation5 + $0x358] sm:$0xff]
    %v2271 = vld [vmem:[#allocation5 + $0x360] sm:$0xff]
    %v2272 = vld [vmem:[#allocation5 + $0x368] sm:$0xff]
    %v2273 = vld [vmem:[#allocation5 + $0x370] sm:$0xff]
    %v2274 = vld [vmem:[#allocation5 + $0x378] sm:$0xff]
    %v2275 = vld [vmem:[#allocation5 + $0x380] sm:$0xff]
    %v2276 = vld [vmem:[#allocation5 + $0x388] sm:$0xff]
    %v2277 = vld [vmem:[#allocation5 + $0x390] sm:$0xff]
    %v2278 = vld [vmem:[#allocation5 + $0x398] sm:$0xff]
    %v2279 = vld [vmem:[#allocation5 + $0x3a0] sm:$0xff]
    %v2280 = vld [vmem:[#allocation5 + $0x3a8] sm:$0xff]
    %v2281 = vld [vmem:[#allocation5 + $0x3b0] sm:$0xff]
    %v2282 = vld [vmem:[#allocation5 + $0x3b8] sm:$0xff]
    %v2283 = vld [vmem:[#allocation5 + $0x3c0] sm:$0xff]
    %v2284 = vld [vmem:[#allocation5 + $0x3c8] sm:$0xff]
    %v2285 = vld [vmem:[#allocation5 + $0x3d0] sm:$0xff]
    %v2286 = vld [vmem:[#allocation5 + $0x3d8] sm:$0xff]
    %v2287 = vld [vmem:[#allocation5 + $0x3e0] sm:$0xff]
    %v2288 = vld [vmem:[#allocation5 + $0x3e8] sm:$0xff]
    %v2289 = vld [vmem:[#allocation5 + $0x3f0] sm:$0xff]
    %v2290 = vld [vmem:[#allocation5 + $0x3f8] sm:$0xff]
    %2291 = vmatprep.subr.mxu0 %v2224
    %2292 = vmatpush1.msra.mxu0 %v2223
    %2293 = vmatprep.subr.mxu0 %v2220
    %2294 = vmatpush1.msra.mxu0 %v2219
    %2295 = vmatprep.subr.mxu0 %v2216
    %2296 = vmatpush1.msra.mxu0 %v2215
    %2297 = vmatprep.subr.mxu0 %v2212
    %2298 = vmatpush1.msra.mxu0 %v2211
    %2299 = vmatprep.subr.mxu0 %v2208
    %2300 = vmatpush1.msra.mxu0 %v2207
    %2301 = vmatprep.subr.mxu0 %v2204
    %2302 = vmatpush1.msra.mxu0 %v2203
    %2303 = vmatprep.subr.mxu0 %v2200
    %2304 = vmatpush1.msra.mxu0 %v2199
    %2305 = vmatprep.subr.mxu0 %v2196
    %2306 = vmatpush1.msra.mxu0 %v2195
    %2307 = vmatprep.subr.mxu0 %v2192
    %2308 = vmatpush1.msra.mxu0 %v2191
    %2309 = vmatprep.subr.mxu0 %v2188
    %2310 = vmatpush1.msra.mxu0 %v2187
    %2311 = vmatprep.subr.mxu0 %v2184
    %2312 = vmatpush1.msra.mxu0 %v2183
    %2313 = vmatprep.subr.mxu0 %v2180
    %2314 = vmatpush1.msra.mxu0 %v2179
    %2315 = vmatprep.subr.mxu0 %v2176
    %2316 = vmatpush1.msra.mxu0 %v2175
    %2317 = vmatprep.subr.mxu0 %v2172
    %2318 = vmatpush1.msra.mxu0 %v2171
    %2319 = vmatprep.subr.mxu0 %v2168
    %2320 = vmatpush1.msra.mxu0 %v2167
    %2321 = vmatprep.subr.mxu0 %v2164
    %2322 = vmatpush1.msra.mxu0 %v2163
    %2323 = vmatprep.subr.mxu0 %v2288
    %2324 = vmatpush2.msra.mxu0 %v2287
    %2325 = vmatprep.subr.mxu0 %v2284
    %2326 = vmatpush2.msra.mxu0 %v2283
    %2327 = vmatprep.subr.mxu0 %v2280
    %2328 = vmatpush2.msra.mxu0 %v2279
    %2329 = vmatprep.subr.mxu0 %v2276
    %2330 = vmatpush2.msra.mxu0 %v2275
    %2331 = vmatprep.subr.mxu0 %v2272
    %2332 = vmatpush2.msra.mxu0 %v2271
    %2333 = vmatprep.subr.mxu0 %v2268
    %2334 = vmatpush2.msra.mxu0 %v2267
    %2335 = vmatprep.subr.mxu0 %v2264
    %2336 = vmatpush2.msra.mxu0 %v2263
    %2337 = vmatprep.subr.mxu0 %v2260
    %2338 = vmatpush2.msra.mxu0 %v2259
    %2339 = vmatprep.subr.mxu0 %v2256
    %2340 = vmatpush2.msra.mxu0 %v2255
    %2341 = vmatprep.subr.mxu0 %v2252
    %2342 = vmatpush2.msra.mxu0 %v2251
    %2343 = vmatprep.subr.mxu0 %v2248
    %2344 = vmatpush2.msra.mxu0 %v2247
    %2345 = vmatprep.subr.mxu0 %v2244
    %2346 = vmatpush2.msra.mxu0 %v2243
    %2347 = vmatprep.subr.mxu0 %v2240
    %2348 = vmatpush2.msra.mxu0 %v2239
    %2349 = vmatprep.subr.mxu0 %v2236
    %2350 = vmatpush2.msra.mxu0 %v2235
    %2351 = vmatprep.subr.mxu0 %v2232
    %2352 = vmatpush2.msra.mxu0 %v2231
    %2353 = vmatprep.subr.mxu0 %v2228
    %2354 = vmatpush2.msra.mxu0 %v2227
    %2355 = vmatprep.mubr.f32.mxu0 %v1636
    %2356 = vmatmul.mubr.f32.gmra.mxu0 %v1106
    %v2357 = vpop.f32.mrf.mxu0
    %v2358 = vadd.f32 %v449, %v2357
    %v2359 = vpop.f32.mrf.mxu0
    %v2360 = vadd.f32 %v453, %v2359
    %2361 = vdwg.mxu0
    %2362 = vmatprep.subr.mxu0 %v2226
    %2363 = vmatpush1.msra.mxu0 %v2225
    %2364 = vmatprep.subr.mxu0 %v2222
    %2365 = vmatpush1.msra.mxu0 %v2221
    %2366 = vmatprep.subr.mxu0 %v2218
    %2367 = vmatpush1.msra.mxu0 %v2217
    %2368 = vmatprep.subr.mxu0 %v2214
    %2369 = vmatpush1.msra.mxu0 %v2213
    %2370 = vmatprep.subr.mxu0 %v2210
    %2371 = vmatpush1.msra.mxu0 %v2209
    %2372 = vmatprep.subr.mxu0 %v2206
    %2373 = vmatpush1.msra.mxu0 %v2205
    %2374 = vmatprep.subr.mxu0 %v2202
    %2375 = vmatpush1.msra.mxu0 %v2201
    %2376 = vmatprep.subr.mxu0 %v2198
    %2377 = vmatpush1.msra.mxu0 %v2197
    %2378 = vmatprep.subr.mxu0 %v2194
    %2379 = vmatpush1.msra.mxu0 %v2193
    %2380 = vmatprep.subr.mxu0 %v2190
    %2381 = vmatpush1.msra.mxu0 %v2189
    %2382 = vmatprep.subr.mxu0 %v2186
    %2383 = vmatpush1.msra.mxu0 %v2185
    %2384 = vmatprep.subr.mxu0 %v2182
    %2385 = vmatpush1.msra.mxu0 %v2181
    %2386 = vmatprep.subr.mxu0 %v2178
    %2387 = vmatpush1.msra.mxu0 %v2177
    %2388 = vmatprep.subr.mxu0 %v2174
    %2389 = vmatpush1.msra.mxu0 %v2173
    %2390 = vmatprep.subr.mxu0 %v2170
    %2391 = vmatpush1.msra.mxu0 %v2169
    %2392 = vmatprep.subr.mxu0 %v2166
    %2393 = vmatpush1.msra.mxu0 %v2165
    %2394 = vmatprep.subr.mxu0 %v2290
    %2395 = vmatpush2.msra.mxu0 %v2289
    %2396 = vmatprep.subr.mxu0 %v2286
    %2397 = vmatpush2.msra.mxu0 %v2285
    %2398 = vmatprep.subr.mxu0 %v2282
    %2399 = vmatpush2.msra.mxu0 %v2281
    %2400 = vmatprep.subr.mxu0 %v2278
    %2401 = vmatpush2.msra.mxu0 %v2277
    %2402 = vmatprep.subr.mxu0 %v2274
    %2403 = vmatpush2.msra.mxu0 %v2273
    %2404 = vmatprep.subr.mxu0 %v2270
    %2405 = vmatpush2.msra.mxu0 %v2269
    %2406 = vmatprep.subr.mxu0 %v2266
    %2407 = vmatpush2.msra.mxu0 %v2265
    %2408 = vmatprep.subr.mxu0 %v2262
    %2409 = vmatpush2.msra.mxu0 %v2261
    %2410 = vmatprep.subr.mxu0 %v2258
    %2411 = vmatpush2.msra.mxu0 %v2257
    %2412 = vmatprep.subr.mxu0 %v2254
    %2413 = vmatpush2.msra.mxu0 %v2253
    %2414 = vmatprep.subr.mxu0 %v2250
    %2415 = vmatpush2.msra.mxu0 %v2249
    %2416 = vmatprep.subr.mxu0 %v2246
    %2417 = vmatpush2.msra.mxu0 %v2245
    %2418 = vmatprep.subr.mxu0 %v2242
    %2419 = vmatpush2.msra.mxu0 %v2241
    %2420 = vmatprep.subr.mxu0 %v2238
    %2421 = vmatpush2.msra.mxu0 %v2237
    %2422 = vmatprep.subr.mxu0 %v2234
    %2423 = vmatpush2.msra.mxu0 %v2233
    %2424 = vmatprep.subr.mxu0 %v2230
    %2425 = vmatpush2.msra.mxu0 %v2229
    %2426 = vmatprep.mubr.f32.mxu0 %v1636
    %2427 = vmatmul.mubr.f32.gmra.mxu0 %v1106
    %v2428 = vpop.f32.mrf.mxu0
    %v2429 = vadd.f32 %v457, %v2428
    %v2430 = vpop.f32.mrf.mxu0
    %v2431 = vadd.f32 %v461, %v2430
    %2432 = vdwg.mxu0
    %v2433 = vxor.u32 %v2358, 2147483648
    %v2434 = vmul.f32 %v2433, 1.442695
    %v2435 = vpow.pop %v2434
    %v2436 = vadd.f32 %v2435, 1.0
    %v2437 = vrcp.pop %v2436
    %v2438 = vmul.f32 1.0, %v2437
    %v2439 = vxor.u32 %v2360, 2147483648
    %v2440 = vmul.f32 %v2439, 1.442695
    %v2441 = vpow.pop %v2440
    %v2442 = vadd.f32 %v2441, 1.0
    %v2443 = vrcp.pop %v2442
    %v2444 = vmul.f32 1.0, %v2443
    %v2445 = vtanh.pop %v2429
    %v2446 = vxor.u32 %v2431, 2147483648
    %v2447 = vmul.f32 %v2446, 1.442695
    %v2448 = vpow.pop %v2447
    %v2449 = vadd.f32 %v2448, 1.0
    %v2450 = vrcp.pop %v2449
    %v2451 = vmul.f32 1.0, %v2450
    %v2452 = vmul.f32 %v2444, %v809
    %v2453 = vmul.f32 %v2438, %v2445
    %v2454 = vadd.f32 %v2452, %v2453
    %v2455 = vtanh.pop %v2454
    %v2456 = vmul.f32 %v2451, %v2455
    %v2457 = vld [vmem:[%s812] sm:$0xff]
    %v2458 = vld [vmem:[%s812 + $0x8] sm:$0xff]
    %v2459 = vld [vmem:[%s812 + $0x10] sm:$0xff]
    %v2460 = vld [vmem:[%s812 + $0x18] sm:$0xff]
    %v2461 = vld [vmem:[%s812 + $0x20] sm:$0xff]
    %v2462 = vld [vmem:[%s812 + $0x28] sm:$0xff]
    %v2463 = vld [vmem:[%s812 + $0x30] sm:$0xff]
    %v2464 = vld [vmem:[%s812 + $0x38] sm:$0xff]
    %v2465 = vld [vmem:[%s812 + $0x40] sm:$0xff]
    %v2466 = vld [vmem:[%s812 + $0x48] sm:$0xff]
    %v2467 = vld [vmem:[%s812 + $0x50] sm:$0xff]
    %v2468 = vld [vmem:[%s812 + $0x58] sm:$0xff]
    %v2469 = vld [vmem:[%s812 + $0x60] sm:$0xff]
    %v2470 = vld [vmem:[%s812 + $0x68] sm:$0xff]
    %v2471 = vld [vmem:[%s812 + $0x70] sm:$0xff]
    %v2472 = vld [vmem:[%s812 + $0x78] sm:$0xff]
    %v2473 = vld [vmem:[%s812 + $0x80] sm:$0xff]
    %v2474 = vld [vmem:[%s812 + $0x88] sm:$0xff]
    %v2475 = vld [vmem:[%s812 + $0x90] sm:$0xff]
    %v2476 = vld [vmem:[%s812 + $0x98] sm:$0xff]
    %v2477 = vld [vmem:[%s812 + $0xa0] sm:$0xff]
    %v2478 = vld [vmem:[%s812 + $0xa8] sm:$0xff]
    %v2479 = vld [vmem:[%s812 + $0xb0] sm:$0xff]
    %v2480 = vld [vmem:[%s812 + $0xb8] sm:$0xff]
    %v2481 = vld [vmem:[%s812 + $0xc0] sm:$0xff]
    %v2482 = vld [vmem:[%s812 + $0xc8] sm:$0xff]
    %v2483 = vld [vmem:[%s812 + $0xd0] sm:$0xff]
    %v2484 = vld [vmem:[%s812 + $0xd8] sm:$0xff]
    %v2485 = vld [vmem:[%s812 + $0xe0] sm:$0xff]
    %v2486 = vld [vmem:[%s812 + $0xe8] sm:$0xff]
    %v2487 = vld [vmem:[%s812 + $0xf0] sm:$0xff]
    %v2488 = vld [vmem:[%s812 + $0xf8] sm:$0xff]
    %v2489 = vld [vmem:[%s812 + $0x100] sm:$0xff]
    %v2490 = vld [vmem:[%s812 + $0x108] sm:$0xff]
    %v2491 = vld [vmem:[%s812 + $0x110] sm:$0xff]
    %v2492 = vld [vmem:[%s812 + $0x118] sm:$0xff]
    %v2493 = vld [vmem:[%s812 + $0x120] sm:$0xff]
    %v2494 = vld [vmem:[%s812 + $0x128] sm:$0xff]
    %v2495 = vld [vmem:[%s812 + $0x130] sm:$0xff]
    %v2496 = vld [vmem:[%s812 + $0x138] sm:$0xff]
    %v2497 = vld [vmem:[%s812 + $0x140] sm:$0xff]
    %v2498 = vld [vmem:[%s812 + $0x148] sm:$0xff]
    %v2499 = vld [vmem:[%s812 + $0x150] sm:$0xff]
    %v2500 = vld [vmem:[%s812 + $0x158] sm:$0xff]
    %v2501 = vld [vmem:[%s812 + $0x160] sm:$0xff]
    %v2502 = vld [vmem:[%s812 + $0x168] sm:$0xff]
    %v2503 = vld [vmem:[%s812 + $0x170] sm:$0xff]
    %v2504 = vld [vmem:[%s812 + $0x178] sm:$0xff]
    %v2505 = vld [vmem:[%s812 + $0x180] sm:$0xff]
    %v2506 = vld [vmem:[%s812 + $0x188] sm:$0xff]
    %v2507 = vld [vmem:[%s812 + $0x190] sm:$0xff]
    %v2508 = vld [vmem:[%s812 + $0x198] sm:$0xff]
    %v2509 = vld [vmem:[%s812 + $0x1a0] sm:$0xff]
    %v2510 = vld [vmem:[%s812 + $0x1a8] sm:$0xff]
    %v2511 = vld [vmem:[%s812 + $0x1b0] sm:$0xff]
    %v2512 = vld [vmem:[%s812 + $0x1b8] sm:$0xff]
    %v2513 = vld [vmem:[%s812 + $0x1c0] sm:$0xff]
    %v2514 = vld [vmem:[%s812 + $0x1c8] sm:$0xff]
    %v2515 = vld [vmem:[%s812 + $0x1d0] sm:$0xff]
    %v2516 = vld [vmem:[%s812 + $0x1d8] sm:$0xff]
    %v2517 = vld [vmem:[%s812 + $0x1e0] sm:$0xff]
    %v2518 = vld [vmem:[%s812 + $0x1e8] sm:$0xff]
    %v2519 = vld [vmem:[%s812 + $0x1f0] sm:$0xff]
    %v2520 = vld [vmem:[%s812 + $0x1f8] sm:$0xff]
    %v2521 = vld [vmem:[%s812 + $0x200] sm:$0xff]
    %v2522 = vld [vmem:[%s812 + $0x208] sm:$0xff]
    %v2523 = vld [vmem:[%s812 + $0x210] sm:$0xff]
    %v2524 = vld [vmem:[%s812 + $0x218] sm:$0xff]
    %v2525 = vld [vmem:[%s812 + $0x220] sm:$0xff]
    %v2526 = vld [vmem:[%s812 + $0x228] sm:$0xff]
    %v2527 = vld [vmem:[%s812 + $0x230] sm:$0xff]
    %v2528 = vld [vmem:[%s812 + $0x238] sm:$0xff]
    %v2529 = vld [vmem:[%s812 + $0x240] sm:$0xff]
    %v2530 = vld [vmem:[%s812 + $0x248] sm:$0xff]
    %v2531 = vld [vmem:[%s812 + $0x250] sm:$0xff]
    %v2532 = vld [vmem:[%s812 + $0x258] sm:$0xff]
    %v2533 = vld [vmem:[%s812 + $0x260] sm:$0xff]
    %v2534 = vld [vmem:[%s812 + $0x268] sm:$0xff]
    %v2535 = vld [vmem:[%s812 + $0x270] sm:$0xff]
    %v2536 = vld [vmem:[%s812 + $0x278] sm:$0xff]
    %v2537 = vld [vmem:[%s812 + $0x280] sm:$0xff]
    %v2538 = vld [vmem:[%s812 + $0x288] sm:$0xff]
    %v2539 = vld [vmem:[%s812 + $0x290] sm:$0xff]
    %v2540 = vld [vmem:[%s812 + $0x298] sm:$0xff]
    %v2541 = vld [vmem:[%s812 + $0x2a0] sm:$0xff]
    %v2542 = vld [vmem:[%s812 + $0x2a8] sm:$0xff]
    %v2543 = vld [vmem:[%s812 + $0x2b0] sm:$0xff]
    %v2544 = vld [vmem:[%s812 + $0x2b8] sm:$0xff]
    %v2545 = vld [vmem:[%s812 + $0x2c0] sm:$0xff]
    %v2546 = vld [vmem:[%s812 + $0x2c8] sm:$0xff]
    %v2547 = vld [vmem:[%s812 + $0x2d0] sm:$0xff]
    %v2548 = vld [vmem:[%s812 + $0x2d8] sm:$0xff]
    %v2549 = vld [vmem:[%s812 + $0x2e0] sm:$0xff]
    %v2550 = vld [vmem:[%s812 + $0x2e8] sm:$0xff]
    %v2551 = vld [vmem:[%s812 + $0x2f0] sm:$0xff]
    %v2552 = vld [vmem:[%s812 + $0x2f8] sm:$0xff]
    %v2553 = vld [vmem:[%s812 + $0x300] sm:$0xff]
    %v2554 = vld [vmem:[%s812 + $0x308] sm:$0xff]
    %v2555 = vld [vmem:[%s812 + $0x310] sm:$0xff]
    %v2556 = vld [vmem:[%s812 + $0x318] sm:$0xff]
    %v2557 = vld [vmem:[%s812 + $0x320] sm:$0xff]
    %v2558 = vld [vmem:[%s812 + $0x328] sm:$0xff]
    %v2559 = vld [vmem:[%s812 + $0x330] sm:$0xff]
    %v2560 = vld [vmem:[%s812 + $0x338] sm:$0xff]
    %v2561 = vld [vmem:[%s812 + $0x340] sm:$0xff]
    %v2562 = vld [vmem:[%s812 + $0x348] sm:$0xff]
    %v2563 = vld [vmem:[%s812 + $0x350] sm:$0xff]
    %v2564 = vld [vmem:[%s812 + $0x358] sm:$0xff]
    %v2565 = vld [vmem:[%s812 + $0x360] sm:$0xff]
    %v2566 = vld [vmem:[%s812 + $0x368] sm:$0xff]
    %v2567 = vld [vmem:[%s812 + $0x370] sm:$0xff]
    %v2568 = vld [vmem:[%s812 + $0x378] sm:$0xff]
    %v2569 = vld [vmem:[%s812 + $0x380] sm:$0xff]
    %v2570 = vld [vmem:[%s812 + $0x388] sm:$0xff]
    %v2571 = vld [vmem:[%s812 + $0x390] sm:$0xff]
    %v2572 = vld [vmem:[%s812 + $0x398] sm:$0xff]
    %v2573 = vld [vmem:[%s812 + $0x3a0] sm:$0xff]
    %v2574 = vld [vmem:[%s812 + $0x3a8] sm:$0xff]
    %v2575 = vld [vmem:[%s812 + $0x3b0] sm:$0xff]
    %v2576 = vld [vmem:[%s812 + $0x3b8] sm:$0xff]
    %v2577 = vld [vmem:[%s812 + $0x3c0] sm:$0xff]
    %v2578 = vld [vmem:[%s812 + $0x3c8] sm:$0xff]
    %v2579 = vld [vmem:[%s812 + $0x3d0] sm:$0xff]
    %v2580 = vld [vmem:[%s812 + $0x3d8] sm:$0xff]
    %v2581 = vld [vmem:[%s812 + $0x3e0] sm:$0xff]
    %v2582 = vld [vmem:[%s812 + $0x3e8] sm:$0xff]
    %v2583 = vld [vmem:[%s812 + $0x3f0] sm:$0xff]
    %v2584 = vld [vmem:[%s812 + $0x3f8] sm:$0xff]
    %2585 = vmatprep.subr.mxu0 %v2518
    %2586 = vmatpush1.msra.mxu0 %v2517
    %2587 = vmatprep.subr.mxu0 %v2514
    %2588 = vmatpush1.msra.mxu0 %v2513
    %2589 = vmatprep.subr.mxu0 %v2510
    %2590 = vmatpush1.msra.mxu0 %v2509
    %2591 = vmatprep.subr.mxu0 %v2506
    %2592 = vmatpush1.msra.mxu0 %v2505
    %2593 = vmatprep.subr.mxu0 %v2502
    %2594 = vmatpush1.msra.mxu0 %v2501
    %2595 = vmatprep.subr.mxu0 %v2498
    %2596 = vmatpush1.msra.mxu0 %v2497
    %2597 = vmatprep.subr.mxu0 %v2494
    %2598 = vmatpush1.msra.mxu0 %v2493
    %2599 = vmatprep.subr.mxu0 %v2490
    %2600 = vmatpush1.msra.mxu0 %v2489
    %2601 = vmatprep.subr.mxu0 %v2486
    %2602 = vmatpush1.msra.mxu0 %v2485
    %2603 = vmatprep.subr.mxu0 %v2482
    %2604 = vmatpush1.msra.mxu0 %v2481
    %2605 = vmatprep.subr.mxu0 %v2478
    %2606 = vmatpush1.msra.mxu0 %v2477
    %2607 = vmatprep.subr.mxu0 %v2474
    %2608 = vmatpush1.msra.mxu0 %v2473
    %2609 = vmatprep.subr.mxu0 %v2470
    %2610 = vmatpush1.msra.mxu0 %v2469
    %2611 = vmatprep.subr.mxu0 %v2466
    %2612 = vmatpush1.msra.mxu0 %v2465
    %2613 = vmatprep.subr.mxu0 %v2462
    %2614 = vmatpush1.msra.mxu0 %v2461
    %2615 = vmatprep.subr.mxu0 %v2458
    %2616 = vmatpush1.msra.mxu0 %v2457
    %2617 = vmatprep.subr.mxu0 %v2582
    %2618 = vmatpush2.msra.mxu0 %v2581
    %2619 = vmatprep.subr.mxu0 %v2578
    %2620 = vmatpush2.msra.mxu0 %v2577
    %2621 = vmatprep.subr.mxu0 %v2574
    %2622 = vmatpush2.msra.mxu0 %v2573
    %2623 = vmatprep.subr.mxu0 %v2570
    %2624 = vmatpush2.msra.mxu0 %v2569
    %2625 = vmatprep.subr.mxu0 %v2566
    %2626 = vmatpush2.msra.mxu0 %v2565
    %2627 = vmatprep.subr.mxu0 %v2562
    %2628 = vmatpush2.msra.mxu0 %v2561
    %2629 = vmatprep.subr.mxu0 %v2558
    %2630 = vmatpush2.msra.mxu0 %v2557
    %2631 = vmatprep.subr.mxu0 %v2554
    %2632 = vmatpush2.msra.mxu0 %v2553
    %2633 = vmatprep.subr.mxu0 %v2550
    %2634 = vmatpush2.msra.mxu0 %v2549
    %2635 = vmatprep.subr.mxu0 %v2546
    %2636 = vmatpush2.msra.mxu0 %v2545
    %2637 = vmatprep.subr.mxu0 %v2542
    %2638 = vmatpush2.msra.mxu0 %v2541
    %2639 = vmatprep.subr.mxu0 %v2538
    %2640 = vmatpush2.msra.mxu0 %v2537
    %2641 = vmatprep.subr.mxu0 %v2534
    %2642 = vmatpush2.msra.mxu0 %v2533
    %2643 = vmatprep.subr.mxu0 %v2530
    %2644 = vmatpush2.msra.mxu0 %v2529
    %2645 = vmatprep.subr.mxu0 %v2526
    %2646 = vmatpush2.msra.mxu0 %v2525
    %2647 = vmatprep.subr.mxu0 %v2522
    %2648 = vmatpush2.msra.mxu0 %v2521
    %2649 = vmatprep.mubr.f32.mxu0 %v2162
    %2650 = vmatmul.mubr.f32.gmra.mxu0 %v2456
    %v2651 = vpop.f32.mrf.mxu0
    %v2652 = vadd.f32 %v472, %v2651
    %v2653 = vpop.f32.mrf.mxu0
    %v2654 = vadd.f32 %v476, %v2653
    %2655 = vdwg.mxu0
    %2656 = vmatprep.subr.mxu0 %v2520
    %2657 = vmatpush1.msra.mxu0 %v2519
    %2658 = vmatprep.subr.mxu0 %v2516
    %2659 = vmatpush1.msra.mxu0 %v2515
    %2660 = vmatprep.subr.mxu0 %v2512
    %2661 = vmatpush1.msra.mxu0 %v2511
    %2662 = vmatprep.subr.mxu0 %v2508
    %2663 = vmatpush1.msra.mxu0 %v2507
    %2664 = vmatprep.subr.mxu0 %v2504
    %2665 = vmatpush1.msra.mxu0 %v2503
    %2666 = vmatprep.subr.mxu0 %v2500
    %2667 = vmatpush1.msra.mxu0 %v2499
    %2668 = vmatprep.subr.mxu0 %v2496
    %2669 = vmatpush1.msra.mxu0 %v2495
    %2670 = vmatprep.subr.mxu0 %v2492
    %2671 = vmatpush1.msra.mxu0 %v2491
    %2672 = vmatprep.subr.mxu0 %v2488
    %2673 = vmatpush1.msra.mxu0 %v2487
    %2674 = vmatprep.subr.mxu0 %v2484
    %2675 = vmatpush1.msra.mxu0 %v2483
    %2676 = vmatprep.subr.mxu0 %v2480
    %2677 = vmatpush1.msra.mxu0 %v2479
    %2678 = vmatprep.subr.mxu0 %v2476
    %2679 = vmatpush1.msra.mxu0 %v2475
    %2680 = vmatprep.subr.mxu0 %v2472
    %2681 = vmatpush1.msra.mxu0 %v2471
    %2682 = vmatprep.subr.mxu0 %v2468
    %2683 = vmatpush1.msra.mxu0 %v2467
    %2684 = vmatprep.subr.mxu0 %v2464
    %2685 = vmatpush1.msra.mxu0 %v2463
    %2686 = vmatprep.subr.mxu0 %v2460
    %2687 = vmatpush1.msra.mxu0 %v2459
    %2688 = vmatprep.subr.mxu0 %v2584
    %2689 = vmatpush2.msra.mxu0 %v2583
    %2690 = vmatprep.subr.mxu0 %v2580
    %2691 = vmatpush2.msra.mxu0 %v2579
    %2692 = vmatprep.subr.mxu0 %v2576
    %2693 = vmatpush2.msra.mxu0 %v2575
    %2694 = vmatprep.subr.mxu0 %v2572
    %2695 = vmatpush2.msra.mxu0 %v2571
    %2696 = vmatprep.subr.mxu0 %v2568
    %2697 = vmatpush2.msra.mxu0 %v2567
    %2698 = vmatprep.subr.mxu0 %v2564
    %2699 = vmatpush2.msra.mxu0 %v2563
    %2700 = vmatprep.subr.mxu0 %v2560
    %2701 = vmatpush2.msra.mxu0 %v2559
    %2702 = vmatprep.subr.mxu0 %v2556
    %2703 = vmatpush2.msra.mxu0 %v2555
    %2704 = vmatprep.subr.mxu0 %v2552
    %2705 = vmatpush2.msra.mxu0 %v2551
    %2706 = vmatprep.subr.mxu0 %v2548
    %2707 = vmatpush2.msra.mxu0 %v2547
    %2708 = vmatprep.subr.mxu0 %v2544
    %2709 = vmatpush2.msra.mxu0 %v2543
    %2710 = vmatprep.subr.mxu0 %v2540
    %2711 = vmatpush2.msra.mxu0 %v2539
    %2712 = vmatprep.subr.mxu0 %v2536
    %2713 = vmatpush2.msra.mxu0 %v2535
    %2714 = vmatprep.subr.mxu0 %v2532
    %2715 = vmatpush2.msra.mxu0 %v2531
    %2716 = vmatprep.subr.mxu0 %v2528
    %2717 = vmatpush2.msra.mxu0 %v2527
    %2718 = vmatprep.subr.mxu0 %v2524
    %2719 = vmatpush2.msra.mxu0 %v2523
    %2720 = vmatprep.mubr.f32.mxu0 %v2162
    %2721 = vmatmul.mubr.f32.gmra.mxu0 %v2456
    %v2722 = vpop.f32.mrf.mxu0
    %v2723 = vadd.f32 %v480, %v2722
    %v2724 = vpop.f32.mrf.mxu0
    %v2725 = vadd.f32 %v484, %v2724
    %2726 = vdwg.mxu0
    %v2727 = vxor.u32 %v2652, 2147483648
    %v2728 = vmul.f32 %v2727, 1.442695
    %v2729 = vpow.pop %v2728
    %v2730 = vadd.f32 %v2729, 1.0
    %v2731 = vrcp.pop %v2730
    %v2732 = vmul.f32 1.0, %v2731
    %v2733 = vxor.u32 %v2654, 2147483648
    %v2734 = vmul.f32 %v2733, 1.442695
    %v2735 = vpow.pop %v2734
    %v2736 = vadd.f32 %v2735, 1.0
    %v2737 = vrcp.pop %v2736
    %v2738 = vmul.f32 1.0, %v2737
    %v2739 = vtanh.pop %v2723
    %v2740 = vxor.u32 %v2725, 2147483648
    %v2741 = vmul.f32 %v2740, 1.442695
    %v2742 = vpow.pop %v2741
    %v2743 = vadd.f32 %v2742, 1.0
    %v2744 = vrcp.pop %v2743
    %v2745 = vmul.f32 1.0, %v2744
    %v2746 = vmul.f32 %v2738, %v1104
    %v2747 = vmul.f32 %v2732, %v2739
    %v2748 = vadd.f32 %v2746, %v2747
    %v2749 = vtanh.pop %v2748
    %v2750 = vmul.f32 %v2745, %v2749
    %v2751 = vld [vmem:[#allocation8] sm:$0xff]
    %v2752 = vld [vmem:[#allocation8 + $0x8] sm:$0xff]
    %v2753 = vld [vmem:[#allocation8 + $0x10] sm:$0xff]
    %v2754 = vld [vmem:[#allocation8 + $0x18] sm:$0xff]
    %v2755 = vld [vmem:[#allocation8 + $0x20] sm:$0xff]
    %v2756 = vld [vmem:[#allocation8 + $0x28] sm:$0xff]
    %v2757 = vld [vmem:[#allocation8 + $0x30] sm:$0xff]
    %v2758 = vld [vmem:[#allocation8 + $0x38] sm:$0xff]
    %v2759 = vld [vmem:[#allocation8 + $0x40] sm:$0xff]
    %v2760 = vld [vmem:[#allocation8 + $0x48] sm:$0xff]
    %v2761 = vld [vmem:[#allocation8 + $0x50] sm:$0xff]
    %v2762 = vld [vmem:[#allocation8 + $0x58] sm:$0xff]
    %v2763 = vld [vmem:[#allocation8 + $0x60] sm:$0xff]
    %v2764 = vld [vmem:[#allocation8 + $0x68] sm:$0xff]
    %v2765 = vld [vmem:[#allocation8 + $0x70] sm:$0xff]
    %v2766 = vld [vmem:[#allocation8 + $0x78] sm:$0xff]
    %v2767 = vld [vmem:[#allocation8 + $0x80] sm:$0xff]
    %v2768 = vld [vmem:[#allocation8 + $0x88] sm:$0xff]
    %v2769 = vld [vmem:[#allocation8 + $0x90] sm:$0xff]
    %v2770 = vld [vmem:[#allocation8 + $0x98] sm:$0xff]
    %v2771 = vld [vmem:[#allocation8 + $0xa0] sm:$0xff]
    %v2772 = vld [vmem:[#allocation8 + $0xa8] sm:$0xff]
    %v2773 = vld [vmem:[#allocation8 + $0xb0] sm:$0xff]
    %v2774 = vld [vmem:[#allocation8 + $0xb8] sm:$0xff]
    %v2775 = vld [vmem:[#allocation8 + $0xc0] sm:$0xff]
    %v2776 = vld [vmem:[#allocation8 + $0xc8] sm:$0xff]
    %v2777 = vld [vmem:[#allocation8 + $0xd0] sm:$0xff]
    %v2778 = vld [vmem:[#allocation8 + $0xd8] sm:$0xff]
    %v2779 = vld [vmem:[#allocation8 + $0xe0] sm:$0xff]
    %v2780 = vld [vmem:[#allocation8 + $0xe8] sm:$0xff]
    %v2781 = vld [vmem:[#allocation8 + $0xf0] sm:$0xff]
    %v2782 = vld [vmem:[#allocation8 + $0xf8] sm:$0xff]
    %2783 = vmatprep.subr.mxu0 %v2782
    %2784 = vmatpush1.msra.mxu0 %v2781
    %2785 = vmatprep.subr.mxu0 %v2780
    %2786 = vmatpush1.msra.mxu0 %v2779
    %2787 = vmatprep.subr.mxu0 %v2778
    %2788 = vmatpush1.msra.mxu0 %v2777
    %2789 = vmatprep.subr.mxu0 %v2776
    %2790 = vmatpush1.msra.mxu0 %v2775
    %2791 = vmatprep.subr.mxu0 %v2774
    %2792 = vmatpush1.msra.mxu0 %v2773
    %2793 = vmatprep.subr.mxu0 %v2772
    %2794 = vmatpush1.msra.mxu0 %v2771
    %2795 = vmatprep.subr.mxu0 %v2770
    %2796 = vmatpush1.msra.mxu0 %v2769
    %2797 = vmatprep.subr.mxu0 %v2768
    %2798 = vmatpush1.msra.mxu0 %v2767
    %2799 = vmatprep.subr.mxu0 %v2766
    %2800 = vmatpush1.msra.mxu0 %v2765
    %2801 = vmatprep.subr.mxu0 %v2764
    %2802 = vmatpush1.msra.mxu0 %v2763
    %2803 = vmatprep.subr.mxu0 %v2762
    %2804 = vmatpush1.msra.mxu0 %v2761
    %2805 = vmatprep.subr.mxu0 %v2760
    %2806 = vmatpush1.msra.mxu0 %v2759
    %2807 = vmatprep.subr.mxu0 %v2758
    %2808 = vmatpush1.msra.mxu0 %v2757
    %2809 = vmatprep.subr.mxu0 %v2756
    %2810 = vmatpush1.msra.mxu0 %v2755
    %2811 = vmatprep.subr.mxu0 %v2754
    %2812 = vmatpush1.msra.mxu0 %v2753
    %2813 = vmatprep.subr.mxu0 %v2752
    %2814 = vmatpush1.msra.mxu0 %v2751
    %2815 = vmatprep.subr.mxu0 0.0
    %2816 = vmatpush2.msra.mxu0 0.0
    %2817 = vmatprep.subr.mxu0 0.0
    %2818 = vmatpush2.msra.mxu0 0.0
    %2819 = vmatprep.subr.mxu0 0.0
    %2820 = vmatpush2.msra.mxu0 0.0
    %2821 = vmatprep.subr.mxu0 0.0
    %2822 = vmatpush2.msra.mxu0 0.0
    %2823 = vmatprep.subr.mxu0 0.0
    %2824 = vmatpush2.msra.mxu0 0.0
    %2825 = vmatprep.subr.mxu0 0.0
    %2826 = vmatpush2.msra.mxu0 0.0
    %2827 = vmatprep.subr.mxu0 0.0
    %2828 = vmatpush2.msra.mxu0 0.0
    %2829 = vmatprep.subr.mxu0 0.0
    %2830 = vmatpush2.msra.mxu0 0.0
    %2831 = vmatprep.subr.mxu0 0.0
    %2832 = vmatpush2.msra.mxu0 0.0
    %2833 = vmatprep.subr.mxu0 0.0
    %2834 = vmatpush2.msra.mxu0 0.0
    %2835 = vmatprep.subr.mxu0 0.0
    %2836 = vmatpush2.msra.mxu0 0.0
    %2837 = vmatprep.subr.mxu0 0.0
    %2838 = vmatpush2.msra.mxu0 0.0
    %2839 = vmatprep.subr.mxu0 0.0
    %2840 = vmatpush2.msra.mxu0 0.0
    %2841 = vmatprep.subr.mxu0 0.0
    %2842 = vmatpush2.msra.mxu0 0.0
    %2843 = vmatprep.subr.mxu0 0.0
    %2844 = vmatpush2.msra.mxu0 0.0
    %2845 = vmatprep.subr.mxu0 0.0
    %2846 = vmatpush2.msra.mxu0 0.0
    %2847 = vmatprep.mubr.f32.mxu0 0.0
    %2848 = vmatmul.mubr.f32.gmra.mxu0 %v2456
    %v2849 = vpop.f32.mrf.mxu0
    %v2850 = vadd.f32 %v494, %v2849
    %v2851 = vpop.f32.mrf.mxu0
    %v2852 = vadd.f32 %v498, %v2851
    %2853 = vdwg.mxu0
    %v2854 = vtanh.pop %v2850
    %v2857 = vunpack.c.l.s4 1966171168
    %v2858 = vunpack.c.0.s8 %v2857
    %v2859 = vlaneseq
    %v2860 = vshrl.u32 %v2859, 7
    %v2861 = vsub.s32 %v2858, %v2860
    %v2862 = vrot.slane %v2854, %v2861
    %v2863 = vcombine.high %v2862, %v2862
    %v2865 = vunpack.c.l.s4 1966171168
    %v2866 = vunpack.c.0.s8 %v2865
    %v2867 = vlaneseq
    %v2868 = vshrl.u32 %v2867, 7
    %v2869 = vsub.s32 %v2866, %v2868
    %v2870 = vrot.slane %v2862, %v2869
    %v2872 = vunpack.c.l.s4 1966171168
    %v2873 = vunpack.c.0.s8 %v2872
    %v2874 = vlaneseq
    %v2875 = vshrl.u32 %v2874, 7
    %v2876 = vsub.s32 %v2873, %v2875
    %v2877 = vrot.slane %v2863, %v2876
    %v2878 = vlaneseq
    %v2879 = vshrl.u32 %v2878, 7
    %v2880 = vsub.s32 0, %v2879
    %v2881 = vrot.slane %v2870, %v2880
    %v2882 = vlaneseq
    %v2883 = vshrl.u32 %v2882, 7
    %v2884 = vsub.s32 0, %v2883
    %v2885 = vrot.slane %v2877, %v2884
    %v2888 = vmul.f32 %v436, %v2881
    %v2889 = vmul.f32 %v437, %v2881
    %v2890 = vmul.f32 %v438, %v2885
    %v2891 = vmul.f32 %v439, %v2885
    %2892 = vadd.xlane.f32.xlu0 %v2888
    %v2893 = vpop.xlane.xlu0 %2892
    %2894 = vadd.xlane.f32.xlu0 %v2889
    %v2895 = vpop.xlane.xlu0 %2894
    %2896 = vadd.xlane.f32.xlu0 %v2890
    %v2897 = vpop.xlane.xlu0 %2896
    %2898 = vadd.xlane.f32.xlu0 %v2891
    %v2899 = vpop.xlane.xlu0 %2898
    %v2904 = vlaneseq
    %v2905 = vshrl.u32 %v2904, 7
    %v2906 = vsub.s32 %v1261, %v2905
    %v2907 = vrot.slane %v2893, %v2906
    %v2908 = vlaneseq
    %v2909 = vshrl.u32 %v2908, 7
    %v2910 = vsub.s32 %v1266, %v2909
    %v2911 = vrot.slane %v2895, %v2910
    %v2912 = vsel %vm1271, %v2911, %v2907
    %v2913 = vlaneseq
    %v2914 = vshrl.u32 %v2913, 7
    %v2915 = vsub.s32 %v1261, %v2914
    %v2916 = vrot.slane %v2897, %v2915
    %v2917 = vlaneseq
    %v2918 = vshrl.u32 %v2917, 7
    %v2919 = vsub.s32 %v1266, %v2918
    %v2920 = vrot.slane %v2899, %v2919
    %v2921 = vsel %vm1271, %v2920, %v2916
    %v2922 = vsel %vm1282, %v2921, %v2912
    %v2924 = vsel %vm1285, %v2922, -inf
    %2925 = vmax.xlane.f32.xlu0 %v2924
    %v2926 = vpop.xlane.xlu0 %2925
    %v2928 = vlaneseq
    %v2929 = vshrl.u32 %v2928, 7
    %v2930 = vsub.s32 0, %v2929
    %v2931 = vrot.slane %v2926, %v2930
    %v2932 = vlaneseq
    %v2933 = vshrl.u32 %v2932, 7
    %v2934 = vsub.s32 1, %v2933
    %v2935 = vrot.slane %v2926, %v2934
    %v2938 = vsub.f32 %v2893, %v2931
    %v2939 = vsub.f32 %v2895, %v2931
    %v2940 = vsub.f32 %v2897, %v2935
    %v2941 = vsub.f32 %v2899, %v2935
    %v2942 = vmul.f32 %v2938, 1.442695
    %v2943 = vpow.pop %v2942
    %v2944 = vmul.f32 %v2939, 1.442695
    %v2945 = vpow.pop %v2944
    %v2946 = vmul.f32 %v2940, 1.442695
    %v2947 = vpow.pop %v2946
    %v2948 = vmul.f32 %v2941, 1.442695
    %v2949 = vpow.pop %v2948
    %2954 = vset.pattern.permute.xlu0 0
    %2955 = vperm.xlu0 %2954, %v2943
    %v2956 = vpop.permute.xlu0 %2955
    %2957 = vset.pattern.permute.xlu0 0
    %2958 = vperm.xlu0 %2957, %v2945
    %v2959 = vpop.permute.xlu0 %2958
    %2960 = vset.pattern.permute.xlu0 0
    %2961 = vperm.xlu0 %2960, %v2947
    %v2962 = vpop.permute.xlu0 %2961
    %2963 = vset.pattern.permute.xlu0 0
    %2964 = vperm.xlu0 %2963, %v2949
    %v2965 = vpop.permute.xlu0 %2964
    %v2966 = vlaneseq
    %v2967 = vshrl.u32 %v2966, 7
    %v2968 = vsub.s32 %v1261, %v2967
    %v2969 = vrot.slane %v2956, %v2968
    %v2970 = vlaneseq
    %v2971 = vshrl.u32 %v2970, 7
    %v2972 = vsub.s32 %v1266, %v2971
    %v2973 = vrot.slane %v2959, %v2972
    %v2974 = vsel %vm1271, %v2973, %v2969
    %v2975 = vlaneseq
    %v2976 = vshrl.u32 %v2975, 7
    %v2977 = vsub.s32 %v1261, %v2976
    %v2978 = vrot.slane %v2962, %v2977
    %v2979 = vlaneseq
    %v2980 = vshrl.u32 %v2979, 7
    %v2981 = vsub.s32 %v1266, %v2980
    %v2982 = vrot.slane %v2965, %v2981
    %v2983 = vsel %vm1271, %v2982, %v2978
    %v2984 = vsel %vm1282, %v2983, %v2974
    %v2986 = vsel %vm1285, %v2984, 0.0
    %2987 = vadd.xlane.f32.xlu0 %v2986
    %v2988 = vpop.xlane.xlu0 %2987
    %v2989 = vrcp.pop %v2988
    %v2991 = vlaneseq
    %v2992 = vshrl.u32 %v2991, 7
    %v2993 = vsub.s32 0, %v2992
    %v2994 = vrot.slane %v2989, %v2993
    %v2995 = vlaneseq
    %v2996 = vshrl.u32 %v2995, 7
    %v2997 = vsub.s32 1, %v2996
    %v2998 = vrot.slane %v2989, %v2997
    %v3001 = vmul.f32 %v2943, %v2994
    %v3002 = vmul.f32 %v2945, %v2994
    %v3003 = vmul.f32 %v2947, %v2998
    %v3004 = vmul.f32 %v2949, %v2998
    %3007 = vset.pattern.permute.xlu0 0
    %3008 = vperm.xlu0 %3007, %v3001
    %v3009 = vpop.permute.xlu0 %3008
    %3010 = vset.pattern.permute.xlu0 0
    %3011 = vperm.xlu0 %3010, %v3002
    %v3012 = vpop.permute.xlu0 %3011
    %v3013 = vlaneseq
    %v3014 = vshrl.u32 %v3013, 7
    %v3015 = vsub.s32 %v1261, %v3014
    %v3016 = vrot.slane %v3009, %v3015
    %v3017 = vlaneseq
    %v3018 = vshrl.u32 %v3017, 7
    %v3019 = vsub.s32 %v1266, %v3018
    %v3020 = vrot.slane %v3012, %v3019
    %v3021 = vsel %vm1271, %v3020, %v3016
    %v3022 = vsel %vm182, %v3021, 0
    %3024 = vmatprep.subr.mxu0 0.0
    %3025 = vmatpush1.msra.mxu0 0.0
    %3026 = vmatprep.subr.mxu0 0.0
    %3027 = vmatpush1.msra.mxu0 0.0
    %3028 = vmatprep.subr.mxu0 0.0
    %3029 = vmatpush1.msra.mxu0 0.0
    %3030 = vmatprep.subr.mxu0 0.0
    %3031 = vmatpush1.msra.mxu0 0.0
    %3032 = vmatprep.subr.mxu0 0.0
    %3033 = vmatpush1.msra.mxu0 0.0
    %3034 = vmatprep.subr.mxu0 0.0
    %3035 = vmatpush1.msra.mxu0 0.0
    %3036 = vmatprep.subr.mxu0 0.0
    %3037 = vmatpush1.msra.mxu0 0.0
    %3038 = vmatprep.subr.mxu0 0.0
    %3039 = vmatpush1.msra.mxu0 0.0
    %3040 = vmatprep.subr.mxu0 0.0
    %3041 = vmatpush1.msra.mxu0 0.0
    %3042 = vmatprep.subr.mxu0 0.0
    %3043 = vmatpush1.msra.mxu0 0.0
    %3044 = vmatprep.subr.mxu0 0.0
    %3045 = vmatpush1.msra.mxu0 0.0
    %3046 = vmatprep.subr.mxu0 0.0
    %3047 = vmatpush1.msra.mxu0 0.0
    %3048 = vmatprep.subr.mxu0 0.0
    %3049 = vmatpush1.msra.mxu0 0.0
    %3050 = vmatprep.subr.mxu0 0.0
    %3051 = vmatpush1.msra.mxu0 0.0
    %3052 = vmatprep.subr.mxu0 0.0
    %3053 = vmatpush1.msra.mxu0 %v315
    %3054 = vmatprep.subr.mxu0 0.0
    %3055 = vmatpush1.msra.mxu0 %v314
    %3056 = vmatprep.subr.mxu0 0.0
    %3057 = vmatpush2.msra.mxu0 0.0
    %3058 = vmatprep.subr.mxu0 0.0
    %3059 = vmatpush2.msra.mxu0 0.0
    %3060 = vmatprep.subr.mxu0 0.0
    %3061 = vmatpush2.msra.mxu0 0.0
    %3062 = vmatprep.subr.mxu0 0.0
    %3063 = vmatpush2.msra.mxu0 0.0
    %3064 = vmatprep.subr.mxu0 0.0
    %3065 = vmatpush2.msra.mxu0 0.0
    %3066 = vmatprep.subr.mxu0 0.0
    %3067 = vmatpush2.msra.mxu0 0.0
    %3068 = vmatprep.subr.mxu0 0.0
    %3069 = vmatpush2.msra.mxu0 0.0
    %3070 = vmatprep.subr.mxu0 0.0
    %3071 = vmatpush2.msra.mxu0 0.0
    %3072 = vmatprep.subr.mxu0 0.0
    %3073 = vmatpush2.msra.mxu0 0.0
    %3074 = vmatprep.subr.mxu0 0.0
    %3075 = vmatpush2.msra.mxu0 0.0
    %3076 = vmatprep.subr.mxu0 0.0
    %3077 = vmatpush2.msra.mxu0 0.0
    %3078 = vmatprep.subr.mxu0 0.0
    %3079 = vmatpush2.msra.mxu0 0.0
    %3080 = vmatprep.subr.mxu0 0.0
    %3081 = vmatpush2.msra.mxu0 0.0
    %3082 = vmatprep.subr.mxu0 0.0
    %3083 = vmatpush2.msra.mxu0 0.0
    %3084 = vmatprep.subr.mxu0 0.0
    %3085 = vmatpush2.msra.mxu0 0.0
    %3086 = vmatprep.subr.mxu0 0.0
    %3087 = vmatpush2.msra.mxu0 0.0
    %3088 = vmatprep.mubr.f32.mxu0 0.0
    %3089 = vmatmul.mubr.f32.gmra.mxu0 %v3022
    %v3090 = vpop.f32.mrf.mxu0
    %v3091 = vadd.f32 0.0, %v3090
    %v3092 = vpop.f32.mrf.mxu0
    %3093 = vdwg.mxu0
    %3096 = vset.pattern.permute.xlu0 0
    %3097 = vperm.xlu0 %3096, %v3003
    %v3098 = vpop.permute.xlu0 %3097
    %3099 = vset.pattern.permute.xlu0 0
    %3100 = vperm.xlu0 %3099, %v3004
    %v3101 = vpop.permute.xlu0 %3100
    %v3102 = vlaneseq
    %v3103 = vshrl.u32 %v3102, 7
    %v3104 = vsub.s32 %v1261, %v3103
    %v3105 = vrot.slane %v3098, %v3104
    %v3106 = vlaneseq
    %v3107 = vshrl.u32 %v3106, 7
    %v3108 = vsub.s32 %v1266, %v3107
    %v3109 = vrot.slane %v3101, %v3108
    %v3110 = vsel %vm1271, %v3109, %v3105
    %v3111 = vsel %vm182, %v3110, 0
    %3113 = vmatprep.subr.mxu0 0.0
    %3114 = vmatpush1.msra.mxu0 0.0
    %3115 = vmatprep.subr.mxu0 0.0
    %3116 = vmatpush1.msra.mxu0 0.0
    %3117 = vmatprep.subr.mxu0 0.0
    %3118 = vmatpush1.msra.mxu0 0.0
    %3119 = vmatprep.subr.mxu0 0.0
    %3120 = vmatpush1.msra.mxu0 0.0
    %3121 = vmatprep.subr.mxu0 0.0
    %3122 = vmatpush1.msra.mxu0 0.0
    %3123 = vmatprep.subr.mxu0 0.0
    %3124 = vmatpush1.msra.mxu0 0.0
    %3125 = vmatprep.subr.mxu0 0.0
    %3126 = vmatpush1.msra.mxu0 0.0
    %3127 = vmatprep.subr.mxu0 0.0
    %3128 = vmatpush1.msra.mxu0 0.0
    %3129 = vmatprep.subr.mxu0 0.0
    %3130 = vmatpush1.msra.mxu0 0.0
    %3131 = vmatprep.subr.mxu0 0.0
    %3132 = vmatpush1.msra.mxu0 0.0
    %3133 = vmatprep.subr.mxu0 0.0
    %3134 = vmatpush1.msra.mxu0 0.0
    %3135 = vmatprep.subr.mxu0 0.0
    %3136 = vmatpush1.msra.mxu0 0.0
    %3137 = vmatprep.subr.mxu0 0.0
    %3138 = vmatpush1.msra.mxu0 0.0
    %3139 = vmatprep.subr.mxu0 0.0
    %3140 = vmatpush1.msra.mxu0 0.0
    %3141 = vmatprep.subr.mxu0 0.0
    %3142 = vmatpush1.msra.mxu0 %v431
    %3143 = vmatprep.subr.mxu0 0.0
    %3144 = vmatpush1.msra.mxu0 %v430
    %3145 = vmatprep.subr.mxu0 0.0
    %3146 = vmatpush2.msra.mxu0 0.0
    %3147 = vmatprep.subr.mxu0 0.0
    %3148 = vmatpush2.msra.mxu0 0.0
    %3149 = vmatprep.subr.mxu0 0.0
    %3150 = vmatpush2.msra.mxu0 0.0
    %3151 = vmatprep.subr.mxu0 0.0
    %3152 = vmatpush2.msra.mxu0 0.0
    %3153 = vmatprep.subr.mxu0 0.0
    %3154 = vmatpush2.msra.mxu0 0.0
    %3155 = vmatprep.subr.mxu0 0.0
    %3156 = vmatpush2.msra.mxu0 0.0
    %3157 = vmatprep.subr.mxu0 0.0
    %3158 = vmatpush2.msra.mxu0 0.0
    %3159 = vmatprep.subr.mxu0 0.0
    %3160 = vmatpush2.msra.mxu0 0.0
    %3161 = vmatprep.subr.mxu0 0.0
    %3162 = vmatpush2.msra.mxu0 0.0
    %3163 = vmatprep.subr.mxu0 0.0
    %3164 = vmatpush2.msra.mxu0 0.0
    %3165 = vmatprep.subr.mxu0 0.0
    %3166 = vmatpush2.msra.mxu0 0.0
    %3167 = vmatprep.subr.mxu0 0.0
    %3168 = vmatpush2.msra.mxu0 0.0
    %3169 = vmatprep.subr.mxu0 0.0
    %3170 = vmatpush2.msra.mxu0 0.0
    %3171 = vmatprep.subr.mxu0 0.0
    %3172 = vmatpush2.msra.mxu0 0.0
    %3173 = vmatprep.subr.mxu0 0.0
    %3174 = vmatpush2.msra.mxu0 0.0
    %3175 = vmatprep.subr.mxu0 0.0
    %3176 = vmatpush2.msra.mxu0 0.0
    %3177 = vmatprep.mubr.f32.mxu0 0.0
    %3178 = vmatmul.mubr.f32.gmra.mxu0 %v3111
    %v3179 = vpop.f32.mrf.mxu0
    %v3180 = vadd.f32 0.0, %v3179
    %v3181 = vpop.f32.mrf.mxu0
    %3182 = vdwg.mxu0
    %v3183 = vld [vmem:[#allocation11] sm:$0xff]
    %v3184 = vld [vmem:[#allocation11 + $0x8] sm:$0xff]
    %v3185 = vld [vmem:[#allocation11 + $0x10] sm:$0xff]
    %v3186 = vld [vmem:[#allocation11 + $0x18] sm:$0xff]
    %v3187 = vld [vmem:[#allocation11 + $0x20] sm:$0xff]
    %v3188 = vld [vmem:[#allocation11 + $0x28] sm:$0xff]
    %v3189 = vld [vmem:[#allocation11 + $0x30] sm:$0xff]
    %v3190 = vld [vmem:[#allocation11 + $0x38] sm:$0xff]
    %v3191 = vld [vmem:[#allocation11 + $0x40] sm:$0xff]
    %v3192 = vld [vmem:[#allocation11 + $0x48] sm:$0xff]
    %v3193 = vld [vmem:[#allocation11 + $0x50] sm:$0xff]
    %v3194 = vld [vmem:[#allocation11 + $0x58] sm:$0xff]
    %v3195 = vld [vmem:[#allocation11 + $0x60] sm:$0xff]
    %v3196 = vld [vmem:[#allocation11 + $0x68] sm:$0xff]
    %v3197 = vld [vmem:[#allocation11 + $0x70] sm:$0xff]
    %v3198 = vld [vmem:[#allocation11 + $0x78] sm:$0xff]
    %v3201 = vrot.slane %v3180, 7
    %v3202 = vsel %vm1282, %v3201, %v3091
    %3204 = vmatprep.subr.mxu0 0.0
    %3205 = vmatpush1.msra.mxu0 %v3198
    %3206 = vmatprep.subr.mxu0 0.0
    %3207 = vmatpush1.msra.mxu0 %v3197
    %3208 = vmatprep.subr.mxu0 0.0
    %3209 = vmatpush1.msra.mxu0 %v3196
    %3210 = vmatprep.subr.mxu0 0.0
    %3211 = vmatpush1.msra.mxu0 %v3195
    %3212 = vmatprep.subr.mxu0 0.0
    %3213 = vmatpush1.msra.mxu0 %v3194
    %3214 = vmatprep.subr.mxu0 0.0
    %3215 = vmatpush1.msra.mxu0 %v3193
    %3216 = vmatprep.subr.mxu0 0.0
    %3217 = vmatpush1.msra.mxu0 %v3192
    %3218 = vmatprep.subr.mxu0 0.0
    %3219 = vmatpush1.msra.mxu0 %v3191
    %3220 = vmatprep.subr.mxu0 0.0
    %3221 = vmatpush1.msra.mxu0 %v3190
    %3222 = vmatprep.subr.mxu0 0.0
    %3223 = vmatpush1.msra.mxu0 %v3189
    %3224 = vmatprep.subr.mxu0 0.0
    %3225 = vmatpush1.msra.mxu0 %v3188
    %3226 = vmatprep.subr.mxu0 0.0
    %3227 = vmatpush1.msra.mxu0 %v3187
    %3228 = vmatprep.subr.mxu0 0.0
    %3229 = vmatpush1.msra.mxu0 %v3186
    %3230 = vmatprep.subr.mxu0 0.0
    %3231 = vmatpush1.msra.mxu0 %v3185
    %3232 = vmatprep.subr.mxu0 0.0
    %3233 = vmatpush1.msra.mxu0 %v3184
    %3234 = vmatprep.subr.mxu0 0.0
    %3235 = vmatpush1.msra.mxu0 %v3183
    %3236 = vmatprep.subr.mxu0 0.0
    %3237 = vmatpush2.msra.mxu0 0.0
    %3238 = vmatprep.subr.mxu0 0.0
    %3239 = vmatpush2.msra.mxu0 0.0
    %3240 = vmatprep.subr.mxu0 0.0
    %3241 = vmatpush2.msra.mxu0 0.0
    %3242 = vmatprep.subr.mxu0 0.0
    %3243 = vmatpush2.msra.mxu0 0.0
    %3244 = vmatprep.subr.mxu0 0.0
    %3245 = vmatpush2.msra.mxu0 0.0
    %3246 = vmatprep.subr.mxu0 0.0
    %3247 = vmatpush2.msra.mxu0 0.0
    %3248 = vmatprep.subr.mxu0 0.0
    %3249 = vmatpush2.msra.mxu0 0.0
    %3250 = vmatprep.subr.mxu0 0.0
    %3251 = vmatpush2.msra.mxu0 0.0
    %3252 = vmatprep.subr.mxu0 0.0
    %3253 = vmatpush2.msra.mxu0 0.0
    %3254 = vmatprep.subr.mxu0 0.0
    %3255 = vmatpush2.msra.mxu0 0.0
    %3256 = vmatprep.subr.mxu0 0.0
    %3257 = vmatpush2.msra.mxu0 0.0
    %3258 = vmatprep.subr.mxu0 0.0
    %3259 = vmatpush2.msra.mxu0 0.0
    %3260 = vmatprep.subr.mxu0 0.0
    %3261 = vmatpush2.msra.mxu0 0.0
    %3262 = vmatprep.subr.mxu0 0.0
    %3263 = vmatpush2.msra.mxu0 0.0
    %3264 = vmatprep.subr.mxu0 0.0
    %3265 = vmatpush2.msra.mxu0 0.0
    %3266 = vmatprep.subr.mxu0 0.0
    %3267 = vmatpush2.msra.mxu0 0.0
    %3268 = vmatprep.mubr.f32.mxu0 0.0
    %3269 = vmatmul.mubr.f32.gmra.mxu0 %v3202
    %v3270 = vpop.f32.mrf.mxu0
    %v3271 = vadd.f32 %v2852, %v3270
    %v3272 = vpop.f32.mrf.mxu0
    %3273 = vdwg.mxu0
    %v3274 = vtanh.pop %v3271
    %v3275 = vld [vmem:[%s1637] sm:$0xff]
    %v3276 = vld [vmem:[%s1637 + $0x8] sm:$0xff]
    %v3277 = vld [vmem:[%s1637 + $0x10] sm:$0xff]
    %v3278 = vld [vmem:[%s1637 + $0x18] sm:$0xff]
    %v3279 = vld [vmem:[%s1637 + $0x20] sm:$0xff]
    %v3280 = vld [vmem:[%s1637 + $0x28] sm:$0xff]
    %v3281 = vld [vmem:[%s1637 + $0x30] sm:$0xff]
    %v3282 = vld [vmem:[%s1637 + $0x38] sm:$0xff]
    %v3283 = vld [vmem:[%s1637 + $0x40] sm:$0xff]
    %v3284 = vld [vmem:[%s1637 + $0x48] sm:$0xff]
    %v3285 = vld [vmem:[%s1637 + $0x50] sm:$0xff]
    %v3286 = vld [vmem:[%s1637 + $0x58] sm:$0xff]
    %v3287 = vld [vmem:[%s1637 + $0x60] sm:$0xff]
    %v3288 = vld [vmem:[%s1637 + $0x68] sm:$0xff]
    %v3289 = vld [vmem:[%s1637 + $0x70] sm:$0xff]
    %v3290 = vld [vmem:[%s1637 + $0x78] sm:$0xff]
    %v3291 = vld [vmem:[%s1637 + $0x80] sm:$0xff]
    %v3292 = vld [vmem:[%s1637 + $0x88] sm:$0xff]
    %v3293 = vld [vmem:[%s1637 + $0x90] sm:$0xff]
    %v3294 = vld [vmem:[%s1637 + $0x98] sm:$0xff]
    %v3295 = vld [vmem:[%s1637 + $0xa0] sm:$0xff]
    %v3296 = vld [vmem:[%s1637 + $0xa8] sm:$0xff]
    %v3297 = vld [vmem:[%s1637 + $0xb0] sm:$0xff]
    %v3298 = vld [vmem:[%s1637 + $0xb8] sm:$0xff]
    %v3299 = vld [vmem:[%s1637 + $0xc0] sm:$0xff]
    %v3300 = vld [vmem:[%s1637 + $0xc8] sm:$0xff]
    %v3301 = vld [vmem:[%s1637 + $0xd0] sm:$0xff]
    %v3302 = vld [vmem:[%s1637 + $0xd8] sm:$0xff]
    %v3303 = vld [vmem:[%s1637 + $0xe0] sm:$0xff]
    %v3304 = vld [vmem:[%s1637 + $0xe8] sm:$0xff]
    %v3305 = vld [vmem:[%s1637 + $0xf0] sm:$0xff]
    %v3306 = vld [vmem:[%s1637 + $0xf8] sm:$0xff]
    %3307 = vmatprep.subr.mxu0 %v3306
    %3308 = vmatpush1.msra.mxu0 %v3305
    %3309 = vmatprep.subr.mxu0 %v3304
    %3310 = vmatpush1.msra.mxu0 %v3303
    %3311 = vmatprep.subr.mxu0 %v3302
    %3312 = vmatpush1.msra.mxu0 %v3301
    %3313 = vmatprep.subr.mxu0 %v3300
    %3314 = vmatpush1.msra.mxu0 %v3299
    %3315 = vmatprep.subr.mxu0 %v3298
    %3316 = vmatpush1.msra.mxu0 %v3297
    %3317 = vmatprep.subr.mxu0 %v3296
    %3318 = vmatpush1.msra.mxu0 %v3295
    %3319 = vmatprep.subr.mxu0 %v3294
    %3320 = vmatpush1.msra.mxu0 %v3293
    %3321 = vmatprep.subr.mxu0 %v3292
    %3322 = vmatpush1.msra.mxu0 %v3291
    %3323 = vmatprep.subr.mxu0 %v3290
    %3324 = vmatpush1.msra.mxu0 %v3289
    %3325 = vmatprep.subr.mxu0 %v3288
    %3326 = vmatpush1.msra.mxu0 %v3287
    %3327 = vmatprep.subr.mxu0 %v3286
    %3328 = vmatpush1.msra.mxu0 %v3285
    %3329 = vmatprep.subr.mxu0 %v3284
    %3330 = vmatpush1.msra.mxu0 %v3283
    %3331 = vmatprep.subr.mxu0 %v3282
    %3332 = vmatpush1.msra.mxu0 %v3281
    %3333 = vmatprep.subr.mxu0 %v3280
    %3334 = vmatpush1.msra.mxu0 %v3279
    %3335 = vmatprep.subr.mxu0 %v3278
    %3336 = vmatpush1.msra.mxu0 %v3277
    %3337 = vmatprep.subr.mxu0 %v3276
    %3338 = vmatpush1.msra.mxu0 %v3275
    %3339 = vmatprep.subr.mxu0 0.0
    %3340 = vmatpush2.msra.mxu0 0.0
    %3341 = vmatprep.subr.mxu0 0.0
    %3342 = vmatpush2.msra.mxu0 0.0
    %3343 = vmatprep.subr.mxu0 0.0
    %3344 = vmatpush2.msra.mxu0 0.0
    %3345 = vmatprep.subr.mxu0 0.0
    %3346 = vmatpush2.msra.mxu0 0.0
    %3347 = vmatprep.subr.mxu0 0.0
    %3348 = vmatpush2.msra.mxu0 0.0
    %3349 = vmatprep.subr.mxu0 0.0
    %3350 = vmatpush2.msra.mxu0 0.0
    %3351 = vmatprep.subr.mxu0 0.0
    %3352 = vmatpush2.msra.mxu0 0.0
    %3353 = vmatprep.subr.mxu0 0.0
    %3354 = vmatpush2.msra.mxu0 0.0
    %3355 = vmatprep.subr.mxu0 0.0
    %3356 = vmatpush2.msra.mxu0 0.0
    %3357 = vmatprep.subr.mxu0 0.0
    %3358 = vmatpush2.msra.mxu0 0.0
    %3359 = vmatprep.subr.mxu0 0.0
    %3360 = vmatpush2.msra.mxu0 0.0
    %3361 = vmatprep.subr.mxu0 0.0
    %3362 = vmatpush2.msra.mxu0 0.0
    %3363 = vmatprep.subr.mxu0 0.0
    %3364 = vmatpush2.msra.mxu0 0.0
    %3365 = vmatprep.subr.mxu0 0.0
    %3366 = vmatpush2.msra.mxu0 0.0
    %3367 = vmatprep.subr.mxu0 0.0
    %3368 = vmatpush2.msra.mxu0 0.0
    %3369 = vmatprep.subr.mxu0 0.0
    %3370 = vmatpush2.msra.mxu0 0.0
    %3371 = vmatprep.mubr.f32.mxu0 0.0
    %3372 = vmatmul.mubr.f32.gmra.mxu0 %v2750
    %v3373 = vpop.f32.mrf.mxu0
    %v3374 = vadd.f32 %v507, %v3373
    %v3375 = vpop.f32.mrf.mxu0
    %v3376 = vadd.f32 %v511, %v3375
    %3377 = vdwg.mxu0
    %v3378 = vtanh.pop %v3374
    %v3381 = vunpack.c.l.s4 1966171168
    %v3382 = vunpack.c.0.s8 %v3381
    %v3383 = vlaneseq
    %v3384 = vshrl.u32 %v3383, 7
    %v3385 = vsub.s32 %v3382, %v3384
    %v3386 = vrot.slane %v3378, %v3385
    %v3387 = vcombine.high %v3386, %v3386
    %v3389 = vunpack.c.l.s4 1966171168
    %v3390 = vunpack.c.0.s8 %v3389
    %v3391 = vlaneseq
    %v3392 = vshrl.u32 %v3391, 7
    %v3393 = vsub.s32 %v3390, %v3392
    %v3394 = vrot.slane %v3386, %v3393
    %v3396 = vunpack.c.l.s4 1966171168
    %v3397 = vunpack.c.0.s8 %v3396
    %v3398 = vlaneseq
    %v3399 = vshrl.u32 %v3398, 7
    %v3400 = vsub.s32 %v3397, %v3399
    %v3401 = vrot.slane %v3387, %v3400
    %v3402 = vlaneseq
    %v3403 = vshrl.u32 %v3402, 7
    %v3404 = vsub.s32 0, %v3403
    %v3405 = vrot.slane %v3394, %v3404
    %v3406 = vlaneseq
    %v3407 = vshrl.u32 %v3406, 7
    %v3408 = vsub.s32 0, %v3407
    %v3409 = vrot.slane %v3401, %v3408
    %v3412 = vmul.f32 %v440, %v3405
    %v3413 = vmul.f32 %v441, %v3405
    %v3414 = vmul.f32 %v442, %v3409
    %v3415 = vmul.f32 %v443, %v3409
    %3416 = vadd.xlane.f32.xlu0 %v3412
    %v3417 = vpop.xlane.xlu0 %3416
    %3418 = vadd.xlane.f32.xlu0 %v3413
    %v3419 = vpop.xlane.xlu0 %3418
    %3420 = vadd.xlane.f32.xlu0 %v3414
    %v3421 = vpop.xlane.xlu0 %3420
    %3422 = vadd.xlane.f32.xlu0 %v3415
    %v3423 = vpop.xlane.xlu0 %3422
    %v3428 = vlaneseq
    %v3429 = vshrl.u32 %v3428, 7
    %v3430 = vsub.s32 %v1261, %v3429
    %v3431 = vrot.slane %v3417, %v3430
    %v3432 = vlaneseq
    %v3433 = vshrl.u32 %v3432, 7
    %v3434 = vsub.s32 %v1266, %v3433
    %v3435 = vrot.slane %v3419, %v3434
    %v3436 = vsel %vm1271, %v3435, %v3431
    %v3437 = vlaneseq
    %v3438 = vshrl.u32 %v3437, 7
    %v3439 = vsub.s32 %v1261, %v3438
    %v3440 = vrot.slane %v3421, %v3439
    %v3441 = vlaneseq
    %v3442 = vshrl.u32 %v3441, 7
    %v3443 = vsub.s32 %v1266, %v3442
    %v3444 = vrot.slane %v3423, %v3443
    %v3445 = vsel %vm1271, %v3444, %v3440
    %v3446 = vsel %vm1282, %v3445, %v3436
    %v3448 = vsel %vm1285, %v3446, -inf
    %3449 = vmax.xlane.f32.xlu0 %v3448
    %v3450 = vpop.xlane.xlu0 %3449
    %v3452 = vlaneseq
    %v3453 = vshrl.u32 %v3452, 7
    %v3454 = vsub.s32 0, %v3453
    %v3455 = vrot.slane %v3450, %v3454
    %v3456 = vlaneseq
    %v3457 = vshrl.u32 %v3456, 7
    %v3458 = vsub.s32 1, %v3457
    %v3459 = vrot.slane %v3450, %v3458
    %v3462 = vsub.f32 %v3417, %v3455
    %v3463 = vsub.f32 %v3419, %v3455
    %v3464 = vsub.f32 %v3421, %v3459
    %v3465 = vsub.f32 %v3423, %v3459
    %v3466 = vmul.f32 %v3462, 1.442695
    %v3467 = vpow.pop %v3466
    %v3468 = vmul.f32 %v3463, 1.442695
    %v3469 = vpow.pop %v3468
    %v3470 = vmul.f32 %v3464, 1.442695
    %v3471 = vpow.pop %v3470
    %v3472 = vmul.f32 %v3465, 1.442695
    %v3473 = vpow.pop %v3472
    %3478 = vset.pattern.permute.xlu0 0
    %3479 = vperm.xlu0 %3478, %v3467
    %v3480 = vpop.permute.xlu0 %3479
    %3481 = vset.pattern.permute.xlu0 0
    %3482 = vperm.xlu0 %3481, %v3469
    %v3483 = vpop.permute.xlu0 %3482
    %3484 = vset.pattern.permute.xlu0 0
    %3485 = vperm.xlu0 %3484, %v3471
    %v3486 = vpop.permute.xlu0 %3485
    %3487 = vset.pattern.permute.xlu0 0
    %3488 = vperm.xlu0 %3487, %v3473
    %v3489 = vpop.permute.xlu0 %3488
    %v3490 = vlaneseq
    %v3491 = vshrl.u32 %v3490, 7
    %v3492 = vsub.s32 %v1261, %v3491
    %v3493 = vrot.slane %v3480, %v3492
    %v3494 = vlaneseq
    %v3495 = vshrl.u32 %v3494, 7
    %v3496 = vsub.s32 %v1266, %v3495
    %v3497 = vrot.slane %v3483, %v3496
    %v3498 = vsel %vm1271, %v3497, %v3493
    %v3499 = vlaneseq
    %v3500 = vshrl.u32 %v3499, 7
    %v3501 = vsub.s32 %v1261, %v3500
    %v3502 = vrot.slane %v3486, %v3501
    %v3503 = vlaneseq
    %v3504 = vshrl.u32 %v3503, 7
    %v3505 = vsub.s32 %v1266, %v3504
    %v3506 = vrot.slane %v3489, %v3505
    %v3507 = vsel %vm1271, %v3506, %v3502
    %v3508 = vsel %vm1282, %v3507, %v3498
    %v3510 = vsel %vm1285, %v3508, 0.0
    %3511 = vadd.xlane.f32.xlu0 %v3510
    %v3512 = vpop.xlane.xlu0 %3511
    %v3513 = vrcp.pop %v3512
    %v3515 = vlaneseq
    %v3516 = vshrl.u32 %v3515, 7
    %v3517 = vsub.s32 0, %v3516
    %v3518 = vrot.slane %v3513, %v3517
    %v3519 = vlaneseq
    %v3520 = vshrl.u32 %v3519, 7
    %v3521 = vsub.s32 1, %v3520
    %v3522 = vrot.slane %v3513, %v3521
    %v3525 = vmul.f32 %v3467, %v3518
    %v3526 = vmul.f32 %v3469, %v3518
    %v3527 = vmul.f32 %v3471, %v3522
    %v3528 = vmul.f32 %v3473, %v3522
    %3531 = vset.pattern.permute.xlu0 0
    %3532 = vperm.xlu0 %3531, %v3525
    %v3533 = vpop.permute.xlu0 %3532
    %3534 = vset.pattern.permute.xlu0 0
    %3535 = vperm.xlu0 %3534, %v3526
    %v3536 = vpop.permute.xlu0 %3535
    %v3537 = vlaneseq
    %v3538 = vshrl.u32 %v3537, 7
    %v3539 = vsub.s32 %v1261, %v3538
    %v3540 = vrot.slane %v3533, %v3539
    %v3541 = vlaneseq
    %v3542 = vshrl.u32 %v3541, 7
    %v3543 = vsub.s32 %v1266, %v3542
    %v3544 = vrot.slane %v3536, %v3543
    %v3545 = vsel %vm1271, %v3544, %v3540
    %v3546 = vsel %vm182, %v3545, 0
    %3548 = vmatprep.subr.mxu0 0.0
    %3549 = vmatpush1.msra.mxu0 0.0
    %3550 = vmatprep.subr.mxu0 0.0
    %3551 = vmatpush1.msra.mxu0 0.0
    %3552 = vmatprep.subr.mxu0 0.0
    %3553 = vmatpush1.msra.mxu0 0.0
    %3554 = vmatprep.subr.mxu0 0.0
    %3555 = vmatpush1.msra.mxu0 0.0
    %3556 = vmatprep.subr.mxu0 0.0
    %3557 = vmatpush1.msra.mxu0 0.0
    %3558 = vmatprep.subr.mxu0 0.0
    %3559 = vmatpush1.msra.mxu0 0.0
    %3560 = vmatprep.subr.mxu0 0.0
    %3561 = vmatpush1.msra.mxu0 0.0
    %3562 = vmatprep.subr.mxu0 0.0
    %3563 = vmatpush1.msra.mxu0 0.0
    %3564 = vmatprep.subr.mxu0 0.0
    %3565 = vmatpush1.msra.mxu0 0.0
    %3566 = vmatprep.subr.mxu0 0.0
    %3567 = vmatpush1.msra.mxu0 0.0
    %3568 = vmatprep.subr.mxu0 0.0
    %3569 = vmatpush1.msra.mxu0 0.0
    %3570 = vmatprep.subr.mxu0 0.0
    %3571 = vmatpush1.msra.mxu0 0.0
    %3572 = vmatprep.subr.mxu0 0.0
    %3573 = vmatpush1.msra.mxu0 0.0
    %3574 = vmatprep.subr.mxu0 0.0
    %3575 = vmatpush1.msra.mxu0 0.0
    %3576 = vmatprep.subr.mxu0 0.0
    %3577 = vmatpush1.msra.mxu0 %v319
    %3578 = vmatprep.subr.mxu0 0.0
    %3579 = vmatpush1.msra.mxu0 %v318
    %3580 = vmatprep.subr.mxu0 0.0
    %3581 = vmatpush2.msra.mxu0 0.0
    %3582 = vmatprep.subr.mxu0 0.0
    %3583 = vmatpush2.msra.mxu0 0.0
    %3584 = vmatprep.subr.mxu0 0.0
    %3585 = vmatpush2.msra.mxu0 0.0
    %3586 = vmatprep.subr.mxu0 0.0
    %3587 = vmatpush2.msra.mxu0 0.0
    %3588 = vmatprep.subr.mxu0 0.0
    %3589 = vmatpush2.msra.mxu0 0.0
    %3590 = vmatprep.subr.mxu0 0.0
    %3591 = vmatpush2.msra.mxu0 0.0
    %3592 = vmatprep.subr.mxu0 0.0
    %3593 = vmatpush2.msra.mxu0 0.0
    %3594 = vmatprep.subr.mxu0 0.0
    %3595 = vmatpush2.msra.mxu0 0.0
    %3596 = vmatprep.subr.mxu0 0.0
    %3597 = vmatpush2.msra.mxu0 0.0
    %3598 = vmatprep.subr.mxu0 0.0
    %3599 = vmatpush2.msra.mxu0 0.0
    %3600 = vmatprep.subr.mxu0 0.0
    %3601 = vmatpush2.msra.mxu0 0.0
    %3602 = vmatprep.subr.mxu0 0.0
    %3603 = vmatpush2.msra.mxu0 0.0
    %3604 = vmatprep.subr.mxu0 0.0
    %3605 = vmatpush2.msra.mxu0 0.0
    %3606 = vmatprep.subr.mxu0 0.0
    %3607 = vmatpush2.msra.mxu0 0.0
    %3608 = vmatprep.subr.mxu0 0.0
    %3609 = vmatpush2.msra.mxu0 0.0
    %3610 = vmatprep.subr.mxu0 0.0
    %3611 = vmatpush2.msra.mxu0 0.0
    %3612 = vmatprep.mubr.f32.mxu0 0.0
    %3613 = vmatmul.mubr.f32.gmra.mxu0 %v3546
    %v3614 = vpop.f32.mrf.mxu0
    %v3615 = vadd.f32 0.0, %v3614
    %v3616 = vpop.f32.mrf.mxu0
    %3617 = vdwg.mxu0
    %3620 = vset.pattern.permute.xlu0 0
    %3621 = vperm.xlu0 %3620, %v3527
    %v3622 = vpop.permute.xlu0 %3621
    %3623 = vset.pattern.permute.xlu0 0
    %3624 = vperm.xlu0 %3623, %v3528
    %v3625 = vpop.permute.xlu0 %3624
    %v3626 = vlaneseq
    %v3627 = vshrl.u32 %v3626, 7
    %v3628 = vsub.s32 %v1261, %v3627
    %v3629 = vrot.slane %v3622, %v3628
    %v3630 = vlaneseq
    %v3631 = vshrl.u32 %v3630, 7
    %v3632 = vsub.s32 %v1266, %v3631
    %v3633 = vrot.slane %v3625, %v3632
    %v3634 = vsel %vm1271, %v3633, %v3629
    %v3635 = vsel %vm182, %v3634, 0
    %3637 = vmatprep.subr.mxu0 0.0
    %3638 = vmatpush1.msra.mxu0 0.0
    %3639 = vmatprep.subr.mxu0 0.0
    %3640 = vmatpush1.msra.mxu0 0.0
    %3641 = vmatprep.subr.mxu0 0.0
    %3642 = vmatpush1.msra.mxu0 0.0
    %3643 = vmatprep.subr.mxu0 0.0
    %3644 = vmatpush1.msra.mxu0 0.0
    %3645 = vmatprep.subr.mxu0 0.0
    %3646 = vmatpush1.msra.mxu0 0.0
    %3647 = vmatprep.subr.mxu0 0.0
    %3648 = vmatpush1.msra.mxu0 0.0
    %3649 = vmatprep.subr.mxu0 0.0
    %3650 = vmatpush1.msra.mxu0 0.0
    %3651 = vmatprep.subr.mxu0 0.0
    %3652 = vmatpush1.msra.mxu0 0.0
    %3653 = vmatprep.subr.mxu0 0.0
    %3654 = vmatpush1.msra.mxu0 0.0
    %3655 = vmatprep.subr.mxu0 0.0
    %3656 = vmatpush1.msra.mxu0 0.0
    %3657 = vmatprep.subr.mxu0 0.0
    %3658 = vmatpush1.msra.mxu0 0.0
    %3659 = vmatprep.subr.mxu0 0.0
    %3660 = vmatpush1.msra.mxu0 0.0
    %3661 = vmatprep.subr.mxu0 0.0
    %3662 = vmatpush1.msra.mxu0 0.0
    %3663 = vmatprep.subr.mxu0 0.0
    %3664 = vmatpush1.msra.mxu0 0.0
    %3665 = vmatprep.subr.mxu0 0.0
    %3666 = vmatpush1.msra.mxu0 %v435
    %3667 = vmatprep.subr.mxu0 0.0
    %3668 = vmatpush1.msra.mxu0 %v434
    %3669 = vmatprep.subr.mxu0 0.0
    %3670 = vmatpush2.msra.mxu0 0.0
    %3671 = vmatprep.subr.mxu0 0.0
    %3672 = vmatpush2.msra.mxu0 0.0
    %3673 = vmatprep.subr.mxu0 0.0
    %3674 = vmatpush2.msra.mxu0 0.0
    %3675 = vmatprep.subr.mxu0 0.0
    %3676 = vmatpush2.msra.mxu0 0.0
    %3677 = vmatprep.subr.mxu0 0.0
    %3678 = vmatpush2.msra.mxu0 0.0
    %3679 = vmatprep.subr.mxu0 0.0
    %3680 = vmatpush2.msra.mxu0 0.0
    %3681 = vmatprep.subr.mxu0 0.0
    %3682 = vmatpush2.msra.mxu0 0.0
    %3683 = vmatprep.subr.mxu0 0.0
    %3684 = vmatpush2.msra.mxu0 0.0
    %3685 = vmatprep.subr.mxu0 0.0
    %3686 = vmatpush2.msra.mxu0 0.0
    %3687 = vmatprep.subr.mxu0 0.0
    %3688 = vmatpush2.msra.mxu0 0.0
    %3689 = vmatprep.subr.mxu0 0.0
    %3690 = vmatpush2.msra.mxu0 0.0
    %3691 = vmatprep.subr.mxu0 0.0
    %3692 = vmatpush2.msra.mxu0 0.0
    %3693 = vmatprep.subr.mxu0 0.0
    %3694 = vmatpush2.msra.mxu0 0.0
    %3695 = vmatprep.subr.mxu0 0.0
    %3696 = vmatpush2.msra.mxu0 0.0
    %3697 = vmatprep.subr.mxu0 0.0
    %3698 = vmatpush2.msra.mxu0 0.0
    %3699 = vmatprep.subr.mxu0 0.0
    %3700 = vmatpush2.msra.mxu0 0.0
    %3701 = vmatprep.mubr.f32.mxu0 0.0
    %3702 = vmatmul.mubr.f32.gmra.mxu0 %v3635
    %v3703 = vpop.f32.mrf.mxu0
    %v3704 = vadd.f32 0.0, %v3703
    %v3705 = vpop.f32.mrf.mxu0
    %3706 = vdwg.mxu0
    %v3707 = vld [vmem:[%s2070] sm:$0xff]
    %v3708 = vld [vmem:[%s2070 + $0x8] sm:$0xff]
    %v3709 = vld [vmem:[%s2070 + $0x10] sm:$0xff]
    %v3710 = vld [vmem:[%s2070 + $0x18] sm:$0xff]
    %v3711 = vld [vmem:[%s2070 + $0x20] sm:$0xff]
    %v3712 = vld [vmem:[%s2070 + $0x28] sm:$0xff]
    %v3713 = vld [vmem:[%s2070 + $0x30] sm:$0xff]
    %v3714 = vld [vmem:[%s2070 + $0x38] sm:$0xff]
    %v3715 = vld [vmem:[%s2070 + $0x40] sm:$0xff]
    %v3716 = vld [vmem:[%s2070 + $0x48] sm:$0xff]
    %v3717 = vld [vmem:[%s2070 + $0x50] sm:$0xff]
    %v3718 = vld [vmem:[%s2070 + $0x58] sm:$0xff]
    %v3719 = vld [vmem:[%s2070 + $0x60] sm:$0xff]
    %v3720 = vld [vmem:[%s2070 + $0x68] sm:$0xff]
    %v3721 = vld [vmem:[%s2070 + $0x70] sm:$0xff]
    %v3722 = vld [vmem:[%s2070 + $0x78] sm:$0xff]
    %v3725 = vrot.slane %v3704, 7
    %v3726 = vsel %vm1282, %v3725, %v3615
    %3728 = vmatprep.subr.mxu0 0.0
    %3729 = vmatpush1.msra.mxu0 %v3722
    %3730 = vmatprep.subr.mxu0 0.0
    %3731 = vmatpush1.msra.mxu0 %v3721
    %3732 = vmatprep.subr.mxu0 0.0
    %3733 = vmatpush1.msra.mxu0 %v3720
    %3734 = vmatprep.subr.mxu0 0.0
    %3735 = vmatpush1.msra.mxu0 %v3719
    %3736 = vmatprep.subr.mxu0 0.0
    %3737 = vmatpush1.msra.mxu0 %v3718
    %3738 = vmatprep.subr.mxu0 0.0
    %3739 = vmatpush1.msra.mxu0 %v3717
    %3740 = vmatprep.subr.mxu0 0.0
    %3741 = vmatpush1.msra.mxu0 %v3716
    %3742 = vmatprep.subr.mxu0 0.0
    %3743 = vmatpush1.msra.mxu0 %v3715
    %3744 = vmatprep.subr.mxu0 0.0
    %3745 = vmatpush1.msra.mxu0 %v3714
    %3746 = vmatprep.subr.mxu0 0.0
    %3747 = vmatpush1.msra.mxu0 %v3713
    %3748 = vmatprep.subr.mxu0 0.0
    %3749 = vmatpush1.msra.mxu0 %v3712
    %3750 = vmatprep.subr.mxu0 0.0
    %3751 = vmatpush1.msra.mxu0 %v3711
    %3752 = vmatprep.subr.mxu0 0.0
    %3753 = vmatpush1.msra.mxu0 %v3710
    %3754 = vmatprep.subr.mxu0 0.0
    %3755 = vmatpush1.msra.mxu0 %v3709
    %3756 = vmatprep.subr.mxu0 0.0
    %3757 = vmatpush1.msra.mxu0 %v3708
    %3758 = vmatprep.subr.mxu0 0.0
    %3759 = vmatpush1.msra.mxu0 %v3707
    %3760 = vmatprep.subr.mxu0 0.0
    %3761 = vmatpush2.msra.mxu0 0.0
    %3762 = vmatprep.subr.mxu0 0.0
    %3763 = vmatpush2.msra.mxu0 0.0
    %3764 = vmatprep.subr.mxu0 0.0
    %3765 = vmatpush2.msra.mxu0 0.0
    %3766 = vmatprep.subr.mxu0 0.0
    %3767 = vmatpush2.msra.mxu0 0.0
    %3768 = vmatprep.subr.mxu0 0.0
    %3769 = vmatpush2.msra.mxu0 0.0
    %3770 = vmatprep.subr.mxu0 0.0
    %3771 = vmatpush2.msra.mxu0 0.0
    %3772 = vmatprep.subr.mxu0 0.0
    %3773 = vmatpush2.msra.mxu0 0.0
    %3774 = vmatprep.subr.mxu0 0.0
    %3775 = vmatpush2.msra.mxu0 0.0
    %3776 = vmatprep.subr.mxu0 0.0
    %3777 = vmatpush2.msra.mxu0 0.0
    %3778 = vmatprep.subr.mxu0 0.0
    %3779 = vmatpush2.msra.mxu0 0.0
    %3780 = vmatprep.subr.mxu0 0.0
    %3781 = vmatpush2.msra.mxu0 0.0
    %3782 = vmatprep.subr.mxu0 0.0
    %3783 = vmatpush2.msra.mxu0 0.0
    %3784 = vmatprep.subr.mxu0 0.0
    %3785 = vmatpush2.msra.mxu0 0.0
    %3786 = vmatprep.subr.mxu0 0.0
    %3787 = vmatpush2.msra.mxu0 0.0
    %3788 = vmatprep.subr.mxu0 0.0
    %3789 = vmatpush2.msra.mxu0 0.0
    %3790 = vmatprep.subr.mxu0 0.0
    %3791 = vmatpush2.msra.mxu0 0.0
    %3792 = vmatprep.mubr.f32.mxu0 0.0
    %3793 = vmatmul.mubr.f32.gmra.mxu0 %v3726
    %v3794 = vpop.f32.mrf.mxu0
    %v3795 = vadd.f32 %v3376, %v3794
    %v3796 = vpop.f32.mrf.mxu0
    %3797 = vdwg.mxu0
    %v3798 = vtanh.pop %v3795
    %v3799 = vld [vmem:[#allocation5] sm:$0xff]
    %v3800 = vld [vmem:[#allocation5 + $0x8] sm:$0xff]
    %v3801 = vld [vmem:[#allocation5 + $0x10] sm:$0xff]
    %v3802 = vld [vmem:[#allocation5 + $0x18] sm:$0xff]
    %v3803 = vld [vmem:[#allocation5 + $0x20] sm:$0xff]
    %v3804 = vld [vmem:[#allocation5 + $0x28] sm:$0xff]
    %v3805 = vld [vmem:[#allocation5 + $0x30] sm:$0xff]
    %v3806 = vld [vmem:[#allocation5 + $0x38] sm:$0xff]
    %v3807 = vld [vmem:[#allocation5 + $0x40] sm:$0xff]
    %v3808 = vld [vmem:[#allocation5 + $0x48] sm:$0xff]
    %v3809 = vld [vmem:[#allocation5 + $0x50] sm:$0xff]
    %v3810 = vld [vmem:[#allocation5 + $0x58] sm:$0xff]
    %v3811 = vld [vmem:[#allocation5 + $0x60] sm:$0xff]
    %v3812 = vld [vmem:[#allocation5 + $0x68] sm:$0xff]
    %v3813 = vld [vmem:[#allocation5 + $0x70] sm:$0xff]
    %v3814 = vld [vmem:[#allocation5 + $0x78] sm:$0xff]
    %v3815 = vld [vmem:[#allocation5 + $0x80] sm:$0xff]
    %v3816 = vld [vmem:[#allocation5 + $0x88] sm:$0xff]
    %v3817 = vld [vmem:[#allocation5 + $0x90] sm:$0xff]
    %v3818 = vld [vmem:[#allocation5 + $0x98] sm:$0xff]
    %v3819 = vld [vmem:[#allocation5 + $0xa0] sm:$0xff]
    %v3820 = vld [vmem:[#allocation5 + $0xa8] sm:$0xff]
    %v3821 = vld [vmem:[#allocation5 + $0xb0] sm:$0xff]
    %v3822 = vld [vmem:[#allocation5 + $0xb8] sm:$0xff]
    %v3823 = vld [vmem:[#allocation5 + $0xc0] sm:$0xff]
    %v3824 = vld [vmem:[#allocation5 + $0xc8] sm:$0xff]
    %v3825 = vld [vmem:[#allocation5 + $0xd0] sm:$0xff]
    %v3826 = vld [vmem:[#allocation5 + $0xd8] sm:$0xff]
    %v3827 = vld [vmem:[#allocation5 + $0xe0] sm:$0xff]
    %v3828 = vld [vmem:[#allocation5 + $0xe8] sm:$0xff]
    %v3829 = vld [vmem:[#allocation5 + $0xf0] sm:$0xff]
    %v3830 = vld [vmem:[#allocation5 + $0xf8] sm:$0xff]
    %v3831 = vld [vmem:[#allocation5 + $0x100] sm:$0xff]
    %v3832 = vld [vmem:[#allocation5 + $0x108] sm:$0xff]
    %v3833 = vld [vmem:[#allocation5 + $0x110] sm:$0xff]
    %v3834 = vld [vmem:[#allocation5 + $0x118] sm:$0xff]
    %v3835 = vld [vmem:[#allocation5 + $0x120] sm:$0xff]
    %v3836 = vld [vmem:[#allocation5 + $0x128] sm:$0xff]
    %v3837 = vld [vmem:[#allocation5 + $0x130] sm:$0xff]
    %v3838 = vld [vmem:[#allocation5 + $0x138] sm:$0xff]
    %v3839 = vld [vmem:[#allocation5 + $0x140] sm:$0xff]
    %v3840 = vld [vmem:[#allocation5 + $0x148] sm:$0xff]
    %v3841 = vld [vmem:[#allocation5 + $0x150] sm:$0xff]
    %v3842 = vld [vmem:[#allocation5 + $0x158] sm:$0xff]
    %v3843 = vld [vmem:[#allocation5 + $0x160] sm:$0xff]
    %v3844 = vld [vmem:[#allocation5 + $0x168] sm:$0xff]
    %v3845 = vld [vmem:[#allocation5 + $0x170] sm:$0xff]
    %v3846 = vld [vmem:[#allocation5 + $0x178] sm:$0xff]
    %v3847 = vld [vmem:[#allocation5 + $0x180] sm:$0xff]
    %v3848 = vld [vmem:[#allocation5 + $0x188] sm:$0xff]
    %v3849 = vld [vmem:[#allocation5 + $0x190] sm:$0xff]
    %v3850 = vld [vmem:[#allocation5 + $0x198] sm:$0xff]
    %v3851 = vld [vmem:[#allocation5 + $0x1a0] sm:$0xff]
    %v3852 = vld [vmem:[#allocation5 + $0x1a8] sm:$0xff]
    %v3853 = vld [vmem:[#allocation5 + $0x1b0] sm:$0xff]
    %v3854 = vld [vmem:[#allocation5 + $0x1b8] sm:$0xff]
    %v3855 = vld [vmem:[#allocation5 + $0x1c0] sm:$0xff]
    %v3856 = vld [vmem:[#allocation5 + $0x1c8] sm:$0xff]
    %v3857 = vld [vmem:[#allocation5 + $0x1d0] sm:$0xff]
    %v3858 = vld [vmem:[#allocation5 + $0x1d8] sm:$0xff]
    %v3859 = vld [vmem:[#allocation5 + $0x1e0] sm:$0xff]
    %v3860 = vld [vmem:[#allocation5 + $0x1e8] sm:$0xff]
    %v3861 = vld [vmem:[#allocation5 + $0x1f0] sm:$0xff]
    %v3862 = vld [vmem:[#allocation5 + $0x1f8] sm:$0xff]
    %v3863 = vld [vmem:[#allocation5 + $0x200] sm:$0xff]
    %v3864 = vld [vmem:[#allocation5 + $0x208] sm:$0xff]
    %v3865 = vld [vmem:[#allocation5 + $0x210] sm:$0xff]
    %v3866 = vld [vmem:[#allocation5 + $0x218] sm:$0xff]
    %v3867 = vld [vmem:[#allocation5 + $0x220] sm:$0xff]
    %v3868 = vld [vmem:[#allocation5 + $0x228] sm:$0xff]
    %v3869 = vld [vmem:[#allocation5 + $0x230] sm:$0xff]
    %v3870 = vld [vmem:[#allocation5 + $0x238] sm:$0xff]
    %v3871 = vld [vmem:[#allocation5 + $0x240] sm:$0xff]
    %v3872 = vld [vmem:[#allocation5 + $0x248] sm:$0xff]
    %v3873 = vld [vmem:[#allocation5 + $0x250] sm:$0xff]
    %v3874 = vld [vmem:[#allocation5 + $0x258] sm:$0xff]
    %v3875 = vld [vmem:[#allocation5 + $0x260] sm:$0xff]
    %v3876 = vld [vmem:[#allocation5 + $0x268] sm:$0xff]
    %v3877 = vld [vmem:[#allocation5 + $0x270] sm:$0xff]
    %v3878 = vld [vmem:[#allocation5 + $0x278] sm:$0xff]
    %v3879 = vld [vmem:[#allocation5 + $0x280] sm:$0xff]
    %v3880 = vld [vmem:[#allocation5 + $0x288] sm:$0xff]
    %v3881 = vld [vmem:[#allocation5 + $0x290] sm:$0xff]
    %v3882 = vld [vmem:[#allocation5 + $0x298] sm:$0xff]
    %v3883 = vld [vmem:[#allocation5 + $0x2a0] sm:$0xff]
    %v3884 = vld [vmem:[#allocation5 + $0x2a8] sm:$0xff]
    %v3885 = vld [vmem:[#allocation5 + $0x2b0] sm:$0xff]
    %v3886 = vld [vmem:[#allocation5 + $0x2b8] sm:$0xff]
    %v3887 = vld [vmem:[#allocation5 + $0x2c0] sm:$0xff]
    %v3888 = vld [vmem:[#allocation5 + $0x2c8] sm:$0xff]
    %v3889 = vld [vmem:[#allocation5 + $0x2d0] sm:$0xff]
    %v3890 = vld [vmem:[#allocation5 + $0x2d8] sm:$0xff]
    %v3891 = vld [vmem:[#allocation5 + $0x2e0] sm:$0xff]
    %v3892 = vld [vmem:[#allocation5 + $0x2e8] sm:$0xff]
    %v3893 = vld [vmem:[#allocation5 + $0x2f0] sm:$0xff]
    %v3894 = vld [vmem:[#allocation5 + $0x2f8] sm:$0xff]
    %v3895 = vld [vmem:[#allocation5 + $0x300] sm:$0xff]
    %v3896 = vld [vmem:[#allocation5 + $0x308] sm:$0xff]
    %v3897 = vld [vmem:[#allocation5 + $0x310] sm:$0xff]
    %v3898 = vld [vmem:[#allocation5 + $0x318] sm:$0xff]
    %v3899 = vld [vmem:[#allocation5 + $0x320] sm:$0xff]
    %v3900 = vld [vmem:[#allocation5 + $0x328] sm:$0xff]
    %v3901 = vld [vmem:[#allocation5 + $0x330] sm:$0xff]
    %v3902 = vld [vmem:[#allocation5 + $0x338] sm:$0xff]
    %v3903 = vld [vmem:[#allocation5 + $0x340] sm:$0xff]
    %v3904 = vld [vmem:[#allocation5 + $0x348] sm:$0xff]
    %v3905 = vld [vmem:[#allocation5 + $0x350] sm:$0xff]
    %v3906 = vld [vmem:[#allocation5 + $0x358] sm:$0xff]
    %v3907 = vld [vmem:[#allocation5 + $0x360] sm:$0xff]
    %v3908 = vld [vmem:[#allocation5 + $0x368] sm:$0xff]
    %v3909 = vld [vmem:[#allocation5 + $0x370] sm:$0xff]
    %v3910 = vld [vmem:[#allocation5 + $0x378] sm:$0xff]
    %v3911 = vld [vmem:[#allocation5 + $0x380] sm:$0xff]
    %v3912 = vld [vmem:[#allocation5 + $0x388] sm:$0xff]
    %v3913 = vld [vmem:[#allocation5 + $0x390] sm:$0xff]
    %v3914 = vld [vmem:[#allocation5 + $0x398] sm:$0xff]
    %v3915 = vld [vmem:[#allocation5 + $0x3a0] sm:$0xff]
    %v3916 = vld [vmem:[#allocation5 + $0x3a8] sm:$0xff]
    %v3917 = vld [vmem:[#allocation5 + $0x3b0] sm:$0xff]
    %v3918 = vld [vmem:[#allocation5 + $0x3b8] sm:$0xff]
    %v3919 = vld [vmem:[#allocation5 + $0x3c0] sm:$0xff]
    %v3920 = vld [vmem:[#allocation5 + $0x3c8] sm:$0xff]
    %v3921 = vld [vmem:[#allocation5 + $0x3d0] sm:$0xff]
    %v3922 = vld [vmem:[#allocation5 + $0x3d8] sm:$0xff]
    %v3923 = vld [vmem:[#allocation5 + $0x3e0] sm:$0xff]
    %v3924 = vld [vmem:[#allocation5 + $0x3e8] sm:$0xff]
    %v3925 = vld [vmem:[#allocation5 + $0x3f0] sm:$0xff]
    %v3926 = vld [vmem:[#allocation5 + $0x3f8] sm:$0xff]
    %3927 = vmatprep.subr.mxu0 %v3860
    %3928 = vmatpush1.msra.mxu0 %v3859
    %3929 = vmatprep.subr.mxu0 %v3856
    %3930 = vmatpush1.msra.mxu0 %v3855
    %3931 = vmatprep.subr.mxu0 %v3852
    %3932 = vmatpush1.msra.mxu0 %v3851
    %3933 = vmatprep.subr.mxu0 %v3848
    %3934 = vmatpush1.msra.mxu0 %v3847
    %3935 = vmatprep.subr.mxu0 %v3844
    %3936 = vmatpush1.msra.mxu0 %v3843
    %3937 = vmatprep.subr.mxu0 %v3840
    %3938 = vmatpush1.msra.mxu0 %v3839
    %3939 = vmatprep.subr.mxu0 %v3836
    %3940 = vmatpush1.msra.mxu0 %v3835
    %3941 = vmatprep.subr.mxu0 %v3832
    %3942 = vmatpush1.msra.mxu0 %v3831
    %3943 = vmatprep.subr.mxu0 %v3828
    %3944 = vmatpush1.msra.mxu0 %v3827
    %3945 = vmatprep.subr.mxu0 %v3824
    %3946 = vmatpush1.msra.mxu0 %v3823
    %3947 = vmatprep.subr.mxu0 %v3820
    %3948 = vmatpush1.msra.mxu0 %v3819
    %3949 = vmatprep.subr.mxu0 %v3816
    %3950 = vmatpush1.msra.mxu0 %v3815
    %3951 = vmatprep.subr.mxu0 %v3812
    %3952 = vmatpush1.msra.mxu0 %v3811
    %3953 = vmatprep.subr.mxu0 %v3808
    %3954 = vmatpush1.msra.mxu0 %v3807
    %3955 = vmatprep.subr.mxu0 %v3804
    %3956 = vmatpush1.msra.mxu0 %v3803
    %3957 = vmatprep.subr.mxu0 %v3800
    %3958 = vmatpush1.msra.mxu0 %v3799
    %3959 = vmatprep.subr.mxu0 %v3924
    %3960 = vmatpush2.msra.mxu0 %v3923
    %3961 = vmatprep.subr.mxu0 %v3920
    %3962 = vmatpush2.msra.mxu0 %v3919
    %3963 = vmatprep.subr.mxu0 %v3916
    %3964 = vmatpush2.msra.mxu0 %v3915
    %3965 = vmatprep.subr.mxu0 %v3912
    %3966 = vmatpush2.msra.mxu0 %v3911
    %3967 = vmatprep.subr.mxu0 %v3908
    %3968 = vmatpush2.msra.mxu0 %v3907
    %3969 = vmatprep.subr.mxu0 %v3904
    %3970 = vmatpush2.msra.mxu0 %v3903
    %3971 = vmatprep.subr.mxu0 %v3900
    %3972 = vmatpush2.msra.mxu0 %v3899
    %3973 = vmatprep.subr.mxu0 %v3896
    %3974 = vmatpush2.msra.mxu0 %v3895
    %3975 = vmatprep.subr.mxu0 %v3892
    %3976 = vmatpush2.msra.mxu0 %v3891
    %3977 = vmatprep.subr.mxu0 %v3888
    %3978 = vmatpush2.msra.mxu0 %v3887
    %3979 = vmatprep.subr.mxu0 %v3884
    %3980 = vmatpush2.msra.mxu0 %v3883
    %3981 = vmatprep.subr.mxu0 %v3880
    %3982 = vmatpush2.msra.mxu0 %v3879
    %3983 = vmatprep.subr.mxu0 %v3876
    %3984 = vmatpush2.msra.mxu0 %v3875
    %3985 = vmatprep.subr.mxu0 %v3872
    %3986 = vmatpush2.msra.mxu0 %v3871
    %3987 = vmatprep.subr.mxu0 %v3868
    %3988 = vmatpush2.msra.mxu0 %v3867
    %3989 = vmatprep.subr.mxu0 %v3864
    %3990 = vmatpush2.msra.mxu0 %v3863
    %3991 = vmatprep.mubr.f32.mxu0 %v3274
    %3992 = vmatmul.mubr.f32.gmra.mxu0 %v2750
    %v3993 = vpop.f32.mrf.mxu0
    %v3994 = vadd.f32 %v449, %v3993
    %v3995 = vpop.f32.mrf.mxu0
    %v3996 = vadd.f32 %v453, %v3995
    %3997 = vdwg.mxu0
    %3998 = vmatprep.subr.mxu0 %v3862
    %3999 = vmatpush1.msra.mxu0 %v3861
    %4000 = vmatprep.subr.mxu0 %v3858
    %4001 = vmatpush1.msra.mxu0 %v3857
    %4002 = vmatprep.subr.mxu0 %v3854
    %4003 = vmatpush1.msra.mxu0 %v3853
    %4004 = vmatprep.subr.mxu0 %v3850
    %4005 = vmatpush1.msra.mxu0 %v3849
    %4006 = vmatprep.subr.mxu0 %v3846
    %4007 = vmatpush1.msra.mxu0 %v3845
    %4008 = vmatprep.subr.mxu0 %v3842
    %4009 = vmatpush1.msra.mxu0 %v3841
    %4010 = vmatprep.subr.mxu0 %v3838
    %4011 = vmatpush1.msra.mxu0 %v3837
    %4012 = vmatprep.subr.mxu0 %v3834
    %4013 = vmatpush1.msra.mxu0 %v3833
    %4014 = vmatprep.subr.mxu0 %v3830
    %4015 = vmatpush1.msra.mxu0 %v3829
    %4016 = vmatprep.subr.mxu0 %v3826
    %4017 = vmatpush1.msra.mxu0 %v3825
    %4018 = vmatprep.subr.mxu0 %v3822
    %4019 = vmatpush1.msra.mxu0 %v3821
    %4020 = vmatprep.subr.mxu0 %v3818
    %4021 = vmatpush1.msra.mxu0 %v3817
    %4022 = vmatprep.subr.mxu0 %v3814
    %4023 = vmatpush1.msra.mxu0 %v3813
    %4024 = vmatprep.subr.mxu0 %v3810
    %4025 = vmatpush1.msra.mxu0 %v3809
    %4026 = vmatprep.subr.mxu0 %v3806
    %4027 = vmatpush1.msra.mxu0 %v3805
    %4028 = vmatprep.subr.mxu0 %v3802
    %4029 = vmatpush1.msra.mxu0 %v3801
    %4030 = vmatprep.subr.mxu0 %v3926
    %4031 = vmatpush2.msra.mxu0 %v3925
    %4032 = vmatprep.subr.mxu0 %v3922
    %4033 = vmatpush2.msra.mxu0 %v3921
    %4034 = vmatprep.subr.mxu0 %v3918
    %4035 = vmatpush2.msra.mxu0 %v3917
    %4036 = vmatprep.subr.mxu0 %v3914
    %4037 = vmatpush2.msra.mxu0 %v3913
    %4038 = vmatprep.subr.mxu0 %v3910
    %4039 = vmatpush2.msra.mxu0 %v3909
    %4040 = vmatprep.subr.mxu0 %v3906
    %4041 = vmatpush2.msra.mxu0 %v3905
    %4042 = vmatprep.subr.mxu0 %v3902
    %4043 = vmatpush2.msra.mxu0 %v3901
    %4044 = vmatprep.subr.mxu0 %v3898
    %4045 = vmatpush2.msra.mxu0 %v3897
    %4046 = vmatprep.subr.mxu0 %v3894
    %4047 = vmatpush2.msra.mxu0 %v3893
    %4048 = vmatprep.subr.mxu0 %v3890
    %4049 = vmatpush2.msra.mxu0 %v3889
    %4050 = vmatprep.subr.mxu0 %v3886
    %4051 = vmatpush2.msra.mxu0 %v3885
    %4052 = vmatprep.subr.mxu0 %v3882
    %4053 = vmatpush2.msra.mxu0 %v3881
    %4054 = vmatprep.subr.mxu0 %v3878
    %4055 = vmatpush2.msra.mxu0 %v3877
    %4056 = vmatprep.subr.mxu0 %v3874
    %4057 = vmatpush2.msra.mxu0 %v3873
    %4058 = vmatprep.subr.mxu0 %v3870
    %4059 = vmatpush2.msra.mxu0 %v3869
    %4060 = vmatprep.subr.mxu0 %v3866
    %4061 = vmatpush2.msra.mxu0 %v3865
    %4062 = vmatprep.mubr.f32.mxu0 %v3274
    %4063 = vmatmul.mubr.f32.gmra.mxu0 %v2750
    %v4064 = vpop.f32.mrf.mxu0
    %v4065 = vadd.f32 %v457, %v4064
    %v4066 = vpop.f32.mrf.mxu0
    %v4067 = vadd.f32 %v461, %v4066
    %4068 = vdwg.mxu0
    %v4069 = vxor.u32 %v3994, 2147483648
    %v4070 = vmul.f32 %v4069, 1.442695
    %v4071 = vpow.pop %v4070
    %v4072 = vadd.f32 %v4071, 1.0
    %v4073 = vrcp.pop %v4072
    %v4074 = vmul.f32 1.0, %v4073
    %v4075 = vxor.u32 %v3996, 2147483648
    %v4076 = vmul.f32 %v4075, 1.442695
    %v4077 = vpow.pop %v4076
    %v4078 = vadd.f32 %v4077, 1.0
    %v4079 = vrcp.pop %v4078
    %v4080 = vmul.f32 1.0, %v4079
    %v4081 = vtanh.pop %v4065
    %v4082 = vxor.u32 %v4067, 2147483648
    %v4083 = vmul.f32 %v4082, 1.442695
    %v4084 = vpow.pop %v4083
    %v4085 = vadd.f32 %v4084, 1.0
    %v4086 = vrcp.pop %v4085
    %v4087 = vmul.f32 1.0, %v4086
    %v4088 = vmul.f32 %v4080, %v2454
    %v4089 = vmul.f32 %v4074, %v4081
    %v4090 = vadd.f32 %v4088, %v4089
    %v4091 = vtanh.pop %v4090
    %v4092 = vmul.f32 %v4087, %v4091
    %v4093 = vld [vmem:[%s812] sm:$0xff]
    %v4094 = vld [vmem:[%s812 + $0x8] sm:$0xff]
    %v4095 = vld [vmem:[%s812 + $0x10] sm:$0xff]
    %v4096 = vld [vmem:[%s812 + $0x18] sm:$0xff]
    %v4097 = vld [vmem:[%s812 + $0x20] sm:$0xff]
    %v4098 = vld [vmem:[%s812 + $0x28] sm:$0xff]
    %v4099 = vld [vmem:[%s812 + $0x30] sm:$0xff]
    %v4100 = vld [vmem:[%s812 + $0x38] sm:$0xff]
    %v4101 = vld [vmem:[%s812 + $0x40] sm:$0xff]
    %v4102 = vld [vmem:[%s812 + $0x48] sm:$0xff]
    %v4103 = vld [vmem:[%s812 + $0x50] sm:$0xff]
    %v4104 = vld [vmem:[%s812 + $0x58] sm:$0xff]
    %v4105 = vld [vmem:[%s812 + $0x60] sm:$0xff]
    %v4106 = vld [vmem:[%s812 + $0x68] sm:$0xff]
    %v4107 = vld [vmem:[%s812 + $0x70] sm:$0xff]
    %v4108 = vld [vmem:[%s812 + $0x78] sm:$0xff]
    %v4109 = vld [vmem:[%s812 + $0x80] sm:$0xff]
    %v4110 = vld [vmem:[%s812 + $0x88] sm:$0xff]
    %v4111 = vld [vmem:[%s812 + $0x90] sm:$0xff]
    %v4112 = vld [vmem:[%s812 + $0x98] sm:$0xff]
    %v4113 = vld [vmem:[%s812 + $0xa0] sm:$0xff]
    %v4114 = vld [vmem:[%s812 + $0xa8] sm:$0xff]
    %v4115 = vld [vmem:[%s812 + $0xb0] sm:$0xff]
    %v4116 = vld [vmem:[%s812 + $0xb8] sm:$0xff]
    %v4117 = vld [vmem:[%s812 + $0xc0] sm:$0xff]
    %v4118 = vld [vmem:[%s812 + $0xc8] sm:$0xff]
    %v4119 = vld [vmem:[%s812 + $0xd0] sm:$0xff]
    %v4120 = vld [vmem:[%s812 + $0xd8] sm:$0xff]
    %v4121 = vld [vmem:[%s812 + $0xe0] sm:$0xff]
    %v4122 = vld [vmem:[%s812 + $0xe8] sm:$0xff]
    %v4123 = vld [vmem:[%s812 + $0xf0] sm:$0xff]
    %v4124 = vld [vmem:[%s812 + $0xf8] sm:$0xff]
    %v4125 = vld [vmem:[%s812 + $0x100] sm:$0xff]
    %v4126 = vld [vmem:[%s812 + $0x108] sm:$0xff]
    %v4127 = vld [vmem:[%s812 + $0x110] sm:$0xff]
    %v4128 = vld [vmem:[%s812 + $0x118] sm:$0xff]
    %v4129 = vld [vmem:[%s812 + $0x120] sm:$0xff]
    %v4130 = vld [vmem:[%s812 + $0x128] sm:$0xff]
    %v4131 = vld [vmem:[%s812 + $0x130] sm:$0xff]
    %v4132 = vld [vmem:[%s812 + $0x138] sm:$0xff]
    %v4133 = vld [vmem:[%s812 + $0x140] sm:$0xff]
    %v4134 = vld [vmem:[%s812 + $0x148] sm:$0xff]
    %v4135 = vld [vmem:[%s812 + $0x150] sm:$0xff]
    %v4136 = vld [vmem:[%s812 + $0x158] sm:$0xff]
    %v4137 = vld [vmem:[%s812 + $0x160] sm:$0xff]
    %v4138 = vld [vmem:[%s812 + $0x168] sm:$0xff]
    %v4139 = vld [vmem:[%s812 + $0x170] sm:$0xff]
    %v4140 = vld [vmem:[%s812 + $0x178] sm:$0xff]
    %v4141 = vld [vmem:[%s812 + $0x180] sm:$0xff]
    %v4142 = vld [vmem:[%s812 + $0x188] sm:$0xff]
    %v4143 = vld [vmem:[%s812 + $0x190] sm:$0xff]
    %v4144 = vld [vmem:[%s812 + $0x198] sm:$0xff]
    %v4145 = vld [vmem:[%s812 + $0x1a0] sm:$0xff]
    %v4146 = vld [vmem:[%s812 + $0x1a8] sm:$0xff]
    %v4147 = vld [vmem:[%s812 + $0x1b0] sm:$0xff]
    %v4148 = vld [vmem:[%s812 + $0x1b8] sm:$0xff]
    %v4149 = vld [vmem:[%s812 + $0x1c0] sm:$0xff]
    %v4150 = vld [vmem:[%s812 + $0x1c8] sm:$0xff]
    %v4151 = vld [vmem:[%s812 + $0x1d0] sm:$0xff]
    %v4152 = vld [vmem:[%s812 + $0x1d8] sm:$0xff]
    %v4153 = vld [vmem:[%s812 + $0x1e0] sm:$0xff]
    %v4154 = vld [vmem:[%s812 + $0x1e8] sm:$0xff]
    %v4155 = vld [vmem:[%s812 + $0x1f0] sm:$0xff]
    %v4156 = vld [vmem:[%s812 + $0x1f8] sm:$0xff]
    %v4157 = vld [vmem:[%s812 + $0x200] sm:$0xff]
    %v4158 = vld [vmem:[%s812 + $0x208] sm:$0xff]
    %v4159 = vld [vmem:[%s812 + $0x210] sm:$0xff]
    %v4160 = vld [vmem:[%s812 + $0x218] sm:$0xff]
    %v4161 = vld [vmem:[%s812 + $0x220] sm:$0xff]
    %v4162 = vld [vmem:[%s812 + $0x228] sm:$0xff]
    %v4163 = vld [vmem:[%s812 + $0x230] sm:$0xff]
    %v4164 = vld [vmem:[%s812 + $0x238] sm:$0xff]
    %v4165 = vld [vmem:[%s812 + $0x240] sm:$0xff]
    %v4166 = vld [vmem:[%s812 + $0x248] sm:$0xff]
    %v4167 = vld [vmem:[%s812 + $0x250] sm:$0xff]
    %v4168 = vld [vmem:[%s812 + $0x258] sm:$0xff]
    %v4169 = vld [vmem:[%s812 + $0x260] sm:$0xff]
    %v4170 = vld [vmem:[%s812 + $0x268] sm:$0xff]
    %v4171 = vld [vmem:[%s812 + $0x270] sm:$0xff]
    %v4172 = vld [vmem:[%s812 + $0x278] sm:$0xff]
    %v4173 = vld [vmem:[%s812 + $0x280] sm:$0xff]
    %v4174 = vld [vmem:[%s812 + $0x288] sm:$0xff]
    %v4175 = vld [vmem:[%s812 + $0x290] sm:$0xff]
    %v4176 = vld [vmem:[%s812 + $0x298] sm:$0xff]
    %v4177 = vld [vmem:[%s812 + $0x2a0] sm:$0xff]
    %v4178 = vld [vmem:[%s812 + $0x2a8] sm:$0xff]
    %v4179 = vld [vmem:[%s812 + $0x2b0] sm:$0xff]
    %v4180 = vld [vmem:[%s812 + $0x2b8] sm:$0xff]
    %v4181 = vld [vmem:[%s812 + $0x2c0] sm:$0xff]
    %v4182 = vld [vmem:[%s812 + $0x2c8] sm:$0xff]
    %v4183 = vld [vmem:[%s812 + $0x2d0] sm:$0xff]
    %v4184 = vld [vmem:[%s812 + $0x2d8] sm:$0xff]
    %v4185 = vld [vmem:[%s812 + $0x2e0] sm:$0xff]
    %v4186 = vld [vmem:[%s812 + $0x2e8] sm:$0xff]
    %v4187 = vld [vmem:[%s812 + $0x2f0] sm:$0xff]
    %v4188 = vld [vmem:[%s812 + $0x2f8] sm:$0xff]
    %v4189 = vld [vmem:[%s812 + $0x300] sm:$0xff]
    %v4190 = vld [vmem:[%s812 + $0x308] sm:$0xff]
    %v4191 = vld [vmem:[%s812 + $0x310] sm:$0xff]
    %v4192 = vld [vmem:[%s812 + $0x318] sm:$0xff]
    %v4193 = vld [vmem:[%s812 + $0x320] sm:$0xff]
    %v4194 = vld [vmem:[%s812 + $0x328] sm:$0xff]
    %v4195 = vld [vmem:[%s812 + $0x330] sm:$0xff]
    %v4196 = vld [vmem:[%s812 + $0x338] sm:$0xff]
    %v4197 = vld [vmem:[%s812 + $0x340] sm:$0xff]
    %v4198 = vld [vmem:[%s812 + $0x348] sm:$0xff]
    %v4199 = vld [vmem:[%s812 + $0x350] sm:$0xff]
    %v4200 = vld [vmem:[%s812 + $0x358] sm:$0xff]
    %v4201 = vld [vmem:[%s812 + $0x360] sm:$0xff]
    %v4202 = vld [vmem:[%s812 + $0x368] sm:$0xff]
    %v4203 = vld [vmem:[%s812 + $0x370] sm:$0xff]
    %v4204 = vld [vmem:[%s812 + $0x378] sm:$0xff]
    %v4205 = vld [vmem:[%s812 + $0x380] sm:$0xff]
    %v4206 = vld [vmem:[%s812 + $0x388] sm:$0xff]
    %v4207 = vld [vmem:[%s812 + $0x390] sm:$0xff]
    %v4208 = vld [vmem:[%s812 + $0x398] sm:$0xff]
    %v4209 = vld [vmem:[%s812 + $0x3a0] sm:$0xff]
    %v4210 = vld [vmem:[%s812 + $0x3a8] sm:$0xff]
    %v4211 = vld [vmem:[%s812 + $0x3b0] sm:$0xff]
    %v4212 = vld [vmem:[%s812 + $0x3b8] sm:$0xff]
    %v4213 = vld [vmem:[%s812 + $0x3c0] sm:$0xff]
    %v4214 = vld [vmem:[%s812 + $0x3c8] sm:$0xff]
    %v4215 = vld [vmem:[%s812 + $0x3d0] sm:$0xff]
    %v4216 = vld [vmem:[%s812 + $0x3d8] sm:$0xff]
    %v4217 = vld [vmem:[%s812 + $0x3e0] sm:$0xff]
    %v4218 = vld [vmem:[%s812 + $0x3e8] sm:$0xff]
    %v4219 = vld [vmem:[%s812 + $0x3f0] sm:$0xff]
    %v4220 = vld [vmem:[%s812 + $0x3f8] sm:$0xff]
    %4221 = vmatprep.subr.mxu0 %v4154
    %4222 = vmatpush1.msra.mxu0 %v4153
    %4223 = vmatprep.subr.mxu0 %v4150
    %4224 = vmatpush1.msra.mxu0 %v4149
    %4225 = vmatprep.subr.mxu0 %v4146
    %4226 = vmatpush1.msra.mxu0 %v4145
    %4227 = vmatprep.subr.mxu0 %v4142
    %4228 = vmatpush1.msra.mxu0 %v4141
    %4229 = vmatprep.subr.mxu0 %v4138
    %4230 = vmatpush1.msra.mxu0 %v4137
    %4231 = vmatprep.subr.mxu0 %v4134
    %4232 = vmatpush1.msra.mxu0 %v4133
    %4233 = vmatprep.subr.mxu0 %v4130
    %4234 = vmatpush1.msra.mxu0 %v4129
    %4235 = vmatprep.subr.mxu0 %v4126
    %4236 = vmatpush1.msra.mxu0 %v4125
    %4237 = vmatprep.subr.mxu0 %v4122
    %4238 = vmatpush1.msra.mxu0 %v4121
    %4239 = vmatprep.subr.mxu0 %v4118
    %4240 = vmatpush1.msra.mxu0 %v4117
    %4241 = vmatprep.subr.mxu0 %v4114
    %4242 = vmatpush1.msra.mxu0 %v4113
    %4243 = vmatprep.subr.mxu0 %v4110
    %4244 = vmatpush1.msra.mxu0 %v4109
    %4245 = vmatprep.subr.mxu0 %v4106
    %4246 = vmatpush1.msra.mxu0 %v4105
    %4247 = vmatprep.subr.mxu0 %v4102
    %4248 = vmatpush1.msra.mxu0 %v4101
    %4249 = vmatprep.subr.mxu0 %v4098
    %4250 = vmatpush1.msra.mxu0 %v4097
    %4251 = vmatprep.subr.mxu0 %v4094
    %4252 = vmatpush1.msra.mxu0 %v4093
    %4253 = vmatprep.subr.mxu0 %v4218
    %4254 = vmatpush2.msra.mxu0 %v4217
    %4255 = vmatprep.subr.mxu0 %v4214
    %4256 = vmatpush2.msra.mxu0 %v4213
    %4257 = vmatprep.subr.mxu0 %v4210
    %4258 = vmatpush2.msra.mxu0 %v4209
    %4259 = vmatprep.subr.mxu0 %v4206
    %4260 = vmatpush2.msra.mxu0 %v4205
    %4261 = vmatprep.subr.mxu0 %v4202
    %4262 = vmatpush2.msra.mxu0 %v4201
    %4263 = vmatprep.subr.mxu0 %v4198
    %4264 = vmatpush2.msra.mxu0 %v4197
    %4265 = vmatprep.subr.mxu0 %v4194
    %4266 = vmatpush2.msra.mxu0 %v4193
    %4267 = vmatprep.subr.mxu0 %v4190
    %4268 = vmatpush2.msra.mxu0 %v4189
    %4269 = vmatprep.subr.mxu0 %v4186
    %4270 = vmatpush2.msra.mxu0 %v4185
    %4271 = vmatprep.subr.mxu0 %v4182
    %4272 = vmatpush2.msra.mxu0 %v4181
    %4273 = vmatprep.subr.mxu0 %v4178
    %4274 = vmatpush2.msra.mxu0 %v4177
    %4275 = vmatprep.subr.mxu0 %v4174
    %4276 = vmatpush2.msra.mxu0 %v4173
    %4277 = vmatprep.subr.mxu0 %v4170
    %4278 = vmatpush2.msra.mxu0 %v4169
    %4279 = vmatprep.subr.mxu0 %v4166
    %4280 = vmatpush2.msra.mxu0 %v4165
    %4281 = vmatprep.subr.mxu0 %v4162
    %4282 = vmatpush2.msra.mxu0 %v4161
    %4283 = vmatprep.subr.mxu0 %v4158
    %4284 = vmatpush2.msra.mxu0 %v4157
    %4285 = vmatprep.mubr.f32.mxu0 %v3798
    %4286 = vmatmul.mubr.f32.gmra.mxu0 %v4092
    %v4287 = vpop.f32.mrf.mxu0
    %v4288 = vadd.f32 %v472, %v4287
    %v4289 = vpop.f32.mrf.mxu0
    %v4290 = vadd.f32 %v476, %v4289
    %4291 = vdwg.mxu0
    %4292 = vmatprep.subr.mxu0 %v4156
    %4293 = vmatpush1.msra.mxu0 %v4155
    %4294 = vmatprep.subr.mxu0 %v4152
    %4295 = vmatpush1.msra.mxu0 %v4151
    %4296 = vmatprep.subr.mxu0 %v4148
    %4297 = vmatpush1.msra.mxu0 %v4147
    %4298 = vmatprep.subr.mxu0 %v4144
    %4299 = vmatpush1.msra.mxu0 %v4143
    %4300 = vmatprep.subr.mxu0 %v4140
    %4301 = vmatpush1.msra.mxu0 %v4139
    %4302 = vmatprep.subr.mxu0 %v4136
    %4303 = vmatpush1.msra.mxu0 %v4135
    %4304 = vmatprep.subr.mxu0 %v4132
    %4305 = vmatpush1.msra.mxu0 %v4131
    %4306 = vmatprep.subr.mxu0 %v4128
    %4307 = vmatpush1.msra.mxu0 %v4127
    %4308 = vmatprep.subr.mxu0 %v4124
    %4309 = vmatpush1.msra.mxu0 %v4123
    %4310 = vmatprep.subr.mxu0 %v4120
    %4311 = vmatpush1.msra.mxu0 %v4119
    %4312 = vmatprep.subr.mxu0 %v4116
    %4313 = vmatpush1.msra.mxu0 %v4115
    %4314 = vmatprep.subr.mxu0 %v4112
    %4315 = vmatpush1.msra.mxu0 %v4111
    %4316 = vmatprep.subr.mxu0 %v4108
    %4317 = vmatpush1.msra.mxu0 %v4107
    %4318 = vmatprep.subr.mxu0 %v4104
    %4319 = vmatpush1.msra.mxu0 %v4103
    %4320 = vmatprep.subr.mxu0 %v4100
    %4321 = vmatpush1.msra.mxu0 %v4099
    %4322 = vmatprep.subr.mxu0 %v4096
    %4323 = vmatpush1.msra.mxu0 %v4095
    %4324 = vmatprep.subr.mxu0 %v4220
    %4325 = vmatpush2.msra.mxu0 %v4219
    %4326 = vmatprep.subr.mxu0 %v4216
    %4327 = vmatpush2.msra.mxu0 %v4215
    %4328 = vmatprep.subr.mxu0 %v4212
    %4329 = vmatpush2.msra.mxu0 %v4211
    %4330 = vmatprep.subr.mxu0 %v4208
    %4331 = vmatpush2.msra.mxu0 %v4207
    %4332 = vmatprep.subr.mxu0 %v4204
    %4333 = vmatpush2.msra.mxu0 %v4203
    %4334 = vmatprep.subr.mxu0 %v4200
    %4335 = vmatpush2.msra.mxu0 %v4199
    %4336 = vmatprep.subr.mxu0 %v4196
    %4337 = vmatpush2.msra.mxu0 %v4195
    %4338 = vmatprep.subr.mxu0 %v4192
    %4339 = vmatpush2.msra.mxu0 %v4191
    %4340 = vmatprep.subr.mxu0 %v4188
    %4341 = vmatpush2.msra.mxu0 %v4187
    %4342 = vmatprep.subr.mxu0 %v4184
    %4343 = vmatpush2.msra.mxu0 %v4183
    %4344 = vmatprep.subr.mxu0 %v4180
    %4345 = vmatpush2.msra.mxu0 %v4179
    %4346 = vmatprep.subr.mxu0 %v4176
    %4347 = vmatpush2.msra.mxu0 %v4175
    %4348 = vmatprep.subr.mxu0 %v4172
    %4349 = vmatpush2.msra.mxu0 %v4171
    %4350 = vmatprep.subr.mxu0 %v4168
    %4351 = vmatpush2.msra.mxu0 %v4167
    %4352 = vmatprep.subr.mxu0 %v4164
    %4353 = vmatpush2.msra.mxu0 %v4163
    %4354 = vmatprep.subr.mxu0 %v4160
    %4355 = vmatpush2.msra.mxu0 %v4159
    %4356 = vmatprep.mubr.f32.mxu0 %v3798
    %4357 = vmatmul.mubr.f32.gmra.mxu0 %v4092
    %v4358 = vpop.f32.mrf.mxu0
    %v4359 = vadd.f32 %v480, %v4358
    %v4360 = vpop.f32.mrf.mxu0
    %v4361 = vadd.f32 %v484, %v4360
    %4362 = vdwg.mxu0
    %v4363 = vxor.u32 %v4288, 2147483648
    %v4364 = vmul.f32 %v4363, 1.442695
    %v4365 = vpow.pop %v4364
    %v4366 = vadd.f32 %v4365, 1.0
    %v4367 = vrcp.pop %v4366
    %v4368 = vmul.f32 1.0, %v4367
    %v4369 = vxor.u32 %v4290, 2147483648
    %v4370 = vmul.f32 %v4369, 1.442695
    %v4371 = vpow.pop %v4370
    %v4372 = vadd.f32 %v4371, 1.0
    %v4373 = vrcp.pop %v4372
    %v4374 = vmul.f32 1.0, %v4373
    %v4375 = vtanh.pop %v4359
    %v4376 = vxor.u32 %v4361, 2147483648
    %v4377 = vmul.f32 %v4376, 1.442695
    %v4378 = vpow.pop %v4377
    %v4379 = vadd.f32 %v4378, 1.0
    %v4380 = vrcp.pop %v4379
    %v4381 = vmul.f32 1.0, %v4380
    %v4382 = vmul.f32 %v4374, %v2748
    %v4383 = vmul.f32 %v4368, %v4375
    %v4384 = vadd.f32 %v4382, %v4383
    %v4385 = vtanh.pop %v4384
    %v4386 = vmul.f32 %v4381, %v4385
    %v4387 = vld [vmem:[#allocation8] sm:$0xff]
    %v4388 = vld [vmem:[#allocation8 + $0x8] sm:$0xff]
    %v4389 = vld [vmem:[#allocation8 + $0x10] sm:$0xff]
    %v4390 = vld [vmem:[#allocation8 + $0x18] sm:$0xff]
    %v4391 = vld [vmem:[#allocation8 + $0x20] sm:$0xff]
    %v4392 = vld [vmem:[#allocation8 + $0x28] sm:$0xff]
    %v4393 = vld [vmem:[#allocation8 + $0x30] sm:$0xff]
    %v4394 = vld [vmem:[#allocation8 + $0x38] sm:$0xff]
    %v4395 = vld [vmem:[#allocation8 + $0x40] sm:$0xff]
    %v4396 = vld [vmem:[#allocation8 + $0x48] sm:$0xff]
    %v4397 = vld [vmem:[#allocation8 + $0x50] sm:$0xff]
    %v4398 = vld [vmem:[#allocation8 + $0x58] sm:$0xff]
    %v4399 = vld [vmem:[#allocation8 + $0x60] sm:$0xff]
    %v4400 = vld [vmem:[#allocation8 + $0x68] sm:$0xff]
    %v4401 = vld [vmem:[#allocation8 + $0x70] sm:$0xff]
    %v4402 = vld [vmem:[#allocation8 + $0x78] sm:$0xff]
    %v4403 = vld [vmem:[#allocation8 + $0x80] sm:$0xff]
    %v4404 = vld [vmem:[#allocation8 + $0x88] sm:$0xff]
    %v4405 = vld [vmem:[#allocation8 + $0x90] sm:$0xff]
    %v4406 = vld [vmem:[#allocation8 + $0x98] sm:$0xff]
    %v4407 = vld [vmem:[#allocation8 + $0xa0] sm:$0xff]
    %v4408 = vld [vmem:[#allocation8 + $0xa8] sm:$0xff]
    %v4409 = vld [vmem:[#allocation8 + $0xb0] sm:$0xff]
    %v4410 = vld [vmem:[#allocation8 + $0xb8] sm:$0xff]
    %v4411 = vld [vmem:[#allocation8 + $0xc0] sm:$0xff]
    %v4412 = vld [vmem:[#allocation8 + $0xc8] sm:$0xff]
    %v4413 = vld [vmem:[#allocation8 + $0xd0] sm:$0xff]
    %v4414 = vld [vmem:[#allocation8 + $0xd8] sm:$0xff]
    %v4415 = vld [vmem:[#allocation8 + $0xe0] sm:$0xff]
    %v4416 = vld [vmem:[#allocation8 + $0xe8] sm:$0xff]
    %v4417 = vld [vmem:[#allocation8 + $0xf0] sm:$0xff]
    %v4418 = vld [vmem:[#allocation8 + $0xf8] sm:$0xff]
    %4419 = vmatprep.subr.mxu0 %v4418
    %4420 = vmatpush1.msra.mxu0 %v4417
    %4421 = vmatprep.subr.mxu0 %v4416
    %4422 = vmatpush1.msra.mxu0 %v4415
    %4423 = vmatprep.subr.mxu0 %v4414
    %4424 = vmatpush1.msra.mxu0 %v4413
    %4425 = vmatprep.subr.mxu0 %v4412
    %4426 = vmatpush1.msra.mxu0 %v4411
    %4427 = vmatprep.subr.mxu0 %v4410
    %4428 = vmatpush1.msra.mxu0 %v4409
    %4429 = vmatprep.subr.mxu0 %v4408
    %4430 = vmatpush1.msra.mxu0 %v4407
    %4431 = vmatprep.subr.mxu0 %v4406
    %4432 = vmatpush1.msra.mxu0 %v4405
    %4433 = vmatprep.subr.mxu0 %v4404
    %4434 = vmatpush1.msra.mxu0 %v4403
    %4435 = vmatprep.subr.mxu0 %v4402
    %4436 = vmatpush1.msra.mxu0 %v4401
    %4437 = vmatprep.subr.mxu0 %v4400
    %4438 = vmatpush1.msra.mxu0 %v4399
    %4439 = vmatprep.subr.mxu0 %v4398
    %4440 = vmatpush1.msra.mxu0 %v4397
    %4441 = vmatprep.subr.mxu0 %v4396
    %4442 = vmatpush1.msra.mxu0 %v4395
    %4443 = vmatprep.subr.mxu0 %v4394
    %4444 = vmatpush1.msra.mxu0 %v4393
    %4445 = vmatprep.subr.mxu0 %v4392
    %4446 = vmatpush1.msra.mxu0 %v4391
    %4447 = vmatprep.subr.mxu0 %v4390
    %4448 = vmatpush1.msra.mxu0 %v4389
    %4449 = vmatprep.subr.mxu0 %v4388
    %4450 = vmatpush1.msra.mxu0 %v4387
    %4451 = vmatprep.subr.mxu0 0.0
    %4452 = vmatpush2.msra.mxu0 0.0
    %4453 = vmatprep.subr.mxu0 0.0
    %4454 = vmatpush2.msra.mxu0 0.0
    %4455 = vmatprep.subr.mxu0 0.0
    %4456 = vmatpush2.msra.mxu0 0.0
    %4457 = vmatprep.subr.mxu0 0.0
    %4458 = vmatpush2.msra.mxu0 0.0
    %4459 = vmatprep.subr.mxu0 0.0
    %4460 = vmatpush2.msra.mxu0 0.0
    %4461 = vmatprep.subr.mxu0 0.0
    %4462 = vmatpush2.msra.mxu0 0.0
    %4463 = vmatprep.subr.mxu0 0.0
    %4464 = vmatpush2.msra.mxu0 0.0
    %4465 = vmatprep.subr.mxu0 0.0
    %4466 = vmatpush2.msra.mxu0 0.0
    %4467 = vmatprep.subr.mxu0 0.0
    %4468 = vmatpush2.msra.mxu0 0.0
    %4469 = vmatprep.subr.mxu0 0.0
    %4470 = vmatpush2.msra.mxu0 0.0
    %4471 = vmatprep.subr.mxu0 0.0
    %4472 = vmatpush2.msra.mxu0 0.0
    %4473 = vmatprep.subr.mxu0 0.0
    %4474 = vmatpush2.msra.mxu0 0.0
    %4475 = vmatprep.subr.mxu0 0.0
    %4476 = vmatpush2.msra.mxu0 0.0
    %4477 = vmatprep.subr.mxu0 0.0
    %4478 = vmatpush2.msra.mxu0 0.0
    %4479 = vmatprep.subr.mxu0 0.0
    %4480 = vmatpush2.msra.mxu0 0.0
    %4481 = vmatprep.subr.mxu0 0.0
    %4482 = vmatpush2.msra.mxu0 0.0
    %4483 = vmatprep.mubr.f32.mxu0 0.0
    %4484 = vmatmul.mubr.f32.gmra.mxu0 %v4092
    %v4485 = vpop.f32.mrf.mxu0
    %v4486 = vadd.f32 %v494, %v4485
    %v4487 = vpop.f32.mrf.mxu0
    %v4488 = vadd.f32 %v498, %v4487
    %4489 = vdwg.mxu0
    %v4490 = vtanh.pop %v4486
    %v4493 = vunpack.c.l.s4 1966171168
    %v4494 = vunpack.c.0.s8 %v4493
    %v4495 = vlaneseq
    %v4496 = vshrl.u32 %v4495, 7
    %v4497 = vsub.s32 %v4494, %v4496
    %v4498 = vrot.slane %v4490, %v4497
    %v4499 = vcombine.high %v4498, %v4498
    %v4501 = vunpack.c.l.s4 1966171168
    %v4502 = vunpack.c.0.s8 %v4501
    %v4503 = vlaneseq
    %v4504 = vshrl.u32 %v4503, 7
    %v4505 = vsub.s32 %v4502, %v4504
    %v4506 = vrot.slane %v4498, %v4505
    %v4508 = vunpack.c.l.s4 1966171168
    %v4509 = vunpack.c.0.s8 %v4508
    %v4510 = vlaneseq
    %v4511 = vshrl.u32 %v4510, 7
    %v4512 = vsub.s32 %v4509, %v4511
    %v4513 = vrot.slane %v4499, %v4512
    %v4514 = vlaneseq
    %v4515 = vshrl.u32 %v4514, 7
    %v4516 = vsub.s32 0, %v4515
    %v4517 = vrot.slane %v4506, %v4516
    %v4518 = vlaneseq
    %v4519 = vshrl.u32 %v4518, 7
    %v4520 = vsub.s32 0, %v4519
    %v4521 = vrot.slane %v4513, %v4520
    %v4524 = vmul.f32 %v436, %v4517
    %v4525 = vmul.f32 %v437, %v4517
    %v4526 = vmul.f32 %v438, %v4521
    %v4527 = vmul.f32 %v439, %v4521
    %4528 = vadd.xlane.f32.xlu0 %v4524
    %v4529 = vpop.xlane.xlu0 %4528
    %4530 = vadd.xlane.f32.xlu0 %v4525
    %v4531 = vpop.xlane.xlu0 %4530
    %4532 = vadd.xlane.f32.xlu0 %v4526
    %v4533 = vpop.xlane.xlu0 %4532
    %4534 = vadd.xlane.f32.xlu0 %v4527
    %v4535 = vpop.xlane.xlu0 %4534
    %v4540 = vlaneseq
    %v4541 = vshrl.u32 %v4540, 7
    %v4542 = vsub.s32 %v1261, %v4541
    %v4543 = vrot.slane %v4529, %v4542
    %v4544 = vlaneseq
    %v4545 = vshrl.u32 %v4544, 7
    %v4546 = vsub.s32 %v1266, %v4545
    %v4547 = vrot.slane %v4531, %v4546
    %v4548 = vsel %vm1271, %v4547, %v4543
    %v4549 = vlaneseq
    %v4550 = vshrl.u32 %v4549, 7
    %v4551 = vsub.s32 %v1261, %v4550
    %v4552 = vrot.slane %v4533, %v4551
    %v4553 = vlaneseq
    %v4554 = vshrl.u32 %v4553, 7
    %v4555 = vsub.s32 %v1266, %v4554
    %v4556 = vrot.slane %v4535, %v4555
    %v4557 = vsel %vm1271, %v4556, %v4552
    %v4558 = vsel %vm1282, %v4557, %v4548
    %v4560 = vsel %vm1285, %v4558, -inf
    %4561 = vmax.xlane.f32.xlu0 %v4560
    %v4562 = vpop.xlane.xlu0 %4561
    %v4564 = vlaneseq
    %v4565 = vshrl.u32 %v4564, 7
    %v4566 = vsub.s32 0, %v4565
    %v4567 = vrot.slane %v4562, %v4566
    %v4568 = vlaneseq
    %v4569 = vshrl.u32 %v4568, 7
    %v4570 = vsub.s32 1, %v4569
    %v4571 = vrot.slane %v4562, %v4570
    %v4574 = vsub.f32 %v4529, %v4567
    %v4575 = vsub.f32 %v4531, %v4567
    %v4576 = vsub.f32 %v4533, %v4571
    %v4577 = vsub.f32 %v4535, %v4571
    %v4578 = vmul.f32 %v4574, 1.442695
    %v4579 = vpow.pop %v4578
    %v4580 = vmul.f32 %v4575, 1.442695
    %v4581 = vpow.pop %v4580
    %v4582 = vmul.f32 %v4576, 1.442695
    %v4583 = vpow.pop %v4582
    %v4584 = vmul.f32 %v4577, 1.442695
    %v4585 = vpow.pop %v4584
    %4590 = vset.pattern.permute.xlu0 0
    %4591 = vperm.xlu0 %4590, %v4579
    %v4592 = vpop.permute.xlu0 %4591
    %4593 = vset.pattern.permute.xlu0 0
    %4594 = vperm.xlu0 %4593, %v4581
    %v4595 = vpop.permute.xlu0 %4594
    %4596 = vset.pattern.permute.xlu0 0
    %4597 = vperm.xlu0 %4596, %v4583
    %v4598 = vpop.permute.xlu0 %4597
    %4599 = vset.pattern.permute.xlu0 0
    %4600 = vperm.xlu0 %4599, %v4585
    %v4601 = vpop.permute.xlu0 %4600
    %v4602 = vlaneseq
    %v4603 = vshrl.u32 %v4602, 7
    %v4604 = vsub.s32 %v1261, %v4603
    %v4605 = vrot.slane %v4592, %v4604
    %v4606 = vlaneseq
    %v4607 = vshrl.u32 %v4606, 7
    %v4608 = vsub.s32 %v1266, %v4607
    %v4609 = vrot.slane %v4595, %v4608
    %v4610 = vsel %vm1271, %v4609, %v4605
    %v4611 = vlaneseq
    %v4612 = vshrl.u32 %v4611, 7
    %v4613 = vsub.s32 %v1261, %v4612
    %v4614 = vrot.slane %v4598, %v4613
    %v4615 = vlaneseq
    %v4616 = vshrl.u32 %v4615, 7
    %v4617 = vsub.s32 %v1266, %v4616
    %v4618 = vrot.slane %v4601, %v4617
    %v4619 = vsel %vm1271, %v4618, %v4614
    %v4620 = vsel %vm1282, %v4619, %v4610
    %v4622 = vsel %vm1285, %v4620, 0.0
    %4623 = vadd.xlane.f32.xlu0 %v4622
    %v4624 = vpop.xlane.xlu0 %4623
    %v4625 = vrcp.pop %v4624
    %v4627 = vlaneseq
    %v4628 = vshrl.u32 %v4627, 7
    %v4629 = vsub.s32 0, %v4628
    %v4630 = vrot.slane %v4625, %v4629
    %v4631 = vlaneseq
    %v4632 = vshrl.u32 %v4631, 7
    %v4633 = vsub.s32 1, %v4632
    %v4634 = vrot.slane %v4625, %v4633
    %v4637 = vmul.f32 %v4579, %v4630
    %v4638 = vmul.f32 %v4581, %v4630
    %v4639 = vmul.f32 %v4583, %v4634
    %v4640 = vmul.f32 %v4585, %v4634
    %4643 = vset.pattern.permute.xlu0 0
    %4644 = vperm.xlu0 %4643, %v4637
    %v4645 = vpop.permute.xlu0 %4644
    %4646 = vset.pattern.permute.xlu0 0
    %4647 = vperm.xlu0 %4646, %v4638
    %v4648 = vpop.permute.xlu0 %4647
    %v4649 = vlaneseq
    %v4650 = vshrl.u32 %v4649, 7
    %v4651 = vsub.s32 %v1261, %v4650
    %v4652 = vrot.slane %v4645, %v4651
    %v4653 = vlaneseq
    %v4654 = vshrl.u32 %v4653, 7
    %v4655 = vsub.s32 %v1266, %v4654
    %v4656 = vrot.slane %v4648, %v4655
    %v4657 = vsel %vm1271, %v4656, %v4652
    %v4658 = vsel %vm182, %v4657, 0
    %4660 = vmatprep.subr.mxu0 0.0
    %4661 = vmatpush1.msra.mxu0 0.0
    %4662 = vmatprep.subr.mxu0 0.0
    %4663 = vmatpush1.msra.mxu0 0.0
    %4664 = vmatprep.subr.mxu0 0.0
    %4665 = vmatpush1.msra.mxu0 0.0
    %4666 = vmatprep.subr.mxu0 0.0
    %4667 = vmatpush1.msra.mxu0 0.0
    %4668 = vmatprep.subr.mxu0 0.0
    %4669 = vmatpush1.msra.mxu0 0.0
    %4670 = vmatprep.subr.mxu0 0.0
    %4671 = vmatpush1.msra.mxu0 0.0
    %4672 = vmatprep.subr.mxu0 0.0
    %4673 = vmatpush1.msra.mxu0 0.0
    %4674 = vmatprep.subr.mxu0 0.0
    %4675 = vmatpush1.msra.mxu0 0.0
    %4676 = vmatprep.subr.mxu0 0.0
    %4677 = vmatpush1.msra.mxu0 0.0
    %4678 = vmatprep.subr.mxu0 0.0
    %4679 = vmatpush1.msra.mxu0 0.0
    %4680 = vmatprep.subr.mxu0 0.0
    %4681 = vmatpush1.msra.mxu0 0.0
    %4682 = vmatprep.subr.mxu0 0.0
    %4683 = vmatpush1.msra.mxu0 0.0
    %4684 = vmatprep.subr.mxu0 0.0
    %4685 = vmatpush1.msra.mxu0 0.0
    %4686 = vmatprep.subr.mxu0 0.0
    %4687 = vmatpush1.msra.mxu0 0.0
    %4688 = vmatprep.subr.mxu0 0.0
    %4689 = vmatpush1.msra.mxu0 %v315
    %4690 = vmatprep.subr.mxu0 0.0
    %4691 = vmatpush1.msra.mxu0 %v314
    %4692 = vmatprep.subr.mxu0 0.0
    %4693 = vmatpush2.msra.mxu0 0.0
    %4694 = vmatprep.subr.mxu0 0.0
    %4695 = vmatpush2.msra.mxu0 0.0
    %4696 = vmatprep.subr.mxu0 0.0
    %4697 = vmatpush2.msra.mxu0 0.0
    %4698 = vmatprep.subr.mxu0 0.0
    %4699 = vmatpush2.msra.mxu0 0.0
    %4700 = vmatprep.subr.mxu0 0.0
    %4701 = vmatpush2.msra.mxu0 0.0
    %4702 = vmatprep.subr.mxu0 0.0
    %4703 = vmatpush2.msra.mxu0 0.0
    %4704 = vmatprep.subr.mxu0 0.0
    %4705 = vmatpush2.msra.mxu0 0.0
    %4706 = vmatprep.subr.mxu0 0.0
    %4707 = vmatpush2.msra.mxu0 0.0
    %4708 = vmatprep.subr.mxu0 0.0
    %4709 = vmatpush2.msra.mxu0 0.0
    %4710 = vmatprep.subr.mxu0 0.0
    %4711 = vmatpush2.msra.mxu0 0.0
    %4712 = vmatprep.subr.mxu0 0.0
    %4713 = vmatpush2.msra.mxu0 0.0
    %4714 = vmatprep.subr.mxu0 0.0
    %4715 = vmatpush2.msra.mxu0 0.0
    %4716 = vmatprep.subr.mxu0 0.0
    %4717 = vmatpush2.msra.mxu0 0.0
    %4718 = vmatprep.subr.mxu0 0.0
    %4719 = vmatpush2.msra.mxu0 0.0
    %4720 = vmatprep.subr.mxu0 0.0
    %4721 = vmatpush2.msra.mxu0 0.0
    %4722 = vmatprep.subr.mxu0 0.0
    %4723 = vmatpush2.msra.mxu0 0.0
    %4724 = vmatprep.mubr.f32.mxu0 0.0
    %4725 = vmatmul.mubr.f32.gmra.mxu0 %v4658
    %v4726 = vpop.f32.mrf.mxu0
    %v4727 = vadd.f32 0.0, %v4726
    %v4728 = vpop.f32.mrf.mxu0
    %4729 = vdwg.mxu0
    %4732 = vset.pattern.permute.xlu0 0
    %4733 = vperm.xlu0 %4732, %v4639
    %v4734 = vpop.permute.xlu0 %4733
    %4735 = vset.pattern.permute.xlu0 0
    %4736 = vperm.xlu0 %4735, %v4640
    %v4737 = vpop.permute.xlu0 %4736
    %v4738 = vlaneseq
    %v4739 = vshrl.u32 %v4738, 7
    %v4740 = vsub.s32 %v1261, %v4739
    %v4741 = vrot.slane %v4734, %v4740
    %v4742 = vlaneseq
    %v4743 = vshrl.u32 %v4742, 7
    %v4744 = vsub.s32 %v1266, %v4743
    %v4745 = vrot.slane %v4737, %v4744
    %v4746 = vsel %vm1271, %v4745, %v4741
    %v4747 = vsel %vm182, %v4746, 0
    %4749 = vmatprep.subr.mxu0 0.0
    %4750 = vmatpush1.msra.mxu0 0.0
    %4751 = vmatprep.subr.mxu0 0.0
    %4752 = vmatpush1.msra.mxu0 0.0
    %4753 = vmatprep.subr.mxu0 0.0
    %4754 = vmatpush1.msra.mxu0 0.0
    %4755 = vmatprep.subr.mxu0 0.0
    %4756 = vmatpush1.msra.mxu0 0.0
    %4757 = vmatprep.subr.mxu0 0.0
    %4758 = vmatpush1.msra.mxu0 0.0
    %4759 = vmatprep.subr.mxu0 0.0
    %4760 = vmatpush1.msra.mxu0 0.0
    %4761 = vmatprep.subr.mxu0 0.0
    %4762 = vmatpush1.msra.mxu0 0.0
    %4763 = vmatprep.subr.mxu0 0.0
    %4764 = vmatpush1.msra.mxu0 0.0
    %4765 = vmatprep.subr.mxu0 0.0
    %4766 = vmatpush1.msra.mxu0 0.0
    %4767 = vmatprep.subr.mxu0 0.0
    %4768 = vmatpush1.msra.mxu0 0.0
    %4769 = vmatprep.subr.mxu0 0.0
    %4770 = vmatpush1.msra.mxu0 0.0
    %4771 = vmatprep.subr.mxu0 0.0
    %4772 = vmatpush1.msra.mxu0 0.0
    %4773 = vmatprep.subr.mxu0 0.0
    %4774 = vmatpush1.msra.mxu0 0.0
    %4775 = vmatprep.subr.mxu0 0.0
    %4776 = vmatpush1.msra.mxu0 0.0
    %4777 = vmatprep.subr.mxu0 0.0
    %4778 = vmatpush1.msra.mxu0 %v431
    %4779 = vmatprep.subr.mxu0 0.0
    %4780 = vmatpush1.msra.mxu0 %v430
    %4781 = vmatprep.subr.mxu0 0.0
    %4782 = vmatpush2.msra.mxu0 0.0
    %4783 = vmatprep.subr.mxu0 0.0
    %4784 = vmatpush2.msra.mxu0 0.0
    %4785 = vmatprep.subr.mxu0 0.0
    %4786 = vmatpush2.msra.mxu0 0.0
    %4787 = vmatprep.subr.mxu0 0.0
    %4788 = vmatpush2.msra.mxu0 0.0
    %4789 = vmatprep.subr.mxu0 0.0
    %4790 = vmatpush2.msra.mxu0 0.0
    %4791 = vmatprep.subr.mxu0 0.0
    %4792 = vmatpush2.msra.mxu0 0.0
    %4793 = vmatprep.subr.mxu0 0.0
    %4794 = vmatpush2.msra.mxu0 0.0
    %4795 = vmatprep.subr.mxu0 0.0
    %4796 = vmatpush2.msra.mxu0 0.0
    %4797 = vmatprep.subr.mxu0 0.0
    %4798 = vmatpush2.msra.mxu0 0.0
    %4799 = vmatprep.subr.mxu0 0.0
    %4800 = vmatpush2.msra.mxu0 0.0
    %4801 = vmatprep.subr.mxu0 0.0
    %4802 = vmatpush2.msra.mxu0 0.0
    %4803 = vmatprep.subr.mxu0 0.0
    %4804 = vmatpush2.msra.mxu0 0.0
    %4805 = vmatprep.subr.mxu0 0.0
    %4806 = vmatpush2.msra.mxu0 0.0
    %4807 = vmatprep.subr.mxu0 0.0
    %4808 = vmatpush2.msra.mxu0 0.0
    %4809 = vmatprep.subr.mxu0 0.0
    %4810 = vmatpush2.msra.mxu0 0.0
    %4811 = vmatprep.subr.mxu0 0.0
    %4812 = vmatpush2.msra.mxu0 0.0
    %4813 = vmatprep.mubr.f32.mxu0 0.0
    %4814 = vmatmul.mubr.f32.gmra.mxu0 %v4747
    %v4815 = vpop.f32.mrf.mxu0
    %v4816 = vadd.f32 0.0, %v4815
    %v4817 = vpop.f32.mrf.mxu0
    %4818 = vdwg.mxu0
    %v4819 = vld [vmem:[#allocation11] sm:$0xff]
    %v4820 = vld [vmem:[#allocation11 + $0x8] sm:$0xff]
    %v4821 = vld [vmem:[#allocation11 + $0x10] sm:$0xff]
    %v4822 = vld [vmem:[#allocation11 + $0x18] sm:$0xff]
    %v4823 = vld [vmem:[#allocation11 + $0x20] sm:$0xff]
    %v4824 = vld [vmem:[#allocation11 + $0x28] sm:$0xff]
    %v4825 = vld [vmem:[#allocation11 + $0x30] sm:$0xff]
    %v4826 = vld [vmem:[#allocation11 + $0x38] sm:$0xff]
    %v4827 = vld [vmem:[#allocation11 + $0x40] sm:$0xff]
    %v4828 = vld [vmem:[#allocation11 + $0x48] sm:$0xff]
    %v4829 = vld [vmem:[#allocation11 + $0x50] sm:$0xff]
    %v4830 = vld [vmem:[#allocation11 + $0x58] sm:$0xff]
    %v4831 = vld [vmem:[#allocation11 + $0x60] sm:$0xff]
    %v4832 = vld [vmem:[#allocation11 + $0x68] sm:$0xff]
    %v4833 = vld [vmem:[#allocation11 + $0x70] sm:$0xff]
    %v4834 = vld [vmem:[#allocation11 + $0x78] sm:$0xff]
    %v4837 = vrot.slane %v4816, 7
    %v4838 = vsel %vm1282, %v4837, %v4727
    %4840 = vmatprep.subr.mxu0 0.0
    %4841 = vmatpush1.msra.mxu0 %v4834
    %4842 = vmatprep.subr.mxu0 0.0
    %4843 = vmatpush1.msra.mxu0 %v4833
    %4844 = vmatprep.subr.mxu0 0.0
    %4845 = vmatpush1.msra.mxu0 %v4832
    %4846 = vmatprep.subr.mxu0 0.0
    %4847 = vmatpush1.msra.mxu0 %v4831
    %4848 = vmatprep.subr.mxu0 0.0
    %4849 = vmatpush1.msra.mxu0 %v4830
    %4850 = vmatprep.subr.mxu0 0.0
    %4851 = vmatpush1.msra.mxu0 %v4829
    %4852 = vmatprep.subr.mxu0 0.0
    %4853 = vmatpush1.msra.mxu0 %v4828
    %4854 = vmatprep.subr.mxu0 0.0
    %4855 = vmatpush1.msra.mxu0 %v4827
    %4856 = vmatprep.subr.mxu0 0.0
    %4857 = vmatpush1.msra.mxu0 %v4826
    %4858 = vmatprep.subr.mxu0 0.0
    %4859 = vmatpush1.msra.mxu0 %v4825
    %4860 = vmatprep.subr.mxu0 0.0
    %4861 = vmatpush1.msra.mxu0 %v4824
    %4862 = vmatprep.subr.mxu0 0.0
    %4863 = vmatpush1.msra.mxu0 %v4823
    %4864 = vmatprep.subr.mxu0 0.0
    %4865 = vmatpush1.msra.mxu0 %v4822
    %4866 = vmatprep.subr.mxu0 0.0
    %4867 = vmatpush1.msra.mxu0 %v4821
    %4868 = vmatprep.subr.mxu0 0.0
    %4869 = vmatpush1.msra.mxu0 %v4820
    %4870 = vmatprep.subr.mxu0 0.0
    %4871 = vmatpush1.msra.mxu0 %v4819
    %4872 = vmatprep.subr.mxu0 0.0
    %4873 = vmatpush2.msra.mxu0 0.0
    %4874 = vmatprep.subr.mxu0 0.0
    %4875 = vmatpush2.msra.mxu0 0.0
    %4876 = vmatprep.subr.mxu0 0.0
    %4877 = vmatpush2.msra.mxu0 0.0
    %4878 = vmatprep.subr.mxu0 0.0
    %4879 = vmatpush2.msra.mxu0 0.0
    %4880 = vmatprep.subr.mxu0 0.0
    %4881 = vmatpush2.msra.mxu0 0.0
    %4882 = vmatprep.subr.mxu0 0.0
    %4883 = vmatpush2.msra.mxu0 0.0
    %4884 = vmatprep.subr.mxu0 0.0
    %4885 = vmatpush2.msra.mxu0 0.0
    %4886 = vmatprep.subr.mxu0 0.0
    %4887 = vmatpush2.msra.mxu0 0.0
    %4888 = vmatprep.subr.mxu0 0.0
    %4889 = vmatpush2.msra.mxu0 0.0
    %4890 = vmatprep.subr.mxu0 0.0
    %4891 = vmatpush2.msra.mxu0 0.0
    %4892 = vmatprep.subr.mxu0 0.0
    %4893 = vmatpush2.msra.mxu0 0.0
    %4894 = vmatprep.subr.mxu0 0.0
    %4895 = vmatpush2.msra.mxu0 0.0
    %4896 = vmatprep.subr.mxu0 0.0
    %4897 = vmatpush2.msra.mxu0 0.0
    %4898 = vmatprep.subr.mxu0 0.0
    %4899 = vmatpush2.msra.mxu0 0.0
    %4900 = vmatprep.subr.mxu0 0.0
    %4901 = vmatpush2.msra.mxu0 0.0
    %4902 = vmatprep.subr.mxu0 0.0
    %4903 = vmatpush2.msra.mxu0 0.0
    %4904 = vmatprep.mubr.f32.mxu0 0.0
    %4905 = vmatmul.mubr.f32.gmra.mxu0 %v4838
    %v4906 = vpop.f32.mrf.mxu0
    %v4907 = vadd.f32 %v4488, %v4906
    %v4908 = vpop.f32.mrf.mxu0
    %4909 = vdwg.mxu0
    %v4910 = vtanh.pop %v4907
    %v4911 = vld [vmem:[%s1637] sm:$0xff]
    %v4912 = vld [vmem:[%s1637 + $0x8] sm:$0xff]
    %v4913 = vld [vmem:[%s1637 + $0x10] sm:$0xff]
    %v4914 = vld [vmem:[%s1637 + $0x18] sm:$0xff]
    %v4915 = vld [vmem:[%s1637 + $0x20] sm:$0xff]
    %v4916 = vld [vmem:[%s1637 + $0x28] sm:$0xff]
    %v4917 = vld [vmem:[%s1637 + $0x30] sm:$0xff]
    %v4918 = vld [vmem:[%s1637 + $0x38] sm:$0xff]
    %v4919 = vld [vmem:[%s1637 + $0x40] sm:$0xff]
    %v4920 = vld [vmem:[%s1637 + $0x48] sm:$0xff]
    %v4921 = vld [vmem:[%s1637 + $0x50] sm:$0xff]
    %v4922 = vld [vmem:[%s1637 + $0x58] sm:$0xff]
    %v4923 = vld [vmem:[%s1637 + $0x60] sm:$0xff]
    %v4924 = vld [vmem:[%s1637 + $0x68] sm:$0xff]
    %v4925 = vld [vmem:[%s1637 + $0x70] sm:$0xff]
    %v4926 = vld [vmem:[%s1637 + $0x78] sm:$0xff]
    %v4927 = vld [vmem:[%s1637 + $0x80] sm:$0xff]
    %v4928 = vld [vmem:[%s1637 + $0x88] sm:$0xff]
    %v4929 = vld [vmem:[%s1637 + $0x90] sm:$0xff]
    %v4930 = vld [vmem:[%s1637 + $0x98] sm:$0xff]
    %v4931 = vld [vmem:[%s1637 + $0xa0] sm:$0xff]
    %v4932 = vld [vmem:[%s1637 + $0xa8] sm:$0xff]
    %v4933 = vld [vmem:[%s1637 + $0xb0] sm:$0xff]
    %v4934 = vld [vmem:[%s1637 + $0xb8] sm:$0xff]
    %v4935 = vld [vmem:[%s1637 + $0xc0] sm:$0xff]
    %v4936 = vld [vmem:[%s1637 + $0xc8] sm:$0xff]
    %v4937 = vld [vmem:[%s1637 + $0xd0] sm:$0xff]
    %v4938 = vld [vmem:[%s1637 + $0xd8] sm:$0xff]
    %v4939 = vld [vmem:[%s1637 + $0xe0] sm:$0xff]
    %v4940 = vld [vmem:[%s1637 + $0xe8] sm:$0xff]
    %v4941 = vld [vmem:[%s1637 + $0xf0] sm:$0xff]
    %v4942 = vld [vmem:[%s1637 + $0xf8] sm:$0xff]
    %4943 = vmatprep.subr.mxu0 %v4942
    %4944 = vmatpush1.msra.mxu0 %v4941
    %4945 = vmatprep.subr.mxu0 %v4940
    %4946 = vmatpush1.msra.mxu0 %v4939
    %4947 = vmatprep.subr.mxu0 %v4938
    %4948 = vmatpush1.msra.mxu0 %v4937
    %4949 = vmatprep.subr.mxu0 %v4936
    %4950 = vmatpush1.msra.mxu0 %v4935
    %4951 = vmatprep.subr.mxu0 %v4934
    %4952 = vmatpush1.msra.mxu0 %v4933
    %4953 = vmatprep.subr.mxu0 %v4932
    %4954 = vmatpush1.msra.mxu0 %v4931
    %4955 = vmatprep.subr.mxu0 %v4930
    %4956 = vmatpush1.msra.mxu0 %v4929
    %4957 = vmatprep.subr.mxu0 %v4928
    %4958 = vmatpush1.msra.mxu0 %v4927
    %4959 = vmatprep.subr.mxu0 %v4926
    %4960 = vmatpush1.msra.mxu0 %v4925
    %4961 = vmatprep.subr.mxu0 %v4924
    %4962 = vmatpush1.msra.mxu0 %v4923
    %4963 = vmatprep.subr.mxu0 %v4922
    %4964 = vmatpush1.msra.mxu0 %v4921
    %4965 = vmatprep.subr.mxu0 %v4920
    %4966 = vmatpush1.msra.mxu0 %v4919
    %4967 = vmatprep.subr.mxu0 %v4918
    %4968 = vmatpush1.msra.mxu0 %v4917
    %4969 = vmatprep.subr.mxu0 %v4916
    %4970 = vmatpush1.msra.mxu0 %v4915
    %4971 = vmatprep.subr.mxu0 %v4914
    %4972 = vmatpush1.msra.mxu0 %v4913
    %4973 = vmatprep.subr.mxu0 %v4912
    %4974 = vmatpush1.msra.mxu0 %v4911
    %4975 = vmatprep.subr.mxu0 0.0
    %4976 = vmatpush2.msra.mxu0 0.0
    %4977 = vmatprep.subr.mxu0 0.0
    %4978 = vmatpush2.msra.mxu0 0.0
    %4979 = vmatprep.subr.mxu0 0.0
    %4980 = vmatpush2.msra.mxu0 0.0
    %4981 = vmatprep.subr.mxu0 0.0
    %4982 = vmatpush2.msra.mxu0 0.0
    %4983 = vmatprep.subr.mxu0 0.0
    %4984 = vmatpush2.msra.mxu0 0.0
    %4985 = vmatprep.subr.mxu0 0.0
    %4986 = vmatpush2.msra.mxu0 0.0
    %4987 = vmatprep.subr.mxu0 0.0
    %4988 = vmatpush2.msra.mxu0 0.0
    %4989 = vmatprep.subr.mxu0 0.0
    %4990 = vmatpush2.msra.mxu0 0.0
    %4991 = vmatprep.subr.mxu0 0.0
    %4992 = vmatpush2.msra.mxu0 0.0
    %4993 = vmatprep.subr.mxu0 0.0
    %4994 = vmatpush2.msra.mxu0 0.0
    %4995 = vmatprep.subr.mxu0 0.0
    %4996 = vmatpush2.msra.mxu0 0.0
    %4997 = vmatprep.subr.mxu0 0.0
    %4998 = vmatpush2.msra.mxu0 0.0
    %4999 = vmatprep.subr.mxu0 0.0
    %5000 = vmatpush2.msra.mxu0 0.0
    %5001 = vmatprep.subr.mxu0 0.0
    %5002 = vmatpush2.msra.mxu0 0.0
    %5003 = vmatprep.subr.mxu0 0.0
    %5004 = vmatpush2.msra.mxu0 0.0
    %5005 = vmatprep.subr.mxu0 0.0
    %5006 = vmatpush2.msra.mxu0 0.0
    %5007 = vmatprep.mubr.f32.mxu0 0.0
    %5008 = vmatmul.mubr.f32.gmra.mxu0 %v4386
    %v5009 = vpop.f32.mrf.mxu0
    %v5010 = vadd.f32 %v507, %v5009
    %v5011 = vpop.f32.mrf.mxu0
    %v5012 = vadd.f32 %v511, %v5011
    %5013 = vdwg.mxu0
    %v5014 = vtanh.pop %v5010
    %v5017 = vunpack.c.l.s4 1966171168
    %v5018 = vunpack.c.0.s8 %v5017
    %v5019 = vlaneseq
    %v5020 = vshrl.u32 %v5019, 7
    %v5021 = vsub.s32 %v5018, %v5020
    %v5022 = vrot.slane %v5014, %v5021
    %v5023 = vcombine.high %v5022, %v5022
    %v5025 = vunpack.c.l.s4 1966171168
    %v5026 = vunpack.c.0.s8 %v5025
    %v5027 = vlaneseq
    %v5028 = vshrl.u32 %v5027, 7
    %v5029 = vsub.s32 %v5026, %v5028
    %v5030 = vrot.slane %v5022, %v5029
    %v5032 = vunpack.c.l.s4 1966171168
    %v5033 = vunpack.c.0.s8 %v5032
    %v5034 = vlaneseq
    %v5035 = vshrl.u32 %v5034, 7
    %v5036 = vsub.s32 %v5033, %v5035
    %v5037 = vrot.slane %v5023, %v5036
    %v5038 = vlaneseq
    %v5039 = vshrl.u32 %v5038, 7
    %v5040 = vsub.s32 0, %v5039
    %v5041 = vrot.slane %v5030, %v5040
    %v5042 = vlaneseq
    %v5043 = vshrl.u32 %v5042, 7
    %v5044 = vsub.s32 0, %v5043
    %v5045 = vrot.slane %v5037, %v5044
    %v5048 = vmul.f32 %v440, %v5041
    %v5049 = vmul.f32 %v441, %v5041
    %v5050 = vmul.f32 %v442, %v5045
    %v5051 = vmul.f32 %v443, %v5045
    %5052 = vadd.xlane.f32.xlu0 %v5048
    %v5053 = vpop.xlane.xlu0 %5052
    %5054 = vadd.xlane.f32.xlu0 %v5049
    %v5055 = vpop.xlane.xlu0 %5054
    %5056 = vadd.xlane.f32.xlu0 %v5050
    %v5057 = vpop.xlane.xlu0 %5056
    %5058 = vadd.xlane.f32.xlu0 %v5051
    %v5059 = vpop.xlane.xlu0 %5058
    %v5064 = vlaneseq
    %v5065 = vshrl.u32 %v5064, 7
    %v5066 = vsub.s32 %v1261, %v5065
    %v5067 = vrot.slane %v5053, %v5066
    %v5068 = vlaneseq
    %v5069 = vshrl.u32 %v5068, 7
    %v5070 = vsub.s32 %v1266, %v5069
    %v5071 = vrot.slane %v5055, %v5070
    %v5072 = vsel %vm1271, %v5071, %v5067
    %v5073 = vlaneseq
    %v5074 = vshrl.u32 %v5073, 7
    %v5075 = vsub.s32 %v1261, %v5074
    %v5076 = vrot.slane %v5057, %v5075
    %v5077 = vlaneseq
    %v5078 = vshrl.u32 %v5077, 7
    %v5079 = vsub.s32 %v1266, %v5078
    %v5080 = vrot.slane %v5059, %v5079
    %v5081 = vsel %vm1271, %v5080, %v5076
    %v5082 = vsel %vm1282, %v5081, %v5072
    %v5084 = vsel %vm1285, %v5082, -inf
    %5085 = vmax.xlane.f32.xlu0 %v5084
    %v5086 = vpop.xlane.xlu0 %5085
    %v5088 = vlaneseq
    %v5089 = vshrl.u32 %v5088, 7
    %v5090 = vsub.s32 0, %v5089
    %v5091 = vrot.slane %v5086, %v5090
    %v5092 = vlaneseq
    %v5093 = vshrl.u32 %v5092, 7
    %v5094 = vsub.s32 1, %v5093
    %v5095 = vrot.slane %v5086, %v5094
    %v5098 = vsub.f32 %v5053, %v5091
    %v5099 = vsub.f32 %v5055, %v5091
    %v5100 = vsub.f32 %v5057, %v5095
    %v5101 = vsub.f32 %v5059, %v5095
    %v5102 = vmul.f32 %v5098, 1.442695
    %v5103 = vpow.pop %v5102
    %v5104 = vmul.f32 %v5099, 1.442695
    %v5105 = vpow.pop %v5104
    %v5106 = vmul.f32 %v5100, 1.442695
    %v5107 = vpow.pop %v5106
    %v5108 = vmul.f32 %v5101, 1.442695
    %v5109 = vpow.pop %v5108
    %5114 = vset.pattern.permute.xlu0 0
    %5115 = vperm.xlu0 %5114, %v5103
    %v5116 = vpop.permute.xlu0 %5115
    %5117 = vset.pattern.permute.xlu0 0
    %5118 = vperm.xlu0 %5117, %v5105
    %v5119 = vpop.permute.xlu0 %5118
    %5120 = vset.pattern.permute.xlu0 0
    %5121 = vperm.xlu0 %5120, %v5107
    %v5122 = vpop.permute.xlu0 %5121
    %5123 = vset.pattern.permute.xlu0 0
    %5124 = vperm.xlu0 %5123, %v5109
    %v5125 = vpop.permute.xlu0 %5124
    %v5126 = vlaneseq
    %v5127 = vshrl.u32 %v5126, 7
    %v5128 = vsub.s32 %v1261, %v5127
    %v5129 = vrot.slane %v5116, %v5128
    %v5130 = vlaneseq
    %v5131 = vshrl.u32 %v5130, 7
    %v5132 = vsub.s32 %v1266, %v5131
    %v5133 = vrot.slane %v5119, %v5132
    %v5134 = vsel %vm1271, %v5133, %v5129
    %v5135 = vlaneseq
    %v5136 = vshrl.u32 %v5135, 7
    %v5137 = vsub.s32 %v1261, %v5136
    %v5138 = vrot.slane %v5122, %v5137
    %v5139 = vlaneseq
    %v5140 = vshrl.u32 %v5139, 7
    %v5141 = vsub.s32 %v1266, %v5140
    %v5142 = vrot.slane %v5125, %v5141
    %v5143 = vsel %vm1271, %v5142, %v5138
    %v5144 = vsel %vm1282, %v5143, %v5134
    %v5146 = vsel %vm1285, %v5144, 0.0
    %5147 = vadd.xlane.f32.xlu0 %v5146
    %v5148 = vpop.xlane.xlu0 %5147
    %v5149 = vrcp.pop %v5148
    %v5151 = vlaneseq
    %v5152 = vshrl.u32 %v5151, 7
    %v5153 = vsub.s32 0, %v5152
    %v5154 = vrot.slane %v5149, %v5153
    %v5155 = vlaneseq
    %v5156 = vshrl.u32 %v5155, 7
    %v5157 = vsub.s32 1, %v5156
    %v5158 = vrot.slane %v5149, %v5157
    %v5161 = vmul.f32 %v5103, %v5154
    %v5162 = vmul.f32 %v5105, %v5154
    %v5163 = vmul.f32 %v5107, %v5158
    %v5164 = vmul.f32 %v5109, %v5158
    %5167 = vset.pattern.permute.xlu0 0
    %5168 = vperm.xlu0 %5167, %v5161
    %v5169 = vpop.permute.xlu0 %5168
    %5170 = vset.pattern.permute.xlu0 0
    %5171 = vperm.xlu0 %5170, %v5162
    %v5172 = vpop.permute.xlu0 %5171
    %v5173 = vlaneseq
    %v5174 = vshrl.u32 %v5173, 7
    %v5175 = vsub.s32 %v1261, %v5174
    %v5176 = vrot.slane %v5169, %v5175
    %v5177 = vlaneseq
    %v5178 = vshrl.u32 %v5177, 7
    %v5179 = vsub.s32 %v1266, %v5178
    %v5180 = vrot.slane %v5172, %v5179
    %v5181 = vsel %vm1271, %v5180, %v5176
    %v5182 = vsel %vm182, %v5181, 0
    %5184 = vmatprep.subr.mxu0 0.0
    %5185 = vmatpush1.msra.mxu0 0.0
    %5186 = vmatprep.subr.mxu0 0.0
    %5187 = vmatpush1.msra.mxu0 0.0
    %5188 = vmatprep.subr.mxu0 0.0
    %5189 = vmatpush1.msra.mxu0 0.0
    %5190 = vmatprep.subr.mxu0 0.0
    %5191 = vmatpush1.msra.mxu0 0.0
    %5192 = vmatprep.subr.mxu0 0.0
    %5193 = vmatpush1.msra.mxu0 0.0
    %5194 = vmatprep.subr.mxu0 0.0
    %5195 = vmatpush1.msra.mxu0 0.0
    %5196 = vmatprep.subr.mxu0 0.0
    %5197 = vmatpush1.msra.mxu0 0.0
    %5198 = vmatprep.subr.mxu0 0.0
    %5199 = vmatpush1.msra.mxu0 0.0
    %5200 = vmatprep.subr.mxu0 0.0
    %5201 = vmatpush1.msra.mxu0 0.0
    %5202 = vmatprep.subr.mxu0 0.0
    %5203 = vmatpush1.msra.mxu0 0.0
    %5204 = vmatprep.subr.mxu0 0.0
    %5205 = vmatpush1.msra.mxu0 0.0
    %5206 = vmatprep.subr.mxu0 0.0
    %5207 = vmatpush1.msra.mxu0 0.0
    %5208 = vmatprep.subr.mxu0 0.0
    %5209 = vmatpush1.msra.mxu0 0.0
    %5210 = vmatprep.subr.mxu0 0.0
    %5211 = vmatpush1.msra.mxu0 0.0
    %5212 = vmatprep.subr.mxu0 0.0
    %5213 = vmatpush1.msra.mxu0 %v319
    %5214 = vmatprep.subr.mxu0 0.0
    %5215 = vmatpush1.msra.mxu0 %v318
    %5216 = vmatprep.subr.mxu0 0.0
    %5217 = vmatpush2.msra.mxu0 0.0
    %5218 = vmatprep.subr.mxu0 0.0
    %5219 = vmatpush2.msra.mxu0 0.0
    %5220 = vmatprep.subr.mxu0 0.0
    %5221 = vmatpush2.msra.mxu0 0.0
    %5222 = vmatprep.subr.mxu0 0.0
    %5223 = vmatpush2.msra.mxu0 0.0
    %5224 = vmatprep.subr.mxu0 0.0
    %5225 = vmatpush2.msra.mxu0 0.0
    %5226 = vmatprep.subr.mxu0 0.0
    %5227 = vmatpush2.msra.mxu0 0.0
    %5228 = vmatprep.subr.mxu0 0.0
    %5229 = vmatpush2.msra.mxu0 0.0
    %5230 = vmatprep.subr.mxu0 0.0
    %5231 = vmatpush2.msra.mxu0 0.0
    %5232 = vmatprep.subr.mxu0 0.0
    %5233 = vmatpush2.msra.mxu0 0.0
    %5234 = vmatprep.subr.mxu0 0.0
    %5235 = vmatpush2.msra.mxu0 0.0
    %5236 = vmatprep.subr.mxu0 0.0
    %5237 = vmatpush2.msra.mxu0 0.0
    %5238 = vmatprep.subr.mxu0 0.0
    %5239 = vmatpush2.msra.mxu0 0.0
    %5240 = vmatprep.subr.mxu0 0.0
    %5241 = vmatpush2.msra.mxu0 0.0
    %5242 = vmatprep.subr.mxu0 0.0
    %5243 = vmatpush2.msra.mxu0 0.0
    %5244 = vmatprep.subr.mxu0 0.0
    %5245 = vmatpush2.msra.mxu0 0.0
    %5246 = vmatprep.subr.mxu0 0.0
    %5247 = vmatpush2.msra.mxu0 0.0
    %5248 = vmatprep.mubr.f32.mxu0 0.0
    %5249 = vmatmul.mubr.f32.gmra.mxu0 %v5182
    %v5250 = vpop.f32.mrf.mxu0
    %v5251 = vadd.f32 0.0, %v5250
    %v5252 = vpop.f32.mrf.mxu0
    %5253 = vdwg.mxu0
    %5256 = vset.pattern.permute.xlu0 0
    %5257 = vperm.xlu0 %5256, %v5163
    %v5258 = vpop.permute.xlu0 %5257
    %5259 = vset.pattern.permute.xlu0 0
    %5260 = vperm.xlu0 %5259, %v5164
    %v5261 = vpop.permute.xlu0 %5260
    %v5262 = vlaneseq
    %v5263 = vshrl.u32 %v5262, 7
    %v5264 = vsub.s32 %v1261, %v5263
    %v5265 = vrot.slane %v5258, %v5264
    %v5266 = vlaneseq
    %v5267 = vshrl.u32 %v5266, 7
    %v5268 = vsub.s32 %v1266, %v5267
    %v5269 = vrot.slane %v5261, %v5268
    %v5270 = vsel %vm1271, %v5269, %v5265
    %v5271 = vsel %vm182, %v5270, 0
    %5273 = vmatprep.subr.mxu0 0.0
    %5274 = vmatpush1.msra.mxu0 0.0
    %5275 = vmatprep.subr.mxu0 0.0
    %5276 = vmatpush1.msra.mxu0 0.0
    %5277 = vmatprep.subr.mxu0 0.0
    %5278 = vmatpush1.msra.mxu0 0.0
    %5279 = vmatprep.subr.mxu0 0.0
    %5280 = vmatpush1.msra.mxu0 0.0
    %5281 = vmatprep.subr.mxu0 0.0
    %5282 = vmatpush1.msra.mxu0 0.0
    %5283 = vmatprep.subr.mxu0 0.0
    %5284 = vmatpush1.msra.mxu0 0.0
    %5285 = vmatprep.subr.mxu0 0.0
    %5286 = vmatpush1.msra.mxu0 0.0
    %5287 = vmatprep.subr.mxu0 0.0
    %5288 = vmatpush1.msra.mxu0 0.0
    %5289 = vmatprep.subr.mxu0 0.0
    %5290 = vmatpush1.msra.mxu0 0.0
    %5291 = vmatprep.subr.mxu0 0.0
    %5292 = vmatpush1.msra.mxu0 0.0
    %5293 = vmatprep.subr.mxu0 0.0
    %5294 = vmatpush1.msra.mxu0 0.0
    %5295 = vmatprep.subr.mxu0 0.0
    %5296 = vmatpush1.msra.mxu0 0.0
    %5297 = vmatprep.subr.mxu0 0.0
    %5298 = vmatpush1.msra.mxu0 0.0
    %5299 = vmatprep.subr.mxu0 0.0
    %5300 = vmatpush1.msra.mxu0 0.0
    %5301 = vmatprep.subr.mxu0 0.0
    %5302 = vmatpush1.msra.mxu0 %v435
    %5303 = vmatprep.subr.mxu0 0.0
    %5304 = vmatpush1.msra.mxu0 %v434
    %5305 = vmatprep.subr.mxu0 0.0
    %5306 = vmatpush2.msra.mxu0 0.0
    %5307 = vmatprep.subr.mxu0 0.0
    %5308 = vmatpush2.msra.mxu0 0.0
    %5309 = vmatprep.subr.mxu0 0.0
    %5310 = vmatpush2.msra.mxu0 0.0
    %5311 = vmatprep.subr.mxu0 0.0
    %5312 = vmatpush2.msra.mxu0 0.0
    %5313 = vmatprep.subr.mxu0 0.0
    %5314 = vmatpush2.msra.mxu0 0.0
    %5315 = vmatprep.subr.mxu0 0.0
    %5316 = vmatpush2.msra.mxu0 0.0
    %5317 = vmatprep.subr.mxu0 0.0
    %5318 = vmatpush2.msra.mxu0 0.0
    %5319 = vmatprep.subr.mxu0 0.0
    %5320 = vmatpush2.msra.mxu0 0.0
    %5321 = vmatprep.subr.mxu0 0.0
    %5322 = vmatpush2.msra.mxu0 0.0
    %5323 = vmatprep.subr.mxu0 0.0
    %5324 = vmatpush2.msra.mxu0 0.0
    %5325 = vmatprep.subr.mxu0 0.0
    %5326 = vmatpush2.msra.mxu0 0.0
    %5327 = vmatprep.subr.mxu0 0.0
    %5328 = vmatpush2.msra.mxu0 0.0
    %5329 = vmatprep.subr.mxu0 0.0
    %5330 = vmatpush2.msra.mxu0 0.0
    %5331 = vmatprep.subr.mxu0 0.0
    %5332 = vmatpush2.msra.mxu0 0.0
    %5333 = vmatprep.subr.mxu0 0.0
    %5334 = vmatpush2.msra.mxu0 0.0
    %5335 = vmatprep.subr.mxu0 0.0
    %5336 = vmatpush2.msra.mxu0 0.0
    %5337 = vmatprep.mubr.f32.mxu0 0.0
    %5338 = vmatmul.mubr.f32.gmra.mxu0 %v5271
    %v5339 = vpop.f32.mrf.mxu0
    %v5340 = vadd.f32 0.0, %v5339
    %v5341 = vpop.f32.mrf.mxu0
    %5342 = vdwg.mxu0
    %v5343 = vld [vmem:[%s2070] sm:$0xff]
    %v5344 = vld [vmem:[%s2070 + $0x8] sm:$0xff]
    %v5345 = vld [vmem:[%s2070 + $0x10] sm:$0xff]
    %v5346 = vld [vmem:[%s2070 + $0x18] sm:$0xff]
    %v5347 = vld [vmem:[%s2070 + $0x20] sm:$0xff]
    %v5348 = vld [vmem:[%s2070 + $0x28] sm:$0xff]
    %v5349 = vld [vmem:[%s2070 + $0x30] sm:$0xff]
    %v5350 = vld [vmem:[%s2070 + $0x38] sm:$0xff]
    %v5351 = vld [vmem:[%s2070 + $0x40] sm:$0xff]
    %v5352 = vld [vmem:[%s2070 + $0x48] sm:$0xff]
    %v5353 = vld [vmem:[%s2070 + $0x50] sm:$0xff]
    %v5354 = vld [vmem:[%s2070 + $0x58] sm:$0xff]
    %v5355 = vld [vmem:[%s2070 + $0x60] sm:$0xff]
    %v5356 = vld [vmem:[%s2070 + $0x68] sm:$0xff]
    %v5357 = vld [vmem:[%s2070 + $0x70] sm:$0xff]
    %v5358 = vld [vmem:[%s2070 + $0x78] sm:$0xff]
    %v5361 = vrot.slane %v5340, 7
    %v5362 = vsel %vm1282, %v5361, %v5251
    %5364 = vmatprep.subr.mxu0 0.0
    %5365 = vmatpush1.msra.mxu0 %v5358
    %5366 = vmatprep.subr.mxu0 0.0
    %5367 = vmatpush1.msra.mxu0 %v5357
    %5368 = vmatprep.subr.mxu0 0.0
    %5369 = vmatpush1.msra.mxu0 %v5356
    %5370 = vmatprep.subr.mxu0 0.0
    %5371 = vmatpush1.msra.mxu0 %v5355
    %5372 = vmatprep.subr.mxu0 0.0
    %5373 = vmatpush1.msra.mxu0 %v5354
    %5374 = vmatprep.subr.mxu0 0.0
    %5375 = vmatpush1.msra.mxu0 %v5353
    %5376 = vmatprep.subr.mxu0 0.0
    %5377 = vmatpush1.msra.mxu0 %v5352
    %5378 = vmatprep.subr.mxu0 0.0
    %5379 = vmatpush1.msra.mxu0 %v5351
    %5380 = vmatprep.subr.mxu0 0.0
    %5381 = vmatpush1.msra.mxu0 %v5350
    %5382 = vmatprep.subr.mxu0 0.0
    %5383 = vmatpush1.msra.mxu0 %v5349
    %5384 = vmatprep.subr.mxu0 0.0
    %5385 = vmatpush1.msra.mxu0 %v5348
    %5386 = vmatprep.subr.mxu0 0.0
    %5387 = vmatpush1.msra.mxu0 %v5347
    %5388 = vmatprep.subr.mxu0 0.0
    %5389 = vmatpush1.msra.mxu0 %v5346
    %5390 = vmatprep.subr.mxu0 0.0
    %5391 = vmatpush1.msra.mxu0 %v5345
    %5392 = vmatprep.subr.mxu0 0.0
    %5393 = vmatpush1.msra.mxu0 %v5344
    %5394 = vmatprep.subr.mxu0 0.0
    %5395 = vmatpush1.msra.mxu0 %v5343
    %5396 = vmatprep.subr.mxu0 0.0
    %5397 = vmatpush2.msra.mxu0 0.0
    %5398 = vmatprep.subr.mxu0 0.0
    %5399 = vmatpush2.msra.mxu0 0.0
    %5400 = vmatprep.subr.mxu0 0.0
    %5401 = vmatpush2.msra.mxu0 0.0
    %5402 = vmatprep.subr.mxu0 0.0
    %5403 = vmatpush2.msra.mxu0 0.0
    %5404 = vmatprep.subr.mxu0 0.0
    %5405 = vmatpush2.msra.mxu0 0.0
    %5406 = vmatprep.subr.mxu0 0.0
    %5407 = vmatpush2.msra.mxu0 0.0
    %5408 = vmatprep.subr.mxu0 0.0
    %5409 = vmatpush2.msra.mxu0 0.0
    %5410 = vmatprep.subr.mxu0 0.0
    %5411 = vmatpush2.msra.mxu0 0.0
    %5412 = vmatprep.subr.mxu0 0.0
    %5413 = vmatpush2.msra.mxu0 0.0
    %5414 = vmatprep.subr.mxu0 0.0
    %5415 = vmatpush2.msra.mxu0 0.0
    %5416 = vmatprep.subr.mxu0 0.0
    %5417 = vmatpush2.msra.mxu0 0.0
    %5418 = vmatprep.subr.mxu0 0.0
    %5419 = vmatpush2.msra.mxu0 0.0
    %5420 = vmatprep.subr.mxu0 0.0
    %5421 = vmatpush2.msra.mxu0 0.0
    %5422 = vmatprep.subr.mxu0 0.0
    %5423 = vmatpush2.msra.mxu0 0.0
    %5424 = vmatprep.subr.mxu0 0.0
    %5425 = vmatpush2.msra.mxu0 0.0
    %5426 = vmatprep.subr.mxu0 0.0
    %5427 = vmatpush2.msra.mxu0 0.0
    %5428 = vmatprep.mubr.f32.mxu0 0.0
    %5429 = vmatmul.mubr.f32.gmra.mxu0 %v5362
    %v5430 = vpop.f32.mrf.mxu0
    %v5431 = vadd.f32 %v5012, %v5430
    %v5432 = vpop.f32.mrf.mxu0
    %5433 = vdwg.mxu0
    %v5434 = vtanh.pop %v5431
    %v5435 = vld [vmem:[#allocation5] sm:$0xff]
    %v5436 = vld [vmem:[#allocation5 + $0x8] sm:$0xff]
    %v5437 = vld [vmem:[#allocation5 + $0x10] sm:$0xff]
    %v5438 = vld [vmem:[#allocation5 + $0x18] sm:$0xff]
    %v5439 = vld [vmem:[#allocation5 + $0x20] sm:$0xff]
    %v5440 = vld [vmem:[#allocation5 + $0x28] sm:$0xff]
    %v5441 = vld [vmem:[#allocation5 + $0x30] sm:$0xff]
    %v5442 = vld [vmem:[#allocation5 + $0x38] sm:$0xff]
    %v5443 = vld [vmem:[#allocation5 + $0x40] sm:$0xff]
    %v5444 = vld [vmem:[#allocation5 + $0x48] sm:$0xff]
    %v5445 = vld [vmem:[#allocation5 + $0x50] sm:$0xff]
    %v5446 = vld [vmem:[#allocation5 + $0x58] sm:$0xff]
    %v5447 = vld [vmem:[#allocation5 + $0x60] sm:$0xff]
    %v5448 = vld [vmem:[#allocation5 + $0x68] sm:$0xff]
    %v5449 = vld [vmem:[#allocation5 + $0x70] sm:$0xff]
    %v5450 = vld [vmem:[#allocation5 + $0x78] sm:$0xff]
    %v5451 = vld [vmem:[#allocation5 + $0x80] sm:$0xff]
    %v5452 = vld [vmem:[#allocation5 + $0x88] sm:$0xff]
    %v5453 = vld [vmem:[#allocation5 + $0x90] sm:$0xff]
    %v5454 = vld [vmem:[#allocation5 + $0x98] sm:$0xff]
    %v5455 = vld [vmem:[#allocation5 + $0xa0] sm:$0xff]
    %v5456 = vld [vmem:[#allocation5 + $0xa8] sm:$0xff]
    %v5457 = vld [vmem:[#allocation5 + $0xb0] sm:$0xff]
    %v5458 = vld [vmem:[#allocation5 + $0xb8] sm:$0xff]
    %v5459 = vld [vmem:[#allocation5 + $0xc0] sm:$0xff]
    %v5460 = vld [vmem:[#allocation5 + $0xc8] sm:$0xff]
    %v5461 = vld [vmem:[#allocation5 + $0xd0] sm:$0xff]
    %v5462 = vld [vmem:[#allocation5 + $0xd8] sm:$0xff]
    %v5463 = vld [vmem:[#allocation5 + $0xe0] sm:$0xff]
    %v5464 = vld [vmem:[#allocation5 + $0xe8] sm:$0xff]
    %v5465 = vld [vmem:[#allocation5 + $0xf0] sm:$0xff]
    %v5466 = vld [vmem:[#allocation5 + $0xf8] sm:$0xff]
    %v5467 = vld [vmem:[#allocation5 + $0x100] sm:$0xff]
    %v5468 = vld [vmem:[#allocation5 + $0x108] sm:$0xff]
    %v5469 = vld [vmem:[#allocation5 + $0x110] sm:$0xff]
    %v5470 = vld [vmem:[#allocation5 + $0x118] sm:$0xff]
    %v5471 = vld [vmem:[#allocation5 + $0x120] sm:$0xff]
    %v5472 = vld [vmem:[#allocation5 + $0x128] sm:$0xff]
    %v5473 = vld [vmem:[#allocation5 + $0x130] sm:$0xff]
    %v5474 = vld [vmem:[#allocation5 + $0x138] sm:$0xff]
    %v5475 = vld [vmem:[#allocation5 + $0x140] sm:$0xff]
    %v5476 = vld [vmem:[#allocation5 + $0x148] sm:$0xff]
    %v5477 = vld [vmem:[#allocation5 + $0x150] sm:$0xff]
    %v5478 = vld [vmem:[#allocation5 + $0x158] sm:$0xff]
    %v5479 = vld [vmem:[#allocation5 + $0x160] sm:$0xff]
    %v5480 = vld [vmem:[#allocation5 + $0x168] sm:$0xff]
    %v5481 = vld [vmem:[#allocation5 + $0x170] sm:$0xff]
    %v5482 = vld [vmem:[#allocation5 + $0x178] sm:$0xff]
    %v5483 = vld [vmem:[#allocation5 + $0x180] sm:$0xff]
    %v5484 = vld [vmem:[#allocation5 + $0x188] sm:$0xff]
    %v5485 = vld [vmem:[#allocation5 + $0x190] sm:$0xff]
    %v5486 = vld [vmem:[#allocation5 + $0x198] sm:$0xff]
    %v5487 = vld [vmem:[#allocation5 + $0x1a0] sm:$0xff]
    %v5488 = vld [vmem:[#allocation5 + $0x1a8] sm:$0xff]
    %v5489 = vld [vmem:[#allocation5 + $0x1b0] sm:$0xff]
    %v5490 = vld [vmem:[#allocation5 + $0x1b8] sm:$0xff]
    %v5491 = vld [vmem:[#allocation5 + $0x1c0] sm:$0xff]
    %v5492 = vld [vmem:[#allocation5 + $0x1c8] sm:$0xff]
    %v5493 = vld [vmem:[#allocation5 + $0x1d0] sm:$0xff]
    %v5494 = vld [vmem:[#allocation5 + $0x1d8] sm:$0xff]
    %v5495 = vld [vmem:[#allocation5 + $0x1e0] sm:$0xff]
    %v5496 = vld [vmem:[#allocation5 + $0x1e8] sm:$0xff]
    %v5497 = vld [vmem:[#allocation5 + $0x1f0] sm:$0xff]
    %v5498 = vld [vmem:[#allocation5 + $0x1f8] sm:$0xff]
    %v5499 = vld [vmem:[#allocation5 + $0x200] sm:$0xff]
    %v5500 = vld [vmem:[#allocation5 + $0x208] sm:$0xff]
    %v5501 = vld [vmem:[#allocation5 + $0x210] sm:$0xff]
    %v5502 = vld [vmem:[#allocation5 + $0x218] sm:$0xff]
    %v5503 = vld [vmem:[#allocation5 + $0x220] sm:$0xff]
    %v5504 = vld [vmem:[#allocation5 + $0x228] sm:$0xff]
    %v5505 = vld [vmem:[#allocation5 + $0x230] sm:$0xff]
    %v5506 = vld [vmem:[#allocation5 + $0x238] sm:$0xff]
    %v5507 = vld [vmem:[#allocation5 + $0x240] sm:$0xff]
    %v5508 = vld [vmem:[#allocation5 + $0x248] sm:$0xff]
    %v5509 = vld [vmem:[#allocation5 + $0x250] sm:$0xff]
    %v5510 = vld [vmem:[#allocation5 + $0x258] sm:$0xff]
    %v5511 = vld [vmem:[#allocation5 + $0x260] sm:$0xff]
    %v5512 = vld [vmem:[#allocation5 + $0x268] sm:$0xff]
    %v5513 = vld [vmem:[#allocation5 + $0x270] sm:$0xff]
    %v5514 = vld [vmem:[#allocation5 + $0x278] sm:$0xff]
    %v5515 = vld [vmem:[#allocation5 + $0x280] sm:$0xff]
    %v5516 = vld [vmem:[#allocation5 + $0x288] sm:$0xff]
    %v5517 = vld [vmem:[#allocation5 + $0x290] sm:$0xff]
    %v5518 = vld [vmem:[#allocation5 + $0x298] sm:$0xff]
    %v5519 = vld [vmem:[#allocation5 + $0x2a0] sm:$0xff]
    %v5520 = vld [vmem:[#allocation5 + $0x2a8] sm:$0xff]
    %v5521 = vld [vmem:[#allocation5 + $0x2b0] sm:$0xff]
    %v5522 = vld [vmem:[#allocation5 + $0x2b8] sm:$0xff]
    %v5523 = vld [vmem:[#allocation5 + $0x2c0] sm:$0xff]
    %v5524 = vld [vmem:[#allocation5 + $0x2c8] sm:$0xff]
    %v5525 = vld [vmem:[#allocation5 + $0x2d0] sm:$0xff]
    %v5526 = vld [vmem:[#allocation5 + $0x2d8] sm:$0xff]
    %v5527 = vld [vmem:[#allocation5 + $0x2e0] sm:$0xff]
    %v5528 = vld [vmem:[#allocation5 + $0x2e8] sm:$0xff]
    %v5529 = vld [vmem:[#allocation5 + $0x2f0] sm:$0xff]
    %v5530 = vld [vmem:[#allocation5 + $0x2f8] sm:$0xff]
    %v5531 = vld [vmem:[#allocation5 + $0x300] sm:$0xff]
    %v5532 = vld [vmem:[#allocation5 + $0x308] sm:$0xff]
    %v5533 = vld [vmem:[#allocation5 + $0x310] sm:$0xff]
    %v5534 = vld [vmem:[#allocation5 + $0x318] sm:$0xff]
    %v5535 = vld [vmem:[#allocation5 + $0x320] sm:$0xff]
    %v5536 = vld [vmem:[#allocation5 + $0x328] sm:$0xff]
    %v5537 = vld [vmem:[#allocation5 + $0x330] sm:$0xff]
    %v5538 = vld [vmem:[#allocation5 + $0x338] sm:$0xff]
    %v5539 = vld [vmem:[#allocation5 + $0x340] sm:$0xff]
    %v5540 = vld [vmem:[#allocation5 + $0x348] sm:$0xff]
    %v5541 = vld [vmem:[#allocation5 + $0x350] sm:$0xff]
    %v5542 = vld [vmem:[#allocation5 + $0x358] sm:$0xff]
    %v5543 = vld [vmem:[#allocation5 + $0x360] sm:$0xff]
    %v5544 = vld [vmem:[#allocation5 + $0x368] sm:$0xff]
    %v5545 = vld [vmem:[#allocation5 + $0x370] sm:$0xff]
    %v5546 = vld [vmem:[#allocation5 + $0x378] sm:$0xff]
    %v5547 = vld [vmem:[#allocation5 + $0x380] sm:$0xff]
    %v5548 = vld [vmem:[#allocation5 + $0x388] sm:$0xff]
    %v5549 = vld [vmem:[#allocation5 + $0x390] sm:$0xff]
    %v5550 = vld [vmem:[#allocation5 + $0x398] sm:$0xff]
    %v5551 = vld [vmem:[#allocation5 + $0x3a0] sm:$0xff]
    %v5552 = vld [vmem:[#allocation5 + $0x3a8] sm:$0xff]
    %v5553 = vld [vmem:[#allocation5 + $0x3b0] sm:$0xff]
    %v5554 = vld [vmem:[#allocation5 + $0x3b8] sm:$0xff]
    %v5555 = vld [vmem:[#allocation5 + $0x3c0] sm:$0xff]
    %v5556 = vld [vmem:[#allocation5 + $0x3c8] sm:$0xff]
    %v5557 = vld [vmem:[#allocation5 + $0x3d0] sm:$0xff]
    %v5558 = vld [vmem:[#allocation5 + $0x3d8] sm:$0xff]
    %v5559 = vld [vmem:[#allocation5 + $0x3e0] sm:$0xff]
    %v5560 = vld [vmem:[#allocation5 + $0x3e8] sm:$0xff]
    %v5561 = vld [vmem:[#allocation5 + $0x3f0] sm:$0xff]
    %v5562 = vld [vmem:[#allocation5 + $0x3f8] sm:$0xff]
    %5563 = vmatprep.subr.mxu0 %v5496
    %5564 = vmatpush1.msra.mxu0 %v5495
    %5565 = vmatprep.subr.mxu0 %v5492
    %5566 = vmatpush1.msra.mxu0 %v5491
    %5567 = vmatprep.subr.mxu0 %v5488
    %5568 = vmatpush1.msra.mxu0 %v5487
    %5569 = vmatprep.subr.mxu0 %v5484
    %5570 = vmatpush1.msra.mxu0 %v5483
    %5571 = vmatprep.subr.mxu0 %v5480
    %5572 = vmatpush1.msra.mxu0 %v5479
    %5573 = vmatprep.subr.mxu0 %v5476
    %5574 = vmatpush1.msra.mxu0 %v5475
    %5575 = vmatprep.subr.mxu0 %v5472
    %5576 = vmatpush1.msra.mxu0 %v5471
    %5577 = vmatprep.subr.mxu0 %v5468
    %5578 = vmatpush1.msra.mxu0 %v5467
    %5579 = vmatprep.subr.mxu0 %v5464
    %5580 = vmatpush1.msra.mxu0 %v5463
    %5581 = vmatprep.subr.mxu0 %v5460
    %5582 = vmatpush1.msra.mxu0 %v5459
    %5583 = vmatprep.subr.mxu0 %v5456
    %5584 = vmatpush1.msra.mxu0 %v5455
    %5585 = vmatprep.subr.mxu0 %v5452
    %5586 = vmatpush1.msra.mxu0 %v5451
    %5587 = vmatprep.subr.mxu0 %v5448
    %5588 = vmatpush1.msra.mxu0 %v5447
    %5589 = vmatprep.subr.mxu0 %v5444
    %5590 = vmatpush1.msra.mxu0 %v5443
    %5591 = vmatprep.subr.mxu0 %v5440
    %5592 = vmatpush1.msra.mxu0 %v5439
    %5593 = vmatprep.subr.mxu0 %v5436
    %5594 = vmatpush1.msra.mxu0 %v5435
    %5595 = vmatprep.subr.mxu0 %v5560
    %5596 = vmatpush2.msra.mxu0 %v5559
    %5597 = vmatprep.subr.mxu0 %v5556
    %5598 = vmatpush2.msra.mxu0 %v5555
    %5599 = vmatprep.subr.mxu0 %v5552
    %5600 = vmatpush2.msra.mxu0 %v5551
    %5601 = vmatprep.subr.mxu0 %v5548
    %5602 = vmatpush2.msra.mxu0 %v5547
    %5603 = vmatprep.subr.mxu0 %v5544
    %5604 = vmatpush2.msra.mxu0 %v5543
    %5605 = vmatprep.subr.mxu0 %v5540
    %5606 = vmatpush2.msra.mxu0 %v5539
    %5607 = vmatprep.subr.mxu0 %v5536
    %5608 = vmatpush2.msra.mxu0 %v5535
    %5609 = vmatprep.subr.mxu0 %v5532
    %5610 = vmatpush2.msra.mxu0 %v5531
    %5611 = vmatprep.subr.mxu0 %v5528
    %5612 = vmatpush2.msra.mxu0 %v5527
    %5613 = vmatprep.subr.mxu0 %v5524
    %5614 = vmatpush2.msra.mxu0 %v5523
    %5615 = vmatprep.subr.mxu0 %v5520
    %5616 = vmatpush2.msra.mxu0 %v5519
    %5617 = vmatprep.subr.mxu0 %v5516
    %5618 = vmatpush2.msra.mxu0 %v5515
    %5619 = vmatprep.subr.mxu0 %v5512
    %5620 = vmatpush2.msra.mxu0 %v5511
    %5621 = vmatprep.subr.mxu0 %v5508
    %5622 = vmatpush2.msra.mxu0 %v5507
    %5623 = vmatprep.subr.mxu0 %v5504
    %5624 = vmatpush2.msra.mxu0 %v5503
    %5625 = vmatprep.subr.mxu0 %v5500
    %5626 = vmatpush2.msra.mxu0 %v5499
    %5627 = vmatprep.mubr.f32.mxu0 %v4910
    %5628 = vmatmul.mubr.f32.gmra.mxu0 %v4386
    %v5629 = vpop.f32.mrf.mxu0
    %v5630 = vadd.f32 %v449, %v5629
    %v5631 = vpop.f32.mrf.mxu0
    %v5632 = vadd.f32 %v453, %v5631
    %5633 = vdwg.mxu0
    %5634 = vmatprep.subr.mxu0 %v5498
    %5635 = vmatpush1.msra.mxu0 %v5497
    %5636 = vmatprep.subr.mxu0 %v5494
    %5637 = vmatpush1.msra.mxu0 %v5493
    %5638 = vmatprep.subr.mxu0 %v5490
    %5639 = vmatpush1.msra.mxu0 %v5489
    %5640 = vmatprep.subr.mxu0 %v5486
    %5641 = vmatpush1.msra.mxu0 %v5485
    %5642 = vmatprep.subr.mxu0 %v5482
    %5643 = vmatpush1.msra.mxu0 %v5481
    %5644 = vmatprep.subr.mxu0 %v5478
    %5645 = vmatpush1.msra.mxu0 %v5477
    %5646 = vmatprep.subr.mxu0 %v5474
    %5647 = vmatpush1.msra.mxu0 %v5473
    %5648 = vmatprep.subr.mxu0 %v5470
    %5649 = vmatpush1.msra.mxu0 %v5469
    %5650 = vmatprep.subr.mxu0 %v5466
    %5651 = vmatpush1.msra.mxu0 %v5465
    %5652 = vmatprep.subr.mxu0 %v5462
    %5653 = vmatpush1.msra.mxu0 %v5461
    %5654 = vmatprep.subr.mxu0 %v5458
    %5655 = vmatpush1.msra.mxu0 %v5457
    %5656 = vmatprep.subr.mxu0 %v5454
    %5657 = vmatpush1.msra.mxu0 %v5453
    %5658 = vmatprep.subr.mxu0 %v5450
    %5659 = vmatpush1.msra.mxu0 %v5449
    %5660 = vmatprep.subr.mxu0 %v5446
    %5661 = vmatpush1.msra.mxu0 %v5445
    %5662 = vmatprep.subr.mxu0 %v5442
    %5663 = vmatpush1.msra.mxu0 %v5441
    %5664 = vmatprep.subr.mxu0 %v5438
    %5665 = vmatpush1.msra.mxu0 %v5437
    %5666 = vmatprep.subr.mxu0 %v5562
    %5667 = vmatpush2.msra.mxu0 %v5561
    %5668 = vmatprep.subr.mxu0 %v5558
    %5669 = vmatpush2.msra.mxu0 %v5557
    %5670 = vmatprep.subr.mxu0 %v5554
    %5671 = vmatpush2.msra.mxu0 %v5553
    %5672 = vmatprep.subr.mxu0 %v5550
    %5673 = vmatpush2.msra.mxu0 %v5549
    %5674 = vmatprep.subr.mxu0 %v5546
    %5675 = vmatpush2.msra.mxu0 %v5545
    %5676 = vmatprep.subr.mxu0 %v5542
    %5677 = vmatpush2.msra.mxu0 %v5541
    %5678 = vmatprep.subr.mxu0 %v5538
    %5679 = vmatpush2.msra.mxu0 %v5537
    %5680 = vmatprep.subr.mxu0 %v5534
    %5681 = vmatpush2.msra.mxu0 %v5533
    %5682 = vmatprep.subr.mxu0 %v5530
    %5683 = vmatpush2.msra.mxu0 %v5529
    %5684 = vmatprep.subr.mxu0 %v5526
    %5685 = vmatpush2.msra.mxu0 %v5525
    %5686 = vmatprep.subr.mxu0 %v5522
    %5687 = vmatpush2.msra.mxu0 %v5521
    %5688 = vmatprep.subr.mxu0 %v5518
    %5689 = vmatpush2.msra.mxu0 %v5517
    %5690 = vmatprep.subr.mxu0 %v5514
    %5691 = vmatpush2.msra.mxu0 %v5513
    %5692 = vmatprep.subr.mxu0 %v5510
    %5693 = vmatpush2.msra.mxu0 %v5509
    %5694 = vmatprep.subr.mxu0 %v5506
    %5695 = vmatpush2.msra.mxu0 %v5505
    %5696 = vmatprep.subr.mxu0 %v5502
    %5697 = vmatpush2.msra.mxu0 %v5501
    %5698 = vmatprep.mubr.f32.mxu0 %v4910
    %5699 = vmatmul.mubr.f32.gmra.mxu0 %v4386
    %v5700 = vpop.f32.mrf.mxu0
    %v5701 = vadd.f32 %v457, %v5700
    %v5702 = vpop.f32.mrf.mxu0
    %v5703 = vadd.f32 %v461, %v5702
    %5704 = vdwg.mxu0
    %v5705 = vxor.u32 %v5630, 2147483648
    %v5706 = vmul.f32 %v5705, 1.442695
    %v5707 = vpow.pop %v5706
    %v5708 = vadd.f32 %v5707, 1.0
    %v5709 = vrcp.pop %v5708
    %v5710 = vmul.f32 1.0, %v5709
    %v5711 = vxor.u32 %v5632, 2147483648
    %v5712 = vmul.f32 %v5711, 1.442695
    %v5713 = vpow.pop %v5712
    %v5714 = vadd.f32 %v5713, 1.0
    %v5715 = vrcp.pop %v5714
    %v5716 = vmul.f32 1.0, %v5715
    %v5717 = vtanh.pop %v5701
    %v5718 = vxor.u32 %v5703, 2147483648
    %v5719 = vmul.f32 %v5718, 1.442695
    %v5720 = vpow.pop %v5719
    %v5721 = vadd.f32 %v5720, 1.0
    %v5722 = vrcp.pop %v5721
    %v5723 = vmul.f32 1.0, %v5722
    %v5724 = vmul.f32 %v5716, %v4090
    %v5725 = vmul.f32 %v5710, %v5717
    %v5726 = vadd.f32 %v5724, %v5725
    %v5727 = vtanh.pop %v5726
    %v5728 = vmul.f32 %v5723, %v5727
    %v5729 = vld [vmem:[%s812] sm:$0xff]
    %v5730 = vld [vmem:[%s812 + $0x8] sm:$0xff]
    %v5731 = vld [vmem:[%s812 + $0x10] sm:$0xff]
    %v5732 = vld [vmem:[%s812 + $0x18] sm:$0xff]
    %v5733 = vld [vmem:[%s812 + $0x20] sm:$0xff]
    %v5734 = vld [vmem:[%s812 + $0x28] sm:$0xff]
    %v5735 = vld [vmem:[%s812 + $0x30] sm:$0xff]
    %v5736 = vld [vmem:[%s812 + $0x38] sm:$0xff]
    %v5737 = vld [vmem:[%s812 + $0x40] sm:$0xff]
    %v5738 = vld [vmem:[%s812 + $0x48] sm:$0xff]
    %v5739 = vld [vmem:[%s812 + $0x50] sm:$0xff]
    %v5740 = vld [vmem:[%s812 + $0x58] sm:$0xff]
    %v5741 = vld [vmem:[%s812 + $0x60] sm:$0xff]
    %v5742 = vld [vmem:[%s812 + $0x68] sm:$0xff]
    %v5743 = vld [vmem:[%s812 + $0x70] sm:$0xff]
    %v5744 = vld [vmem:[%s812 + $0x78] sm:$0xff]
    %v5745 = vld [vmem:[%s812 + $0x80] sm:$0xff]
    %v5746 = vld [vmem:[%s812 + $0x88] sm:$0xff]
    %v5747 = vld [vmem:[%s812 + $0x90] sm:$0xff]
    %v5748 = vld [vmem:[%s812 + $0x98] sm:$0xff]
    %v5749 = vld [vmem:[%s812 + $0xa0] sm:$0xff]
    %v5750 = vld [vmem:[%s812 + $0xa8] sm:$0xff]
    %v5751 = vld [vmem:[%s812 + $0xb0] sm:$0xff]
    %v5752 = vld [vmem:[%s812 + $0xb8] sm:$0xff]
    %v5753 = vld [vmem:[%s812 + $0xc0] sm:$0xff]
    %v5754 = vld [vmem:[%s812 + $0xc8] sm:$0xff]
    %v5755 = vld [vmem:[%s812 + $0xd0] sm:$0xff]
    %v5756 = vld [vmem:[%s812 + $0xd8] sm:$0xff]
    %v5757 = vld [vmem:[%s812 + $0xe0] sm:$0xff]
    %v5758 = vld [vmem:[%s812 + $0xe8] sm:$0xff]
    %v5759 = vld [vmem:[%s812 + $0xf0] sm:$0xff]
    %v5760 = vld [vmem:[%s812 + $0xf8] sm:$0xff]
    %v5761 = vld [vmem:[%s812 + $0x100] sm:$0xff]
    %v5762 = vld [vmem:[%s812 + $0x108] sm:$0xff]
    %v5763 = vld [vmem:[%s812 + $0x110] sm:$0xff]
    %v5764 = vld [vmem:[%s812 + $0x118] sm:$0xff]
    %v5765 = vld [vmem:[%s812 + $0x120] sm:$0xff]
    %v5766 = vld [vmem:[%s812 + $0x128] sm:$0xff]
    %v5767 = vld [vmem:[%s812 + $0x130] sm:$0xff]
    %v5768 = vld [vmem:[%s812 + $0x138] sm:$0xff]
    %v5769 = vld [vmem:[%s812 + $0x140] sm:$0xff]
    %v5770 = vld [vmem:[%s812 + $0x148] sm:$0xff]
    %v5771 = vld [vmem:[%s812 + $0x150] sm:$0xff]
    %v5772 = vld [vmem:[%s812 + $0x158] sm:$0xff]
    %v5773 = vld [vmem:[%s812 + $0x160] sm:$0xff]
    %v5774 = vld [vmem:[%s812 + $0x168] sm:$0xff]
    %v5775 = vld [vmem:[%s812 + $0x170] sm:$0xff]
    %v5776 = vld [vmem:[%s812 + $0x178] sm:$0xff]
    %v5777 = vld [vmem:[%s812 + $0x180] sm:$0xff]
    %v5778 = vld [vmem:[%s812 + $0x188] sm:$0xff]
    %v5779 = vld [vmem:[%s812 + $0x190] sm:$0xff]
    %v5780 = vld [vmem:[%s812 + $0x198] sm:$0xff]
    %v5781 = vld [vmem:[%s812 + $0x1a0] sm:$0xff]
    %v5782 = vld [vmem:[%s812 + $0x1a8] sm:$0xff]
    %v5783 = vld [vmem:[%s812 + $0x1b0] sm:$0xff]
    %v5784 = vld [vmem:[%s812 + $0x1b8] sm:$0xff]
    %v5785 = vld [vmem:[%s812 + $0x1c0] sm:$0xff]
    %v5786 = vld [vmem:[%s812 + $0x1c8] sm:$0xff]
    %v5787 = vld [vmem:[%s812 + $0x1d0] sm:$0xff]
    %v5788 = vld [vmem:[%s812 + $0x1d8] sm:$0xff]
    %v5789 = vld [vmem:[%s812 + $0x1e0] sm:$0xff]
    %v5790 = vld [vmem:[%s812 + $0x1e8] sm:$0xff]
    %v5791 = vld [vmem:[%s812 + $0x1f0] sm:$0xff]
    %v5792 = vld [vmem:[%s812 + $0x1f8] sm:$0xff]
    %v5793 = vld [vmem:[%s812 + $0x200] sm:$0xff]
    %v5794 = vld [vmem:[%s812 + $0x208] sm:$0xff]
    %v5795 = vld [vmem:[%s812 + $0x210] sm:$0xff]
    %v5796 = vld [vmem:[%s812 + $0x218] sm:$0xff]
    %v5797 = vld [vmem:[%s812 + $0x220] sm:$0xff]
    %v5798 = vld [vmem:[%s812 + $0x228] sm:$0xff]
    %v5799 = vld [vmem:[%s812 + $0x230] sm:$0xff]
    %v5800 = vld [vmem:[%s812 + $0x238] sm:$0xff]
    %v5801 = vld [vmem:[%s812 + $0x240] sm:$0xff]
    %v5802 = vld [vmem:[%s812 + $0x248] sm:$0xff]
    %v5803 = vld [vmem:[%s812 + $0x250] sm:$0xff]
    %v5804 = vld [vmem:[%s812 + $0x258] sm:$0xff]
    %v5805 = vld [vmem:[%s812 + $0x260] sm:$0xff]
    %v5806 = vld [vmem:[%s812 + $0x268] sm:$0xff]
    %v5807 = vld [vmem:[%s812 + $0x270] sm:$0xff]
    %v5808 = vld [vmem:[%s812 + $0x278] sm:$0xff]
    %v5809 = vld [vmem:[%s812 + $0x280] sm:$0xff]
    %v5810 = vld [vmem:[%s812 + $0x288] sm:$0xff]
    %v5811 = vld [vmem:[%s812 + $0x290] sm:$0xff]
    %v5812 = vld [vmem:[%s812 + $0x298] sm:$0xff]
    %v5813 = vld [vmem:[%s812 + $0x2a0] sm:$0xff]
    %v5814 = vld [vmem:[%s812 + $0x2a8] sm:$0xff]
    %v5815 = vld [vmem:[%s812 + $0x2b0] sm:$0xff]
    %v5816 = vld [vmem:[%s812 + $0x2b8] sm:$0xff]
    %v5817 = vld [vmem:[%s812 + $0x2c0] sm:$0xff]
    %v5818 = vld [vmem:[%s812 + $0x2c8] sm:$0xff]
    %v5819 = vld [vmem:[%s812 + $0x2d0] sm:$0xff]
    %v5820 = vld [vmem:[%s812 + $0x2d8] sm:$0xff]
    %v5821 = vld [vmem:[%s812 + $0x2e0] sm:$0xff]
    %v5822 = vld [vmem:[%s812 + $0x2e8] sm:$0xff]
    %v5823 = vld [vmem:[%s812 + $0x2f0] sm:$0xff]
    %v5824 = vld [vmem:[%s812 + $0x2f8] sm:$0xff]
    %v5825 = vld [vmem:[%s812 + $0x300] sm:$0xff]
    %v5826 = vld [vmem:[%s812 + $0x308] sm:$0xff]
    %v5827 = vld [vmem:[%s812 + $0x310] sm:$0xff]
    %v5828 = vld [vmem:[%s812 + $0x318] sm:$0xff]
    %v5829 = vld [vmem:[%s812 + $0x320] sm:$0xff]
    %v5830 = vld [vmem:[%s812 + $0x328] sm:$0xff]
    %v5831 = vld [vmem:[%s812 + $0x330] sm:$0xff]
    %v5832 = vld [vmem:[%s812 + $0x338] sm:$0xff]
    %v5833 = vld [vmem:[%s812 + $0x340] sm:$0xff]
    %v5834 = vld [vmem:[%s812 + $0x348] sm:$0xff]
    %v5835 = vld [vmem:[%s812 + $0x350] sm:$0xff]
    %v5836 = vld [vmem:[%s812 + $0x358] sm:$0xff]
    %v5837 = vld [vmem:[%s812 + $0x360] sm:$0xff]
    %v5838 = vld [vmem:[%s812 + $0x368] sm:$0xff]
    %v5839 = vld [vmem:[%s812 + $0x370] sm:$0xff]
    %v5840 = vld [vmem:[%s812 + $0x378] sm:$0xff]
    %v5841 = vld [vmem:[%s812 + $0x380] sm:$0xff]
    %v5842 = vld [vmem:[%s812 + $0x388] sm:$0xff]
    %v5843 = vld [vmem:[%s812 + $0x390] sm:$0xff]
    %v5844 = vld [vmem:[%s812 + $0x398] sm:$0xff]
    %v5845 = vld [vmem:[%s812 + $0x3a0] sm:$0xff]
    %v5846 = vld [vmem:[%s812 + $0x3a8] sm:$0xff]
    %v5847 = vld [vmem:[%s812 + $0x3b0] sm:$0xff]
    %v5848 = vld [vmem:[%s812 + $0x3b8] sm:$0xff]
    %v5849 = vld [vmem:[%s812 + $0x3c0] sm:$0xff]
    %v5850 = vld [vmem:[%s812 + $0x3c8] sm:$0xff]
    %v5851 = vld [vmem:[%s812 + $0x3d0] sm:$0xff]
    %v5852 = vld [vmem:[%s812 + $0x3d8] sm:$0xff]
    %v5853 = vld [vmem:[%s812 + $0x3e0] sm:$0xff]
    %v5854 = vld [vmem:[%s812 + $0x3e8] sm:$0xff]
    %v5855 = vld [vmem:[%s812 + $0x3f0] sm:$0xff]
    %v5856 = vld [vmem:[%s812 + $0x3f8] sm:$0xff]
    %5857 = vmatprep.subr.mxu0 %v5790
    %5858 = vmatpush1.msra.mxu0 %v5789
    %5859 = vmatprep.subr.mxu0 %v5786
    %5860 = vmatpush1.msra.mxu0 %v5785
    %5861 = vmatprep.subr.mxu0 %v5782
    %5862 = vmatpush1.msra.mxu0 %v5781
    %5863 = vmatprep.subr.mxu0 %v5778
    %5864 = vmatpush1.msra.mxu0 %v5777
    %5865 = vmatprep.subr.mxu0 %v5774
    %5866 = vmatpush1.msra.mxu0 %v5773
    %5867 = vmatprep.subr.mxu0 %v5770
    %5868 = vmatpush1.msra.mxu0 %v5769
    %5869 = vmatprep.subr.mxu0 %v5766
    %5870 = vmatpush1.msra.mxu0 %v5765
    %5871 = vmatprep.subr.mxu0 %v5762
    %5872 = vmatpush1.msra.mxu0 %v5761
    %5873 = vmatprep.subr.mxu0 %v5758
    %5874 = vmatpush1.msra.mxu0 %v5757
    %5875 = vmatprep.subr.mxu0 %v5754
    %5876 = vmatpush1.msra.mxu0 %v5753
    %5877 = vmatprep.subr.mxu0 %v5750
    %5878 = vmatpush1.msra.mxu0 %v5749
    %5879 = vmatprep.subr.mxu0 %v5746
    %5880 = vmatpush1.msra.mxu0 %v5745
    %5881 = vmatprep.subr.mxu0 %v5742
    %5882 = vmatpush1.msra.mxu0 %v5741
    %5883 = vmatprep.subr.mxu0 %v5738
    %5884 = vmatpush1.msra.mxu0 %v5737
    %5885 = vmatprep.subr.mxu0 %v5734
    %5886 = vmatpush1.msra.mxu0 %v5733
    %5887 = vmatprep.subr.mxu0 %v5730
    %5888 = vmatpush1.msra.mxu0 %v5729
    %5889 = vmatprep.subr.mxu0 %v5854
    %5890 = vmatpush2.msra.mxu0 %v5853
    %5891 = vmatprep.subr.mxu0 %v5850
    %5892 = vmatpush2.msra.mxu0 %v5849
    %5893 = vmatprep.subr.mxu0 %v5846
    %5894 = vmatpush2.msra.mxu0 %v5845
    %5895 = vmatprep.subr.mxu0 %v5842
    %5896 = vmatpush2.msra.mxu0 %v5841
    %5897 = vmatprep.subr.mxu0 %v5838
    %5898 = vmatpush2.msra.mxu0 %v5837
    %5899 = vmatprep.subr.mxu0 %v5834
    %5900 = vmatpush2.msra.mxu0 %v5833
    %5901 = vmatprep.subr.mxu0 %v5830
    %5902 = vmatpush2.msra.mxu0 %v5829
    %5903 = vmatprep.subr.mxu0 %v5826
    %5904 = vmatpush2.msra.mxu0 %v5825
    %5905 = vmatprep.subr.mxu0 %v5822
    %5906 = vmatpush2.msra.mxu0 %v5821
    %5907 = vmatprep.subr.mxu0 %v5818
    %5908 = vmatpush2.msra.mxu0 %v5817
    %5909 = vmatprep.subr.mxu0 %v5814
    %5910 = vmatpush2.msra.mxu0 %v5813
    %5911 = vmatprep.subr.mxu0 %v5810
    %5912 = vmatpush2.msra.mxu0 %v5809
    %5913 = vmatprep.subr.mxu0 %v5806
    %5914 = vmatpush2.msra.mxu0 %v5805
    %5915 = vmatprep.subr.mxu0 %v5802
    %5916 = vmatpush2.msra.mxu0 %v5801
    %5917 = vmatprep.subr.mxu0 %v5798
    %5918 = vmatpush2.msra.mxu0 %v5797
    %5919 = vmatprep.subr.mxu0 %v5794
    %5920 = vmatpush2.msra.mxu0 %v5793
    %5921 = vmatprep.mubr.f32.mxu0 %v5434
    %5922 = vmatmul.mubr.f32.gmra.mxu0 %v5728
    %v5923 = vpop.f32.mrf.mxu0
    %v5924 = vadd.f32 %v472, %v5923
    %v5925 = vpop.f32.mrf.mxu0
    %v5926 = vadd.f32 %v476, %v5925
    %5927 = vdwg.mxu0
    %5928 = vmatprep.subr.mxu0 %v5792
    %5929 = vmatpush1.msra.mxu0 %v5791
    %5930 = vmatprep.subr.mxu0 %v5788
    %5931 = vmatpush1.msra.mxu0 %v5787
    %5932 = vmatprep.subr.mxu0 %v5784
    %5933 = vmatpush1.msra.mxu0 %v5783
    %5934 = vmatprep.subr.mxu0 %v5780
    %5935 = vmatpush1.msra.mxu0 %v5779
    %5936 = vmatprep.subr.mxu0 %v5776
    %5937 = vmatpush1.msra.mxu0 %v5775
    %5938 = vmatprep.subr.mxu0 %v5772
    %5939 = vmatpush1.msra.mxu0 %v5771
    %5940 = vmatprep.subr.mxu0 %v5768
    %5941 = vmatpush1.msra.mxu0 %v5767
    %5942 = vmatprep.subr.mxu0 %v5764
    %5943 = vmatpush1.msra.mxu0 %v5763
    %5944 = vmatprep.subr.mxu0 %v5760
    %5945 = vmatpush1.msra.mxu0 %v5759
    %5946 = vmatprep.subr.mxu0 %v5756
    %5947 = vmatpush1.msra.mxu0 %v5755
    %5948 = vmatprep.subr.mxu0 %v5752
    %5949 = vmatpush1.msra.mxu0 %v5751
    %5950 = vmatprep.subr.mxu0 %v5748
    %5951 = vmatpush1.msra.mxu0 %v5747
    %5952 = vmatprep.subr.mxu0 %v5744
    %5953 = vmatpush1.msra.mxu0 %v5743
    %5954 = vmatprep.subr.mxu0 %v5740
    %5955 = vmatpush1.msra.mxu0 %v5739
    %5956 = vmatprep.subr.mxu0 %v5736
    %5957 = vmatpush1.msra.mxu0 %v5735
    %5958 = vmatprep.subr.mxu0 %v5732
    %5959 = vmatpush1.msra.mxu0 %v5731
    %5960 = vmatprep.subr.mxu0 %v5856
    %5961 = vmatpush2.msra.mxu0 %v5855
    %5962 = vmatprep.subr.mxu0 %v5852
    %5963 = vmatpush2.msra.mxu0 %v5851
    %5964 = vmatprep.subr.mxu0 %v5848
    %5965 = vmatpush2.msra.mxu0 %v5847
    %5966 = vmatprep.subr.mxu0 %v5844
    %5967 = vmatpush2.msra.mxu0 %v5843
    %5968 = vmatprep.subr.mxu0 %v5840
    %5969 = vmatpush2.msra.mxu0 %v5839
    %5970 = vmatprep.subr.mxu0 %v5836
    %5971 = vmatpush2.msra.mxu0 %v5835
    %5972 = vmatprep.subr.mxu0 %v5832
    %5973 = vmatpush2.msra.mxu0 %v5831
    %5974 = vmatprep.subr.mxu0 %v5828
    %5975 = vmatpush2.msra.mxu0 %v5827
    %5976 = vmatprep.subr.mxu0 %v5824
    %5977 = vmatpush2.msra.mxu0 %v5823
    %5978 = vmatprep.subr.mxu0 %v5820
    %5979 = vmatpush2.msra.mxu0 %v5819
    %5980 = vmatprep.subr.mxu0 %v5816
    %5981 = vmatpush2.msra.mxu0 %v5815
    %5982 = vmatprep.subr.mxu0 %v5812
    %5983 = vmatpush2.msra.mxu0 %v5811
    %5984 = vmatprep.subr.mxu0 %v5808
    %5985 = vmatpush2.msra.mxu0 %v5807
    %5986 = vmatprep.subr.mxu0 %v5804
    %5987 = vmatpush2.msra.mxu0 %v5803
    %5988 = vmatprep.subr.mxu0 %v5800
    %5989 = vmatpush2.msra.mxu0 %v5799
    %5990 = vmatprep.subr.mxu0 %v5796
    %5991 = vmatpush2.msra.mxu0 %v5795
    %5992 = vmatprep.mubr.f32.mxu0 %v5434
    %5993 = vmatmul.mubr.f32.gmra.mxu0 %v5728
    %v5994 = vpop.f32.mrf.mxu0
    %v5995 = vadd.f32 %v480, %v5994
    %v5996 = vpop.f32.mrf.mxu0
    %v5997 = vadd.f32 %v484, %v5996
    %5998 = vdwg.mxu0
    %v5999 = vxor.u32 %v5924, 2147483648
    %v6000 = vmul.f32 %v5999, 1.442695
    %v6001 = vpow.pop %v6000
    %v6002 = vadd.f32 %v6001, 1.0
    %v6003 = vrcp.pop %v6002
    %v6004 = vmul.f32 1.0, %v6003
    %v6005 = vxor.u32 %v5926, 2147483648
    %v6006 = vmul.f32 %v6005, 1.442695
    %v6007 = vpow.pop %v6006
    %v6008 = vadd.f32 %v6007, 1.0
    %v6009 = vrcp.pop %v6008
    %v6010 = vmul.f32 1.0, %v6009
    %v6011 = vtanh.pop %v5995
    %v6012 = vxor.u32 %v5997, 2147483648
    %v6013 = vmul.f32 %v6012, 1.442695
    %v6014 = vpow.pop %v6013
    %v6015 = vadd.f32 %v6014, 1.0
    %v6016 = vrcp.pop %v6015
    %v6017 = vmul.f32 1.0, %v6016
    %v6018 = vmul.f32 %v6010, %v4384
    %v6019 = vmul.f32 %v6004, %v6011
    %v6020 = vadd.f32 %v6018, %v6019
    %v6021 = vtanh.pop %v6020
    %v6022 = vmul.f32 %v6017, %v6021
    %v6024 = vrot.slane %v1106, 6
    %v6027 = vrot.slane %v2750, 4
    %v6030 = vrot.slane %v4386, 2
    %vm6032 = vcmask 1041408
    %v6033 = vsel %vm6032, %v517, %v6024
    %vm6034 = vcmask 1043456
    %v6035 = vsel %vm6034, %v6033, %v6027
    %vm6036 = vcmask 1045504
    %v6037 = vsel %vm6036, %v6035, %v6030
    %v6038 = vld [vmem:[%s10] sm:$0xff]
    %v6039 = vld [vmem:[%s10 + $0x8] sm:$0xff]
    %v6040 = vld [vmem:[%s10 + $0x10] sm:$0xff]
    %v6041 = vld [vmem:[%s10 + $0x18] sm:$0xff]
    %v6042 = vld [vmem:[%s10 + $0x20] sm:$0xff]
    %v6043 = vld [vmem:[%s10 + $0x28] sm:$0xff]
    %v6044 = vld [vmem:[%s10 + $0x30] sm:$0xff]
    %v6045 = vld [vmem:[%s10 + $0x38] sm:$0xff]
    %v6046 = vld [vmem:[%s10 + $0x40] sm:$0xff]
    %v6047 = vld [vmem:[%s10 + $0x48] sm:$0xff]
    %v6048 = vld [vmem:[%s10 + $0x50] sm:$0xff]
    %v6049 = vld [vmem:[%s10 + $0x58] sm:$0xff]
    %v6050 = vld [vmem:[%s10 + $0x60] sm:$0xff]
    %v6051 = vld [vmem:[%s10 + $0x68] sm:$0xff]
    %v6052 = vld [vmem:[%s10 + $0x70] sm:$0xff]
    %v6053 = vld [vmem:[%s10 + $0x78] sm:$0xff]
    %v6054 = vld [vmem:[%s11] sm:$0x1]
    %v6056 = vlaneseq
    %v6057 = vshrl.u32 %v6056, 7
    %v6058 = vsub.s32 0, %v6057
    %v6059 = vrot.slane %v6054, %v6058
    %6061 = vmatprep.subr.mxu0 0.0
    %6062 = vmatpush1.msra.mxu0 %v6053
    %6063 = vmatprep.subr.mxu0 0.0
    %6064 = vmatpush1.msra.mxu0 %v6052
    %6065 = vmatprep.subr.mxu0 0.0
    %6066 = vmatpush1.msra.mxu0 %v6051
    %6067 = vmatprep.subr.mxu0 0.0
    %6068 = vmatpush1.msra.mxu0 %v6050
    %6069 = vmatprep.subr.mxu0 0.0
    %6070 = vmatpush1.msra.mxu0 %v6049
    %6071 = vmatprep.subr.mxu0 0.0
    %6072 = vmatpush1.msra.mxu0 %v6048
    %6073 = vmatprep.subr.mxu0 0.0
    %6074 = vmatpush1.msra.mxu0 %v6047
    %6075 = vmatprep.subr.mxu0 0.0
    %6076 = vmatpush1.msra.mxu0 %v6046
    %6077 = vmatprep.subr.mxu0 0.0
    %6078 = vmatpush1.msra.mxu0 %v6045
    %6079 = vmatprep.subr.mxu0 0.0
    %6080 = vmatpush1.msra.mxu0 %v6044
    %6081 = vmatprep.subr.mxu0 0.0
    %6082 = vmatpush1.msra.mxu0 %v6043
    %6083 = vmatprep.subr.mxu0 0.0
    %6084 = vmatpush1.msra.mxu0 %v6042
    %6085 = vmatprep.subr.mxu0 0.0
    %6086 = vmatpush1.msra.mxu0 %v6041
    %6087 = vmatprep.subr.mxu0 0.0
    %6088 = vmatpush1.msra.mxu0 %v6040
    %6089 = vmatprep.subr.mxu0 0.0
    %6090 = vmatpush1.msra.mxu0 %v6039
    %6091 = vmatprep.subr.mxu0 0.0
    %6092 = vmatpush1.msra.mxu0 %v6038
    %6093 = vmatprep.subr.mxu0 0.0
    %6094 = vmatpush2.msra.mxu0 0.0
    %6095 = vmatprep.subr.mxu0 0.0
    %6096 = vmatpush2.msra.mxu0 0.0
    %6097 = vmatprep.subr.mxu0 0.0
    %6098 = vmatpush2.msra.mxu0 0.0
    %6099 = vmatprep.subr.mxu0 0.0
    %6100 = vmatpush2.msra.mxu0 0.0
    %6101 = vmatprep.subr.mxu0 0.0
    %6102 = vmatpush2.msra.mxu0 0.0
    %6103 = vmatprep.subr.mxu0 0.0
    %6104 = vmatpush2.msra.mxu0 0.0
    %6105 = vmatprep.subr.mxu0 0.0
    %6106 = vmatpush2.msra.mxu0 0.0
    %6107 = vmatprep.subr.mxu0 0.0
    %6108 = vmatpush2.msra.mxu0 0.0
    %6109 = vmatprep.subr.mxu0 0.0
    %6110 = vmatpush2.msra.mxu0 0.0
    %6111 = vmatprep.subr.mxu0 0.0
    %6112 = vmatpush2.msra.mxu0 0.0
    %6113 = vmatprep.subr.mxu0 0.0
    %6114 = vmatpush2.msra.mxu0 0.0
    %6115 = vmatprep.subr.mxu0 0.0
    %6116 = vmatpush2.msra.mxu0 0.0
    %6117 = vmatprep.subr.mxu0 0.0
    %6118 = vmatpush2.msra.mxu0 0.0
    %6119 = vmatprep.subr.mxu0 0.0
    %6120 = vmatpush2.msra.mxu0 0.0
    %6121 = vmatprep.subr.mxu0 0.0
    %6122 = vmatpush2.msra.mxu0 0.0
    %6123 = vmatprep.subr.mxu0 0.0
    %6124 = vmatpush2.msra.mxu0 0.0
    %6125 = vmatprep.mubr.f32.mxu0 0.0
    %6126 = vmatmul.mubr.f32.gmra.mxu0 %v6037
    %v6127 = vpop.f32.mrf.mxu0
    %v6128 = vadd.f32 %v6059, %v6127
    %v6129 = vpop.f32.mrf.mxu0
    %6130 = vmatprep.mubr.f32.mxu0 0.0
    %6131 = vmatmul.mubr.f32.gmra.mxu0 %v6022
    %v6132 = vpop.f32.mrf.mxu0
    %v6133 = vadd.f32 %v6059, %v6132
    %v6134 = vpop.f32.mrf.mxu0
    %6135 = vdwg.mxu0
    %6136 = vst [vmem:[#allocation13] sm:$0xff] %v6128
    %6137 = vst [vmem:[#allocation13 + $0x8] sm:$0x3] %v6133
    // Predicated region
    $region74: #{tpu_custom_call.1} parent=1 // pred_check
      _
    $region75: #{tpu_custom_call.1} parent=1 // pred_check_branch
      %6139 = sbr.rel (0) target = $region77
    $region76: #{tpu_custom_call.1} parent=1 // pred_region
      %s6141 = ssub.s32 256, 256
      %6142 = vsyncadd [#allocation4], %s6141
      %s6143 = sshll.u32 [#allocation13], 4
      %s6144 = int_to_ptr.vmem [resolvable:$true] %s6143
      %6149 = dma.vmem_to_hbm [thread:$0]  %s6144, 256, %s12, [#allocation4], 128, 128, 8
    $region77: #{tpu_custom_call.1} parent=1 // pred_fallthru
      _
    // Predicated region
    $region78: #{tpu_custom_call.1} parent=1 // pred_check
      _
    $region79: #{tpu_custom_call.1} parent=1 // pred_check_branch
      %6151 = sbr.rel (0) target = $region81
    $region80: #{tpu_custom_call.1} parent=1 // pred_region
      %6152 = dma.done [#allocation4], 256
    $region81: #{tpu_custom_call.1} parent=1 // pred_fallthru
      _
    %6153 = vsyncpa [#allocation3], 1
    %6154 = vsyncpa [#allocation6], 1
    %6155 = vsyncpa [#allocation9], 1
    %6156 = vsyncpa [#allocation12], 1
    %6157 = vsyncpa [#allocation4], 1

</llo_original>
